<compile_context>
chip_gen: v7x
topology: tpu7x:2x2x1
jax: 0.10.0
libtpu: 0.0.40
codegen_flags: <defaults>
</compile_context>

<pallas_src>
import jax
import jax.numpy as jnp
from jax.experimental import pallas as pl
from jax.experimental.pallas import tpu as pltpu


# ----------------------------------------------------------------------------
# Fused TemporalBlock kernel
# ----------------------------------------------------------------------------
def _make_block_kernel(H, W, ci, ch, co, has_proj, cdt):
    HW = H * W
    c2 = 2 * ch          # packed causal-conv channels kept in history: [h0a|h1a]

    def kernel(x_ref, wpre_ref, bpre_ref, wprev_ref, wcur_ref, b01_ref,
               wagg01_ref, wagg2_ref, bagg_ref, wpp_ref, bpp_ref, waggpp_ref,
               *rest):
        if has_proj:
            wproj_ref, bproj_ref, o_ref, hist_ref, mprev_ref = rest
        else:
            o_ref, hist_ref, mprev_ref = rest

        t = pl.program_id(1)

        x2d = x_ref[...].reshape(HW, ci)                       # (HW, ci) bf16

        # --- three parallel 1x1x1 conv+BN+ReLU paths as ONE bf16 matmul -----
        pre = jnp.dot(x2d, wpre_ref[...], preferred_element_type=jnp.float32)
        pre = jnp.maximum(pre + bpre_ref[...], 0.0)            # (HW, 3ch) f32

        # --- pyramid spatio-temporal pooling (pool=(2,H,W), causal) ---------
        # pooled[0] = mean(x[0]); pooled[t] = (mean(x[t-1]) + mean(x[t])) / 2
        mean_cur = jnp.sum(x2d.astype(jnp.float32), axis=0,
                           keepdims=True) * (1.0 / HW)         # (1, ci)

        @pl.when(t == 0)
        def _():
            mprev_ref[...] = mean_cur

        pooled = 0.5 * (mprev_ref[...] + mean_cur)             # (1, ci)
        mprev_ref[...] = mean_cur
        pooled8 = jnp.broadcast_to(pooled, (8, ci))            # pad M for MXU
        pp8 = jnp.maximum(
            jnp.dot(pooled8, wpp_ref[...],
                    preferred_element_type=jnp.float32) + bpp_ref[...], 0.0)
        pp_agg = jnp.dot(pp8, waggpp_ref[...],
                         preferred_element_type=jnp.float32)[0:1]   # (1, co)

        # --- causal temporal history: rotating slot carried in VMEM ---------
        # Correct ONLY because T is the innermost, sequentially iterated grid
        # axis; the t==0 reset handles each new batch element.
        @pl.when(t == 0)
        def _():          # zero time-pad (causal) + zero spatial border
            hist_ref[...] = jnp.zeros_like(hist_ref)

        cur = t % 2                      # slot holding the current frame
        prev = 1 - cur                   # slot holding the previous frame
        hist_ref[pl.ds(cur, 1), 1:H + 1, 1:W + 1, :] = (
            pre[:, :c2].astype(cdt).reshape(1, H, W, c2))

        # --- causal (2,3,3) + (1,3,3) convs: 18 shifted-window bf16 matmuls -
        # prev-frame taps only need the h0a group (K = ch); cur-frame taps use
        # the packed [h0a|h1a] group (K = 2ch) with block-diagonal weights.
        acc = None
        for dh in range(3):
            for dw in range(3):
                k = dh * 3 + dw
                winp = hist_ref[pl.ds(prev, 1), dh:dh + H, dw:dw + W, :ch]
                d = jnp.dot(winp.reshape(HW, ch), wprev_ref[k],
                            preferred_element_type=jnp.float32)
                acc = d if acc is None else acc + d
                winc = hist_ref[pl.ds(cur, 1), dh:dh + H, dw:dw + W, :]
                acc = acc + jnp.dot(winc.reshape(HW, c2), wcur_ref[k],
                                    preferred_element_type=jnp.float32)
        h01 = jnp.maximum(acc + b01_ref[...], 0.0)             # (HW, 2ch) f32

        # --- aggregation conv+BN+ReLU over [h0|h1|h2|pp] without a concat ----
        y = (jnp.dot(h01.astype(cdt), wagg01_ref[...],
                     preferred_element_type=jnp.float32)
             + jnp.dot(pre[:, c2:].astype(cdt), wagg2_ref[...],
                       preferred_element_type=jnp.float32)
             + pp_agg + bagg_ref[...])
        y = jnp.maximum(y, 0.0)                                # (HW, co)

        # --- skip connection (projection conv+BN iff channel change) ---------
        if has_proj:
            skip = (jnp.dot(x2d, wproj_ref[...],
                            preferred_element_type=jnp.float32)
                    + bproj_ref[...])
        else:
            skip = x2d.astype(jnp.float32)
        o_ref[...] = (y + skip).reshape(H, W, co).astype(o_ref.dtype)

    return kernel


def temporal_block(x, fp):
    """x: (B, T, H, W, ci) -> (B, T, H, W, co); one fused pallas_call."""
    B, T, H, W, ci = x.shape
    c2 = fp['b01'].shape[-1]
    ch = c2 // 2
    co = fp['b_agg'].shape[-1]
    cr = fp['b_pp'].shape[-1]
    has_proj = 'w_proj' in fp
    cdt = x.dtype

    args = [x, fp['w_pre'], fp['b_pre'], fp['w_prev'], fp['w_cur'], fp['b01'],
            fp['wagg_h01'], fp['wagg_h2'], fp['b_agg'],
            fp['w_pp'], fp['b_pp'], fp['wagg_pp']]
    in_specs = [
        pl.BlockSpec((None, None, H, W, ci), lambda b, t: (b, t, 0, 0, 0)),
        pl.BlockSpec((ci, 3 * ch), lambda b, t: (0, 0)),
        pl.BlockSpec((1, 3 * ch), lambda b, t: (0, 0)),
        pl.BlockSpec((9, ch, 2 * ch), lambda b, t: (0, 0, 0)),
        pl.BlockSpec((9, 2 * ch, 2 * ch), lambda b, t: (0, 0, 0)),
        pl.BlockSpec((1, 2 * ch), lambda b, t: (0, 0)),
        pl.BlockSpec((2 * ch, co), lambda b, t: (0, 0)),
        pl.BlockSpec((ch, co), lambda b, t: (0, 0)),
        pl.BlockSpec((1, co), lambda b, t: (0, 0)),
        pl.BlockSpec((ci, cr), lambda b, t: (0, 0)),
        pl.BlockSpec((1, cr), lambda b, t: (0, 0)),
        pl.BlockSpec((cr, co), lambda b, t: (0, 0)),
    ]
    if has_proj:
        args += [fp['w_proj'], fp['b_proj']]
        in_specs += [pl.BlockSpec((ci, co), lambda b, t: (0, 0)),
                     pl.BlockSpec((1, co), lambda b, t: (0, 0))]

    # Explicit scoped-VMEM budget for the per-step working set
    # (hist + double-buffered x/out blocks + double-buffered weights + slack).
    def nbytes(a):
        return a.size * a.dtype.itemsize
    w_bytes = sum(nbytes(a) for a in args[1:])
    hist_bytes = 2 * (H + 2) * (W + 2) * 2 * ch * jnp.dtype(cdt).itemsize
    step_bytes = (hist_bytes
                  + 2 * H * W * (ci + co) * jnp.dtype(cdt).itemsize
                  + 2 * w_bytes + (1 << 20))
    vmem_limit = int(min(max(2 * step_bytes, 32 << 20), 96 << 20))

    return pl.pallas_call(
        _make_block_kernel(H, W, ci, ch, co, has_proj, cdt),
        out_shape=jax.ShapeDtypeStruct((B, T, H, W, co), cdt),
        grid_spec=pltpu.PrefetchScalarGridSpec(
            num_scalar_prefetch=0,
            # T must stay the innermost, sequential axis (VMEM-carried history).
            grid=(B, T),
            in_specs=in_specs,
            out_specs=pl.BlockSpec((None, None, H, W, co),
                                   lambda b, t: (b, t, 0, 0, 0)),
            scratch_shapes=[
                # padded frame history, rotating slots, bf16, 2ch channels only
                pltpu.VMEM((2, H + 2, W + 2, 2 * ch), cdt),
                # previous frame's spatial mean (pyramid pooling carry)
                pltpu.VMEM((1, ci), jnp.float32),
            ],
        ),
        compiler_params=pltpu.CompilerParams(
            dimension_semantics=("parallel", "arbitrary"),
            vmem_limit_bytes=vmem_limit),
    )(*args)


def temporal_model_forward(x, fused_params, receptive_field,
                           compute_dtype=jnp.bfloat16):
    """x: (B, T, C, H, W) -> (B, T - (receptive_field - 1), C_out, H, W)."""
    h = jnp.transpose(x, (0, 1, 3, 4, 2)).astype(compute_dtype)  # channels-last
    for fp in fused_params:
        h = temporal_block(h, fp)
    h = h[:, receptive_field - 1:].astype(jnp.float32)
    return jnp.transpose(h, (0, 1, 4, 2, 3))


# ----------------------------------------------------------------------------
# Deterministic synthetic parameters (inference-mode BN, folded)
# ----------------------------------------------------------------------------
def _conv_w(key, cin, cout, kdims=()):
    return 0.1 * jax.random.normal(key, kdims + (cin, cout), jnp.float32)


def _bn_folded(key, c, eps=1e-5):
    k1, k2 = jax.random.split(key)
    gamma = 1.0 + 0.1 * jax.random.normal(k1, (c,), jnp.float32)
    beta = 0.1 * jax.random.normal(k2, (c,), jnp.float32)
    mean = jnp.zeros((c,), jnp.float32)       # fresh running stats
    var = jnp.ones((c,), jnp.float32)
    scale = gamma / jnp.sqrt(var + eps)
    bias = beta - mean * scale
    return scale, bias


def make_block_params(key, ci, co):
    ch = ci // 2          # half_channels
    cr = ci // 3          # pyramid reduction channels
    ks = jax.random.split(key, 16)
    p = {}
    p['p0a_w'] = _conv_w(ks[0], ci, ch)
    p['p0a_scale'], p['p0a_bias'] = _bn_folded(ks[1], ch)
    p['p0b_w'] = _conv_w(ks[2], ch, ch, (2, 3, 3))
    p['p0b_scale'], p['p0b_bias'] = _bn_folded(ks[3], ch)
    p['p1a_w'] = _conv_w(ks[4], ci, ch)
    p['p1a_scale'], p['p1a_bias'] = _bn_folded(ks[5], ch)
    p['p1b_w'] = _conv_w(ks[6], ch, ch, (1, 3, 3))
    p['p1b_scale'], p['p1b_bias'] = _bn_folded(ks[7], ch)
    p['p2_w'] = _conv_w(ks[8], ci, ch)
    p['p2_scale'], p['p2_bias'] = _bn_folded(ks[9], ch)
    p['pp_w'] = _conv_w(ks[10], ci, cr)
    p['pp_scale'], p['pp_bias'] = _bn_folded(ks[11], cr)
    p['agg_w'] = _conv_w(ks[12], 3 * ch + cr, co)
    p['agg_scale'], p['agg_bias'] = _bn_folded(ks[13], co)
    if ci != co:
        p['proj_w'] = _conv_w(ks[14], ci, co)
        p['proj_scale'], p['proj_bias'] = _bn_folded(ks[15], co)
    return p


def make_temporal_model_params(key, in_channels, receptive_field,
                               start_out_channels=8, extra_in_channels=0):
    params = []
    ci, co = in_channels, start_out_channels
    for _ in range(receptive_field - 1):
        key, sub = jax.random.split(key)
        params.append(make_block_params(sub, ci, co))
        ci = co
        co = co + extra_in_channels
    return params, ci   # ci == out_channels


def fuse_block_params(p, compute_dtype=jnp.bfloat16):
    """Fold BN into weights, pack per-path weights, cast MXU operands to bf16."""
    ci, ch = p['p0a_w'].shape
    co = p['agg_w'].shape[1]

    # Packed 1x1x1 pre-convs: pre = relu(x @ w_pre + b_pre), groups [h0a|h1a|h2]
    w_pre = jnp.concatenate([p['p0a_w'] * p['p0a_scale'],
                             p['p1a_w'] * p['p1a_scale'],
                             p['p2_w'] * p['p2_scale']], axis=1)
    b_pre = jnp.concatenate([p['p0a_bias'], p['p1a_bias'], p['p2_bias']])[None]

    # Causal conv taps: history carries only [h0a|h1a] (2ch).
    w0b = p['p0b_w'] * p['p0b_scale']            # (2,3,3,ch,ch), time 0 = t-1
    w1b = p['p1b_w'] * p['p1b_scale']            # (1,3,3,ch,ch)
    # previous-frame taps read only h0a (K = ch), write output cols [0:ch]
    w_prev = jnp.zeros((3, 3, ch, 2 * ch), jnp.float32)
    w_prev = w_prev.at[..., 0:ch].set(w0b[0]).reshape(9, ch, 2 * ch)
    # current-frame taps read [h0a|h1a] (K = 2ch), block-diagonal outputs
    w_cur = jnp.zeros((3, 3, 2 * ch, 2 * ch), jnp.float32)
    w_cur = w_cur.at[:, :, 0:ch, 0:ch].set(w0b[1])
    w_cur = w_cur.at[:, :, ch:, ch:].set(w1b[0]).reshape(9, 2 * ch, 2 * ch)
    b01 = jnp.concatenate([p['p0b_bias'], p['p1b_bias']])[None]

    # Aggregation conv split by input group: cat = [h0 | h1 | h2 | pp]
    w_agg = p['agg_w'] * p['agg_scale']

    fp = dict(
        w_pre=w_pre.astype(compute_dtype), b_pre=b_pre,
        w_prev=w_prev.astype(compute_dtype), w_cur=w_cur.astype(compute_dtype),
        b01=b01,
        wagg_h01=w_agg[0:2 * ch].astype(compute_dtype),
        wagg_h2=w_agg[2 * ch:3 * ch].astype(compute_dtype),
        wagg_pp=w_agg[3 * ch:],                  # tiny, kept f32
        b_agg=p['agg_bias'][None],
        w_pp=p['pp_w'] * p['pp_scale'], b_pp=p['pp_bias'][None],
    )
    if 'proj_w' in p:
        fp['w_proj'] = (p['proj_w'] * p['proj_scale']).astype(compute_dtype)
        fp['b_proj'] = p['proj_bias'][None]
    return fp


# ----------------------------------------------------------------------------
# Pure-JAX f32 reference (mirrors the PyTorch module) for a correctness check
# ----------------------------------------------------------------------------
def _reference_block(x, p):
    def pconv(v, w, s, b, relu=True):
        y = jnp.einsum('bthwc,cd->bthwd', v, w) * s + b
        return jnp.maximum(y, 0.0) if relu else y

    def causal_conv(v, w, s, b):
        kt = w.shape[0]
        Bv, Tv, Hv, Wv, _ = v.shape
        vp = jnp.pad(v, ((0, 0), (kt - 1, 0), (1, 1), (1, 1), (0, 0)))
        y = 0.0
        for dt in range(kt):
            for dh in range(3):
                for dw in range(3):
                    y = y + jnp.einsum(
                        'bthwc,cd->bthwd',
                        vp[:, dt:dt + Tv, dh:dh + Hv, dw:dw + Wv], w[dt, dh, dw])
        return jnp.maximum(y * s + b, 0.0)

    h0 = causal_conv(pconv(x, p['p0a_w'], p['p0a_scale'], p['p0a_bias']),
                     p['p0b_w'], p['p0b_scale'], p['p0b_bias'])
    h1 = causal_conv(pconv(x, p['p1a_w'], p['p1a_scale'], p['p1a_bias']),
                     p['p1b_w'], p['p1b_scale'], p['p1b_bias'])
    h2 = pconv(x, p['p2_w'], p['p2_scale'], p['p2_bias'])
    s = jnp.mean(x, axis=(2, 3))
    pooled = 0.5 * (s + jnp.concatenate([s[:, :1], s[:, :-1]], axis=1))
    pp = jnp.maximum(
        jnp.einsum('btc,cr->btr', pooled, p['pp_w']) * p['pp_scale']
        + p['pp_bias'], 0.0)
    Bx, Tx, Hx, Wx, _ = x.shape
    pp = jnp.broadcast_to(pp[:, :, None, None, :], (Bx, Tx, Hx, Wx, pp.shape[-1]))
    cat = jnp.concatenate([h0, h1, h2, pp], axis=-1)
    y = pconv(cat, p['agg_w'], p['agg_scale'], p['agg_bias'])
    if 'proj_w' in p:
        skip = pconv(x, p['proj_w'], p['proj_scale'], p['proj_bias'], relu=False)
    else:
        skip = x
    return y + skip


def reference_forward(x, raw_params, receptive_field):
    h = jnp.transpose(x, (0, 1, 3, 4, 2))
    for p in raw_params:
        h = _reference_block(h, p)
    h = h[:, receptive_field - 1:]
    return jnp.transpose(h, (0, 1, 4, 2, 3))


# ----------------------------------------------------------------------------
if __name__ == "__main__":
    key = jax.random.PRNGKey(0)
    B, T, C, H, W = 2, 5, 6, 8, 8
    receptive_field = 3
    start_out_channels = 8

    kx, kp = jax.random.split(key)
    x = jax.random.normal(kx, (B, T, C, H, W), jnp.float32)

    raw_params, out_channels = make_temporal_model_params(
        kp, C, receptive_field, start_out_channels=start_out_channels)
    fused_params = [fuse_block_params(p) for p in raw_params]

    @jax.jit
    def run(xx, params):
        return temporal_model_forward(xx, params, receptive_field)

    y = jax.block_until_ready(run(x, fused_params))

    expected = (B, T - (receptive_field - 1), out_channels, H, W)
    assert y.shape == expected, (y.shape, expected)
    assert bool(jnp.all(jnp.isfinite(y)))

    # Correctness vs the pure-JAX f32 reference (bf16 weights/activations/history).
    y_ref = reference_forward(x, raw_params, receptive_field)
    max_err = float(jnp.max(jnp.abs(y - y_ref)))
    assert jnp.allclose(y, y_ref, atol=7e-2, rtol=7e-2), max_err

    print("KERNEL_OK")
</pallas_src>

<mosaic_0001>
module attributes {stable_mosaic.version = 11 : i64} {
  func.func @kernel(%arg0: i32, %arg1: i32, %arg2: memref<1x1x8x8x6xbf16, #tpu.memory_space<vmem>>, %arg3: memref<6x9xbf16, #tpu.memory_space<vmem>>, %arg4: memref<1x9xf32, #tpu.memory_space<vmem>>, %arg5: memref<9x3x6xbf16, #tpu.memory_space<vmem>>, %arg6: memref<9x6x6xbf16, #tpu.memory_space<vmem>>, %arg7: memref<1x6xf32, #tpu.memory_space<vmem>>, %arg8: memref<6x8xbf16, #tpu.memory_space<vmem>>, %arg9: memref<3x8xbf16, #tpu.memory_space<vmem>>, %arg10: memref<1x8xf32, #tpu.memory_space<vmem>>, %arg11: memref<6x2xf32, #tpu.memory_space<vmem>>, %arg12: memref<1x2xf32, #tpu.memory_space<vmem>>, %arg13: memref<2x8xf32, #tpu.memory_space<vmem>>, %arg14: memref<6x8xbf16, #tpu.memory_space<vmem>>, %arg15: memref<1x8xf32, #tpu.memory_space<vmem>>, %arg16: memref<1x1x8x8x8xbf16, #tpu.memory_space<vmem>>, %arg17: memref<2x10x10x6xbf16, #tpu.memory_space<vmem>>, %arg18: memref<1x6xf32, #tpu.memory_space<vmem>>) attributes {dimension_semantics = [#tpu.dimension_semantics<parallel>, #tpu.dimension_semantics<arbitrary>], iteration_bounds = array<i64: 2, 5>, scalar_prefetch = 0 : i64, scratch_operands = 2 : i64, tpu.core_type = #tpu.core_type<tc>, window_params = [{transform_indices = @transform_0, window_bounds = array<i64: 1, 1, 8, 8, 6>}, {pipeline_mode = #tpu.pipeline_mode<synchronous>, transform_indices = @transform_1, window_bounds = array<i64: 6, 9>}, {pipeline_mode = #tpu.pipeline_mode<synchronous>, transform_indices = @transform_2, window_bounds = array<i64: 1, 9>}, {pipeline_mode = #tpu.pipeline_mode<synchronous>, transform_indices = @transform_3, window_bounds = array<i64: 9, 3, 6>}, {pipeline_mode = #tpu.pipeline_mode<synchronous>, transform_indices = @transform_4, window_bounds = array<i64: 9, 6, 6>}, {pipeline_mode = #tpu.pipeline_mode<synchronous>, transform_indices = @transform_5, window_bounds = array<i64: 1, 6>}, {pipeline_mode = #tpu.pipeline_mode<synchronous>, transform_indices = @transform_6, window_bounds = array<i64: 6, 8>}, {pipeline_mode = #tpu.pipeline_mode<synchronous>, transform_indices = @transform_7, window_bounds = array<i64: 3, 8>}, {pipeline_mode = #tpu.pipeline_mode<synchronous>, transform_indices = @transform_8, window_bounds = array<i64: 1, 8>}, {pipeline_mode = #tpu.pipeline_mode<synchronous>, transform_indices = @transform_9, window_bounds = array<i64: 6, 2>}, {pipeline_mode = #tpu.pipeline_mode<synchronous>, transform_indices = @transform_10, window_bounds = array<i64: 1, 2>}, {pipeline_mode = #tpu.pipeline_mode<synchronous>, transform_indices = @transform_11, window_bounds = array<i64: 2, 8>}, {pipeline_mode = #tpu.pipeline_mode<synchronous>, transform_indices = @transform_12, window_bounds = array<i64: 6, 8>}, {pipeline_mode = #tpu.pipeline_mode<synchronous>, transform_indices = @transform_13, window_bounds = array<i64: 1, 8>}, {transform_indices = @transform_14, window_bounds = array<i64: 1, 1, 8, 8, 8>}]} {
    %c0 = arith.constant 0 : index
    %c0_0 = arith.constant 0 : index
    %c0_1 = arith.constant 0 : index
    %c0_2 = arith.constant 0 : index
    %c0_3 = arith.constant 0 : index
    %0 = vector.load %arg2[%c0, %c0_0, %c0_1, %c0_2, %c0_3] : memref<1x1x8x8x6xbf16, #tpu.memory_space<vmem>>, vector<1x1x8x8x6xbf16>
    %1 = vector.shape_cast %0 : vector<1x1x8x8x6xbf16> to vector<8x8x6xbf16>
    %2 = vector.shape_cast %1 : vector<8x8x6xbf16> to vector<64x6xbf16>
    %c0_4 = arith.constant 0 : index
    %c0_5 = arith.constant 0 : index
    %3 = vector.load %arg3[%c0_4, %c0_5] : memref<6x9xbf16, #tpu.memory_space<vmem>>, vector<6x9xbf16>
    %cst = arith.constant dense<0.000000e+00> : vector<64x9xf32>
    %4 = tpu.matmul %2, %3, %cst {dimension_numbers = #tpu.dot_dimension_numbers<[1], [0], [0], [1], [0, 0, 1, 1], [], []>} : vector<64x6xbf16>, vector<6x9xbf16>, vector<64x9xf32> -> vector<64x9xf32>
    %c0_6 = arith.constant 0 : index
    %c0_7 = arith.constant 0 : index
    %5 = vector.load %arg4[%c0_6, %c0_7] : memref<1x9xf32, #tpu.memory_space<vmem>>, vector<1x9xf32>
    %6 = vector.broadcast %5 : vector<1x9xf32> to vector<64x9xf32>
    %7 = arith.addf %4, %6 : vector<64x9xf32>
    %cst_8 = arith.constant 0.000000e+00 : f32
    %8 = vector.broadcast %cst_8 : f32 to vector<64x9xf32>
    %9 = arith.maximumf %7, %8 : vector<64x9xf32>
    %10 = arith.extf %2 : vector<64x6xbf16> to vector<64x6xf32>
    %cst_9 = arith.constant dense<0.000000e+00> : vector<6xf32>
    %11 = vector.multi_reduction <add>, %10, %cst_9 [0] : vector<64x6xf32> to vector<6xf32>
    %12 = vector.shape_cast %11 : vector<6xf32> to vector<1x6xf32>
    %cst_10 = arith.constant 1.562500e-02 : f32
    %13 = vector.broadcast %cst_10 : f32 to vector<1x6xf32>
    %14 = arith.mulf %12, %13 : vector<1x6xf32>
    %c0_i32 = arith.constant 0 : i32
    %15 = arith.cmpi eq, %arg1, %c0_i32 : i32
    %16 = arith.extui %15 : i1 to i32
    %c0_i32_11 = arith.constant 0 : i32
    %17 = arith.cmpi ne, %16, %c0_i32_11 : i32
    scf.if %17 {
      %c0_176 = arith.constant 0 : index
      %c0_177 = arith.constant 0 : index
      %210 = vector.load %arg18[%c0_176, %c0_177] : memref<1x6xf32, #tpu.memory_space<vmem>>, vector<1x6xf32>
      tpu.vector_store %arg18[%c0_176, %c0_177], %14 {strides = array<i32>} : memref<1x6xf32, #tpu.memory_space<vmem>>, vector<1x6xf32>,
    } else {
    }
    %c0_12 = arith.constant 0 : index
    %c0_13 = arith.constant 0 : index
    %18 = vector.load %arg18[%c0_12, %c0_13] : memref<1x6xf32, #tpu.memory_space<vmem>>, vector<1x6xf32>
    %19 = arith.addf %18, %14 : vector<1x6xf32>
    %cst_14 = arith.constant 5.000000e-01 : f32
    %20 = vector.broadcast %cst_14 : f32 to vector<1x6xf32>
    %21 = arith.mulf %20, %19 : vector<1x6xf32>
    %c0_15 = arith.constant 0 : index
    %c0_16 = arith.constant 0 : index
    %22 = vector.load %arg18[%c0_15, %c0_16] : memref<1x6xf32, #tpu.memory_space<vmem>>, vector<1x6xf32>
    tpu.vector_store %arg18[%c0_15, %c0_16], %14 {strides = array<i32>} : memref<1x6xf32, #tpu.memory_space<vmem>>, vector<1x6xf32>,
    %23 = vector.shape_cast %21 : vector<1x6xf32> to vector<1x6xf32>
    %24 = vector.broadcast %23 : vector<1x6xf32> to vector<8x6xf32>
    %c0_17 = arith.constant 0 : index
    %c0_18 = arith.constant 0 : index
    %25 = vector.load %arg11[%c0_17, %c0_18] : memref<6x2xf32, #tpu.memory_space<vmem>>, vector<6x2xf32>
    %cst_19 = arith.constant dense<0.000000e+00> : vector<8x2xf32>
    %26 = tpu.matmul %24, %25, %cst_19 {dimension_numbers = #tpu.dot_dimension_numbers<[1], [0], [0], [1], [0, 0, 1, 1], [], []>} : vector<8x6xf32>, vector<6x2xf32>, vector<8x2xf32> -> vector<8x2xf32>
    %c0_20 = arith.constant 0 : index
    %c0_21 = arith.constant 0 : index
    %27 = vector.load %arg12[%c0_20, %c0_21] : memref<1x2xf32, #tpu.memory_space<vmem>>, vector<1x2xf32>
    %28 = vector.broadcast %27 : vector<1x2xf32> to vector<8x2xf32>
    %29 = arith.addf %26, %28 : vector<8x2xf32>
    %cst_22 = arith.constant 0.000000e+00 : f32
    %30 = vector.broadcast %cst_22 : f32 to vector<8x2xf32>
    %31 = arith.maximumf %29, %30 : vector<8x2xf32>
    %c0_23 = arith.constant 0 : index
    %c0_24 = arith.constant 0 : index
    %32 = vector.load %arg13[%c0_23, %c0_24] : memref<2x8xf32, #tpu.memory_space<vmem>>, vector<2x8xf32>
    %cst_25 = arith.constant dense<0.000000e+00> : vector<8x8xf32>
    %33 = tpu.matmul %31, %32, %cst_25 {dimension_numbers = #tpu.dot_dimension_numbers<[1], [0], [0], [1], [0, 0, 1, 1], [], []>} : vector<8x2xf32>, vector<2x8xf32>, vector<8x8xf32> -> vector<8x8xf32>
    %34 = vector.extract_strided_slice %33 {offsets = [0, 0], sizes = [1, 8], strides = [1, 1]} : vector<8x8xf32> to vector<1x8xf32>
    %c0_i32_26 = arith.constant 0 : i32
    %35 = arith.cmpi eq, %arg1, %c0_i32_26 : i32
    %36 = arith.extui %35 : i1 to i32
    %c0_i32_27 = arith.constant 0 : i32
    %37 = arith.cmpi ne, %36, %c0_i32_27 : i32
    scf.if %37 {
      %cst_176 = arith.constant 0.000000e+00 : bf16
      %210 = vector.broadcast %cst_176 : bf16 to vector<2x10x10x6xbf16>
      %c0_177 = arith.constant 0 : index
      %c0_178 = arith.constant 0 : index
      %c0_179 = arith.constant 0 : index
      %c0_180 = arith.constant 0 : index
      %211 = vector.load %arg17[%c0_177, %c0_178, %c0_179, %c0_180] : memref<2x10x10x6xbf16, #tpu.memory_space<vmem>>, vector<2x10x10x6xbf16>
      tpu.vector_store %arg17[%c0_177, %c0_178, %c0_179, %c0_180], %210 {strides = array<i32>} : memref<2x10x10x6xbf16, #tpu.memory_space<vmem>>, vector<2x10x10x6xbf16>,
    } else {
    }
    %c2_i32 = arith.constant 2 : i32
    %c0_i32_28 = arith.constant 0 : i32
    %38 = arith.cmpi eq, %c2_i32, %c0_i32_28 : i32
    %c1_i32 = arith.constant 1 : i32
    %39 = arith.select %38, %c1_i32, %c2_i32 : i32
    %40 = arith.remsi %arg1, %39 : i32
    %c0_i32_29 = arith.constant 0 : i32
    %41 = arith.cmpi ne, %40, %c0_i32_29 : i32
    %c0_i32_30 = arith.constant 0 : i32
    %42 = arith.cmpi slt, %40, %c0_i32_30 : i32
    %c0_i32_31 = arith.constant 0 : i32
    %43 = arith.cmpi slt, %39, %c0_i32_31 : i32
    %44 = arith.xori %42, %43 : i1
    %45 = arith.andi %44, %41 : i1
    %46 = arith.addi %40, %39 : i32
    %47 = arith.select %45, %46, %40 : i32
    %c1_i32_32 = arith.constant 1 : i32
    %48 = arith.subi %c1_i32_32, %47 : i32
    %49 = vector.extract_strided_slice %9 {offsets = [0, 0], sizes = [64, 6], strides = [1, 1]} : vector<64x9xf32> to vector<64x6xf32>
    %50 = arith.truncf %49 : vector<64x6xf32> to vector<64x6xbf16>
    %51 = vector.shape_cast %50 : vector<64x6xbf16> to vector<1x8x8x6xbf16>
    %52 = arith.index_cast %47 : i32 to index
    %c1 = arith.constant 1 : index
    %c1_33 = arith.constant 1 : index
    %c0_34 = arith.constant 0 : index
    %53 = vector.load %arg17[%52, %c1, %c1_33, %c0_34] : memref<2x10x10x6xbf16, #tpu.memory_space<vmem>>, vector<1x8x8x6xbf16>
    tpu.vector_store %arg17[%52, %c1, %c1_33, %c0_34], %51 {strides = array<i32>} : memref<2x10x10x6xbf16, #tpu.memory_space<vmem>>, vector<1x8x8x6xbf16>,
    %54 = arith.index_cast %48 : i32 to index
    %c0_35 = arith.constant 0 : index
    %c0_36 = arith.constant 0 : index
    %c0_37 = arith.constant 0 : index
    %55 = vector.load %arg17[%54, %c0_35, %c0_36, %c0_37] : memref<2x10x10x6xbf16, #tpu.memory_space<vmem>>, vector<1x8x8x3xbf16>
    %56 = vector.shape_cast %55 : vector<1x8x8x3xbf16> to vector<64x3xbf16>
    %c0_38 = arith.constant 0 : index
    %c0_39 = arith.constant 0 : index
    %c0_40 = arith.constant 0 : index
    %57 = vector.load %arg5[%c0_38, %c0_39, %c0_40] : memref<9x3x6xbf16, #tpu.memory_space<vmem>>, vector<1x3x6xbf16>
    %58 = vector.shape_cast %57 : vector<1x3x6xbf16> to vector<3x6xbf16>
    %cst_41 = arith.constant dense<0.000000e+00> : vector<64x6xf32>
    %59 = tpu.matmul %56, %58, %cst_41 {dimension_numbers = #tpu.dot_dimension_numbers<[1], [0], [0], [1], [0, 0, 1, 1], [], []>} : vector<64x3xbf16>, vector<3x6xbf16>, vector<64x6xf32> -> vector<64x6xf32>
    %60 = arith.index_cast %47 : i32 to index
    %c0_42 = arith.constant 0 : index
    %c0_43 = arith.constant 0 : index
    %c0_44 = arith.constant 0 : index
    %61 = vector.load %arg17[%60, %c0_42, %c0_43, %c0_44] : memref<2x10x10x6xbf16, #tpu.memory_space<vmem>>, vector<1x8x8x6xbf16>
    %62 = vector.shape_cast %61 : vector<1x8x8x6xbf16> to vector<64x6xbf16>
    %c0_45 = arith.constant 0 : index
    %c0_46 = arith.constant 0 : index
    %c0_47 = arith.constant 0 : index
    %63 = vector.load %arg6[%c0_45, %c0_46, %c0_47] : memref<9x6x6xbf16, #tpu.memory_space<vmem>>, vector<1x6x6xbf16>
    %64 = vector.shape_cast %63 : vector<1x6x6xbf16> to vector<6x6xbf16>
    %cst_48 = arith.constant dense<0.000000e+00> : vector<64x6xf32>
    %65 = tpu.matmul %62, %64, %cst_48 {dimension_numbers = #tpu.dot_dimension_numbers<[1], [0], [0], [1], [0, 0, 1, 1], [], []>} : vector<64x6xbf16>, vector<6x6xbf16>, vector<64x6xf32> -> vector<64x6xf32>
    %66 = arith.addf %59, %65 : vector<64x6xf32>
    %67 = arith.index_cast %48 : i32 to index
    %c0_49 = arith.constant 0 : index
    %c1_50 = arith.constant 1 : index
    %c0_51 = arith.constant 0 : index
    %68 = vector.load %arg17[%67, %c0_49, %c1_50, %c0_51] : memref<2x10x10x6xbf16, #tpu.memory_space<vmem>>, vector<1x8x8x3xbf16>
    %69 = vector.shape_cast %68 : vector<1x8x8x3xbf16> to vector<64x3xbf16>
    %c1_52 = arith.constant 1 : index
    %c0_53 = arith.constant 0 : index
    %c0_54 = arith.constant 0 : index
    %70 = vector.load %arg5[%c1_52, %c0_53, %c0_54] : memref<9x3x6xbf16, #tpu.memory_space<vmem>>, vector<1x3x6xbf16>
    %71 = vector.shape_cast %70 : vector<1x3x6xbf16> to vector<3x6xbf16>
    %cst_55 = arith.constant dense<0.000000e+00> : vector<64x6xf32>
    %72 = tpu.matmul %69, %71, %cst_55 {dimension_numbers = #tpu.dot_dimension_numbers<[1], [0], [0], [1], [0, 0, 1, 1], [], []>} : vector<64x3xbf16>, vector<3x6xbf16>, vector<64x6xf32> -> vector<64x6xf32>
    %73 = arith.addf %66, %72 : vector<64x6xf32>
    %74 = arith.index_cast %47 : i32 to index
    %c0_56 = arith.constant 0 : index
    %c1_57 = arith.constant 1 : index
    %c0_58 = arith.constant 0 : index
    %75 = vector.load %arg17[%74, %c0_56, %c1_57, %c0_58] : memref<2x10x10x6xbf16, #tpu.memory_space<vmem>>, vector<1x8x8x6xbf16>
    %76 = vector.shape_cast %75 : vector<1x8x8x6xbf16> to vector<64x6xbf16>
    %c1_59 = arith.constant 1 : index
    %c0_60 = arith.constant 0 : index
    %c0_61 = arith.constant 0 : index
    %77 = vector.load %arg6[%c1_59, %c0_60, %c0_61] : memref<9x6x6xbf16, #tpu.memory_space<vmem>>, vector<1x6x6xbf16>
    %78 = vector.shape_cast %77 : vector<1x6x6xbf16> to vector<6x6xbf16>
    %cst_62 = arith.constant dense<0.000000e+00> : vector<64x6xf32>
    %79 = tpu.matmul %76, %78, %cst_62 {dimension_numbers = #tpu.dot_dimension_numbers<[1], [0], [0], [1], [0, 0, 1, 1], [], []>} : vector<64x6xbf16>, vector<6x6xbf16>, vector<64x6xf32> -> vector<64x6xf32>
    %80 = arith.addf %73, %79 : vector<64x6xf32>
    %81 = arith.index_cast %48 : i32 to index
    %c0_63 = arith.constant 0 : index
    %c2 = arith.constant 2 : index
    %c0_64 = arith.constant 0 : index
    %82 = vector.load %arg17[%81, %c0_63, %c2, %c0_64] : memref<2x10x10x6xbf16, #tpu.memory_space<vmem>>, vector<1x8x8x3xbf16>
    %83 = vector.shape_cast %82 : vector<1x8x8x3xbf16> to vector<64x3xbf16>
    %c2_65 = arith.constant 2 : index
    %c0_66 = arith.constant 0 : index
    %c0_67 = arith.constant 0 : index
    %84 = vector.load %arg5[%c2_65, %c0_66, %c0_67] : memref<9x3x6xbf16, #tpu.memory_space<vmem>>, vector<1x3x6xbf16>
    %85 = vector.shape_cast %84 : vector<1x3x6xbf16> to vector<3x6xbf16>
    %cst_68 = arith.constant dense<0.000000e+00> : vector<64x6xf32>
    %86 = tpu.matmul %83, %85, %cst_68 {dimension_numbers = #tpu.dot_dimension_numbers<[1], [0], [0], [1], [0, 0, 1, 1], [], []>} : vector<64x3xbf16>, vector<3x6xbf16>, vector<64x6xf32> -> vector<64x6xf32>
    %87 = arith.addf %80, %86 : vector<64x6xf32>
    %88 = arith.index_cast %47 : i32 to index
    %c0_69 = arith.constant 0 : index
    %c2_70 = arith.constant 2 : index
    %c0_71 = arith.constant 0 : index
    %89 = vector.load %arg17[%88, %c0_69, %c2_70, %c0_71] : memref<2x10x10x6xbf16, #tpu.memory_space<vmem>>, vector<1x8x8x6xbf16>
    %90 = vector.shape_cast %89 : vector<1x8x8x6xbf16> to vector<64x6xbf16>
    %c2_72 = arith.constant 2 : index
    %c0_73 = arith.constant 0 : index
    %c0_74 = arith.constant 0 : index
    %91 = vector.load %arg6[%c2_72, %c0_73, %c0_74] : memref<9x6x6xbf16, #tpu.memory_space<vmem>>, vector<1x6x6xbf16>
    %92 = vector.shape_cast %91 : vector<1x6x6xbf16> to vector<6x6xbf16>
    %cst_75 = arith.constant dense<0.000000e+00> : vector<64x6xf32>
    %93 = tpu.matmul %90, %92, %cst_75 {dimension_numbers = #tpu.dot_dimension_numbers<[1], [0], [0], [1], [0, 0, 1, 1], [], []>} : vector<64x6xbf16>, vector<6x6xbf16>, vector<64x6xf32> -> vector<64x6xf32>
    %94 = arith.addf %87, %93 : vector<64x6xf32>
    %95 = arith.index_cast %48 : i32 to index
    %c1_76 = arith.constant 1 : index
    %c0_77 = arith.constant 0 : index
    %c0_78 = arith.constant 0 : index
    %96 = vector.load %arg17[%95, %c1_76, %c0_77, %c0_78] : memref<2x10x10x6xbf16, #tpu.memory_space<vmem>>, vector<1x8x8x3xbf16>
    %97 = vector.shape_cast %96 : vector<1x8x8x3xbf16> to vector<64x3xbf16>
    %c3 = arith.constant 3 : index
    %c0_79 = arith.constant 0 : index
    %c0_80 = arith.constant 0 : index
    %98 = vector.load %arg5[%c3, %c0_79, %c0_80] : memref<9x3x6xbf16, #tpu.memory_space<vmem>>, vector<1x3x6xbf16>
    %99 = vector.shape_cast %98 : vector<1x3x6xbf16> to vector<3x6xbf16>
    %cst_81 = arith.constant dense<0.000000e+00> : vector<64x6xf32>
    %100 = tpu.matmul %97, %99, %cst_81 {dimension_numbers = #tpu.dot_dimension_numbers<[1], [0], [0], [1], [0, 0, 1, 1], [], []>} : vector<64x3xbf16>, vector<3x6xbf16>, vector<64x6xf32> -> vector<64x6xf32>
    %101 = arith.addf %94, %100 : vector<64x6xf32>
    %102 = arith.index_cast %47 : i32 to index
    %c1_82 = arith.constant 1 : index
    %c0_83 = arith.constant 0 : index
    %c0_84 = arith.constant 0 : index
    %103 = vector.load %arg17[%102, %c1_82, %c0_83, %c0_84] : memref<2x10x10x6xbf16, #tpu.memory_space<vmem>>, vector<1x8x8x6xbf16>
    %104 = vector.shape_cast %103 : vector<1x8x8x6xbf16> to vector<64x6xbf16>
    %c3_85 = arith.constant 3 : index
    %c0_86 = arith.constant 0 : index
    %c0_87 = arith.constant 0 : index
    %105 = vector.load %arg6[%c3_85, %c0_86, %c0_87] : memref<9x6x6xbf16, #tpu.memory_space<vmem>>, vector<1x6x6xbf16>
    %106 = vector.shape_cast %105 : vector<1x6x6xbf16> to vector<6x6xbf16>
    %cst_88 = arith.constant dense<0.000000e+00> : vector<64x6xf32>
    %107 = tpu.matmul %104, %106, %cst_88 {dimension_numbers = #tpu.dot_dimension_numbers<[1], [0], [0], [1], [0, 0, 1, 1], [], []>} : vector<64x6xbf16>, vector<6x6xbf16>, vector<64x6xf32> -> vector<64x6xf32>
    %108 = arith.addf %101, %107 : vector<64x6xf32>
    %109 = arith.index_cast %48 : i32 to index
    %c1_89 = arith.constant 1 : index
    %c1_90 = arith.constant 1 : index
    %c0_91 = arith.constant 0 : index
    %110 = vector.load %arg17[%109, %c1_89, %c1_90, %c0_91] : memref<2x10x10x6xbf16, #tpu.memory_space<vmem>>, vector<1x8x8x3xbf16>
    %111 = vector.shape_cast %110 : vector<1x8x8x3xbf16> to vector<64x3xbf16>
    %c4 = arith.constant 4 : index
    %c0_92 = arith.constant 0 : index
    %c0_93 = arith.constant 0 : index
    %112 = vector.load %arg5[%c4, %c0_92, %c0_93] : memref<9x3x6xbf16, #tpu.memory_space<vmem>>, vector<1x3x6xbf16>
    %113 = vector.shape_cast %112 : vector<1x3x6xbf16> to vector<3x6xbf16>
    %cst_94 = arith.constant dense<0.000000e+00> : vector<64x6xf32>
    %114 = tpu.matmul %111, %113, %cst_94 {dimension_numbers = #tpu.dot_dimension_numbers<[1], [0], [0], [1], [0, 0, 1, 1], [], []>} : vector<64x3xbf16>, vector<3x6xbf16>, vector<64x6xf32> -> vector<64x6xf32>
    %115 = arith.addf %108, %114 : vector<64x6xf32>
    %116 = arith.index_cast %47 : i32 to index
    %c1_95 = arith.constant 1 : index
    %c1_96 = arith.constant 1 : index
    %c0_97 = arith.constant 0 : index
    %117 = vector.load %arg17[%116, %c1_95, %c1_96, %c0_97] : memref<2x10x10x6xbf16, #tpu.memory_space<vmem>>, vector<1x8x8x6xbf16>
    %118 = vector.shape_cast %117 : vector<1x8x8x6xbf16> to vector<64x6xbf16>
    %c4_98 = arith.constant 4 : index
    %c0_99 = arith.constant 0 : index
    %c0_100 = arith.constant 0 : index
    %119 = vector.load %arg6[%c4_98, %c0_99, %c0_100] : memref<9x6x6xbf16, #tpu.memory_space<vmem>>, vector<1x6x6xbf16>
    %120 = vector.shape_cast %119 : vector<1x6x6xbf16> to vector<6x6xbf16>
    %cst_101 = arith.constant dense<0.000000e+00> : vector<64x6xf32>
    %121 = tpu.matmul %118, %120, %cst_101 {dimension_numbers = #tpu.dot_dimension_numbers<[1], [0], [0], [1], [0, 0, 1, 1], [], []>} : vector<64x6xbf16>, vector<6x6xbf16>, vector<64x6xf32> -> vector<64x6xf32>
    %122 = arith.addf %115, %121 : vector<64x6xf32>
    %123 = arith.index_cast %48 : i32 to index
    %c1_102 = arith.constant 1 : index
    %c2_103 = arith.constant 2 : index
    %c0_104 = arith.constant 0 : index
    %124 = vector.load %arg17[%123, %c1_102, %c2_103, %c0_104] : memref<2x10x10x6xbf16, #tpu.memory_space<vmem>>, vector<1x8x8x3xbf16>
    %125 = vector.shape_cast %124 : vector<1x8x8x3xbf16> to vector<64x3xbf16>
    %c5 = arith.constant 5 : index
    %c0_105 = arith.constant 0 : index
    %c0_106 = arith.constant 0 : index
    %126 = vector.load %arg5[%c5, %c0_105, %c0_106] : memref<9x3x6xbf16, #tpu.memory_space<vmem>>, vector<1x3x6xbf16>
    %127 = vector.shape_cast %126 : vector<1x3x6xbf16> to vector<3x6xbf16>
    %cst_107 = arith.constant dense<0.000000e+00> : vector<64x6xf32>
    %128 = tpu.matmul %125, %127, %cst_107 {dimension_numbers = #tpu.dot_dimension_numbers<[1], [0], [0], [1], [0, 0, 1, 1], [], []>} : vector<64x3xbf16>, vector<3x6xbf16>, vector<64x6xf32> -> vector<64x6xf32>
    %129 = arith.addf %122, %128 : vector<64x6xf32>
    %130 = arith.index_cast %47 : i32 to index
    %c1_108 = arith.constant 1 : index
    %c2_109 = arith.constant 2 : index
    %c0_110 = arith.constant 0 : index
    %131 = vector.load %arg17[%130, %c1_108, %c2_109, %c0_110] : memref<2x10x10x6xbf16, #tpu.memory_space<vmem>>, vector<1x8x8x6xbf16>
    %132 = vector.shape_cast %131 : vector<1x8x8x6xbf16> to vector<64x6xbf16>
    %c5_111 = arith.constant 5 : index
    %c0_112 = arith.constant 0 : index
    %c0_113 = arith.constant 0 : index
    %133 = vector.load %arg6[%c5_111, %c0_112, %c0_113] : memref<9x6x6xbf16, #tpu.memory_space<vmem>>, vector<1x6x6xbf16>
    %134 = vector.shape_cast %133 : vector<1x6x6xbf16> to vector<6x6xbf16>
    %cst_114 = arith.constant dense<0.000000e+00> : vector<64x6xf32>
    %135 = tpu.matmul %132, %134, %cst_114 {dimension_numbers = #tpu.dot_dimension_numbers<[1], [0], [0], [1], [0, 0, 1, 1], [], []>} : vector<64x6xbf16>, vector<6x6xbf16>, vector<64x6xf32> -> vector<64x6xf32>
    %136 = arith.addf %129, %135 : vector<64x6xf32>
    %137 = arith.index_cast %48 : i32 to index
    %c2_115 = arith.constant 2 : index
    %c0_116 = arith.constant 0 : index
    %c0_117 = arith.constant 0 : index
    %138 = vector.load %arg17[%137, %c2_115, %c0_116, %c0_117] : memref<2x10x10x6xbf16, #tpu.memory_space<vmem>>, vector<1x8x8x3xbf16>
    %139 = vector.shape_cast %138 : vector<1x8x8x3xbf16> to vector<64x3xbf16>
    %c6 = arith.constant 6 : index
    %c0_118 = arith.constant 0 : index
    %c0_119 = arith.constant 0 : index
    %140 = vector.load %arg5[%c6, %c0_118, %c0_119] : memref<9x3x6xbf16, #tpu.memory_space<vmem>>, vector<1x3x6xbf16>
    %141 = vector.shape_cast %140 : vector<1x3x6xbf16> to vector<3x6xbf16>
    %cst_120 = arith.constant dense<0.000000e+00> : vector<64x6xf32>
    %142 = tpu.matmul %139, %141, %cst_120 {dimension_numbers = #tpu.dot_dimension_numbers<[1], [0], [0], [1], [0, 0, 1, 1], [], []>} : vector<64x3xbf16>, vector<3x6xbf16>, vector<64x6xf32> -> vector<64x6xf32>
    %143 = arith.addf %136, %142 : vector<64x6xf32>
    %144 = arith.index_cast %47 : i32 to index
    %c2_121 = arith.constant 2 : index
    %c0_122 = arith.constant 0 : index
    %c0_123 = arith.constant 0 : index
    %145 = vector.load %arg17[%144, %c2_121, %c0_122, %c0_123] : memref<2x10x10x6xbf16, #tpu.memory_space<vmem>>, vector<1x8x8x6xbf16>
    %146 = vector.shape_cast %145 : vector<1x8x8x6xbf16> to vector<64x6xbf16>
    %c6_124 = arith.constant 6 : index
    %c0_125 = arith.constant 0 : index
    %c0_126 = arith.constant 0 : index
    %147 = vector.load %arg6[%c6_124, %c0_125, %c0_126] : memref<9x6x6xbf16, #tpu.memory_space<vmem>>, vector<1x6x6xbf16>
    %148 = vector.shape_cast %147 : vector<1x6x6xbf16> to vector<6x6xbf16>
    %cst_127 = arith.constant dense<0.000000e+00> : vector<64x6xf32>
    %149 = tpu.matmul %146, %148, %cst_127 {dimension_numbers = #tpu.dot_dimension_numbers<[1], [0], [0], [1], [0, 0, 1, 1], [], []>} : vector<64x6xbf16>, vector<6x6xbf16>, vector<64x6xf32> -> vector<64x6xf32>
    %150 = arith.addf %143, %149 : vector<64x6xf32>
    %151 = arith.index_cast %48 : i32 to index
    %c2_128 = arith.constant 2 : index
    %c1_129 = arith.constant 1 : index
    %c0_130 = arith.constant 0 : index
    %152 = vector.load %arg17[%151, %c2_128, %c1_129, %c0_130] : memref<2x10x10x6xbf16, #tpu.memory_space<vmem>>, vector<1x8x8x3xbf16>
    %153 = vector.shape_cast %152 : vector<1x8x8x3xbf16> to vector<64x3xbf16>
    %c7 = arith.constant 7 : index
    %c0_131 = arith.constant 0 : index
    %c0_132 = arith.constant 0 : index
    %154 = vector.load %arg5[%c7, %c0_131, %c0_132] : memref<9x3x6xbf16, #tpu.memory_space<vmem>>, vector<1x3x6xbf16>
    %155 = vector.shape_cast %154 : vector<1x3x6xbf16> to vector<3x6xbf16>
    %cst_133 = arith.constant dense<0.000000e+00> : vector<64x6xf32>
    %156 = tpu.matmul %153, %155, %cst_133 {dimension_numbers = #tpu.dot_dimension_numbers<[1], [0], [0], [1], [0, 0, 1, 1], [], []>} : vector<64x3xbf16>, vector<3x6xbf16>, vector<64x6xf32> -> vector<64x6xf32>
    %157 = arith.addf %150, %156 : vector<64x6xf32>
    %158 = arith.index_cast %47 : i32 to index
    %c2_134 = arith.constant 2 : index
    %c1_135 = arith.constant 1 : index
    %c0_136 = arith.constant 0 : index
    %159 = vector.load %arg17[%158, %c2_134, %c1_135, %c0_136] : memref<2x10x10x6xbf16, #tpu.memory_space<vmem>>, vector<1x8x8x6xbf16>
    %160 = vector.shape_cast %159 : vector<1x8x8x6xbf16> to vector<64x6xbf16>
    %c7_137 = arith.constant 7 : index
    %c0_138 = arith.constant 0 : index
    %c0_139 = arith.constant 0 : index
    %161 = vector.load %arg6[%c7_137, %c0_138, %c0_139] : memref<9x6x6xbf16, #tpu.memory_space<vmem>>, vector<1x6x6xbf16>
    %162 = vector.shape_cast %161 : vector<1x6x6xbf16> to vector<6x6xbf16>
    %cst_140 = arith.constant dense<0.000000e+00> : vector<64x6xf32>
    %163 = tpu.matmul %160, %162, %cst_140 {dimension_numbers = #tpu.dot_dimension_numbers<[1], [0], [0], [1], [0, 0, 1, 1], [], []>} : vector<64x6xbf16>, vector<6x6xbf16>, vector<64x6xf32> -> vector<64x6xf32>
    %164 = arith.addf %157, %163 : vector<64x6xf32>
    %165 = arith.index_cast %48 : i32 to index
    %c2_141 = arith.constant 2 : index
    %c2_142 = arith.constant 2 : index
    %c0_143 = arith.constant 0 : index
    %166 = vector.load %arg17[%165, %c2_141, %c2_142, %c0_143] : memref<2x10x10x6xbf16, #tpu.memory_space<vmem>>, vector<1x8x8x3xbf16>
    %167 = vector.shape_cast %166 : vector<1x8x8x3xbf16> to vector<64x3xbf16>
    %c8 = arith.constant 8 : index
    %c0_144 = arith.constant 0 : index
    %c0_145 = arith.constant 0 : index
    %168 = vector.load %arg5[%c8, %c0_144, %c0_145] : memref<9x3x6xbf16, #tpu.memory_space<vmem>>, vector<1x3x6xbf16>
    %169 = vector.shape_cast %168 : vector<1x3x6xbf16> to vector<3x6xbf16>
    %cst_146 = arith.constant dense<0.000000e+00> : vector<64x6xf32>
    %170 = tpu.matmul %167, %169, %cst_146 {dimension_numbers = #tpu.dot_dimension_numbers<[1], [0], [0], [1], [0, 0, 1, 1], [], []>} : vector<64x3xbf16>, vector<3x6xbf16>, vector<64x6xf32> -> vector<64x6xf32>
    %171 = arith.addf %164, %170 : vector<64x6xf32>
    %172 = arith.index_cast %47 : i32 to index
    %c2_147 = arith.constant 2 : index
    %c2_148 = arith.constant 2 : index
    %c0_149 = arith.constant 0 : index
    %173 = vector.load %arg17[%172, %c2_147, %c2_148, %c0_149] : memref<2x10x10x6xbf16, #tpu.memory_space<vmem>>, vector<1x8x8x6xbf16>
    %174 = vector.shape_cast %173 : vector<1x8x8x6xbf16> to vector<64x6xbf16>
    %c8_150 = arith.constant 8 : index
    %c0_151 = arith.constant 0 : index
    %c0_152 = arith.constant 0 : index
    %175 = vector.load %arg6[%c8_150, %c0_151, %c0_152] : memref<9x6x6xbf16, #tpu.memory_space<vmem>>, vector<1x6x6xbf16>
    %176 = vector.shape_cast %175 : vector<1x6x6xbf16> to vector<6x6xbf16>
    %cst_153 = arith.constant dense<0.000000e+00> : vector<64x6xf32>
    %177 = tpu.matmul %174, %176, %cst_153 {dimension_numbers = #tpu.dot_dimension_numbers<[1], [0], [0], [1], [0, 0, 1, 1], [], []>} : vector<64x6xbf16>, vector<6x6xbf16>, vector<64x6xf32> -> vector<64x6xf32>
    %178 = arith.addf %171, %177 : vector<64x6xf32>
    %c0_154 = arith.constant 0 : index
    %c0_155 = arith.constant 0 : index
    %179 = vector.load %arg7[%c0_154, %c0_155] : memref<1x6xf32, #tpu.memory_space<vmem>>, vector<1x6xf32>
    %180 = vector.broadcast %179 : vector<1x6xf32> to vector<64x6xf32>
    %181 = arith.addf %178, %180 : vector<64x6xf32>
    %cst_156 = arith.constant 0.000000e+00 : f32
    %182 = vector.broadcast %cst_156 : f32 to vector<64x6xf32>
    %183 = arith.maximumf %181, %182 : vector<64x6xf32>
    %184 = arith.truncf %183 : vector<64x6xf32> to vector<64x6xbf16>
    %c0_157 = arith.constant 0 : index
    %c0_158 = arith.constant 0 : index
    %185 = vector.load %arg8[%c0_157, %c0_158] : memref<6x8xbf16, #tpu.memory_space<vmem>>, vector<6x8xbf16>
    %cst_159 = arith.constant dense<0.000000e+00> : vector<64x8xf32>
    %186 = tpu.matmul %184, %185, %cst_159 {dimension_numbers = #tpu.dot_dimension_numbers<[1], [0], [0], [1], [0, 0, 1, 1], [], []>} : vector<64x6xbf16>, vector<6x8xbf16>, vector<64x8xf32> -> vector<64x8xf32>
    %187 = vector.extract_strided_slice %9 {offsets = [0, 6], sizes = [64, 3], strides = [1, 1]} : vector<64x9xf32> to vector<64x3xf32>
    %188 = arith.truncf %187 : vector<64x3xf32> to vector<64x3xbf16>
    %c0_160 = arith.constant 0 : index
    %c0_161 = arith.constant 0 : index
    %189 = vector.load %arg9[%c0_160, %c0_161] : memref<3x8xbf16, #tpu.memory_space<vmem>>, vector<3x8xbf16>
    %cst_162 = arith.constant dense<0.000000e+00> : vector<64x8xf32>
    %190 = tpu.matmul %188, %189, %cst_162 {dimension_numbers = #tpu.dot_dimension_numbers<[1], [0], [0], [1], [0, 0, 1, 1], [], []>} : vector<64x3xbf16>, vector<3x8xbf16>, vector<64x8xf32> -> vector<64x8xf32>
    %191 = arith.addf %186, %190 : vector<64x8xf32>
    %192 = vector.broadcast %34 : vector<1x8xf32> to vector<64x8xf32>
    %193 = arith.addf %191, %192 : vector<64x8xf32>
    %c0_163 = arith.constant 0 : index
    %c0_164 = arith.constant 0 : index
    %194 = vector.load %arg10[%c0_163, %c0_164] : memref<1x8xf32, #tpu.memory_space<vmem>>, vector<1x8xf32>
    %195 = vector.broadcast %194 : vector<1x8xf32> to vector<64x8xf32>
    %196 = arith.addf %193, %195 : vector<64x8xf32>
    %cst_165 = arith.constant 0.000000e+00 : f32
    %197 = vector.broadcast %cst_165 : f32 to vector<64x8xf32>
    %198 = arith.maximumf %196, %197 : vector<64x8xf32>
    %c0_166 = arith.constant 0 : index
    %c0_167 = arith.constant 0 : index
    %199 = vector.load %arg14[%c0_166, %c0_167] : memref<6x8xbf16, #tpu.memory_space<vmem>>, vector<6x8xbf16>
    %cst_168 = arith.constant dense<0.000000e+00> : vector<64x8xf32>
    %200 = tpu.matmul %2, %199, %cst_168 {dimension_numbers = #tpu.dot_dimension_numbers<[1], [0], [0], [1], [0, 0, 1, 1], [], []>} : vector<64x6xbf16>, vector<6x8xbf16>, vector<64x8xf32> -> vector<64x8xf32>
    %c0_169 = arith.constant 0 : index
    %c0_170 = arith.constant 0 : index
    %201 = vector.load %arg15[%c0_169, %c0_170] : memref<1x8xf32, #tpu.memory_space<vmem>>, vector<1x8xf32>
    %202 = vector.broadcast %201 : vector<1x8xf32> to vector<64x8xf32>
    %203 = arith.addf %200, %202 : vector<64x8xf32>
    %204 = arith.addf %198, %203 : vector<64x8xf32>
    %205 = vector.shape_cast %204 : vector<64x8xf32> to vector<8x8x8xf32>
    %206 = arith.truncf %205 : vector<8x8x8xf32> to vector<8x8x8xbf16>
    %c0_171 = arith.constant 0 : index
    %c0_172 = arith.constant 0 : index
    %c0_173 = arith.constant 0 : index
    %c0_174 = arith.constant 0 : index
    %c0_175 = arith.constant 0 : index
    %207 = vector.load %arg16[%c0_171, %c0_172, %c0_173, %c0_174, %c0_175] : memref<1x1x8x8x8xbf16, #tpu.memory_space<vmem>>, vector<1x1x8x8x8xbf16>
    %208 = vector.shape_cast %207 : vector<1x1x8x8x8xbf16> to vector<8x8x8xbf16>
    %209 = vector.shape_cast %206 : vector<8x8x8xbf16> to vector<1x1x8x8x8xbf16>
    tpu.vector_store %arg16[%c0_171, %c0_172, %c0_173, %c0_174, %c0_175], %209 {strides = array<i32>} : memref<1x1x8x8x8xbf16, #tpu.memory_space<vmem>>, vector<1x1x8x8x8xbf16>,
    return
  }
  func.func @transform_0(%arg0: i32, %arg1: i32) -> (i32, i32, i32, i32, i32) {
    %c0_i32 = arith.constant 0 : i32
    %c0_i32_0 = arith.constant 0 : i32
    %c0_i32_1 = arith.constant 0 : i32
    %c0_i32_2 = arith.constant 0 : i32
    return %arg0, %arg1, %c0_i32, %c0_i32_0, %c0_i32_1 : i32, i32, i32, i32, i32
  }
  func.func @transform_1(%arg0: i32, %arg1: i32) -> (i32, i32) {
    %c0_i32 = arith.constant 0 : i32
    %c0_i32_0 = arith.constant 0 : i32
    %c0_i32_1 = arith.constant 0 : i32
    return %c0_i32, %c0_i32_0 : i32, i32
  }
  func.func @transform_2(%arg0: i32, %arg1: i32) -> (i32, i32) {
    %c0_i32 = arith.constant 0 : i32
    %c0_i32_0 = arith.constant 0 : i32
    %c0_i32_1 = arith.constant 0 : i32
    return %c0_i32, %c0_i32_0 : i32, i32
  }
  func.func @transform_3(%arg0: i32, %arg1: i32) -> (i32, i32, i32) {
    %c0_i32 = arith.constant 0 : i32
    %c0_i32_0 = arith.constant 0 : i32
    %c0_i32_1 = arith.constant 0 : i32
    %c0_i32_2 = arith.constant 0 : i32
    return %c0_i32, %c0_i32_0, %c0_i32_1 : i32, i32, i32
  }
  func.func @transform_4(%arg0: i32, %arg1: i32) -> (i32, i32, i32) {
    %c0_i32 = arith.constant 0 : i32
    %c0_i32_0 = arith.constant 0 : i32
    %c0_i32_1 = arith.constant 0 : i32
    %c0_i32_2 = arith.constant 0 : i32
    return %c0_i32, %c0_i32_0, %c0_i32_1 : i32, i32, i32
  }
  func.func @transform_5(%arg0: i32, %arg1: i32) -> (i32, i32) {
    %c0_i32 = arith.constant 0 : i32
    %c0_i32_0 = arith.constant 0 : i32
    %c0_i32_1 = arith.constant 0 : i32
    return %c0_i32, %c0_i32_0 : i32, i32
  }
  func.func @transform_6(%arg0: i32, %arg1: i32) -> (i32, i32) {
    %c0_i32 = arith.constant 0 : i32
    %c0_i32_0 = arith.constant 0 : i32
    %c0_i32_1 = arith.constant 0 : i32
    return %c0_i32, %c0_i32_0 : i32, i32
  }
  func.func @transform_7(%arg0: i32, %arg1: i32) -> (i32, i32) {
    %c0_i32 = arith.constant 0 : i32
    %c0_i32_0 = arith.constant 0 : i32
    %c0_i32_1 = arith.constant 0 : i32
    return %c0_i32, %c0_i32_0 : i32, i32
  }
  func.func @transform_8(%arg0: i32, %arg1: i32) -> (i32, i32) {
    %c0_i32 = arith.constant 0 : i32
    %c0_i32_0 = arith.constant 0 : i32
    %c0_i32_1 = arith.constant 0 : i32
    return %c0_i32, %c0_i32_0 : i32, i32
  }
  func.func @transform_9(%arg0: i32, %arg1: i32) -> (i32, i32) {
    %c0_i32 = arith.constant 0 : i32
    %c0_i32_0 = arith.constant 0 : i32
    %c0_i32_1 = arith.constant 0 : i32
    return %c0_i32, %c0_i32_0 : i32, i32
  }
  func.func @transform_10(%arg0: i32, %arg1: i32) -> (i32, i32) {
    %c0_i32 = arith.constant 0 : i32
    %c0_i32_0 = arith.constant 0 : i32
    %c0_i32_1 = arith.constant 0 : i32
    return %c0_i32, %c0_i32_0 : i32, i32
  }
  func.func @transform_11(%arg0: i32, %arg1: i32) -> (i32, i32) {
    %c0_i32 = arith.constant 0 : i32
    %c0_i32_0 = arith.constant 0 : i32
    %c0_i32_1 = arith.constant 0 : i32
    return %c0_i32, %c0_i32_0 : i32, i32
  }
  func.func @transform_12(%arg0: i32, %arg1: i32) -> (i32, i32) {
    %c0_i32 = arith.constant 0 : i32
    %c0_i32_0 = arith.constant 0 : i32
    %c0_i32_1 = arith.constant 0 : i32
    return %c0_i32, %c0_i32_0 : i32, i32
  }
  func.func @transform_13(%arg0: i32, %arg1: i32) -> (i32, i32) {
    %c0_i32 = arith.constant 0 : i32
    %c0_i32_0 = arith.constant 0 : i32
    %c0_i32_1 = arith.constant 0 : i32
    return %c0_i32, %c0_i32_0 : i32, i32
  }
  func.func @transform_14(%arg0: i32, %arg1: i32) -> (i32, i32, i32, i32, i32) {
    %c0_i32 = arith.constant 0 : i32
    %c0_i32_0 = arith.constant 0 : i32
    %c0_i32_1 = arith.constant 0 : i32
    %c0_i32_2 = arith.constant 0 : i32
    return %arg0, %arg1, %c0_i32, %c0_i32_0, %c0_i32_1 : i32, i32, i32, i32, i32
  }
}

module attributes {stable_mosaic.version = 11 : i64} {
  func.func @kernel(%arg0: i32, %arg1: i32, %arg2: memref<1x1x8x8x8xbf16, #tpu.memory_space<vmem>>, %arg3: memref<8x12xbf16, #tpu.memory_space<vmem>>, %arg4: memref<1x12xf32, #tpu.memory_space<vmem>>, %arg5: memref<9x4x8xbf16, #tpu.memory_space<vmem>>, %arg6: memref<9x8x8xbf16, #tpu.memory_space<vmem>>, %arg7: memref<1x8xf32, #tpu.memory_space<vmem>>, %arg8: memref<8x8xbf16, #tpu.memory_space<vmem>>, %arg9: memref<4x8xbf16, #tpu.memory_space<vmem>>, %arg10: memref<1x8xf32, #tpu.memory_space<vmem>>, %arg11: memref<8x2xf32, #tpu.memory_space<vmem>>, %arg12: memref<1x2xf32, #tpu.memory_space<vmem>>, %arg13: memref<2x8xf32, #tpu.memory_space<vmem>>, %arg14: memref<1x1x8x8x8xbf16, #tpu.memory_space<vmem>>, %arg15: memref<2x10x10x8xbf16, #tpu.memory_space<vmem>>, %arg16: memref<1x8xf32, #tpu.memory_space<vmem>>) attributes {dimension_semantics = [#tpu.dimension_semantics<parallel>, #tpu.dimension_semantics<arbitrary>], iteration_bounds = array<i64: 2, 5>, scalar_prefetch = 0 : i64, scratch_operands = 2 : i64, tpu.core_type = #tpu.core_type<tc>, window_params = [{transform_indices = @transform_0, window_bounds = array<i64: 1, 1, 8, 8, 8>}, {pipeline_mode = #tpu.pipeline_mode<synchronous>, transform_indices = @transform_1, window_bounds = array<i64: 8, 12>}, {pipeline_mode = #tpu.pipeline_mode<synchronous>, transform_indices = @transform_2, window_bounds = array<i64: 1, 12>}, {pipeline_mode = #tpu.pipeline_mode<synchronous>, transform_indices = @transform_3, window_bounds = array<i64: 9, 4, 8>}, {pipeline_mode = #tpu.pipeline_mode<synchronous>, transform_indices = @transform_4, window_bounds = array<i64: 9, 8, 8>}, {pipeline_mode = #tpu.pipeline_mode<synchronous>, transform_indices = @transform_5, window_bounds = array<i64: 1, 8>}, {pipeline_mode = #tpu.pipeline_mode<synchronous>, transform_indices = @transform_6, window_bounds = array<i64: 8, 8>}, {pipeline_mode = #tpu.pipeline_mode<synchronous>, transform_indices = @transform_7, window_bounds = array<i64: 4, 8>}, {pipeline_mode = #tpu.pipeline_mode<synchronous>, transform_indices = @transform_8, window_bounds = array<i64: 1, 8>}, {pipeline_mode = #tpu.pipeline_mode<synchronous>, transform_indices = @transform_9, window_bounds = array<i64: 8, 2>}, {pipeline_mode = #tpu.pipeline_mode<synchronous>, transform_indices = @transform_10, window_bounds = array<i64: 1, 2>}, {pipeline_mode = #tpu.pipeline_mode<synchronous>, transform_indices = @transform_11, window_bounds = array<i64: 2, 8>}, {transform_indices = @transform_12, window_bounds = array<i64: 1, 1, 8, 8, 8>}]} {
    %c0 = arith.constant 0 : index
    %c0_0 = arith.constant 0 : index
    %c0_1 = arith.constant 0 : index
    %c0_2 = arith.constant 0 : index
    %c0_3 = arith.constant 0 : index
    %0 = vector.load %arg2[%c0, %c0_0, %c0_1, %c0_2, %c0_3] : memref<1x1x8x8x8xbf16, #tpu.memory_space<vmem>>, vector<1x1x8x8x8xbf16>
    %1 = vector.shape_cast %0 : vector<1x1x8x8x8xbf16> to vector<8x8x8xbf16>
    %2 = vector.shape_cast %1 : vector<8x8x8xbf16> to vector<64x8xbf16>
    %c0_4 = arith.constant 0 : index
    %c0_5 = arith.constant 0 : index
    %3 = vector.load %arg3[%c0_4, %c0_5] : memref<8x12xbf16, #tpu.memory_space<vmem>>, vector<8x12xbf16>
    %cst = arith.constant dense<0.000000e+00> : vector<64x12xf32>
    %4 = tpu.matmul %2, %3, %cst {dimension_numbers = #tpu.dot_dimension_numbers<[1], [0], [0], [1], [0, 0, 1, 1], [], []>} : vector<64x8xbf16>, vector<8x12xbf16>, vector<64x12xf32> -> vector<64x12xf32>
    %c0_6 = arith.constant 0 : index
    %c0_7 = arith.constant 0 : index
    %5 = vector.load %arg4[%c0_6, %c0_7] : memref<1x12xf32, #tpu.memory_space<vmem>>, vector<1x12xf32>
    %6 = vector.broadcast %5 : vector<1x12xf32> to vector<64x12xf32>
    %7 = arith.addf %4, %6 : vector<64x12xf32>
    %cst_8 = arith.constant 0.000000e+00 : f32
    %8 = vector.broadcast %cst_8 : f32 to vector<64x12xf32>
    %9 = arith.maximumf %7, %8 : vector<64x12xf32>
    %10 = arith.extf %2 : vector<64x8xbf16> to vector<64x8xf32>
    %cst_9 = arith.constant dense<0.000000e+00> : vector<8xf32>
    %11 = vector.multi_reduction <add>, %10, %cst_9 [0] : vector<64x8xf32> to vector<8xf32>
    %12 = vector.shape_cast %11 : vector<8xf32> to vector<1x8xf32>
    %cst_10 = arith.constant 1.562500e-02 : f32
    %13 = vector.broadcast %cst_10 : f32 to vector<1x8xf32>
    %14 = arith.mulf %12, %13 : vector<1x8xf32>
    %c0_i32 = arith.constant 0 : i32
    %15 = arith.cmpi eq, %arg1, %c0_i32 : i32
    %16 = arith.extui %15 : i1 to i32
    %c0_i32_11 = arith.constant 0 : i32
    %17 = arith.cmpi ne, %16, %c0_i32_11 : i32
    scf.if %17 {
      %c0_171 = arith.constant 0 : index
      %c0_172 = arith.constant 0 : index
      %206 = vector.load %arg16[%c0_171, %c0_172] : memref<1x8xf32, #tpu.memory_space<vmem>>, vector<1x8xf32>
      tpu.vector_store %arg16[%c0_171, %c0_172], %14 {strides = array<i32>} : memref<1x8xf32, #tpu.memory_space<vmem>>, vector<1x8xf32>,
    } else {
    }
    %c0_12 = arith.constant 0 : index
    %c0_13 = arith.constant 0 : index
    %18 = vector.load %arg16[%c0_12, %c0_13] : memref<1x8xf32, #tpu.memory_space<vmem>>, vector<1x8xf32>
    %19 = arith.addf %18, %14 : vector<1x8xf32>
    %cst_14 = arith.constant 5.000000e-01 : f32
    %20 = vector.broadcast %cst_14 : f32 to vector<1x8xf32>
    %21 = arith.mulf %20, %19 : vector<1x8xf32>
    %c0_15 = arith.constant 0 : index
    %c0_16 = arith.constant 0 : index
    %22 = vector.load %arg16[%c0_15, %c0_16] : memref<1x8xf32, #tpu.memory_space<vmem>>, vector<1x8xf32>
    tpu.vector_store %arg16[%c0_15, %c0_16], %14 {strides = array<i32>} : memref<1x8xf32, #tpu.memory_space<vmem>>, vector<1x8xf32>,
    %23 = vector.shape_cast %21 : vector<1x8xf32> to vector<1x8xf32>
    %24 = vector.broadcast %23 : vector<1x8xf32> to vector<8x8xf32>
    %c0_17 = arith.constant 0 : index
    %c0_18 = arith.constant 0 : index
    %25 = vector.load %arg11[%c0_17, %c0_18] : memref<8x2xf32, #tpu.memory_space<vmem>>, vector<8x2xf32>
    %cst_19 = arith.constant dense<0.000000e+00> : vector<8x2xf32>
    %26 = tpu.matmul %24, %25, %cst_19 {dimension_numbers = #tpu.dot_dimension_numbers<[1], [0], [0], [1], [0, 0, 1, 1], [], []>} : vector<8x8xf32>, vector<8x2xf32>, vector<8x2xf32> -> vector<8x2xf32>
    %c0_20 = arith.constant 0 : index
    %c0_21 = arith.constant 0 : index
    %27 = vector.load %arg12[%c0_20, %c0_21] : memref<1x2xf32, #tpu.memory_space<vmem>>, vector<1x2xf32>
    %28 = vector.broadcast %27 : vector<1x2xf32> to vector<8x2xf32>
    %29 = arith.addf %26, %28 : vector<8x2xf32>
    %cst_22 = arith.constant 0.000000e+00 : f32
    %30 = vector.broadcast %cst_22 : f32 to vector<8x2xf32>
    %31 = arith.maximumf %29, %30 : vector<8x2xf32>
    %c0_23 = arith.constant 0 : index
    %c0_24 = arith.constant 0 : index
    %32 = vector.load %arg13[%c0_23, %c0_24] : memref<2x8xf32, #tpu.memory_space<vmem>>, vector<2x8xf32>
    %cst_25 = arith.constant dense<0.000000e+00> : vector<8x8xf32>
    %33 = tpu.matmul %31, %32, %cst_25 {dimension_numbers = #tpu.dot_dimension_numbers<[1], [0], [0], [1], [0, 0, 1, 1], [], []>} : vector<8x2xf32>, vector<2x8xf32>, vector<8x8xf32> -> vector<8x8xf32>
    %34 = vector.extract_strided_slice %33 {offsets = [0, 0], sizes = [1, 8], strides = [1, 1]} : vector<8x8xf32> to vector<1x8xf32>
    %c0_i32_26 = arith.constant 0 : i32
    %35 = arith.cmpi eq, %arg1, %c0_i32_26 : i32
    %36 = arith.extui %35 : i1 to i32
    %c0_i32_27 = arith.constant 0 : i32
    %37 = arith.cmpi ne, %36, %c0_i32_27 : i32
    scf.if %37 {
      %cst_171 = arith.constant 0.000000e+00 : bf16
      %206 = vector.broadcast %cst_171 : bf16 to vector<2x10x10x8xbf16>
      %c0_172 = arith.constant 0 : index
      %c0_173 = arith.constant 0 : index
      %c0_174 = arith.constant 0 : index
      %c0_175 = arith.constant 0 : index
      %207 = vector.load %arg15[%c0_172, %c0_173, %c0_174, %c0_175] : memref<2x10x10x8xbf16, #tpu.memory_space<vmem>>, vector<2x10x10x8xbf16>
      tpu.vector_store %arg15[%c0_172, %c0_173, %c0_174, %c0_175], %206 {strides = array<i32>} : memref<2x10x10x8xbf16, #tpu.memory_space<vmem>>, vector<2x10x10x8xbf16>,
    } else {
    }
    %c2_i32 = arith.constant 2 : i32
    %c0_i32_28 = arith.constant 0 : i32
    %38 = arith.cmpi eq, %c2_i32, %c0_i32_28 : i32
    %c1_i32 = arith.constant 1 : i32
    %39 = arith.select %38, %c1_i32, %c2_i32 : i32
    %40 = arith.remsi %arg1, %39 : i32
    %c0_i32_29 = arith.constant 0 : i32
    %41 = arith.cmpi ne, %40, %c0_i32_29 : i32
    %c0_i32_30 = arith.constant 0 : i32
    %42 = arith.cmpi slt, %40, %c0_i32_30 : i32
    %c0_i32_31 = arith.constant 0 : i32
    %43 = arith.cmpi slt, %39, %c0_i32_31 : i32
    %44 = arith.xori %42, %43 : i1
    %45 = arith.andi %44, %41 : i1
    %46 = arith.addi %40, %39 : i32
    %47 = arith.select %45, %46, %40 : i32
    %c1_i32_32 = arith.constant 1 : i32
    %48 = arith.subi %c1_i32_32, %47 : i32
    %49 = vector.extract_strided_slice %9 {offsets = [0, 0], sizes = [64, 8], strides = [1, 1]} : vector<64x12xf32> to vector<64x8xf32>
    %50 = arith.truncf %49 : vector<64x8xf32> to vector<64x8xbf16>
    %51 = vector.shape_cast %50 : vector<64x8xbf16> to vector<1x8x8x8xbf16>
    %52 = arith.index_cast %47 : i32 to index
    %c1 = arith.constant 1 : index
    %c1_33 = arith.constant 1 : index
    %c0_34 = arith.constant 0 : index
    %53 = vector.load %arg15[%52, %c1, %c1_33, %c0_34] : memref<2x10x10x8xbf16, #tpu.memory_space<vmem>>, vector<1x8x8x8xbf16>
    tpu.vector_store %arg15[%52, %c1, %c1_33, %c0_34], %51 {strides = array<i32>} : memref<2x10x10x8xbf16, #tpu.memory_space<vmem>>, vector<1x8x8x8xbf16>,
    %54 = arith.index_cast %48 : i32 to index
    %c0_35 = arith.constant 0 : index
    %c0_36 = arith.constant 0 : index
    %c0_37 = arith.constant 0 : index
    %55 = vector.load %arg15[%54, %c0_35, %c0_36, %c0_37] : memref<2x10x10x8xbf16, #tpu.memory_space<vmem>>, vector<1x8x8x4xbf16>
    %56 = vector.shape_cast %55 : vector<1x8x8x4xbf16> to vector<64x4xbf16>
    %c0_38 = arith.constant 0 : index
    %c0_39 = arith.constant 0 : index
    %c0_40 = arith.constant 0 : index
    %57 = vector.load %arg5[%c0_38, %c0_39, %c0_40] : memref<9x4x8xbf16, #tpu.memory_space<vmem>>, vector<1x4x8xbf16>
    %58 = vector.shape_cast %57 : vector<1x4x8xbf16> to vector<4x8xbf16>
    %cst_41 = arith.constant dense<0.000000e+00> : vector<64x8xf32>
    %59 = tpu.matmul %56, %58, %cst_41 {dimension_numbers = #tpu.dot_dimension_numbers<[1], [0], [0], [1], [0, 0, 1, 1], [], []>} : vector<64x4xbf16>, vector<4x8xbf16>, vector<64x8xf32> -> vector<64x8xf32>
    %60 = arith.index_cast %47 : i32 to index
    %c0_42 = arith.constant 0 : index
    %c0_43 = arith.constant 0 : index
    %c0_44 = arith.constant 0 : index
    %61 = vector.load %arg15[%60, %c0_42, %c0_43, %c0_44] : memref<2x10x10x8xbf16, #tpu.memory_space<vmem>>, vector<1x8x8x8xbf16>
    %62 = vector.shape_cast %61 : vector<1x8x8x8xbf16> to vector<64x8xbf16>
    %c0_45 = arith.constant 0 : index
    %c0_46 = arith.constant 0 : index
    %c0_47 = arith.constant 0 : index
    %63 = vector.load %arg6[%c0_45, %c0_46, %c0_47] : memref<9x8x8xbf16, #tpu.memory_space<vmem>>, vector<1x8x8xbf16>
    %64 = vector.shape_cast %63 : vector<1x8x8xbf16> to vector<8x8xbf16>
    %cst_48 = arith.constant dense<0.000000e+00> : vector<64x8xf32>
    %65 = tpu.matmul %62, %64, %cst_48 {dimension_numbers = #tpu.dot_dimension_numbers<[1], [0], [0], [1], [0, 0, 1, 1], [], []>} : vector<64x8xbf16>, vector<8x8xbf16>, vector<64x8xf32> -> vector<64x8xf32>
    %66 = arith.addf %59, %65 : vector<64x8xf32>
    %67 = arith.index_cast %48 : i32 to index
    %c0_49 = arith.constant 0 : index
    %c1_50 = arith.constant 1 : index
    %c0_51 = arith.constant 0 : index
    %68 = vector.load %arg15[%67, %c0_49, %c1_50, %c0_51] : memref<2x10x10x8xbf16, #tpu.memory_space<vmem>>, vector<1x8x8x4xbf16>
    %69 = vector.shape_cast %68 : vector<1x8x8x4xbf16> to vector<64x4xbf16>
    %c1_52 = arith.constant 1 : index
    %c0_53 = arith.constant 0 : index
    %c0_54 = arith.constant 0 : index
    %70 = vector.load %arg5[%c1_52, %c0_53, %c0_54] : memref<9x4x8xbf16, #tpu.memory_space<vmem>>, vector<1x4x8xbf16>
    %71 = vector.shape_cast %70 : vector<1x4x8xbf16> to vector<4x8xbf16>
    %cst_55 = arith.constant dense<0.000000e+00> : vector<64x8xf32>
    %72 = tpu.matmul %69, %71, %cst_55 {dimension_numbers = #tpu.dot_dimension_numbers<[1], [0], [0], [1], [0, 0, 1, 1], [], []>} : vector<64x4xbf16>, vector<4x8xbf16>, vector<64x8xf32> -> vector<64x8xf32>
    %73 = arith.addf %66, %72 : vector<64x8xf32>
    %74 = arith.index_cast %47 : i32 to index
    %c0_56 = arith.constant 0 : index
    %c1_57 = arith.constant 1 : index
    %c0_58 = arith.constant 0 : index
    %75 = vector.load %arg15[%74, %c0_56, %c1_57, %c0_58] : memref<2x10x10x8xbf16, #tpu.memory_space<vmem>>, vector<1x8x8x8xbf16>
    %76 = vector.shape_cast %75 : vector<1x8x8x8xbf16> to vector<64x8xbf16>
    %c1_59 = arith.constant 1 : index
    %c0_60 = arith.constant 0 : index
    %c0_61 = arith.constant 0 : index
    %77 = vector.load %arg6[%c1_59, %c0_60, %c0_61] : memref<9x8x8xbf16, #tpu.memory_space<vmem>>, vector<1x8x8xbf16>
    %78 = vector.shape_cast %77 : vector<1x8x8xbf16> to vector<8x8xbf16>
    %cst_62 = arith.constant dense<0.000000e+00> : vector<64x8xf32>
    %79 = tpu.matmul %76, %78, %cst_62 {dimension_numbers = #tpu.dot_dimension_numbers<[1], [0], [0], [1], [0, 0, 1, 1], [], []>} : vector<64x8xbf16>, vector<8x8xbf16>, vector<64x8xf32> -> vector<64x8xf32>
    %80 = arith.addf %73, %79 : vector<64x8xf32>
    %81 = arith.index_cast %48 : i32 to index
    %c0_63 = arith.constant 0 : index
    %c2 = arith.constant 2 : index
    %c0_64 = arith.constant 0 : index
    %82 = vector.load %arg15[%81, %c0_63, %c2, %c0_64] : memref<2x10x10x8xbf16, #tpu.memory_space<vmem>>, vector<1x8x8x4xbf16>
    %83 = vector.shape_cast %82 : vector<1x8x8x4xbf16> to vector<64x4xbf16>
    %c2_65 = arith.constant 2 : index
    %c0_66 = arith.constant 0 : index
    %c0_67 = arith.constant 0 : index
    %84 = vector.load %arg5[%c2_65, %c0_66, %c0_67] : memref<9x4x8xbf16, #tpu.memory_space<vmem>>, vector<1x4x8xbf16>
    %85 = vector.shape_cast %84 : vector<1x4x8xbf16> to vector<4x8xbf16>
    %cst_68 = arith.constant dense<0.000000e+00> : vector<64x8xf32>
    %86 = tpu.matmul %83, %85, %cst_68 {dimension_numbers = #tpu.dot_dimension_numbers<[1], [0], [0], [1], [0, 0, 1, 1], [], []>} : vector<64x4xbf16>, vector<4x8xbf16>, vector<64x8xf32> -> vector<64x8xf32>
    %87 = arith.addf %80, %86 : vector<64x8xf32>
    %88 = arith.index_cast %47 : i32 to index
    %c0_69 = arith.constant 0 : index
    %c2_70 = arith.constant 2 : index
    %c0_71 = arith.constant 0 : index
    %89 = vector.load %arg15[%88, %c0_69, %c2_70, %c0_71] : memref<2x10x10x8xbf16, #tpu.memory_space<vmem>>, vector<1x8x8x8xbf16>
    %90 = vector.shape_cast %89 : vector<1x8x8x8xbf16> to vector<64x8xbf16>
    %c2_72 = arith.constant 2 : index
    %c0_73 = arith.constant 0 : index
    %c0_74 = arith.constant 0 : index
    %91 = vector.load %arg6[%c2_72, %c0_73, %c0_74] : memref<9x8x8xbf16, #tpu.memory_space<vmem>>, vector<1x8x8xbf16>
    %92 = vector.shape_cast %91 : vector<1x8x8xbf16> to vector<8x8xbf16>
    %cst_75 = arith.constant dense<0.000000e+00> : vector<64x8xf32>
    %93 = tpu.matmul %90, %92, %cst_75 {dimension_numbers = #tpu.dot_dimension_numbers<[1], [0], [0], [1], [0, 0, 1, 1], [], []>} : vector<64x8xbf16>, vector<8x8xbf16>, vector<64x8xf32> -> vector<64x8xf32>
    %94 = arith.addf %87, %93 : vector<64x8xf32>
    %95 = arith.index_cast %48 : i32 to index
    %c1_76 = arith.constant 1 : index
    %c0_77 = arith.constant 0 : index
    %c0_78 = arith.constant 0 : index
    %96 = vector.load %arg15[%95, %c1_76, %c0_77, %c0_78] : memref<2x10x10x8xbf16, #tpu.memory_space<vmem>>, vector<1x8x8x4xbf16>
    %97 = vector.shape_cast %96 : vector<1x8x8x4xbf16> to vector<64x4xbf16>
    %c3 = arith.constant 3 : index
    %c0_79 = arith.constant 0 : index
    %c0_80 = arith.constant 0 : index
    %98 = vector.load %arg5[%c3, %c0_79, %c0_80] : memref<9x4x8xbf16, #tpu.memory_space<vmem>>, vector<1x4x8xbf16>
    %99 = vector.shape_cast %98 : vector<1x4x8xbf16> to vector<4x8xbf16>
    %cst_81 = arith.constant dense<0.000000e+00> : vector<64x8xf32>
    %100 = tpu.matmul %97, %99, %cst_81 {dimension_numbers = #tpu.dot_dimension_numbers<[1], [0], [0], [1], [0, 0, 1, 1], [], []>} : vector<64x4xbf16>, vector<4x8xbf16>, vector<64x8xf32> -> vector<64x8xf32>
    %101 = arith.addf %94, %100 : vector<64x8xf32>
    %102 = arith.index_cast %47 : i32 to index
    %c1_82 = arith.constant 1 : index
    %c0_83 = arith.constant 0 : index
    %c0_84 = arith.constant 0 : index
    %103 = vector.load %arg15[%102, %c1_82, %c0_83, %c0_84] : memref<2x10x10x8xbf16, #tpu.memory_space<vmem>>, vector<1x8x8x8xbf16>
    %104 = vector.shape_cast %103 : vector<1x8x8x8xbf16> to vector<64x8xbf16>
    %c3_85 = arith.constant 3 : index
    %c0_86 = arith.constant 0 : index
    %c0_87 = arith.constant 0 : index
    %105 = vector.load %arg6[%c3_85, %c0_86, %c0_87] : memref<9x8x8xbf16, #tpu.memory_space<vmem>>, vector<1x8x8xbf16>
    %106 = vector.shape_cast %105 : vector<1x8x8xbf16> to vector<8x8xbf16>
    %cst_88 = arith.constant dense<0.000000e+00> : vector<64x8xf32>
    %107 = tpu.matmul %104, %106, %cst_88 {dimension_numbers = #tpu.dot_dimension_numbers<[1], [0], [0], [1], [0, 0, 1, 1], [], []>} : vector<64x8xbf16>, vector<8x8xbf16>, vector<64x8xf32> -> vector<64x8xf32>
    %108 = arith.addf %101, %107 : vector<64x8xf32>
    %109 = arith.index_cast %48 : i32 to index
    %c1_89 = arith.constant 1 : index
    %c1_90 = arith.constant 1 : index
    %c0_91 = arith.constant 0 : index
    %110 = vector.load %arg15[%109, %c1_89, %c1_90, %c0_91] : memref<2x10x10x8xbf16, #tpu.memory_space<vmem>>, vector<1x8x8x4xbf16>
    %111 = vector.shape_cast %110 : vector<1x8x8x4xbf16> to vector<64x4xbf16>
    %c4 = arith.constant 4 : index
    %c0_92 = arith.constant 0 : index
    %c0_93 = arith.constant 0 : index
    %112 = vector.load %arg5[%c4, %c0_92, %c0_93] : memref<9x4x8xbf16, #tpu.memory_space<vmem>>, vector<1x4x8xbf16>
    %113 = vector.shape_cast %112 : vector<1x4x8xbf16> to vector<4x8xbf16>
    %cst_94 = arith.constant dense<0.000000e+00> : vector<64x8xf32>
    %114 = tpu.matmul %111, %113, %cst_94 {dimension_numbers = #tpu.dot_dimension_numbers<[1], [0], [0], [1], [0, 0, 1, 1], [], []>} : vector<64x4xbf16>, vector<4x8xbf16>, vector<64x8xf32> -> vector<64x8xf32>
    %115 = arith.addf %108, %114 : vector<64x8xf32>
    %116 = arith.index_cast %47 : i32 to index
    %c1_95 = arith.constant 1 : index
    %c1_96 = arith.constant 1 : index
    %c0_97 = arith.constant 0 : index
    %117 = vector.load %arg15[%116, %c1_95, %c1_96, %c0_97] : memref<2x10x10x8xbf16, #tpu.memory_space<vmem>>, vector<1x8x8x8xbf16>
    %118 = vector.shape_cast %117 : vector<1x8x8x8xbf16> to vector<64x8xbf16>
    %c4_98 = arith.constant 4 : index
    %c0_99 = arith.constant 0 : index
    %c0_100 = arith.constant 0 : index
    %119 = vector.load %arg6[%c4_98, %c0_99, %c0_100] : memref<9x8x8xbf16, #tpu.memory_space<vmem>>, vector<1x8x8xbf16>
    %120 = vector.shape_cast %119 : vector<1x8x8xbf16> to vector<8x8xbf16>
    %cst_101 = arith.constant dense<0.000000e+00> : vector<64x8xf32>
    %121 = tpu.matmul %118, %120, %cst_101 {dimension_numbers = #tpu.dot_dimension_numbers<[1], [0], [0], [1], [0, 0, 1, 1], [], []>} : vector<64x8xbf16>, vector<8x8xbf16>, vector<64x8xf32> -> vector<64x8xf32>
    %122 = arith.addf %115, %121 : vector<64x8xf32>
    %123 = arith.index_cast %48 : i32 to index
    %c1_102 = arith.constant 1 : index
    %c2_103 = arith.constant 2 : index
    %c0_104 = arith.constant 0 : index
    %124 = vector.load %arg15[%123, %c1_102, %c2_103, %c0_104] : memref<2x10x10x8xbf16, #tpu.memory_space<vmem>>, vector<1x8x8x4xbf16>
    %125 = vector.shape_cast %124 : vector<1x8x8x4xbf16> to vector<64x4xbf16>
    %c5 = arith.constant 5 : index
    %c0_105 = arith.constant 0 : index
    %c0_106 = arith.constant 0 : index
    %126 = vector.load %arg5[%c5, %c0_105, %c0_106] : memref<9x4x8xbf16, #tpu.memory_space<vmem>>, vector<1x4x8xbf16>
    %127 = vector.shape_cast %126 : vector<1x4x8xbf16> to vector<4x8xbf16>
    %cst_107 = arith.constant dense<0.000000e+00> : vector<64x8xf32>
    %128 = tpu.matmul %125, %127, %cst_107 {dimension_numbers = #tpu.dot_dimension_numbers<[1], [0], [0], [1], [0, 0, 1, 1], [], []>} : vector<64x4xbf16>, vector<4x8xbf16>, vector<64x8xf32> -> vector<64x8xf32>
    %129 = arith.addf %122, %128 : vector<64x8xf32>
    %130 = arith.index_cast %47 : i32 to index
    %c1_108 = arith.constant 1 : index
    %c2_109 = arith.constant 2 : index
    %c0_110 = arith.constant 0 : index
    %131 = vector.load %arg15[%130, %c1_108, %c2_109, %c0_110] : memref<2x10x10x8xbf16, #tpu.memory_space<vmem>>, vector<1x8x8x8xbf16>
    %132 = vector.shape_cast %131 : vector<1x8x8x8xbf16> to vector<64x8xbf16>
    %c5_111 = arith.constant 5 : index
    %c0_112 = arith.constant 0 : index
    %c0_113 = arith.constant 0 : index
    %133 = vector.load %arg6[%c5_111, %c0_112, %c0_113] : memref<9x8x8xbf16, #tpu.memory_space<vmem>>, vector<1x8x8xbf16>
    %134 = vector.shape_cast %133 : vector<1x8x8xbf16> to vector<8x8xbf16>
    %cst_114 = arith.constant dense<0.000000e+00> : vector<64x8xf32>
    %135 = tpu.matmul %132, %134, %cst_114 {dimension_numbers = #tpu.dot_dimension_numbers<[1], [0], [0], [1], [0, 0, 1, 1], [], []>} : vector<64x8xbf16>, vector<8x8xbf16>, vector<64x8xf32> -> vector<64x8xf32>
    %136 = arith.addf %129, %135 : vector<64x8xf32>
    %137 = arith.index_cast %48 : i32 to index
    %c2_115 = arith.constant 2 : index
    %c0_116 = arith.constant 0 : index
    %c0_117 = arith.constant 0 : index
    %138 = vector.load %arg15[%137, %c2_115, %c0_116, %c0_117] : memref<2x10x10x8xbf16, #tpu.memory_space<vmem>>, vector<1x8x8x4xbf16>
    %139 = vector.shape_cast %138 : vector<1x8x8x4xbf16> to vector<64x4xbf16>
    %c6 = arith.constant 6 : index
    %c0_118 = arith.constant 0 : index
    %c0_119 = arith.constant 0 : index
    %140 = vector.load %arg5[%c6, %c0_118, %c0_119] : memref<9x4x8xbf16, #tpu.memory_space<vmem>>, vector<1x4x8xbf16>
    %141 = vector.shape_cast %140 : vector<1x4x8xbf16> to vector<4x8xbf16>
    %cst_120 = arith.constant dense<0.000000e+00> : vector<64x8xf32>
    %142 = tpu.matmul %139, %141, %cst_120 {dimension_numbers = #tpu.dot_dimension_numbers<[1], [0], [0], [1], [0, 0, 1, 1], [], []>} : vector<64x4xbf16>, vector<4x8xbf16>, vector<64x8xf32> -> vector<64x8xf32>
    %143 = arith.addf %136, %142 : vector<64x8xf32>
    %144 = arith.index_cast %47 : i32 to index
    %c2_121 = arith.constant 2 : index
    %c0_122 = arith.constant 0 : index
    %c0_123 = arith.constant 0 : index
    %145 = vector.load %arg15[%144, %c2_121, %c0_122, %c0_123] : memref<2x10x10x8xbf16, #tpu.memory_space<vmem>>, vector<1x8x8x8xbf16>
    %146 = vector.shape_cast %145 : vector<1x8x8x8xbf16> to vector<64x8xbf16>
    %c6_124 = arith.constant 6 : index
    %c0_125 = arith.constant 0 : index
    %c0_126 = arith.constant 0 : index
    %147 = vector.load %arg6[%c6_124, %c0_125, %c0_126] : memref<9x8x8xbf16, #tpu.memory_space<vmem>>, vector<1x8x8xbf16>
    %148 = vector.shape_cast %147 : vector<1x8x8xbf16> to vector<8x8xbf16>
    %cst_127 = arith.constant dense<0.000000e+00> : vector<64x8xf32>
    %149 = tpu.matmul %146, %148, %cst_127 {dimension_numbers = #tpu.dot_dimension_numbers<[1], [0], [0], [1], [0, 0, 1, 1], [], []>} : vector<64x8xbf16>, vector<8x8xbf16>, vector<64x8xf32> -> vector<64x8xf32>
    %150 = arith.addf %143, %149 : vector<64x8xf32>
    %151 = arith.index_cast %48 : i32 to index
    %c2_128 = arith.constant 2 : index
    %c1_129 = arith.constant 1 : index
    %c0_130 = arith.constant 0 : index
    %152 = vector.load %arg15[%151, %c2_128, %c1_129, %c0_130] : memref<2x10x10x8xbf16, #tpu.memory_space<vmem>>, vector<1x8x8x4xbf16>
    %153 = vector.shape_cast %152 : vector<1x8x8x4xbf16> to vector<64x4xbf16>
    %c7 = arith.constant 7 : index
    %c0_131 = arith.constant 0 : index
    %c0_132 = arith.constant 0 : index
    %154 = vector.load %arg5[%c7, %c0_131, %c0_132] : memref<9x4x8xbf16, #tpu.memory_space<vmem>>, vector<1x4x8xbf16>
    %155 = vector.shape_cast %154 : vector<1x4x8xbf16> to vector<4x8xbf16>
    %cst_133 = arith.constant dense<0.000000e+00> : vector<64x8xf32>
    %156 = tpu.matmul %153, %155, %cst_133 {dimension_numbers = #tpu.dot_dimension_numbers<[1], [0], [0], [1], [0, 0, 1, 1], [], []>} : vector<64x4xbf16>, vector<4x8xbf16>, vector<64x8xf32> -> vector<64x8xf32>
    %157 = arith.addf %150, %156 : vector<64x8xf32>
    %158 = arith.index_cast %47 : i32 to index
    %c2_134 = arith.constant 2 : index
    %c1_135 = arith.constant 1 : index
    %c0_136 = arith.constant 0 : index
    %159 = vector.load %arg15[%158, %c2_134, %c1_135, %c0_136] : memref<2x10x10x8xbf16, #tpu.memory_space<vmem>>, vector<1x8x8x8xbf16>
    %160 = vector.shape_cast %159 : vector<1x8x8x8xbf16> to vector<64x8xbf16>
    %c7_137 = arith.constant 7 : index
    %c0_138 = arith.constant 0 : index
    %c0_139 = arith.constant 0 : index
    %161 = vector.load %arg6[%c7_137, %c0_138, %c0_139] : memref<9x8x8xbf16, #tpu.memory_space<vmem>>, vector<1x8x8xbf16>
    %162 = vector.shape_cast %161 : vector<1x8x8xbf16> to vector<8x8xbf16>
    %cst_140 = arith.constant dense<0.000000e+00> : vector<64x8xf32>
    %163 = tpu.matmul %160, %162, %cst_140 {dimension_numbers = #tpu.dot_dimension_numbers<[1], [0], [0], [1], [0, 0, 1, 1], [], []>} : vector<64x8xbf16>, vector<8x8xbf16>, vector<64x8xf32> -> vector<64x8xf32>
    %164 = arith.addf %157, %163 : vector<64x8xf32>
    %165 = arith.index_cast %48 : i32 to index
    %c2_141 = arith.constant 2 : index
    %c2_142 = arith.constant 2 : index
    %c0_143 = arith.constant 0 : index
    %166 = vector.load %arg15[%165, %c2_141, %c2_142, %c0_143] : memref<2x10x10x8xbf16, #tpu.memory_space<vmem>>, vector<1x8x8x4xbf16>
    %167 = vector.shape_cast %166 : vector<1x8x8x4xbf16> to vector<64x4xbf16>
    %c8 = arith.constant 8 : index
    %c0_144 = arith.constant 0 : index
    %c0_145 = arith.constant 0 : index
    %168 = vector.load %arg5[%c8, %c0_144, %c0_145] : memref<9x4x8xbf16, #tpu.memory_space<vmem>>, vector<1x4x8xbf16>
    %169 = vector.shape_cast %168 : vector<1x4x8xbf16> to vector<4x8xbf16>
    %cst_146 = arith.constant dense<0.000000e+00> : vector<64x8xf32>
    %170 = tpu.matmul %167, %169, %cst_146 {dimension_numbers = #tpu.dot_dimension_numbers<[1], [0], [0], [1], [0, 0, 1, 1], [], []>} : vector<64x4xbf16>, vector<4x8xbf16>, vector<64x8xf32> -> vector<64x8xf32>
    %171 = arith.addf %164, %170 : vector<64x8xf32>
    %172 = arith.index_cast %47 : i32 to index
    %c2_147 = arith.constant 2 : index
    %c2_148 = arith.constant 2 : index
    %c0_149 = arith.constant 0 : index
    %173 = vector.load %arg15[%172, %c2_147, %c2_148, %c0_149] : memref<2x10x10x8xbf16, #tpu.memory_space<vmem>>, vector<1x8x8x8xbf16>
    %174 = vector.shape_cast %173 : vector<1x8x8x8xbf16> to vector<64x8xbf16>
    %c8_150 = arith.constant 8 : index
    %c0_151 = arith.constant 0 : index
    %c0_152 = arith.constant 0 : index
    %175 = vector.load %arg6[%c8_150, %c0_151, %c0_152] : memref<9x8x8xbf16, #tpu.memory_space<vmem>>, vector<1x8x8xbf16>
    %176 = vector.shape_cast %175 : vector<1x8x8xbf16> to vector<8x8xbf16>
    %cst_153 = arith.constant dense<0.000000e+00> : vector<64x8xf32>
    %177 = tpu.matmul %174, %176, %cst_153 {dimension_numbers = #tpu.dot_dimension_numbers<[1], [0], [0], [1], [0, 0, 1, 1], [], []>} : vector<64x8xbf16>, vector<8x8xbf16>, vector<64x8xf32> -> vector<64x8xf32>
    %178 = arith.addf %171, %177 : vector<64x8xf32>
    %c0_154 = arith.constant 0 : index
    %c0_155 = arith.constant 0 : index
    %179 = vector.load %arg7[%c0_154, %c0_155] : memref<1x8xf32, #tpu.memory_space<vmem>>, vector<1x8xf32>
    %180 = vector.broadcast %179 : vector<1x8xf32> to vector<64x8xf32>
    %181 = arith.addf %178, %180 : vector<64x8xf32>
    %cst_156 = arith.constant 0.000000e+00 : f32
    %182 = vector.broadcast %cst_156 : f32 to vector<64x8xf32>
    %183 = arith.maximumf %181, %182 : vector<64x8xf32>
    %184 = arith.truncf %183 : vector<64x8xf32> to vector<64x8xbf16>
    %c0_157 = arith.constant 0 : index
    %c0_158 = arith.constant 0 : index
    %185 = vector.load %arg8[%c0_157, %c0_158] : memref<8x8xbf16, #tpu.memory_space<vmem>>, vector<8x8xbf16>
    %cst_159 = arith.constant dense<0.000000e+00> : vector<64x8xf32>
    %186 = tpu.matmul %184, %185, %cst_159 {dimension_numbers = #tpu.dot_dimension_numbers<[1], [0], [0], [1], [0, 0, 1, 1], [], []>} : vector<64x8xbf16>, vector<8x8xbf16>, vector<64x8xf32> -> vector<64x8xf32>
    %187 = vector.extract_strided_slice %9 {offsets = [0, 8], sizes = [64, 4], strides = [1, 1]} : vector<64x12xf32> to vector<64x4xf32>
    %188 = arith.truncf %187 : vector<64x4xf32> to vector<64x4xbf16>
    %c0_160 = arith.constant 0 : index
    %c0_161 = arith.constant 0 : index
    %189 = vector.load %arg9[%c0_160, %c0_161] : memref<4x8xbf16, #tpu.memory_space<vmem>>, vector<4x8xbf16>
    %cst_162 = arith.constant dense<0.000000e+00> : vector<64x8xf32>
    %190 = tpu.matmul %188, %189, %cst_162 {dimension_numbers = #tpu.dot_dimension_numbers<[1], [0], [0], [1], [0, 0, 1, 1], [], []>} : vector<64x4xbf16>, vector<4x8xbf16>, vector<64x8xf32> -> vector<64x8xf32>
    %191 = arith.addf %186, %190 : vector<64x8xf32>
    %192 = vector.broadcast %34 : vector<1x8xf32> to vector<64x8xf32>
    %193 = arith.addf %191, %192 : vector<64x8xf32>
    %c0_163 = arith.constant 0 : index
    %c0_164 = arith.constant 0 : index
    %194 = vector.load %arg10[%c0_163, %c0_164] : memref<1x8xf32, #tpu.memory_space<vmem>>, vector<1x8xf32>
    %195 = vector.broadcast %194 : vector<1x8xf32> to vector<64x8xf32>
    %196 = arith.addf %193, %195 : vector<64x8xf32>
    %cst_165 = arith.constant 0.000000e+00 : f32
    %197 = vector.broadcast %cst_165 : f32 to vector<64x8xf32>
    %198 = arith.maximumf %196, %197 : vector<64x8xf32>
    %199 = arith.extf %2 : vector<64x8xbf16> to vector<64x8xf32>
    %200 = arith.addf %198, %199 : vector<64x8xf32>
    %201 = vector.shape_cast %200 : vector<64x8xf32> to vector<8x8x8xf32>
    %202 = arith.truncf %201 : vector<8x8x8xf32> to vector<8x8x8xbf16>
    %c0_166 = arith.constant 0 : index
    %c0_167 = arith.constant 0 : index
    %c0_168 = arith.constant 0 : index
    %c0_169 = arith.constant 0 : index
    %c0_170 = arith.constant 0 : index
    %203 = vector.load %arg14[%c0_166, %c0_167, %c0_168, %c0_169, %c0_170] : memref<1x1x8x8x8xbf16, #tpu.memory_space<vmem>>, vector<1x1x8x8x8xbf16>
    %204 = vector.shape_cast %203 : vector<1x1x8x8x8xbf16> to vector<8x8x8xbf16>
    %205 = vector.shape_cast %202 : vector<8x8x8xbf16> to vector<1x1x8x8x8xbf16>
    tpu.vector_store %arg14[%c0_166, %c0_167, %c0_168, %c0_169, %c0_170], %205 {strides = array<i32>} : memref<1x1x8x8x8xbf16, #tpu.memory_space<vmem>>, vector<1x1x8x8x8xbf16>,
    return
  }
  func.func @transform_0(%arg0: i32, %arg1: i32) -> (i32, i32, i32, i32, i32) {
    %c0_i32 = arith.constant 0 : i32
    %c0_i32_0 = arith.constant 0 : i32
    %c0_i32_1 = arith.constant 0 : i32
    %c0_i32_2 = arith.constant 0 : i32
    return %arg0, %arg1, %c0_i32, %c0_i32_0, %c0_i32_1 : i32, i32, i32, i32, i32
  }
  func.func @transform_1(%arg0: i32, %arg1: i32) -> (i32, i32) {
    %c0_i32 = arith.constant 0 : i32
    %c0_i32_0 = arith.constant 0 : i32
    %c0_i32_1 = arith.constant 0 : i32
    return %c0_i32, %c0_i32_0 : i32, i32
  }
  func.func @transform_2(%arg0: i32, %arg1: i32) -> (i32, i32) {
    %c0_i32 = arith.constant 0 : i32
    %c0_i32_0 = arith.constant 0 : i32
    %c0_i32_1 = arith.constant 0 : i32
    return %c0_i32, %c0_i32_0 : i32, i32
  }
  func.func @transform_3(%arg0: i32, %arg1: i32) -> (i32, i32, i32) {
    %c0_i32 = arith.constant 0 : i32
    %c0_i32_0 = arith.constant 0 : i32
    %c0_i32_1 = arith.constant 0 : i32
    %c0_i32_2 = arith.constant 0 : i32
    return %c0_i32, %c0_i32_0, %c0_i32_1 : i32, i32, i32
  }
  func.func @transform_4(%arg0: i32, %arg1: i32) -> (i32, i32, i32) {
    %c0_i32 = arith.constant 0 : i32
    %c0_i32_0 = arith.constant 0 : i32
    %c0_i32_1 = arith.constant 0 : i32
    %c0_i32_2 = arith.constant 0 : i32
    return %c0_i32, %c0_i32_0, %c0_i32_1 : i32, i32, i32
  }
  func.func @transform_5(%arg0: i32, %arg1: i32) -> (i32, i32) {
    %c0_i32 = arith.constant 0 : i32
    %c0_i32_0 = arith.constant 0 : i32
    %c0_i32_1 = arith.constant 0 : i32
    return %c0_i32, %c0_i32_0 : i32, i32
  }
  func.func @transform_6(%arg0: i32, %arg1: i32) -> (i32, i32) {
    %c0_i32 = arith.constant 0 : i32
    %c0_i32_0 = arith.constant 0 : i32
    %c0_i32_1 = arith.constant 0 : i32
    return %c0_i32, %c0_i32_0 : i32, i32
  }
  func.func @transform_7(%arg0: i32, %arg1: i32) -> (i32, i32) {
    %c0_i32 = arith.constant 0 : i32
    %c0_i32_0 = arith.constant 0 : i32
    %c0_i32_1 = arith.constant 0 : i32
    return %c0_i32, %c0_i32_0 : i32, i32
  }
  func.func @transform_8(%arg0: i32, %arg1: i32) -> (i32, i32) {
    %c0_i32 = arith.constant 0 : i32
    %c0_i32_0 = arith.constant 0 : i32
    %c0_i32_1 = arith.constant 0 : i32
    return %c0_i32, %c0_i32_0 : i32, i32
  }
  func.func @transform_9(%arg0: i32, %arg1: i32) -> (i32, i32) {
    %c0_i32 = arith.constant 0 : i32
    %c0_i32_0 = arith.constant 0 : i32
    %c0_i32_1 = arith.constant 0 : i32
    return %c0_i32, %c0_i32_0 : i32, i32
  }
  func.func @transform_10(%arg0: i32, %arg1: i32) -> (i32, i32) {
    %c0_i32 = arith.constant 0 : i32
    %c0_i32_0 = arith.constant 0 : i32
    %c0_i32_1 = arith.constant 0 : i32
    return %c0_i32, %c0_i32_0 : i32, i32
  }
  func.func @transform_11(%arg0: i32, %arg1: i32) -> (i32, i32) {
    %c0_i32 = arith.constant 0 : i32
    %c0_i32_0 = arith.constant 0 : i32
    %c0_i32_1 = arith.constant 0 : i32
    return %c0_i32, %c0_i32_0 : i32, i32
  }
  func.func @transform_12(%arg0: i32, %arg1: i32) -> (i32, i32, i32, i32, i32) {
    %c0_i32 = arith.constant 0 : i32
    %c0_i32_0 = arith.constant 0 : i32
    %c0_i32_1 = arith.constant 0 : i32
    %c0_i32_2 = arith.constant 0 : i32
    return %arg0, %arg1, %c0_i32, %c0_i32_0, %c0_i32_1 : i32, i32, i32, i32, i32
  }
}

</mosaic_0001>

<llo_original>
// kernel: run.2
$region0: #{run.2}
  #allocation0 [shape = 'u32[]', space=smem, size = 0x4, offset = 0x4, fixed_abs, tag = 'smem constant byte address 0x4 - core index']
  #allocation1 [shape = 'u32[144,128]{1,0:T(1,128)}', space=vmem, size = 0x12000, scoped, tag = 'internal scratch']
  #allocation2 [shape = 'bf16[2,10,10,6]{3,2,1,0:T(8,128)(2,1)}', space=vmem, size = 0x14000, scoped, tag = 'scratch operand']
  #allocation3 [shape = 'f32[1,6]{1,0:T(1,128)}', space=vmem, size = 0x200, scoped, tag = 'scratch operand']
  %s0 = inlined_call_operand.vmem [shape: bf16[2,5,8,8,6], index: 0, kind: input, shape index: {}]
  %s1 = inlined_call_operand.vmem [shape: bf16[6,9], index: 1, kind: input, shape index: {}]
  %s2 = inlined_call_operand.vmem [shape: f32[1,9], index: 2, kind: input, shape index: {}]
  %s3 = inlined_call_operand.vmem [shape: bf16[9,3,6], index: 3, kind: input, shape index: {}]
  %s4 = inlined_call_operand.vmem [shape: bf16[9,6,6], index: 4, kind: input, shape index: {}]
  %s5 = inlined_call_operand.vmem [shape: f32[1,6], index: 5, kind: input, shape index: {}]
  %s6 = inlined_call_operand.vmem [shape: bf16[6,8], index: 6, kind: input, shape index: {}]
  %s7 = inlined_call_operand.vmem [shape: bf16[3,8], index: 7, kind: input, shape index: {}]
  %s8 = inlined_call_operand.vmem [shape: f32[1,8], index: 8, kind: input, shape index: {}]
  %s9 = inlined_call_operand.vmem [shape: f32[6,2], index: 9, kind: input, shape index: {}]
  %s10 = inlined_call_operand.vmem [shape: f32[1,2], index: 10, kind: input, shape index: {}]
  %s11 = inlined_call_operand.vmem [shape: f32[2,8], index: 11, kind: input, shape index: {}]
  %s12 = inlined_call_operand.vmem [shape: bf16[6,8], index: 12, kind: input, shape index: {}]
  %s13 = inlined_call_operand.vmem [shape: f32[1,8], index: 13, kind: input, shape index: {}]
  %s14 = inlined_call_operand.vmem [shape: bf16[2,5,8,8,8], index: 14, kind: output, shape index: {}]
  %s15 = sld [smem:[#allocation0]]
  $region97: #{run.2} parent=0
    _
  %s17 = ssub.s32 1, %s15
  %s18 = scalar_select 0, %s17, %s15
  loop: start=0, step=1, limit=12
  $region2: #{run.2} parent=0 // loop_pre_header
    _
  $region3: #{run.2} parent=0 // loop_header
    %s20 = sphi 0, %s24
    %p21 = scmp.ge.s32.totalorder %s20, 12
    %s27 = sphi 0, %s39
    %s28 = sphi 0, %s35
    %s29 = sphi 0, %s27
    %s30 = sphi 0, %s28
    %s31 = sphi 0, %s29
    %s32 = sphi 0, %s30
    %s44 = sphi 0, %s46
    %s47 = sphi 0, %s44
    %s48 = sphi 0, %s47
    %s64 = sphi 0, %s48
    %s68 = sphi 0, %s68
    %s70 = sphi 0, %s68
    %s71 = sphi 0, %s70
    %s85 = sphi 0, %s71
    %s89 = sphi 0, %s89
    %s91 = sphi 0, %s89
    %s92 = sphi 0, %s91
    %s106 = sphi 0, %s92
    %s110 = sphi 0, %s110
    %s112 = sphi 0, %s110
    %s113 = sphi 0, %s112
    %s127 = sphi 0, %s113
    %s131 = sphi 0, %s131
    %s133 = sphi 0, %s131
    %s134 = sphi 0, %s133
    %s148 = sphi 0, %s134
    %s152 = sphi 0, %s152
    %s154 = sphi 0, %s152
    %s155 = sphi 0, %s154
    %s169 = sphi 0, %s155
    %s173 = sphi 0, %s173
    %s175 = sphi 0, %s173
    %s176 = sphi 0, %s175
    %s190 = sphi 0, %s176
    %s194 = sphi 0, %s194
    %s196 = sphi 0, %s194
    %s197 = sphi 0, %s196
    %s211 = sphi 0, %s197
    %s215 = sphi 0, %s215
    %s217 = sphi 0, %s215
    %s218 = sphi 0, %s217
    %s232 = sphi 0, %s218
    %s236 = sphi 0, %s236
    %s238 = sphi 0, %s236
    %s239 = sphi 0, %s238
    %s253 = sphi 0, %s239
    %s257 = sphi 0, %s257
    %s259 = sphi 0, %s257
    %s260 = sphi 0, %s259
    %s274 = sphi 0, %s260
    %s278 = sphi 0, %s278
    %s280 = sphi 0, %s278
    %s281 = sphi 0, %s280
    %s295 = sphi 0, %s281
    %s299 = sphi 0, %s299
    %s301 = sphi 0, %s299
    %s302 = sphi 0, %s301
    %s316 = sphi 0, %s302
    %s320 = sphi 0, %s320
    %s322 = sphi 0, %s320
    %s323 = sphi 0, %s322
    %s337 = sphi 0, %s323
    %s345 = sphi 0, %s347
    %s348 = sphi 0, %s345
    %s349 = sphi 0, %s348
    %s365 = sphi 0, %s349
  $region4: #{run.2} parent=0 // loop_header_branch
    %23 = sbr.rel (%p21) target = $region8
  $region5: #{run.2} parent=0 // loop_body
    %s25 = ssub.s32 %s20, 1
    %s26 = ssub.s32 %s20, 2
    %s33 = sadd.s32 1, %s28
    %p34 = scmp.ge.s32.totalorder %s33, 5
    %s35 = scalar_select %p34, 0, %s33
    %s36 = sadd.s32 1, %s27
    %s37 = scalar_select %p34, %s36, %s27
    %p38 = scmp.ge.s32.totalorder %s37, 2
    %s39 = scalar_select %p38, 0, %s37
    %s40 = ssub.s32 %s27, %s39
    %s41 = ssub.s32 %s28, %s35
    %s42 = sor.u32 %s40, %s41
    %p43 = scmp.eq.s32.totalorder %s42, 0
    %s45 = sadd.s32 %s44, 1
    %s46 = scalar_select %p43, %s44, %s45
    %p49 = pneg %p43
    %p50 = scmp.eq.s32.totalorder %s20, 9
    %p51 = por %p49, %p50
    %p52 = scmp.ne.s32.totalorder %s44, %s47
    %p53 = scmp.eq.s32.totalorder %s20, 0
    %p54 = por %p52, %p53
    %p55 = scmp.ne.s32.totalorder %s44, %s47
    %p56 = scmp.eq.s32.totalorder %s25, 9
    %p57 = por %p55, %p56
    %p58 = scmp.ne.s32.totalorder %s47, %s48
    %p59 = scmp.eq.s32.totalorder %s25, 0
    %p60 = por %p58, %p59
    %p61 = scmp.ne.s32.totalorder %s47, %s48
    %p62 = scmp.eq.s32.totalorder %s26, 9
    %p63 = por %p61, %p62
    %p65 = scmp.ne.s32.totalorder %s48, %s64
    %p66 = scmp.eq.s32.totalorder %s26, 0
    %p67 = por %p65, %p66
    %s69 = sadd.s32 %s68, 1
    %p72 = scmp.eq.s32.totalorder %s20, 9
    %p73 = scmp.ne.s32.totalorder %s68, %s70
    %p74 = scmp.eq.s32.totalorder %s20, 0
    %p75 = por %p73, %p74
    %p76 = scmp.ne.s32.totalorder %s68, %s70
    %p77 = scmp.eq.s32.totalorder %s25, 9
    %p78 = por %p76, %p77
    %p79 = scmp.ne.s32.totalorder %s70, %s71
    %p80 = scmp.eq.s32.totalorder %s25, 0
    %p81 = por %p79, %p80
    %p82 = scmp.ne.s32.totalorder %s70, %s71
    %p83 = scmp.eq.s32.totalorder %s26, 9
    %p84 = por %p82, %p83
    %p86 = scmp.ne.s32.totalorder %s71, %s85
    %p87 = scmp.eq.s32.totalorder %s26, 0
    %p88 = por %p86, %p87
    %s90 = sadd.s32 %s89, 1
    %p93 = scmp.eq.s32.totalorder %s20, 9
    %p94 = scmp.ne.s32.totalorder %s89, %s91
    %p95 = scmp.eq.s32.totalorder %s20, 0
    %p96 = por %p94, %p95
    %p97 = scmp.ne.s32.totalorder %s89, %s91
    %p98 = scmp.eq.s32.totalorder %s25, 9
    %p99 = por %p97, %p98
    %p100 = scmp.ne.s32.totalorder %s91, %s92
    %p101 = scmp.eq.s32.totalorder %s25, 0
    %p102 = por %p100, %p101
    %p103 = scmp.ne.s32.totalorder %s91, %s92
    %p104 = scmp.eq.s32.totalorder %s26, 9
    %p105 = por %p103, %p104
    %p107 = scmp.ne.s32.totalorder %s92, %s106
    %p108 = scmp.eq.s32.totalorder %s26, 0
    %p109 = por %p107, %p108
    %s111 = sadd.s32 %s110, 1
    %p114 = scmp.eq.s32.totalorder %s20, 9
    %p115 = scmp.ne.s32.totalorder %s110, %s112
    %p116 = scmp.eq.s32.totalorder %s20, 0
    %p117 = por %p115, %p116
    %p118 = scmp.ne.s32.totalorder %s110, %s112
    %p119 = scmp.eq.s32.totalorder %s25, 9
    %p120 = por %p118, %p119
    %p121 = scmp.ne.s32.totalorder %s112, %s113
    %p122 = scmp.eq.s32.totalorder %s25, 0
    %p123 = por %p121, %p122
    %p124 = scmp.ne.s32.totalorder %s112, %s113
    %p125 = scmp.eq.s32.totalorder %s26, 9
    %p126 = por %p124, %p125
    %p128 = scmp.ne.s32.totalorder %s113, %s127
    %p129 = scmp.eq.s32.totalorder %s26, 0
    %p130 = por %p128, %p129
    %s132 = sadd.s32 %s131, 1
    %p135 = scmp.eq.s32.totalorder %s20, 9
    %p136 = scmp.ne.s32.totalorder %s131, %s133
    %p137 = scmp.eq.s32.totalorder %s20, 0
    %p138 = por %p136, %p137
    %p139 = scmp.ne.s32.totalorder %s131, %s133
    %p140 = scmp.eq.s32.totalorder %s25, 9
    %p141 = por %p139, %p140
    %p142 = scmp.ne.s32.totalorder %s133, %s134
    %p143 = scmp.eq.s32.totalorder %s25, 0
    %p144 = por %p142, %p143
    %p145 = scmp.ne.s32.totalorder %s133, %s134
    %p146 = scmp.eq.s32.totalorder %s26, 9
    %p147 = por %p145, %p146
    %p149 = scmp.ne.s32.totalorder %s134, %s148
    %p150 = scmp.eq.s32.totalorder %s26, 0
    %p151 = por %p149, %p150
    %s153 = sadd.s32 %s152, 1
    %p156 = scmp.eq.s32.totalorder %s20, 9
    %p157 = scmp.ne.s32.totalorder %s152, %s154
    %p158 = scmp.eq.s32.totalorder %s20, 0
    %p159 = por %p157, %p158
    %p160 = scmp.ne.s32.totalorder %s152, %s154
    %p161 = scmp.eq.s32.totalorder %s25, 9
    %p162 = por %p160, %p161
    %p163 = scmp.ne.s32.totalorder %s154, %s155
    %p164 = scmp.eq.s32.totalorder %s25, 0
    %p165 = por %p163, %p164
    %p166 = scmp.ne.s32.totalorder %s154, %s155
    %p167 = scmp.eq.s32.totalorder %s26, 9
    %p168 = por %p166, %p167
    %p170 = scmp.ne.s32.totalorder %s155, %s169
    %p171 = scmp.eq.s32.totalorder %s26, 0
    %p172 = por %p170, %p171
    %s174 = sadd.s32 %s173, 1
    %p177 = scmp.eq.s32.totalorder %s20, 9
    %p178 = scmp.ne.s32.totalorder %s173, %s175
    %p179 = scmp.eq.s32.totalorder %s20, 0
    %p180 = por %p178, %p179
    %p181 = scmp.ne.s32.totalorder %s173, %s175
    %p182 = scmp.eq.s32.totalorder %s25, 9
    %p183 = por %p181, %p182
    %p184 = scmp.ne.s32.totalorder %s175, %s176
    %p185 = scmp.eq.s32.totalorder %s25, 0
    %p186 = por %p184, %p185
    %p187 = scmp.ne.s32.totalorder %s175, %s176
    %p188 = scmp.eq.s32.totalorder %s26, 9
    %p189 = por %p187, %p188
    %p191 = scmp.ne.s32.totalorder %s176, %s190
    %p192 = scmp.eq.s32.totalorder %s26, 0
    %p193 = por %p191, %p192
    %s195 = sadd.s32 %s194, 1
    %p198 = scmp.eq.s32.totalorder %s20, 9
    %p199 = scmp.ne.s32.totalorder %s194, %s196
    %p200 = scmp.eq.s32.totalorder %s20, 0
    %p201 = por %p199, %p200
    %p202 = scmp.ne.s32.totalorder %s194, %s196
    %p203 = scmp.eq.s32.totalorder %s25, 9
    %p204 = por %p202, %p203
    %p205 = scmp.ne.s32.totalorder %s196, %s197
    %p206 = scmp.eq.s32.totalorder %s25, 0
    %p207 = por %p205, %p206
    %p208 = scmp.ne.s32.totalorder %s196, %s197
    %p209 = scmp.eq.s32.totalorder %s26, 9
    %p210 = por %p208, %p209
    %p212 = scmp.ne.s32.totalorder %s197, %s211
    %p213 = scmp.eq.s32.totalorder %s26, 0
    %p214 = por %p212, %p213
    %s216 = sadd.s32 %s215, 1
    %p219 = scmp.eq.s32.totalorder %s20, 9
    %p220 = scmp.ne.s32.totalorder %s215, %s217
    %p221 = scmp.eq.s32.totalorder %s20, 0
    %p222 = por %p220, %p221
    %p223 = scmp.ne.s32.totalorder %s215, %s217
    %p224 = scmp.eq.s32.totalorder %s25, 9
    %p225 = por %p223, %p224
    %p226 = scmp.ne.s32.totalorder %s217, %s218
    %p227 = scmp.eq.s32.totalorder %s25, 0
    %p228 = por %p226, %p227
    %p229 = scmp.ne.s32.totalorder %s217, %s218
    %p230 = scmp.eq.s32.totalorder %s26, 9
    %p231 = por %p229, %p230
    %p233 = scmp.ne.s32.totalorder %s218, %s232
    %p234 = scmp.eq.s32.totalorder %s26, 0
    %p235 = por %p233, %p234
    %s237 = sadd.s32 %s236, 1
    %p240 = scmp.eq.s32.totalorder %s20, 9
    %p241 = scmp.ne.s32.totalorder %s236, %s238
    %p242 = scmp.eq.s32.totalorder %s20, 0
    %p243 = por %p241, %p242
    %p244 = scmp.ne.s32.totalorder %s236, %s238
    %p245 = scmp.eq.s32.totalorder %s25, 9
    %p246 = por %p244, %p245
    %p247 = scmp.ne.s32.totalorder %s238, %s239
    %p248 = scmp.eq.s32.totalorder %s25, 0
    %p249 = por %p247, %p248
    %p250 = scmp.ne.s32.totalorder %s238, %s239
    %p251 = scmp.eq.s32.totalorder %s26, 9
    %p252 = por %p250, %p251
    %p254 = scmp.ne.s32.totalorder %s239, %s253
    %p255 = scmp.eq.s32.totalorder %s26, 0
    %p256 = por %p254, %p255
    %s258 = sadd.s32 %s257, 1
    %p261 = scmp.eq.s32.totalorder %s20, 9
    %p262 = scmp.ne.s32.totalorder %s257, %s259
    %p263 = scmp.eq.s32.totalorder %s20, 0
    %p264 = por %p262, %p263
    %p265 = scmp.ne.s32.totalorder %s257, %s259
    %p266 = scmp.eq.s32.totalorder %s25, 9
    %p267 = por %p265, %p266
    %p268 = scmp.ne.s32.totalorder %s259, %s260
    %p269 = scmp.eq.s32.totalorder %s25, 0
    %p270 = por %p268, %p269
    %p271 = scmp.ne.s32.totalorder %s259, %s260
    %p272 = scmp.eq.s32.totalorder %s26, 9
    %p273 = por %p271, %p272
    %p275 = scmp.ne.s32.totalorder %s260, %s274
    %p276 = scmp.eq.s32.totalorder %s26, 0
    %p277 = por %p275, %p276
    %s279 = sadd.s32 %s278, 1
    %p282 = scmp.eq.s32.totalorder %s20, 9
    %p283 = scmp.ne.s32.totalorder %s278, %s280
    %p284 = scmp.eq.s32.totalorder %s20, 0
    %p285 = por %p283, %p284
    %p286 = scmp.ne.s32.totalorder %s278, %s280
    %p287 = scmp.eq.s32.totalorder %s25, 9
    %p288 = por %p286, %p287
    %p289 = scmp.ne.s32.totalorder %s280, %s281
    %p290 = scmp.eq.s32.totalorder %s25, 0
    %p291 = por %p289, %p290
    %p292 = scmp.ne.s32.totalorder %s280, %s281
    %p293 = scmp.eq.s32.totalorder %s26, 9
    %p294 = por %p292, %p293
    %p296 = scmp.ne.s32.totalorder %s281, %s295
    %p297 = scmp.eq.s32.totalorder %s26, 0
    %p298 = por %p296, %p297
    %s300 = sadd.s32 %s299, 1
    %p303 = scmp.eq.s32.totalorder %s20, 9
    %p304 = scmp.ne.s32.totalorder %s299, %s301
    %p305 = scmp.eq.s32.totalorder %s20, 0
    %p306 = por %p304, %p305
    %p307 = scmp.ne.s32.totalorder %s299, %s301
    %p308 = scmp.eq.s32.totalorder %s25, 9
    %p309 = por %p307, %p308
    %p310 = scmp.ne.s32.totalorder %s301, %s302
    %p311 = scmp.eq.s32.totalorder %s25, 0
    %p312 = por %p310, %p311
    %p313 = scmp.ne.s32.totalorder %s301, %s302
    %p314 = scmp.eq.s32.totalorder %s26, 9
    %p315 = por %p313, %p314
    %p317 = scmp.ne.s32.totalorder %s302, %s316
    %p318 = scmp.eq.s32.totalorder %s26, 0
    %p319 = por %p317, %p318
    %s321 = sadd.s32 %s320, 1
    %p324 = scmp.eq.s32.totalorder %s20, 9
    %p325 = scmp.ne.s32.totalorder %s320, %s322
    %p326 = scmp.eq.s32.totalorder %s20, 0
    %p327 = por %p325, %p326
    %p328 = scmp.ne.s32.totalorder %s320, %s322
    %p329 = scmp.eq.s32.totalorder %s25, 9
    %p330 = por %p328, %p329
    %p331 = scmp.ne.s32.totalorder %s322, %s323
    %p332 = scmp.eq.s32.totalorder %s25, 0
    %p333 = por %p331, %p332
    %p334 = scmp.ne.s32.totalorder %s322, %s323
    %p335 = scmp.eq.s32.totalorder %s26, 9
    %p336 = por %p334, %p335
    %p338 = scmp.ne.s32.totalorder %s323, %s337
    %p339 = scmp.eq.s32.totalorder %s26, 0
    %p340 = por %p338, %p339
    %s341 = ssub.s32 %s27, %s39
    %s342 = ssub.s32 %s28, %s35
    %s343 = sor.u32 %s341, %s342
    %p344 = scmp.eq.s32.totalorder %s343, 0
    %s346 = sadd.s32 %s345, 1
    %s347 = scalar_select %p344, %s345, %s346
    %p350 = pneg %p344
    %p351 = scmp.eq.s32.totalorder %s20, 9
    %p352 = por %p350, %p351
    %p353 = scmp.ne.s32.totalorder %s345, %s348
    %p354 = scmp.eq.s32.totalorder %s20, 0
    %p355 = por %p353, %p354
    %p356 = scmp.ne.s32.totalorder %s345, %s348
    %p357 = scmp.eq.s32.totalorder %s25, 9
    %p358 = por %p356, %p357
    %p359 = scmp.ne.s32.totalorder %s348, %s349
    %p360 = scmp.eq.s32.totalorder %s25, 0
    %p361 = por %p359, %p360
    %p362 = scmp.ne.s32.totalorder %s348, %s349
    %p363 = scmp.eq.s32.totalorder %s26, 9
    %p364 = por %p362, %p363
    %p366 = scmp.ne.s32.totalorder %s349, %s365
    %p367 = scmp.eq.s32.totalorder %s26, 0
    %p368 = por %p366, %p367
    %p369 = scmp.le.s32.totalorder 1, %s20
    %p370 = scmp.lt.s32.totalorder %s20, 11
    %p371 = pnand %p369, %p370
    %p372 = pneg %p371
    // Predicated region
    $region9: #{run.2} parent=5 // pred_check
      _
    $region10: #{run.2} parent=5 // pred_check_branch
      %374 = sbr.rel (%p371) target = $region12
    $region11: #{run.2} parent=5 // pred_region
      %s375 = ssub.s32 %s20, 1
      // Predicated region
      $region13: #{run.2} parent=11 // pred_check
        %p376 = pneg %p81
      $region14: #{run.2} parent=11 // pred_check_branch
        %378 = sbr.rel (%p376) target = $region16
      $region15: #{run.2} parent=11 // pred_region
        _
      $region16: #{run.2} parent=11 // pred_fallthru
        _
      // Predicated region
      $region17: #{run.2} parent=11 // pred_check
        %p379 = pneg %p102
      $region18: #{run.2} parent=11 // pred_check_branch
        %381 = sbr.rel (%p379) target = $region20
      $region19: #{run.2} parent=11 // pred_region
        _
      $region20: #{run.2} parent=11 // pred_fallthru
        _
      // Predicated region
      $region21: #{run.2} parent=11 // pred_check
        %p382 = pneg %p123
      $region22: #{run.2} parent=11 // pred_check_branch
        %384 = sbr.rel (%p382) target = $region24
      $region23: #{run.2} parent=11 // pred_region
        _
      $region24: #{run.2} parent=11 // pred_fallthru
        _
      // Predicated region
      $region25: #{run.2} parent=11 // pred_check
        %p385 = pneg %p144
      $region26: #{run.2} parent=11 // pred_check_branch
        %387 = sbr.rel (%p385) target = $region28
      $region27: #{run.2} parent=11 // pred_region
        _
      $region28: #{run.2} parent=11 // pred_fallthru
        _
      // Predicated region
      $region29: #{run.2} parent=11 // pred_check
        %p388 = pneg %p165
      $region30: #{run.2} parent=11 // pred_check_branch
        %390 = sbr.rel (%p388) target = $region32
      $region31: #{run.2} parent=11 // pred_region
        _
      $region32: #{run.2} parent=11 // pred_fallthru
        _
      // Predicated region
      $region33: #{run.2} parent=11 // pred_check
        %p391 = pneg %p186
      $region34: #{run.2} parent=11 // pred_check_branch
        %393 = sbr.rel (%p391) target = $region36
      $region35: #{run.2} parent=11 // pred_region
        _
      $region36: #{run.2} parent=11 // pred_fallthru
        _
      // Predicated region
      $region37: #{run.2} parent=11 // pred_check
        %p394 = pneg %p207
      $region38: #{run.2} parent=11 // pred_check_branch
        %396 = sbr.rel (%p394) target = $region40
      $region39: #{run.2} parent=11 // pred_region
        _
      $region40: #{run.2} parent=11 // pred_fallthru
        _
      // Predicated region
      $region41: #{run.2} parent=11 // pred_check
        %p397 = pneg %p228
      $region42: #{run.2} parent=11 // pred_check_branch
        %399 = sbr.rel (%p397) target = $region44
      $region43: #{run.2} parent=11 // pred_region
        _
      $region44: #{run.2} parent=11 // pred_fallthru
        _
      // Predicated region
      $region45: #{run.2} parent=11 // pred_check
        %p400 = pneg %p249
      $region46: #{run.2} parent=11 // pred_check_branch
        %402 = sbr.rel (%p400) target = $region48
      $region47: #{run.2} parent=11 // pred_region
        _
      $region48: #{run.2} parent=11 // pred_fallthru
        _
      // Predicated region
      $region49: #{run.2} parent=11 // pred_check
        %p403 = pneg %p270
      $region50: #{run.2} parent=11 // pred_check_branch
        %405 = sbr.rel (%p403) target = $region52
      $region51: #{run.2} parent=11 // pred_region
        _
      $region52: #{run.2} parent=11 // pred_fallthru
        _
      // Predicated region
      $region53: #{run.2} parent=11 // pred_check
        %p406 = pneg %p291
      $region54: #{run.2} parent=11 // pred_check_branch
        %408 = sbr.rel (%p406) target = $region56
      $region55: #{run.2} parent=11 // pred_region
        _
      $region56: #{run.2} parent=11 // pred_fallthru
        _
      // Predicated region
      $region57: #{run.2} parent=11 // pred_check
        %p409 = pneg %p312
      $region58: #{run.2} parent=11 // pred_check_branch
        %411 = sbr.rel (%p409) target = $region60
      $region59: #{run.2} parent=11 // pred_region
        _
      $region60: #{run.2} parent=11 // pred_fallthru
        _
      // Predicated region
      $region61: #{run.2} parent=11 // pred_check
        %p412 = pneg %p333
      $region62: #{run.2} parent=11 // pred_check_branch
        %414 = sbr.rel (%p412) target = $region64
      $region63: #{run.2} parent=11 // pred_region
        _
      $region64: #{run.2} parent=11 // pred_fallthru
        _
    $region12: #{run.2} parent=5 // pred_fallthru
      _
    %p415 = scmp.lt.s32.totalorder %s20, 10
    // Predicated region
    $region65: #{run.2} parent=5 // pred_check
      %p416 = pneg %p415
    $region66: #{run.2} parent=5 // pred_check_branch
      %418 = sbr.rel (%p416) target = $region68
    $region67: #{run.2} parent=5 // pred_region
      // Predicated region
      $region69: #{run.2} parent=67 // pred_check
        %p419 = pneg %p54
      $region70: #{run.2} parent=67 // pred_check_branch
        %421 = sbr.rel (%p419) target = $region72
      $region71: #{run.2} parent=67 // pred_region
        %p422 = scmp.lt.s32.totalorder %s27, 1
        %s423 = scalar_select %p422, %s27, 1
        %p424 = scmp.lt.s32.totalorder %s28, 4
        %s425 = scalar_select %p424, %s28, 4
        %s426 = smul.addr %s425, 8
        %s427 = smul.addr %s423, 40
        %s428 = sadd.s32 %s426, %s427
        %s429 = smul.addr %s428, 4
        %s430 = scalar_lea.vmem %s0, %s429
      $region72: #{run.2} parent=67 // pred_fallthru
        _
    $region68: #{run.2} parent=5 // pred_fallthru
      _
    %p431 = scmp.le.s32.totalorder 1, %s20
    %p432 = scmp.lt.s32.totalorder %s20, 11
    %p433 = pnand %p431, %p432
    %p434 = pneg %p433
    // Predicated region
    $region73: #{run.2} parent=5 // pred_check
      _
    $region74: #{run.2} parent=5 // pred_check_branch
      %436 = sbr.rel (%p433) target = $region76
    $region75: #{run.2} parent=5 // pred_region
      %s437 = ssub.s32 %s20, 1
      %p438 = scmp.lt.s32.totalorder %s29, 1
      %s439 = scalar_select %p438, %s29, 1
      %p440 = scmp.lt.s32.totalorder %s30, 4
      %s441 = scalar_select %p440, %s30, 4
      %s442 = smul.addr %s441, 8
      %s443 = smul.addr %s439, 40
      %s444 = sadd.s32 %s442, %s443
      %s445 = smul.addr %s444, 4
      %s446 = scalar_lea.vmem %s0, %s445
      %p447 = pneg %p60
      %p448 = pneg %p57
      %p449 = pneg %p81
      %p450 = pneg %p78
      %p451 = pneg %p102
      %p452 = pneg %p99
      %p453 = pneg %p123
      %p454 = pneg %p120
      %p455 = pneg %p144
      %p456 = pneg %p141
      %p457 = pneg %p165
      %p458 = pneg %p162
      %p459 = pneg %p186
      %p460 = pneg %p183
      %p461 = pneg %p207
      %p462 = pneg %p204
      %p463 = pneg %p228
      %p464 = pneg %p225
      %p465 = pneg %p249
      %p466 = pneg %p246
      %p467 = pneg %p270
      %p468 = pneg %p267
      %p469 = pneg %p291
      %p470 = pneg %p288
      %p471 = pneg %p312
      %p472 = pneg %p309
      %p473 = pneg %p333
      %p474 = pneg %p330
      %p475 = pneg %p361
      %p476 = pneg %p358
      %p477 = scmp.lt.s32.totalorder %s29, 1
      %s478 = scalar_select %p477, %s29, 1
      %p479 = scmp.lt.s32.totalorder %s30, 4
      %s480 = scalar_select %p479, %s30, 4
      %s481 = smul.addr %s480, 8
      %s482 = smul.addr %s478, 40
      %s483 = sadd.s32 %s481, %s482
      %s484 = smul.addr %s483, 4
      %s485 = scalar_lea.vmem %s14, %s484
      %p486 = scmp.lt.s32.totalorder %s29, 1
      %s487 = scalar_select %p486, %s29, 1
      %p488 = scmp.lt.s32.totalorder %s30, 4
      %s489 = scalar_select %p488, %s30, 4
      %s490 = smul.addr %s489, 8
      %s491 = smul.addr %s487, 40
      %s492 = sadd.s32 %s490, %s491
      %s493 = smul.addr %s492, 4
      %s494 = scalar_lea.vmem %s0, %s493
      %p495 = scmp.lt.s32.totalorder %s29, 1
      %s496 = scalar_select %p495, %s29, 1
      %p497 = scmp.lt.s32.totalorder %s30, 4
      %s498 = scalar_select %p497, %s30, 4
      %s499 = smul.addr %s498, 8
      %s500 = smul.addr %s496, 40
      %s501 = sadd.s32 %s499, %s500
      %s502 = smul.addr %s501, 4
      %s503 = scalar_lea.vmem %s14, %s502
      %v505 = vld [vmem:[%s494] sm:$0xf]
      %v506 = vld [vmem:[%s494 + $0x4] sm:$0xf]
      %v507 = vld [vmem:[%s494 + $0x8] sm:$0xf]
      %v508 = vld [vmem:[%s494 + $0xc] sm:$0xf]
      %v509 = vld [vmem:[%s494 + $0x10] sm:$0xf]
      %v510 = vld [vmem:[%s494 + $0x14] sm:$0xf]
      %v511 = vld [vmem:[%s494 + $0x18] sm:$0xf]
      %v512 = vld [vmem:[%s494 + $0x1c] sm:$0xf]
      %v513 = vld [vmem:[%s1] sm:$0x7]
      %v514 = vld [vmem:[%s2] sm:$0x1]
      %v516 = vlaneseq
      %v517 = vshrl.u32 %v516, 7
      %v518 = vsub.s32 0, %v517
      %v519 = vrot.slane %v514, %v518
      %v529 = vunpack.c.l.b16 %v505
      %v530 = vunpack.c.l.b16 %v506
      %v531 = vunpack.c.l.b16 %v507
      %v532 = vunpack.c.l.b16 %v508
      %v533 = vunpack.c.l.b16 %v509
      %v534 = vunpack.c.l.b16 %v510
      %v535 = vunpack.c.l.b16 %v511
      %v536 = vunpack.c.l.b16 %v512
      %v537 = vpack.c.b16 %v530, %v529
      %v538 = vpack.c.b16 %v532, %v531
      %v539 = vpack.c.b16 %v534, %v533
      %v540 = vpack.c.b16 %v536, %v535
      %vm541 = vcmask 48128
      %v543 = vsel %vm541, %v537, 0
      %v546 = vsel %vm541, %v538, 0
      %v549 = vsel %vm541, %v539, 0
      %v552 = vsel %vm541, %v540, 0
      %vm554 = vcmask 1042432
      %v556 = vsel %vm554, %v513, 0
      %558 = vmatprep.subr.bf16.mxu0 0
      %559 = vmatpush1.bf16.msra.mxu0 %v556
      %560 = vmatprep.subr.bf16.mxu0 0
      %561 = vmatpush1.bf16.msra.mxu0 0
      %562 = vmatprep.subr.bf16.mxu0 0
      %563 = vmatpush1.bf16.msra.mxu0 0
      %564 = vmatprep.subr.bf16.mxu0 0
      %565 = vmatpush1.bf16.msra.mxu0 0
      %566 = vmatprep.subr.bf16.mxu0 0
      %567 = vmatpush1.bf16.msra.mxu0 0
      %568 = vmatprep.subr.bf16.mxu0 0
      %569 = vmatpush1.bf16.msra.mxu0 0
      %570 = vmatprep.subr.bf16.mxu0 0
      %571 = vmatpush1.bf16.msra.mxu0 0
      %572 = vmatprep.subr.bf16.mxu0 0
      %573 = vmatpush1.bf16.msra.mxu0 0
      %574 = vmatprep.subr.bf16.mxu0 0
      %575 = vmatpush1.bf16.msra.mxu0 0
      %576 = vmatprep.subr.bf16.mxu0 0
      %577 = vmatpush1.bf16.msra.mxu0 0
      %578 = vmatprep.subr.bf16.mxu0 0
      %579 = vmatpush1.bf16.msra.mxu0 0
      %580 = vmatprep.subr.bf16.mxu0 0
      %581 = vmatpush1.bf16.msra.mxu0 0
      %582 = vmatprep.subr.bf16.mxu0 0
      %583 = vmatpush1.bf16.msra.mxu0 0
      %584 = vmatprep.subr.bf16.mxu0 0
      %585 = vmatpush1.bf16.msra.mxu0 0
      %586 = vmatprep.subr.bf16.mxu0 0
      %587 = vmatpush1.bf16.msra.mxu0 0
      %588 = vmatprep.subr.bf16.mxu0 0
      %589 = vmatpush1.bf16.msra.mxu0 0
      %590 = vmatprep.mubr.bf16.mxu0 0
      %591 = vmatmul.mubr.bf16.gmra.mrb[0].mxu0 %v543
      %v592 = vpop.f32.mrb[0].mxu0
      %v593 = vadd.f32 %v519, %v592
      %v594 = vpop.f32.mrb[0].mxu0
      %v595 = vpop.f32.mrb[0].mxu0
      %v596 = vadd.f32 %v519, %v595
      %v597 = vpop.f32.mrb[0].mxu0
      %598 = vmatprep.mubr.bf16.mxu0 0
      %599 = vmatmul.mubr.bf16.gmra.mrb[0].mxu0 %v546
      %v600 = vpop.f32.mrb[0].mxu0
      %v601 = vadd.f32 %v519, %v600
      %v602 = vpop.f32.mrb[0].mxu0
      %v603 = vpop.f32.mrb[0].mxu0
      %v604 = vadd.f32 %v519, %v603
      %v605 = vpop.f32.mrb[0].mxu0
      %606 = vmatprep.mubr.bf16.mxu0 0
      %607 = vmatmul.mubr.bf16.gmra.mrb[0].mxu0 %v549
      %v608 = vpop.f32.mrb[0].mxu0
      %v609 = vadd.f32 %v519, %v608
      %v610 = vpop.f32.mrb[0].mxu0
      %v611 = vpop.f32.mrb[0].mxu0
      %v612 = vadd.f32 %v519, %v611
      %v613 = vpop.f32.mrb[0].mxu0
      %614 = vmatprep.mubr.bf16.mxu0 0
      %615 = vmatmul.mubr.bf16.gmra.mrb[0].mxu0 %v552
      %v616 = vpop.f32.mrb[0].mxu0
      %v617 = vadd.f32 %v519, %v616
      %v618 = vpop.f32.mrb[0].mxu0
      %v619 = vpop.f32.mrb[0].mxu0
      %v620 = vadd.f32 %v519, %v619
      %v621 = vpop.f32.mrb[0].mxu0
      %622 = vdwg.mxu0
      %v623 = vmax.f32 %v593, 0.0
      %v624 = vmax.f32 %v596, 0.0
      %v625 = vmax.f32 %v601, 0.0
      %v626 = vmax.f32 %v604, 0.0
      %v627 = vmax.f32 %v609, 0.0
      %v628 = vmax.f32 %v612, 0.0
      %v629 = vmax.f32 %v617, 0.0
      %v630 = vmax.f32 %v620, 0.0
      %v631 = vunpack.c.l.bf16 %v505
      %v632 = vunpack.c.l.bf16 %v506
      %v633 = vunpack.c.l.bf16 %v507
      %v634 = vunpack.c.l.bf16 %v508
      %v635 = vunpack.c.l.bf16 %v509
      %v636 = vunpack.c.l.bf16 %v510
      %v637 = vunpack.c.l.bf16 %v511
      %v638 = vunpack.c.l.bf16 %v512
      %v639 = vsel %vm541, %v631, 0.0
      %v640 = vsel %vm541, %v632, 0.0
      %v641 = vadd.f32 %v639, %v640
      %v642 = vsel %vm541, %v633, 0.0
      %v643 = vadd.f32 %v641, %v642
      %v644 = vsel %vm541, %v634, 0.0
      %v645 = vadd.f32 %v643, %v644
      %v646 = vsel %vm541, %v635, 0.0
      %v647 = vadd.f32 %v645, %v646
      %v648 = vsel %vm541, %v636, 0.0
      %v649 = vadd.f32 %v647, %v648
      %v650 = vsel %vm541, %v637, 0.0
      %v651 = vadd.f32 %v649, %v650
      %v652 = vsel %vm541, %v638, 0.0
      %v653 = vadd.f32 %v651, %v652
      %v654 = vrot.slane %v653, 4
      %v655 = vadd.f32 %v653, %v654
      %v656 = vrot.slane %v655, 2
      %v657 = vadd.f32 %v655, %v656
      %v658 = vrot.slane %v657, 1
      %v659 = vadd.f32 %v657, %v658
      %v660 = vmul.f32 %v659, 0.015625
      %p661 = scmp.eq.s32.totalorder %s30, 0
      // Predicated region
      $region77: #{run.2} parent=75 // pred_check
        %p662 = pneg %p661
      $region78: #{run.2} parent=75 // pred_check_branch
        %664 = sbr.rel (%p662) target = $region80
      $region79: #{run.2} parent=75 // pred_region
        %vm665 = vcmask 40960
        %666 = vst.msk [vmem:[#allocation3] sm:$0x1] %vm665, %v660
      $region80: #{run.2} parent=75 // pred_fallthru
        _
      %v667 = vld [vmem:[#allocation3] sm:$0x1]
      %v668 = vadd.f32 %v667, %v660
      %v669 = vmul.f32 %v668, 0.5
      %vm670 = vcmask 40960
      %671 = vst.msk [vmem:[#allocation3] sm:$0x1] %vm670, %v660
      %v673 = vlaneseq
      %v674 = vshrl.u32 %v673, 7
      %v675 = vsub.s32 0, %v674
      %v676 = vrot.slane %v669, %v675
      %v677 = vld [vmem:[%s9] sm:$0x3f]
      %v678 = vld [vmem:[%s10] sm:$0x1]
      %v680 = vlaneseq
      %v681 = vshrl.u32 %v680, 7
      %v682 = vsub.s32 0, %v681
      %v683 = vrot.slane %v678, %v682
      %v685 = vsel %vm541, %v676, 0
      %vm687 = vcmask 1045504
      %v689 = vsel %vm687, %v677, 0
      %691 = vmatprep.subr.mxu0 0.0
      %692 = vmatpush1.msra.mxu0 %v689
      %693 = vmatprep.subr.mxu0 0.0
      %694 = vmatpush1.msra.mxu0 0.0
      %695 = vmatprep.subr.mxu0 0.0
      %696 = vmatpush1.msra.mxu0 0.0
      %697 = vmatprep.subr.mxu0 0.0
      %698 = vmatpush1.msra.mxu0 0.0
      %699 = vmatprep.subr.mxu0 0.0
      %700 = vmatpush1.msra.mxu0 0.0
      %701 = vmatprep.subr.mxu0 0.0
      %702 = vmatpush1.msra.mxu0 0.0
      %703 = vmatprep.subr.mxu0 0.0
      %704 = vmatpush1.msra.mxu0 0.0
      %705 = vmatprep.subr.mxu0 0.0
      %706 = vmatpush1.msra.mxu0 0.0
      %707 = vmatprep.subr.mxu0 0.0
      %708 = vmatpush1.msra.mxu0 0.0
      %709 = vmatprep.subr.mxu0 0.0
      %710 = vmatpush1.msra.mxu0 0.0
      %711 = vmatprep.subr.mxu0 0.0
      %712 = vmatpush1.msra.mxu0 0.0
      %713 = vmatprep.subr.mxu0 0.0
      %714 = vmatpush1.msra.mxu0 0.0
      %715 = vmatprep.subr.mxu0 0.0
      %716 = vmatpush1.msra.mxu0 0.0
      %717 = vmatprep.subr.mxu0 0.0
      %718 = vmatpush1.msra.mxu0 0.0
      %719 = vmatprep.subr.mxu0 0.0
      %720 = vmatpush1.msra.mxu0 0.0
      %721 = vmatprep.subr.mxu0 0.0
      %722 = vmatpush1.msra.mxu0 0.0
      %723 = vmatprep.subr.mxu0 0.0
      %724 = vmatpush1.msra.mxu0 0.0
      %725 = vmatprep.subr.mxu0 0.0
      %726 = vmatpush1.msra.mxu0 0.0
      %727 = vmatprep.subr.mxu0 0.0
      %728 = vmatpush1.msra.mxu0 0.0
      %729 = vmatprep.subr.mxu0 0.0
      %730 = vmatpush1.msra.mxu0 0.0
      %731 = vmatprep.subr.mxu0 0.0
      %732 = vmatpush1.msra.mxu0 0.0
      %733 = vmatprep.subr.mxu0 0.0
      %734 = vmatpush1.msra.mxu0 0.0
      %735 = vmatprep.subr.mxu0 0.0
      %736 = vmatpush1.msra.mxu0 0.0
      %737 = vmatprep.subr.mxu0 0.0
      %738 = vmatpush1.msra.mxu0 0.0
      %739 = vmatprep.subr.mxu0 0.0
      %740 = vmatpush1.msra.mxu0 0.0
      %741 = vmatprep.subr.mxu0 0.0
      %742 = vmatpush1.msra.mxu0 0.0
      %743 = vmatprep.subr.mxu0 0.0
      %744 = vmatpush1.msra.mxu0 0.0
      %745 = vmatprep.subr.mxu0 0.0
      %746 = vmatpush1.msra.mxu0 0.0
      %747 = vmatprep.subr.mxu0 0.0
      %748 = vmatpush1.msra.mxu0 0.0
      %749 = vmatprep.subr.mxu0 0.0
      %750 = vmatpush1.msra.mxu0 0.0
      %751 = vmatprep.subr.mxu0 0.0
      %752 = vmatpush1.msra.mxu0 0.0
      %753 = vmatprep.subr.mxu0 0.0
      %754 = vmatpush1.msra.mxu0 0.0
      %755 = vmatprep.mubr.f32.mxu0 0.0
      %756 = vmatmul.mubr.f32.gmra.mrb[0].mxu0 %v685
      %v757 = vpop.f32.mrb[0].mxu0
      %v758 = vadd.f32 %v683, %v757
      %v759 = vpop.f32.mrb[0].mxu0
      %760 = vdwg.mxu0
      %v761 = vmax.f32 %v758, 0.0
      %v762 = vld [vmem:[%s11] sm:$0x3]
      %vm763 = vcmask 15360
      %v765 = vsel %vm763, %v761, 0
      %vm767 = vcmask 1041408
      %v769 = vsel %vm767, %v762, 0
      %771 = vmatprep.subr.mxu0 0.0
      %772 = vmatpush1.msra.mxu0 %v769
      %773 = vmatprep.subr.mxu0 0.0
      %774 = vmatpush1.msra.mxu0 0.0
      %775 = vmatprep.subr.mxu0 0.0
      %776 = vmatpush1.msra.mxu0 0.0
      %777 = vmatprep.subr.mxu0 0.0
      %778 = vmatpush1.msra.mxu0 0.0
      %779 = vmatprep.subr.mxu0 0.0
      %780 = vmatpush1.msra.mxu0 0.0
      %781 = vmatprep.subr.mxu0 0.0
      %782 = vmatpush1.msra.mxu0 0.0
      %783 = vmatprep.subr.mxu0 0.0
      %784 = vmatpush1.msra.mxu0 0.0
      %785 = vmatprep.subr.mxu0 0.0
      %786 = vmatpush1.msra.mxu0 0.0
      %787 = vmatprep.subr.mxu0 0.0
      %788 = vmatpush1.msra.mxu0 0.0
      %789 = vmatprep.subr.mxu0 0.0
      %790 = vmatpush1.msra.mxu0 0.0
      %791 = vmatprep.subr.mxu0 0.0
      %792 = vmatpush1.msra.mxu0 0.0
      %793 = vmatprep.subr.mxu0 0.0
      %794 = vmatpush1.msra.mxu0 0.0
      %795 = vmatprep.subr.mxu0 0.0
      %796 = vmatpush1.msra.mxu0 0.0
      %797 = vmatprep.subr.mxu0 0.0
      %798 = vmatpush1.msra.mxu0 0.0
      %799 = vmatprep.subr.mxu0 0.0
      %800 = vmatpush1.msra.mxu0 0.0
      %801 = vmatprep.subr.mxu0 0.0
      %802 = vmatpush1.msra.mxu0 0.0
      %803 = vmatprep.subr.mxu0 0.0
      %804 = vmatpush1.msra.mxu0 0.0
      %805 = vmatprep.subr.mxu0 0.0
      %806 = vmatpush1.msra.mxu0 0.0
      %807 = vmatprep.subr.mxu0 0.0
      %808 = vmatpush1.msra.mxu0 0.0
      %809 = vmatprep.subr.mxu0 0.0
      %810 = vmatpush1.msra.mxu0 0.0
      %811 = vmatprep.subr.mxu0 0.0
      %812 = vmatpush1.msra.mxu0 0.0
      %813 = vmatprep.subr.mxu0 0.0
      %814 = vmatpush1.msra.mxu0 0.0
      %815 = vmatprep.subr.mxu0 0.0
      %816 = vmatpush1.msra.mxu0 0.0
      %817 = vmatprep.subr.mxu0 0.0
      %818 = vmatpush1.msra.mxu0 0.0
      %819 = vmatprep.subr.mxu0 0.0
      %820 = vmatpush1.msra.mxu0 0.0
      %821 = vmatprep.subr.mxu0 0.0
      %822 = vmatpush1.msra.mxu0 0.0
      %823 = vmatprep.subr.mxu0 0.0
      %824 = vmatpush1.msra.mxu0 0.0
      %825 = vmatprep.subr.mxu0 0.0
      %826 = vmatpush1.msra.mxu0 0.0
      %827 = vmatprep.subr.mxu0 0.0
      %828 = vmatpush1.msra.mxu0 0.0
      %829 = vmatprep.subr.mxu0 0.0
      %830 = vmatpush1.msra.mxu0 0.0
      %831 = vmatprep.subr.mxu0 0.0
      %832 = vmatpush1.msra.mxu0 0.0
      %833 = vmatprep.subr.mxu0 0.0
      %834 = vmatpush1.msra.mxu0 0.0
      %835 = vmatprep.mubr.f32.mxu0 0.0
      %836 = vmatmul.mubr.f32.gmra.mrb[0].mxu0 %v765
      %v837 = vpop.f32.mrb[0].mxu0
      %v838 = vadd.f32 0.0, %v837
      %v839 = vpop.f32.mrb[0].mxu0
      %840 = vdwg.mxu0
      // Predicated region
      $region81: #{run.2} parent=75 // pred_check
        %p841 = pneg %p661
      $region82: #{run.2} parent=75 // pred_check_branch
        %843 = sbr.rel (%p841) target = $region84
      $region83: #{run.2} parent=75 // pred_region
        %vm844 = vcmask 44032
        %845 = vst.msk [vmem:[#allocation2] sm:$0xf] %vm844, 0
        %846 = vst.msk [vmem:[#allocation2 + $0x4] sm:$0x1] %vm670, 0
        %847 = vst.msk [vmem:[#allocation2 + $0x8] sm:$0xf] %vm844, 0
        %848 = vst.msk [vmem:[#allocation2 + $0xc] sm:$0x1] %vm670, 0
        %849 = vst.msk [vmem:[#allocation2 + $0x10] sm:$0xf] %vm844, 0
        %850 = vst.msk [vmem:[#allocation2 + $0x14] sm:$0x1] %vm670, 0
        %851 = vst.msk [vmem:[#allocation2 + $0x18] sm:$0xf] %vm844, 0
        %852 = vst.msk [vmem:[#allocation2 + $0x1c] sm:$0x1] %vm670, 0
        %853 = vst.msk [vmem:[#allocation2 + $0x20] sm:$0xf] %vm844, 0
        %854 = vst.msk [vmem:[#allocation2 + $0x24] sm:$0x1] %vm670, 0
        %855 = vst.msk [vmem:[#allocation2 + $0x28] sm:$0xf] %vm844, 0
        %856 = vst.msk [vmem:[#allocation2 + $0x2c] sm:$0x1] %vm670, 0
        %857 = vst.msk [vmem:[#allocation2 + $0x30] sm:$0xf] %vm844, 0
        %858 = vst.msk [vmem:[#allocation2 + $0x34] sm:$0x1] %vm670, 0
        %859 = vst.msk [vmem:[#allocation2 + $0x38] sm:$0xf] %vm844, 0
        %860 = vst.msk [vmem:[#allocation2 + $0x3c] sm:$0x1] %vm670, 0
        %861 = vst.msk [vmem:[#allocation2 + $0x40] sm:$0xf] %vm844, 0
        %862 = vst.msk [vmem:[#allocation2 + $0x44] sm:$0x1] %vm670, 0
        %863 = vst.msk [vmem:[#allocation2 + $0x48] sm:$0xf] %vm844, 0
        %864 = vst.msk [vmem:[#allocation2 + $0x4c] sm:$0x1] %vm670, 0
        %865 = vst.msk [vmem:[#allocation2 + $0x50] sm:$0xf] %vm844, 0
        %866 = vst.msk [vmem:[#allocation2 + $0x54] sm:$0x1] %vm670, 0
        %867 = vst.msk [vmem:[#allocation2 + $0x58] sm:$0xf] %vm844, 0
        %868 = vst.msk [vmem:[#allocation2 + $0x5c] sm:$0x1] %vm670, 0
        %869 = vst.msk [vmem:[#allocation2 + $0x60] sm:$0xf] %vm844, 0
        %870 = vst.msk [vmem:[#allocation2 + $0x64] sm:$0x1] %vm670, 0
        %871 = vst.msk [vmem:[#allocation2 + $0x68] sm:$0xf] %vm844, 0
        %872 = vst.msk [vmem:[#allocation2 + $0x6c] sm:$0x1] %vm670, 0
        %873 = vst.msk [vmem:[#allocation2 + $0x70] sm:$0xf] %vm844, 0
        %874 = vst.msk [vmem:[#allocation2 + $0x74] sm:$0x1] %vm670, 0
        %875 = vst.msk [vmem:[#allocation2 + $0x78] sm:$0xf] %vm844, 0
        %876 = vst.msk [vmem:[#allocation2 + $0x7c] sm:$0x1] %vm670, 0
        %877 = vst.msk [vmem:[#allocation2 + $0x80] sm:$0xf] %vm844, 0
        %878 = vst.msk [vmem:[#allocation2 + $0x84] sm:$0x1] %vm670, 0
        %879 = vst.msk [vmem:[#allocation2 + $0x88] sm:$0xf] %vm844, 0
        %880 = vst.msk [vmem:[#allocation2 + $0x8c] sm:$0x1] %vm670, 0
        %881 = vst.msk [vmem:[#allocation2 + $0x90] sm:$0xf] %vm844, 0
        %882 = vst.msk [vmem:[#allocation2 + $0x94] sm:$0x1] %vm670, 0
        %883 = vst.msk [vmem:[#allocation2 + $0x98] sm:$0xf] %vm844, 0
        %884 = vst.msk [vmem:[#allocation2 + $0x9c] sm:$0x1] %vm670, 0
      $region84: #{run.2} parent=75 // pred_fallthru
        _
      %p885 = scmp.lt.s32.totalorder %s30, 0
      %s886 = ssub.s32 0, %s30
      %s887 = scalar_select %p885, %s886, %s30
      %s888 = sand.u32 %s887, 1
      %s889 = ssub.s32 0, %s888
      %s890 = scalar_select %p885, %s889, %s888
      %p891 = scmp.ne.s32.totalorder %s890, 0
      %p892 = scmp.lt.s32.totalorder %s890, 0
      %p893 = pnand %p892, %p891
      %p894 = pneg %p893
      %s895 = sadd.s32 %s890, 2
      %s896 = scalar_select %p894, %s895, %s890
      %s897 = ssub.s32 1, %s896
      %v898 = vpack.c.bf16 %v624, %v623
      %v899 = vpack.c.bf16 %v626, %v625
      %v900 = vpack.c.bf16 %v628, %v627
      %v901 = vpack.c.bf16 %v630, %v629
      %v906 = vunpack.c.l.b16 %v898
      %v907 = vunpack.c.h.b16 %v898
      %v908 = vunpack.c.l.b16 %v899
      %v909 = vunpack.c.h.b16 %v899
      %v910 = vunpack.c.l.b16 %v900
      %v911 = vunpack.c.h.b16 %v900
      %v912 = vunpack.c.l.b16 %v901
      %v913 = vunpack.c.h.b16 %v901
      %v914 = vpack.c.b16 %v906, %v906
      %v915 = vpack.c.b16 %v907, %v907
      %v916 = vpack.c.b16 %v908, %v908
      %v917 = vpack.c.b16 %v909, %v909
      %v918 = vpack.c.b16 %v910, %v910
      %v919 = vpack.c.b16 %v911, %v911
      %v920 = vpack.c.b16 %v912, %v912
      %v921 = vpack.c.b16 %v913, %v913
      %v923 = vshrl.u32 %v914, 16
      %v925 = vrot.slane %v923, 7
      %v926 = vshll.u32 %v914, 16
      %v928 = vor.u32 %v925, %v926
      %v929 = vrot.slane %v925, 4
      %v931 = vshrl.u32 %v915, 16
      %v933 = vrot.slane %v931, 7
      %v934 = vshll.u32 %v915, 16
      %v936 = vor.u32 %v933, %v934
      %v937 = vrot.slane %v933, 4
      %v939 = vshrl.u32 %v916, 16
      %v941 = vrot.slane %v939, 7
      %v942 = vshll.u32 %v916, 16
      %v944 = vor.u32 %v941, %v942
      %v945 = vrot.slane %v941, 4
      %v947 = vshrl.u32 %v917, 16
      %v949 = vrot.slane %v947, 7
      %v950 = vshll.u32 %v917, 16
      %v952 = vor.u32 %v949, %v950
      %v953 = vrot.slane %v949, 4
      %v955 = vshrl.u32 %v918, 16
      %v957 = vrot.slane %v955, 7
      %v958 = vshll.u32 %v918, 16
      %v960 = vor.u32 %v957, %v958
      %v961 = vrot.slane %v957, 4
      %v963 = vshrl.u32 %v919, 16
      %v965 = vrot.slane %v963, 7
      %v966 = vshll.u32 %v919, 16
      %v968 = vor.u32 %v965, %v966
      %v969 = vrot.slane %v965, 4
      %v971 = vshrl.u32 %v920, 16
      %v973 = vrot.slane %v971, 7
      %v974 = vshll.u32 %v920, 16
      %v976 = vor.u32 %v973, %v974
      %v977 = vrot.slane %v973, 4
      %v979 = vshrl.u32 %v921, 16
      %v981 = vrot.slane %v979, 7
      %v982 = vshll.u32 %v921, 16
      %v984 = vor.u32 %v981, %v982
      %v985 = vrot.slane %v981, 4
      %s1002 = smul.u32 %s896, 20
      %s1003 = sadd.s32 2, %s1002
      %s1004 = smul.addr %s1003, 4
      %s1005 = scalar_lea.vmem [#allocation2], %s1004
      %vm1006 = vcmask 44032
      %vm1007 = vsmask.f32 7938
      %vm1008 = vmand %vm1006, %vm1007
      %v1009 = vld [vmem:[%s1005] sm:$0xf]
      %v1010 = vsel %vm1008, %v928, %v1009
      %1011 = vst [vmem:[%s1005] sm:$0xf] %v1010
      %vm1012 = vcmask 40960
      %vm1013 = vsmask.f32 256
      %vm1014 = vmand %vm1012, %vm1013
      %v1015 = vld [vmem:[%s1005 + $0x4] sm:$0x1]
      %v1016 = vsel %vm1014, %v929, %v1015
      %1017 = vst [vmem:[%s1005 + $0x4] sm:$0x1] %v1016
      %v1018 = vld [vmem:[%s1005 + $0x8] sm:$0xf]
      %v1019 = vsel %vm1008, %v936, %v1018
      %1020 = vst [vmem:[%s1005 + $0x8] sm:$0xf] %v1019
      %v1021 = vld [vmem:[%s1005 + $0xc] sm:$0x1]
      %v1022 = vsel %vm1014, %v937, %v1021
      %1023 = vst [vmem:[%s1005 + $0xc] sm:$0x1] %v1022
      %v1024 = vld [vmem:[%s1005 + $0x10] sm:$0xf]
      %v1025 = vsel %vm1008, %v944, %v1024
      %1026 = vst [vmem:[%s1005 + $0x10] sm:$0xf] %v1025
      %v1027 = vld [vmem:[%s1005 + $0x14] sm:$0x1]
      %v1028 = vsel %vm1014, %v945, %v1027
      %1029 = vst [vmem:[%s1005 + $0x14] sm:$0x1] %v1028
      %v1030 = vld [vmem:[%s1005 + $0x18] sm:$0xf]
      %v1031 = vsel %vm1008, %v952, %v1030
      %1032 = vst [vmem:[%s1005 + $0x18] sm:$0xf] %v1031
      %v1033 = vld [vmem:[%s1005 + $0x1c] sm:$0x1]
      %v1034 = vsel %vm1014, %v953, %v1033
      %1035 = vst [vmem:[%s1005 + $0x1c] sm:$0x1] %v1034
      %v1036 = vld [vmem:[%s1005 + $0x20] sm:$0xf]
      %v1037 = vsel %vm1008, %v960, %v1036
      %1038 = vst [vmem:[%s1005 + $0x20] sm:$0xf] %v1037
      %v1039 = vld [vmem:[%s1005 + $0x24] sm:$0x1]
      %v1040 = vsel %vm1014, %v961, %v1039
      %1041 = vst [vmem:[%s1005 + $0x24] sm:$0x1] %v1040
      %v1042 = vld [vmem:[%s1005 + $0x28] sm:$0xf]
      %v1043 = vsel %vm1008, %v968, %v1042
      %1044 = vst [vmem:[%s1005 + $0x28] sm:$0xf] %v1043
      %v1045 = vld [vmem:[%s1005 + $0x2c] sm:$0x1]
      %v1046 = vsel %vm1014, %v969, %v1045
      %1047 = vst [vmem:[%s1005 + $0x2c] sm:$0x1] %v1046
      %v1048 = vld [vmem:[%s1005 + $0x30] sm:$0xf]
      %v1049 = vsel %vm1008, %v976, %v1048
      %1050 = vst [vmem:[%s1005 + $0x30] sm:$0xf] %v1049
      %v1051 = vld [vmem:[%s1005 + $0x34] sm:$0x1]
      %v1052 = vsel %vm1014, %v977, %v1051
      %1053 = vst [vmem:[%s1005 + $0x34] sm:$0x1] %v1052
      %v1054 = vld [vmem:[%s1005 + $0x38] sm:$0xf]
      %v1055 = vsel %vm1008, %v984, %v1054
      %1056 = vst [vmem:[%s1005 + $0x38] sm:$0xf] %v1055
      %v1057 = vld [vmem:[%s1005 + $0x3c] sm:$0x1]
      %v1058 = vsel %vm1014, %v985, %v1057
      %1059 = vst [vmem:[%s1005 + $0x3c] sm:$0x1] %v1058
      %s1060 = smul.u32 %s897, 20
      %s1061 = smul.addr %s1060, 4
      %s1062 = scalar_lea.vmem [#allocation2], %s1061
      %v1063 = vld [vmem:[%s1062] sm:$0xf]
      %v1064 = vld [vmem:[%s1062 + $0x8] sm:$0xf]
      %v1065 = vld [vmem:[%s1062 + $0x10] sm:$0xf]
      %v1066 = vld [vmem:[%s1062 + $0x18] sm:$0xf]
      %v1067 = vld [vmem:[%s1062 + $0x20] sm:$0xf]
      %v1068 = vld [vmem:[%s1062 + $0x28] sm:$0xf]
      %v1069 = vld [vmem:[%s1062 + $0x30] sm:$0xf]
      %v1070 = vld [vmem:[%s1062 + $0x38] sm:$0xf]
      %v1071 = vld [vmem:[%s3] sm:$0x3]
      %s1072 = smul.addr %s1002, 4
      %s1073 = scalar_lea.vmem [#allocation2], %s1072
      %v1074 = vld [vmem:[%s1073] sm:$0xf]
      %v1075 = vld [vmem:[%s1073 + $0x8] sm:$0xf]
      %v1076 = vld [vmem:[%s1073 + $0x10] sm:$0xf]
      %v1077 = vld [vmem:[%s1073 + $0x18] sm:$0xf]
      %v1078 = vld [vmem:[%s1073 + $0x20] sm:$0xf]
      %v1079 = vld [vmem:[%s1073 + $0x28] sm:$0xf]
      %v1080 = vld [vmem:[%s1073 + $0x30] sm:$0xf]
      %v1081 = vld [vmem:[%s1073 + $0x38] sm:$0xf]
      %v1082 = vld [vmem:[%s4] sm:$0x7]
      %v1091 = vunpack.c.l.b16 %v1074
      %v1092 = vunpack.c.l.b16 %v1075
      %v1093 = vunpack.c.l.b16 %v1076
      %v1094 = vunpack.c.l.b16 %v1077
      %v1095 = vunpack.c.l.b16 %v1078
      %v1096 = vunpack.c.l.b16 %v1079
      %v1097 = vunpack.c.l.b16 %v1080
      %v1098 = vunpack.c.l.b16 %v1081
      %v1099 = vpack.c.b16 %v1092, %v1091
      %v1100 = vpack.c.b16 %v1094, %v1093
      %v1101 = vpack.c.b16 %v1096, %v1095
      %v1102 = vpack.c.b16 %v1098, %v1097
      %v1104 = vsel %vm541, %v1099, 0
      %v1107 = vsel %vm541, %v1100, 0
      %v1110 = vsel %vm541, %v1101, 0
      %v1113 = vsel %vm541, %v1102, 0
      %v1116 = vsel %vm554, %v1082, 0
      %1118 = vmatprep.subr.bf16.mxu0 0
      %1119 = vmatpush1.bf16.msra.mxu0 %v1116
      %1120 = vmatprep.subr.bf16.mxu0 0
      %1121 = vmatpush1.bf16.msra.mxu0 0
      %1122 = vmatprep.subr.bf16.mxu0 0
      %1123 = vmatpush1.bf16.msra.mxu0 0
      %1124 = vmatprep.subr.bf16.mxu0 0
      %1125 = vmatpush1.bf16.msra.mxu0 0
      %1126 = vmatprep.subr.bf16.mxu0 0
      %1127 = vmatpush1.bf16.msra.mxu0 0
      %1128 = vmatprep.subr.bf16.mxu0 0
      %1129 = vmatpush1.bf16.msra.mxu0 0
      %1130 = vmatprep.subr.bf16.mxu0 0
      %1131 = vmatpush1.bf16.msra.mxu0 0
      %1132 = vmatprep.subr.bf16.mxu0 0
      %1133 = vmatpush1.bf16.msra.mxu0 0
      %1134 = vmatprep.subr.bf16.mxu0 0
      %1135 = vmatpush1.bf16.msra.mxu0 0
      %1136 = vmatprep.subr.bf16.mxu0 0
      %1137 = vmatpush1.bf16.msra.mxu0 0
      %1138 = vmatprep.subr.bf16.mxu0 0
      %1139 = vmatpush1.bf16.msra.mxu0 0
      %1140 = vmatprep.subr.bf16.mxu0 0
      %1141 = vmatpush1.bf16.msra.mxu0 0
      %1142 = vmatprep.subr.bf16.mxu0 0
      %1143 = vmatpush1.bf16.msra.mxu0 0
      %1144 = vmatprep.subr.bf16.mxu0 0
      %1145 = vmatpush1.bf16.msra.mxu0 0
      %1146 = vmatprep.subr.bf16.mxu0 0
      %1147 = vmatpush1.bf16.msra.mxu0 0
      %1148 = vmatprep.subr.bf16.mxu0 0
      %1149 = vmatpush1.bf16.msra.mxu0 0
      %1150 = vmatprep.mubr.bf16.mxu0 0
      %1151 = vmatmul.mubr.bf16.gmra.mrb[0].mxu0 %v1104
      %v1152 = vpop.f32.mrb[0].mxu0
      %v1153 = vadd.f32 0.0, %v1152
      %v1154 = vpop.f32.mrb[0].mxu0
      %v1155 = vpop.f32.mrb[0].mxu0
      %v1156 = vadd.f32 0.0, %v1155
      %v1157 = vpop.f32.mrb[0].mxu0
      %1158 = vmatprep.mubr.bf16.mxu0 0
      %1159 = vmatmul.mubr.bf16.gmra.mrb[0].mxu0 %v1107
      %v1160 = vpop.f32.mrb[0].mxu0
      %v1161 = vadd.f32 0.0, %v1160
      %v1162 = vpop.f32.mrb[0].mxu0
      %v1163 = vpop.f32.mrb[0].mxu0
      %v1164 = vadd.f32 0.0, %v1163
      %v1165 = vpop.f32.mrb[0].mxu0
      %1166 = vmatprep.mubr.bf16.mxu0 0
      %1167 = vmatmul.mubr.bf16.gmra.mrb[0].mxu0 %v1110
      %v1168 = vpop.f32.mrb[0].mxu0
      %v1169 = vadd.f32 0.0, %v1168
      %v1170 = vpop.f32.mrb[0].mxu0
      %v1171 = vpop.f32.mrb[0].mxu0
      %v1172 = vadd.f32 0.0, %v1171
      %v1173 = vpop.f32.mrb[0].mxu0
      %1174 = vmatprep.mubr.bf16.mxu0 0
      %1175 = vmatmul.mubr.bf16.gmra.mrb[0].mxu0 %v1113
      %v1176 = vpop.f32.mrb[0].mxu0
      %v1177 = vadd.f32 0.0, %v1176
      %v1178 = vpop.f32.mrb[0].mxu0
      %v1179 = vpop.f32.mrb[0].mxu0
      %v1180 = vadd.f32 0.0, %v1179
      %v1181 = vpop.f32.mrb[0].mxu0
      %1182 = vdwg.mxu0
      %v1191 = vunpack.c.l.b16 %v1063
      %v1192 = vunpack.c.l.b16 %v1064
      %v1193 = vunpack.c.l.b16 %v1065
      %v1194 = vunpack.c.l.b16 %v1066
      %v1195 = vunpack.c.l.b16 %v1067
      %v1196 = vunpack.c.l.b16 %v1068
      %v1197 = vunpack.c.l.b16 %v1069
      %v1198 = vunpack.c.l.b16 %v1070
      %v1199 = vpack.c.b16 %v1192, %v1191
      %v1200 = vpack.c.b16 %v1194, %v1193
      %v1201 = vpack.c.b16 %v1196, %v1195
      %v1202 = vpack.c.b16 %v1198, %v1197
      %vm1203 = vcmask 23552
      %v1205 = vsel %vm1203, %v1199, 0
      %v1208 = vsel %vm1203, %v1200, 0
      %v1211 = vsel %vm1203, %v1201, 0
      %v1214 = vsel %vm1203, %v1202, 0
      %vm1216 = vcmask 1040384
      %v1217 = vsel %vm1216, 4294967295, 65535
      %v1218 = vsel %vm767, %v1217, 0
      %v1220 = vand.u32 %v1071, %v1218
      %1222 = vmatprep.subr.bf16.mxu0 0
      %1223 = vmatpush1.bf16.msra.mxu0 %v1220
      %1224 = vmatprep.subr.bf16.mxu0 0
      %1225 = vmatpush1.bf16.msra.mxu0 0
      %1226 = vmatprep.subr.bf16.mxu0 0
      %1227 = vmatpush1.bf16.msra.mxu0 0
      %1228 = vmatprep.subr.bf16.mxu0 0
      %1229 = vmatpush1.bf16.msra.mxu0 0
      %1230 = vmatprep.subr.bf16.mxu0 0
      %1231 = vmatpush1.bf16.msra.mxu0 0
      %1232 = vmatprep.subr.bf16.mxu0 0
      %1233 = vmatpush1.bf16.msra.mxu0 0
      %1234 = vmatprep.subr.bf16.mxu0 0
      %1235 = vmatpush1.bf16.msra.mxu0 0
      %1236 = vmatprep.subr.bf16.mxu0 0
      %1237 = vmatpush1.bf16.msra.mxu0 0
      %1238 = vmatprep.subr.bf16.mxu0 0
      %1239 = vmatpush1.bf16.msra.mxu0 0
      %1240 = vmatprep.subr.bf16.mxu0 0
      %1241 = vmatpush1.bf16.msra.mxu0 0
      %1242 = vmatprep.subr.bf16.mxu0 0
      %1243 = vmatpush1.bf16.msra.mxu0 0
      %1244 = vmatprep.subr.bf16.mxu0 0
      %1245 = vmatpush1.bf16.msra.mxu0 0
      %1246 = vmatprep.subr.bf16.mxu0 0
      %1247 = vmatpush1.bf16.msra.mxu0 0
      %1248 = vmatprep.subr.bf16.mxu0 0
      %1249 = vmatpush1.bf16.msra.mxu0 0
      %1250 = vmatprep.subr.bf16.mxu0 0
      %1251 = vmatpush1.bf16.msra.mxu0 0
      %1252 = vmatprep.subr.bf16.mxu0 0
      %1253 = vmatpush1.bf16.msra.mxu0 0
      %1254 = vmatprep.mubr.bf16.mxu0 0
      %1255 = vmatmul.mubr.bf16.gmra.mrb[0].mxu0 %v1205
      %v1256 = vpop.f32.mrb[0].mxu0
      %v1257 = vadd.f32 %v1153, %v1256
      %v1258 = vpop.f32.mrb[0].mxu0
      %v1259 = vpop.f32.mrb[0].mxu0
      %v1260 = vadd.f32 %v1156, %v1259
      %v1261 = vpop.f32.mrb[0].mxu0
      %1262 = vmatprep.mubr.bf16.mxu0 0
      %1263 = vmatmul.mubr.bf16.gmra.mrb[0].mxu0 %v1208
      %v1264 = vpop.f32.mrb[0].mxu0
      %v1265 = vadd.f32 %v1161, %v1264
      %v1266 = vpop.f32.mrb[0].mxu0
      %v1267 = vpop.f32.mrb[0].mxu0
      %v1268 = vadd.f32 %v1164, %v1267
      %v1269 = vpop.f32.mrb[0].mxu0
      %1270 = vmatprep.mubr.bf16.mxu0 0
      %1271 = vmatmul.mubr.bf16.gmra.mrb[0].mxu0 %v1211
      %v1272 = vpop.f32.mrb[0].mxu0
      %v1273 = vadd.f32 %v1169, %v1272
      %v1274 = vpop.f32.mrb[0].mxu0
      %v1275 = vpop.f32.mrb[0].mxu0
      %v1276 = vadd.f32 %v1172, %v1275
      %v1277 = vpop.f32.mrb[0].mxu0
      %1278 = vmatprep.mubr.bf16.mxu0 0
      %1279 = vmatmul.mubr.bf16.gmra.mrb[0].mxu0 %v1214
      %v1280 = vpop.f32.mrb[0].mxu0
      %v1281 = vadd.f32 %v1177, %v1280
      %v1282 = vpop.f32.mrb[0].mxu0
      %v1283 = vpop.f32.mrb[0].mxu0
      %v1284 = vadd.f32 %v1180, %v1283
      %v1285 = vpop.f32.mrb[0].mxu0
      %1286 = vdwg.mxu0
      %v1287 = vld [vmem:[%s1062] sm:$0xf]
      %v1288 = vld [vmem:[%s1062 + $0x4] sm:$0x1]
      %v1289 = vld [vmem:[%s1062 + $0x8] sm:$0xf]
      %v1290 = vld [vmem:[%s1062 + $0xc] sm:$0x1]
      %v1291 = vld [vmem:[%s1062 + $0x10] sm:$0xf]
      %v1292 = vld [vmem:[%s1062 + $0x14] sm:$0x1]
      %v1293 = vld [vmem:[%s1062 + $0x18] sm:$0xf]
      %v1294 = vld [vmem:[%s1062 + $0x1c] sm:$0x1]
      %v1295 = vld [vmem:[%s1062 + $0x20] sm:$0xf]
      %v1296 = vld [vmem:[%s1062 + $0x24] sm:$0x1]
      %v1297 = vld [vmem:[%s1062 + $0x28] sm:$0xf]
      %v1298 = vld [vmem:[%s1062 + $0x2c] sm:$0x1]
      %v1299 = vld [vmem:[%s1062 + $0x30] sm:$0xf]
      %v1300 = vld [vmem:[%s1062 + $0x34] sm:$0x1]
      %v1301 = vld [vmem:[%s1062 + $0x38] sm:$0xf]
      %v1302 = vld [vmem:[%s1062 + $0x3c] sm:$0x1]
      %vm1303 = vsmask.f32 3328
      %vm1304 = vsmask.f32 7440
      %vm1305 = vmor %vm1303, %vm1304
      %v1307 = vshrl.u32 %v1287, 16
      %v1309 = vrot.slane %v1307, 4
      %v1310 = vshll.u32 %v1287, 16
      %v1312 = vrot.slane %v1310, 5
      %v1313 = vor.u32 %v1309, %v1312
      %v1314 = vrot.slane %v1313, 4
      %v1316 = vshll.u32 %v1288, 16
      %v1318 = vrot.slane %v1316, 5
      %v1319 = vsel %vm1305, %v1314, %v1318
      %v1321 = vshrl.u32 %v1289, 16
      %v1323 = vrot.slane %v1321, 4
      %v1324 = vshll.u32 %v1289, 16
      %v1326 = vrot.slane %v1324, 5
      %v1327 = vor.u32 %v1323, %v1326
      %v1328 = vrot.slane %v1327, 4
      %v1330 = vshll.u32 %v1290, 16
      %v1332 = vrot.slane %v1330, 5
      %v1333 = vsel %vm1305, %v1328, %v1332
      %v1335 = vshrl.u32 %v1291, 16
      %v1337 = vrot.slane %v1335, 4
      %v1338 = vshll.u32 %v1291, 16
      %v1340 = vrot.slane %v1338, 5
      %v1341 = vor.u32 %v1337, %v1340
      %v1342 = vrot.slane %v1341, 4
      %v1344 = vshll.u32 %v1292, 16
      %v1346 = vrot.slane %v1344, 5
      %v1347 = vsel %vm1305, %v1342, %v1346
      %v1349 = vshrl.u32 %v1293, 16
      %v1351 = vrot.slane %v1349, 4
      %v1352 = vshll.u32 %v1293, 16
      %v1354 = vrot.slane %v1352, 5
      %v1355 = vor.u32 %v1351, %v1354
      %v1356 = vrot.slane %v1355, 4
      %v1358 = vshll.u32 %v1294, 16
      %v1360 = vrot.slane %v1358, 5
      %v1361 = vsel %vm1305, %v1356, %v1360
      %v1363 = vshrl.u32 %v1295, 16
      %v1365 = vrot.slane %v1363, 4
      %v1366 = vshll.u32 %v1295, 16
      %v1368 = vrot.slane %v1366, 5
      %v1369 = vor.u32 %v1365, %v1368
      %v1370 = vrot.slane %v1369, 4
      %v1372 = vshll.u32 %v1296, 16
      %v1374 = vrot.slane %v1372, 5
      %v1375 = vsel %vm1305, %v1370, %v1374
      %v1377 = vshrl.u32 %v1297, 16
      %v1379 = vrot.slane %v1377, 4
      %v1380 = vshll.u32 %v1297, 16
      %v1382 = vrot.slane %v1380, 5
      %v1383 = vor.u32 %v1379, %v1382
      %v1384 = vrot.slane %v1383, 4
      %v1386 = vshll.u32 %v1298, 16
      %v1388 = vrot.slane %v1386, 5
      %v1389 = vsel %vm1305, %v1384, %v1388
      %v1391 = vshrl.u32 %v1299, 16
      %v1393 = vrot.slane %v1391, 4
      %v1394 = vshll.u32 %v1299, 16
      %v1396 = vrot.slane %v1394, 5
      %v1397 = vor.u32 %v1393, %v1396
      %v1398 = vrot.slane %v1397, 4
      %v1400 = vshll.u32 %v1300, 16
      %v1402 = vrot.slane %v1400, 5
      %v1403 = vsel %vm1305, %v1398, %v1402
      %v1405 = vshrl.u32 %v1301, 16
      %v1407 = vrot.slane %v1405, 4
      %v1408 = vshll.u32 %v1301, 16
      %v1410 = vrot.slane %v1408, 5
      %v1411 = vor.u32 %v1407, %v1410
      %v1412 = vrot.slane %v1411, 4
      %v1414 = vshll.u32 %v1302, 16
      %v1416 = vrot.slane %v1414, 5
      %v1417 = vsel %vm1305, %v1412, %v1416
      %s1418 = scalar_lea.vmem %s3, 2
      %v1419 = vld [vmem:[%s1418] sm:$0x3]
      %v1420 = vunpack.c.l.b16 %v1319
      %v1421 = vunpack.c.l.b16 %v1333
      %v1422 = vunpack.c.l.b16 %v1347
      %v1423 = vunpack.c.l.b16 %v1361
      %v1424 = vunpack.c.l.b16 %v1375
      %v1425 = vunpack.c.l.b16 %v1389
      %v1426 = vunpack.c.l.b16 %v1403
      %v1427 = vunpack.c.l.b16 %v1417
      %v1428 = vpack.c.b16 %v1421, %v1420
      %v1429 = vpack.c.b16 %v1423, %v1422
      %v1430 = vpack.c.b16 %v1425, %v1424
      %v1431 = vpack.c.b16 %v1427, %v1426
      %v1433 = vsel %vm1203, %v1428, 0
      %v1436 = vsel %vm1203, %v1429, 0
      %v1439 = vsel %vm1203, %v1430, 0
      %v1442 = vsel %vm1203, %v1431, 0
      %v1445 = vand.u32 %v1419, %v1218
      %1447 = vmatprep.subr.bf16.mxu0 0
      %1448 = vmatpush1.bf16.msra.mxu0 %v1445
      %1449 = vmatprep.subr.bf16.mxu0 0
      %1450 = vmatpush1.bf16.msra.mxu0 0
      %1451 = vmatprep.subr.bf16.mxu0 0
      %1452 = vmatpush1.bf16.msra.mxu0 0
      %1453 = vmatprep.subr.bf16.mxu0 0
      %1454 = vmatpush1.bf16.msra.mxu0 0
      %1455 = vmatprep.subr.bf16.mxu0 0
      %1456 = vmatpush1.bf16.msra.mxu0 0
      %1457 = vmatprep.subr.bf16.mxu0 0
      %1458 = vmatpush1.bf16.msra.mxu0 0
      %1459 = vmatprep.subr.bf16.mxu0 0
      %1460 = vmatpush1.bf16.msra.mxu0 0
      %1461 = vmatprep.subr.bf16.mxu0 0
      %1462 = vmatpush1.bf16.msra.mxu0 0
      %1463 = vmatprep.subr.bf16.mxu0 0
      %1464 = vmatpush1.bf16.msra.mxu0 0
      %1465 = vmatprep.subr.bf16.mxu0 0
      %1466 = vmatpush1.bf16.msra.mxu0 0
      %1467 = vmatprep.subr.bf16.mxu0 0
      %1468 = vmatpush1.bf16.msra.mxu0 0
      %1469 = vmatprep.subr.bf16.mxu0 0
      %1470 = vmatpush1.bf16.msra.mxu0 0
      %1471 = vmatprep.subr.bf16.mxu0 0
      %1472 = vmatpush1.bf16.msra.mxu0 0
      %1473 = vmatprep.subr.bf16.mxu0 0
      %1474 = vmatpush1.bf16.msra.mxu0 0
      %1475 = vmatprep.subr.bf16.mxu0 0
      %1476 = vmatpush1.bf16.msra.mxu0 0
      %1477 = vmatprep.subr.bf16.mxu0 0
      %1478 = vmatpush1.bf16.msra.mxu0 0
      %1479 = vmatprep.mubr.bf16.mxu0 0
      %1480 = vmatmul.mubr.bf16.gmra.mrb[0].mxu0 %v1433
      %v1481 = vpop.f32.mrb[0].mxu0
      %v1482 = vadd.f32 0.0, %v1481
      %v1483 = vpop.f32.mrb[0].mxu0
      %v1484 = vpop.f32.mrb[0].mxu0
      %v1485 = vadd.f32 0.0, %v1484
      %v1486 = vpop.f32.mrb[0].mxu0
      %1487 = vmatprep.mubr.bf16.mxu0 0
      %1488 = vmatmul.mubr.bf16.gmra.mrb[0].mxu0 %v1436
      %v1489 = vpop.f32.mrb[0].mxu0
      %v1490 = vadd.f32 0.0, %v1489
      %v1491 = vpop.f32.mrb[0].mxu0
      %v1492 = vpop.f32.mrb[0].mxu0
      %v1493 = vadd.f32 0.0, %v1492
      %v1494 = vpop.f32.mrb[0].mxu0
      %1495 = vmatprep.mubr.bf16.mxu0 0
      %1496 = vmatmul.mubr.bf16.gmra.mrb[0].mxu0 %v1439
      %v1497 = vpop.f32.mrb[0].mxu0
      %v1498 = vadd.f32 0.0, %v1497
      %v1499 = vpop.f32.mrb[0].mxu0
      %v1500 = vpop.f32.mrb[0].mxu0
      %v1501 = vadd.f32 0.0, %v1500
      %v1502 = vpop.f32.mrb[0].mxu0
      %1503 = vmatprep.mubr.bf16.mxu0 0
      %1504 = vmatmul.mubr.bf16.gmra.mrb[0].mxu0 %v1442
      %v1505 = vpop.f32.mrb[0].mxu0
      %v1506 = vadd.f32 0.0, %v1505
      %v1507 = vpop.f32.mrb[0].mxu0
      %v1508 = vpop.f32.mrb[0].mxu0
      %v1509 = vadd.f32 0.0, %v1508
      %v1510 = vpop.f32.mrb[0].mxu0
      %1511 = vdwg.mxu0
      %v1512 = vadd.f32 %v1257, %v1482
      %v1513 = vadd.f32 %v1260, %v1485
      %v1514 = vadd.f32 %v1265, %v1490
      %v1515 = vadd.f32 %v1268, %v1493
      %v1516 = vadd.f32 %v1273, %v1498
      %v1517 = vadd.f32 %v1276, %v1501
      %v1518 = vadd.f32 %v1281, %v1506
      %v1519 = vadd.f32 %v1284, %v1509
      %v1520 = vld [vmem:[%s1073] sm:$0xf]
      %v1521 = vld [vmem:[%s1073 + $0x4] sm:$0x1]
      %v1522 = vld [vmem:[%s1073 + $0x8] sm:$0xf]
      %v1523 = vld [vmem:[%s1073 + $0xc] sm:$0x1]
      %v1524 = vld [vmem:[%s1073 + $0x10] sm:$0xf]
      %v1525 = vld [vmem:[%s1073 + $0x14] sm:$0x1]
      %v1526 = vld [vmem:[%s1073 + $0x18] sm:$0xf]
      %v1527 = vld [vmem:[%s1073 + $0x1c] sm:$0x1]
      %v1528 = vld [vmem:[%s1073 + $0x20] sm:$0xf]
      %v1529 = vld [vmem:[%s1073 + $0x24] sm:$0x1]
      %v1530 = vld [vmem:[%s1073 + $0x28] sm:$0xf]
      %v1531 = vld [vmem:[%s1073 + $0x2c] sm:$0x1]
      %v1532 = vld [vmem:[%s1073 + $0x30] sm:$0xf]
      %v1533 = vld [vmem:[%s1073 + $0x34] sm:$0x1]
      %v1534 = vld [vmem:[%s1073 + $0x38] sm:$0xf]
      %v1535 = vld [vmem:[%s1073 + $0x3c] sm:$0x1]
      %v1537 = vshrl.u32 %v1520, 16
      %v1539 = vrot.slane %v1537, 4
      %v1540 = vshll.u32 %v1520, 16
      %v1542 = vrot.slane %v1540, 5
      %v1543 = vor.u32 %v1539, %v1542
      %v1544 = vrot.slane %v1543, 4
      %v1546 = vshll.u32 %v1521, 16
      %v1548 = vrot.slane %v1546, 5
      %v1549 = vsel %vm1305, %v1544, %v1548
      %v1551 = vshrl.u32 %v1522, 16
      %v1553 = vrot.slane %v1551, 4
      %v1554 = vshll.u32 %v1522, 16
      %v1556 = vrot.slane %v1554, 5
      %v1557 = vor.u32 %v1553, %v1556
      %v1558 = vrot.slane %v1557, 4
      %v1560 = vshll.u32 %v1523, 16
      %v1562 = vrot.slane %v1560, 5
      %v1563 = vsel %vm1305, %v1558, %v1562
      %v1565 = vshrl.u32 %v1524, 16
      %v1567 = vrot.slane %v1565, 4
      %v1568 = vshll.u32 %v1524, 16
      %v1570 = vrot.slane %v1568, 5
      %v1571 = vor.u32 %v1567, %v1570
      %v1572 = vrot.slane %v1571, 4
      %v1574 = vshll.u32 %v1525, 16
      %v1576 = vrot.slane %v1574, 5
      %v1577 = vsel %vm1305, %v1572, %v1576
      %v1579 = vshrl.u32 %v1526, 16
      %v1581 = vrot.slane %v1579, 4
      %v1582 = vshll.u32 %v1526, 16
      %v1584 = vrot.slane %v1582, 5
      %v1585 = vor.u32 %v1581, %v1584
      %v1586 = vrot.slane %v1585, 4
      %v1588 = vshll.u32 %v1527, 16
      %v1590 = vrot.slane %v1588, 5
      %v1591 = vsel %vm1305, %v1586, %v1590
      %v1593 = vshrl.u32 %v1528, 16
      %v1595 = vrot.slane %v1593, 4
      %v1596 = vshll.u32 %v1528, 16
      %v1598 = vrot.slane %v1596, 5
      %v1599 = vor.u32 %v1595, %v1598
      %v1600 = vrot.slane %v1599, 4
      %v1602 = vshll.u32 %v1529, 16
      %v1604 = vrot.slane %v1602, 5
      %v1605 = vsel %vm1305, %v1600, %v1604
      %v1607 = vshrl.u32 %v1530, 16
      %v1609 = vrot.slane %v1607, 4
      %v1610 = vshll.u32 %v1530, 16
      %v1612 = vrot.slane %v1610, 5
      %v1613 = vor.u32 %v1609, %v1612
      %v1614 = vrot.slane %v1613, 4
      %v1616 = vshll.u32 %v1531, 16
      %v1618 = vrot.slane %v1616, 5
      %v1619 = vsel %vm1305, %v1614, %v1618
      %v1621 = vshrl.u32 %v1532, 16
      %v1623 = vrot.slane %v1621, 4
      %v1624 = vshll.u32 %v1532, 16
      %v1626 = vrot.slane %v1624, 5
      %v1627 = vor.u32 %v1623, %v1626
      %v1628 = vrot.slane %v1627, 4
      %v1630 = vshll.u32 %v1533, 16
      %v1632 = vrot.slane %v1630, 5
      %v1633 = vsel %vm1305, %v1628, %v1632
      %v1635 = vshrl.u32 %v1534, 16
      %v1637 = vrot.slane %v1635, 4
      %v1638 = vshll.u32 %v1534, 16
      %v1640 = vrot.slane %v1638, 5
      %v1641 = vor.u32 %v1637, %v1640
      %v1642 = vrot.slane %v1641, 4
      %v1644 = vshll.u32 %v1535, 16
      %v1646 = vrot.slane %v1644, 5
      %v1647 = vsel %vm1305, %v1642, %v1646
      %s1648 = scalar_lea.vmem %s4, 4
      %v1649 = vld [vmem:[%s1648] sm:$0x7]
      %v1650 = vunpack.c.l.b16 %v1549
      %v1651 = vunpack.c.l.b16 %v1563
      %v1652 = vunpack.c.l.b16 %v1577
      %v1653 = vunpack.c.l.b16 %v1591
      %v1654 = vunpack.c.l.b16 %v1605
      %v1655 = vunpack.c.l.b16 %v1619
      %v1656 = vunpack.c.l.b16 %v1633
      %v1657 = vunpack.c.l.b16 %v1647
      %v1658 = vpack.c.b16 %v1651, %v1650
      %v1659 = vpack.c.b16 %v1653, %v1652
      %v1660 = vpack.c.b16 %v1655, %v1654
      %v1661 = vpack.c.b16 %v1657, %v1656
      %v1663 = vsel %vm541, %v1658, 0
      %v1666 = vsel %vm541, %v1659, 0
      %v1669 = vsel %vm541, %v1660, 0
      %v1672 = vsel %vm541, %v1661, 0
      %v1675 = vsel %vm554, %v1649, 0
      %1677 = vmatprep.subr.bf16.mxu0 0
      %1678 = vmatpush1.bf16.msra.mxu0 %v1675
      %1679 = vmatprep.subr.bf16.mxu0 0
      %1680 = vmatpush1.bf16.msra.mxu0 0
      %1681 = vmatprep.subr.bf16.mxu0 0
      %1682 = vmatpush1.bf16.msra.mxu0 0
      %1683 = vmatprep.subr.bf16.mxu0 0
      %1684 = vmatpush1.bf16.msra.mxu0 0
      %1685 = vmatprep.subr.bf16.mxu0 0
      %1686 = vmatpush1.bf16.msra.mxu0 0
      %1687 = vmatprep.subr.bf16.mxu0 0
      %1688 = vmatpush1.bf16.msra.mxu0 0
      %1689 = vmatprep.subr.bf16.mxu0 0
      %1690 = vmatpush1.bf16.msra.mxu0 0
      %1691 = vmatprep.subr.bf16.mxu0 0
      %1692 = vmatpush1.bf16.msra.mxu0 0
      %1693 = vmatprep.subr.bf16.mxu0 0
      %1694 = vmatpush1.bf16.msra.mxu0 0
      %1695 = vmatprep.subr.bf16.mxu0 0
      %1696 = vmatpush1.bf16.msra.mxu0 0
      %1697 = vmatprep.subr.bf16.mxu0 0
      %1698 = vmatpush1.bf16.msra.mxu0 0
      %1699 = vmatprep.subr.bf16.mxu0 0
      %1700 = vmatpush1.bf16.msra.mxu0 0
      %1701 = vmatprep.subr.bf16.mxu0 0
      %1702 = vmatpush1.bf16.msra.mxu0 0
      %1703 = vmatprep.subr.bf16.mxu0 0
      %1704 = vmatpush1.bf16.msra.mxu0 0
      %1705 = vmatprep.subr.bf16.mxu0 0
      %1706 = vmatpush1.bf16.msra.mxu0 0
      %1707 = vmatprep.subr.bf16.mxu0 0
      %1708 = vmatpush1.bf16.msra.mxu0 0
      %1709 = vmatprep.mubr.bf16.mxu0 0
      %1710 = vmatmul.mubr.bf16.gmra.mrb[0].mxu0 %v1663
      %v1711 = vpop.f32.mrb[0].mxu0
      %v1712 = vadd.f32 0.0, %v1711
      %v1713 = vpop.f32.mrb[0].mxu0
      %v1714 = vpop.f32.mrb[0].mxu0
      %v1715 = vadd.f32 0.0, %v1714
      %v1716 = vpop.f32.mrb[0].mxu0
      %1717 = vmatprep.mubr.bf16.mxu0 0
      %1718 = vmatmul.mubr.bf16.gmra.mrb[0].mxu0 %v1666
      %v1719 = vpop.f32.mrb[0].mxu0
      %v1720 = vadd.f32 0.0, %v1719
      %v1721 = vpop.f32.mrb[0].mxu0
      %v1722 = vpop.f32.mrb[0].mxu0
      %v1723 = vadd.f32 0.0, %v1722
      %v1724 = vpop.f32.mrb[0].mxu0
      %1725 = vmatprep.mubr.bf16.mxu0 0
      %1726 = vmatmul.mubr.bf16.gmra.mrb[0].mxu0 %v1669
      %v1727 = vpop.f32.mrb[0].mxu0
      %v1728 = vadd.f32 0.0, %v1727
      %v1729 = vpop.f32.mrb[0].mxu0
      %v1730 = vpop.f32.mrb[0].mxu0
      %v1731 = vadd.f32 0.0, %v1730
      %v1732 = vpop.f32.mrb[0].mxu0
      %1733 = vmatprep.mubr.bf16.mxu0 0
      %1734 = vmatmul.mubr.bf16.gmra.mrb[0].mxu0 %v1672
      %v1735 = vpop.f32.mrb[0].mxu0
      %v1736 = vadd.f32 0.0, %v1735
      %v1737 = vpop.f32.mrb[0].mxu0
      %v1738 = vpop.f32.mrb[0].mxu0
      %v1739 = vadd.f32 0.0, %v1738
      %v1740 = vpop.f32.mrb[0].mxu0
      %1741 = vdwg.mxu0
      %v1742 = vadd.f32 %v1512, %v1712
      %v1743 = vadd.f32 %v1513, %v1715
      %v1744 = vadd.f32 %v1514, %v1720
      %v1745 = vadd.f32 %v1515, %v1723
      %v1746 = vadd.f32 %v1516, %v1728
      %v1747 = vadd.f32 %v1517, %v1731
      %v1748 = vadd.f32 %v1518, %v1736
      %v1749 = vadd.f32 %v1519, %v1739
      %v1750 = vld [vmem:[%s1062] sm:$0xe]
      %v1751 = vld [vmem:[%s1062 + $0x8] sm:$0xe]
      %v1752 = vld [vmem:[%s1062 + $0x10] sm:$0xe]
      %v1753 = vld [vmem:[%s1062 + $0x18] sm:$0xe]
      %v1754 = vld [vmem:[%s1062 + $0x20] sm:$0xe]
      %v1755 = vld [vmem:[%s1062 + $0x28] sm:$0xe]
      %v1756 = vld [vmem:[%s1062 + $0x30] sm:$0xe]
      %v1757 = vld [vmem:[%s1062 + $0x38] sm:$0xe]
      %vm1774 = vcmask 1042432
      %vm1775 = vcmask 1046532
      %vm1776 = vmor %vm1774, %vm1775
      %v1777 = vrot.slane %v1750, 5
      %v1778 = vrot.slane %v1777, 4
      %v1779 = vrot.slane %v1288, 5
      %v1780 = vsel %vm1776, %v1778, %v1779
      %v1781 = vrot.slane %v1751, 5
      %v1782 = vrot.slane %v1781, 4
      %v1783 = vrot.slane %v1290, 5
      %v1784 = vsel %vm1776, %v1782, %v1783
      %v1785 = vrot.slane %v1752, 5
      %v1786 = vrot.slane %v1785, 4
      %v1787 = vrot.slane %v1292, 5
      %v1788 = vsel %vm1776, %v1786, %v1787
      %v1789 = vrot.slane %v1753, 5
      %v1790 = vrot.slane %v1789, 4
      %v1791 = vrot.slane %v1294, 5
      %v1792 = vsel %vm1776, %v1790, %v1791
      %v1793 = vrot.slane %v1754, 5
      %v1794 = vrot.slane %v1793, 4
      %v1795 = vrot.slane %v1296, 5
      %v1796 = vsel %vm1776, %v1794, %v1795
      %v1797 = vrot.slane %v1755, 5
      %v1798 = vrot.slane %v1797, 4
      %v1799 = vrot.slane %v1298, 5
      %v1800 = vsel %vm1776, %v1798, %v1799
      %v1801 = vrot.slane %v1756, 5
      %v1802 = vrot.slane %v1801, 4
      %v1803 = vrot.slane %v1300, 5
      %v1804 = vsel %vm1776, %v1802, %v1803
      %v1805 = vrot.slane %v1757, 5
      %v1806 = vrot.slane %v1805, 4
      %v1807 = vrot.slane %v1302, 5
      %v1808 = vsel %vm1776, %v1806, %v1807
      %s1809 = scalar_lea.vmem %s3, 4
      %v1810 = vld [vmem:[%s1809] sm:$0x3]
      %v1811 = vunpack.c.l.b16 %v1780
      %v1812 = vunpack.c.l.b16 %v1784
      %v1813 = vunpack.c.l.b16 %v1788
      %v1814 = vunpack.c.l.b16 %v1792
      %v1815 = vunpack.c.l.b16 %v1796
      %v1816 = vunpack.c.l.b16 %v1800
      %v1817 = vunpack.c.l.b16 %v1804
      %v1818 = vunpack.c.l.b16 %v1808
      %v1819 = vpack.c.b16 %v1812, %v1811
      %v1820 = vpack.c.b16 %v1814, %v1813
      %v1821 = vpack.c.b16 %v1816, %v1815
      %v1822 = vpack.c.b16 %v1818, %v1817
      %v1824 = vsel %vm1203, %v1819, 0
      %v1827 = vsel %vm1203, %v1820, 0
      %v1830 = vsel %vm1203, %v1821, 0
      %v1833 = vsel %vm1203, %v1822, 0
      %v1836 = vand.u32 %v1810, %v1218
      %1838 = vmatprep.subr.bf16.mxu0 0
      %1839 = vmatpush1.bf16.msra.mxu0 %v1836
      %1840 = vmatprep.subr.bf16.mxu0 0
      %1841 = vmatpush1.bf16.msra.mxu0 0
      %1842 = vmatprep.subr.bf16.mxu0 0
      %1843 = vmatpush1.bf16.msra.mxu0 0
      %1844 = vmatprep.subr.bf16.mxu0 0
      %1845 = vmatpush1.bf16.msra.mxu0 0
      %1846 = vmatprep.subr.bf16.mxu0 0
      %1847 = vmatpush1.bf16.msra.mxu0 0
      %1848 = vmatprep.subr.bf16.mxu0 0
      %1849 = vmatpush1.bf16.msra.mxu0 0
      %1850 = vmatprep.subr.bf16.mxu0 0
      %1851 = vmatpush1.bf16.msra.mxu0 0
      %1852 = vmatprep.subr.bf16.mxu0 0
      %1853 = vmatpush1.bf16.msra.mxu0 0
      %1854 = vmatprep.subr.bf16.mxu0 0
      %1855 = vmatpush1.bf16.msra.mxu0 0
      %1856 = vmatprep.subr.bf16.mxu0 0
      %1857 = vmatpush1.bf16.msra.mxu0 0
      %1858 = vmatprep.subr.bf16.mxu0 0
      %1859 = vmatpush1.bf16.msra.mxu0 0
      %1860 = vmatprep.subr.bf16.mxu0 0
      %1861 = vmatpush1.bf16.msra.mxu0 0
      %1862 = vmatprep.subr.bf16.mxu0 0
      %1863 = vmatpush1.bf16.msra.mxu0 0
      %1864 = vmatprep.subr.bf16.mxu0 0
      %1865 = vmatpush1.bf16.msra.mxu0 0
      %1866 = vmatprep.subr.bf16.mxu0 0
      %1867 = vmatpush1.bf16.msra.mxu0 0
      %1868 = vmatprep.subr.bf16.mxu0 0
      %1869 = vmatpush1.bf16.msra.mxu0 0
      %1870 = vmatprep.mubr.bf16.mxu0 0
      %1871 = vmatmul.mubr.bf16.gmra.mrb[0].mxu0 %v1824
      %v1872 = vpop.f32.mrb[0].mxu0
      %v1873 = vadd.f32 0.0, %v1872
      %v1874 = vpop.f32.mrb[0].mxu0
      %v1875 = vpop.f32.mrb[0].mxu0
      %v1876 = vadd.f32 0.0, %v1875
      %v1877 = vpop.f32.mrb[0].mxu0
      %1878 = vmatprep.mubr.bf16.mxu0 0
      %1879 = vmatmul.mubr.bf16.gmra.mrb[0].mxu0 %v1827
      %v1880 = vpop.f32.mrb[0].mxu0
      %v1881 = vadd.f32 0.0, %v1880
      %v1882 = vpop.f32.mrb[0].mxu0
      %v1883 = vpop.f32.mrb[0].mxu0
      %v1884 = vadd.f32 0.0, %v1883
      %v1885 = vpop.f32.mrb[0].mxu0
      %1886 = vmatprep.mubr.bf16.mxu0 0
      %1887 = vmatmul.mubr.bf16.gmra.mrb[0].mxu0 %v1830
      %v1888 = vpop.f32.mrb[0].mxu0
      %v1889 = vadd.f32 0.0, %v1888
      %v1890 = vpop.f32.mrb[0].mxu0
      %v1891 = vpop.f32.mrb[0].mxu0
      %v1892 = vadd.f32 0.0, %v1891
      %v1893 = vpop.f32.mrb[0].mxu0
      %1894 = vmatprep.mubr.bf16.mxu0 0
      %1895 = vmatmul.mubr.bf16.gmra.mrb[0].mxu0 %v1833
      %v1896 = vpop.f32.mrb[0].mxu0
      %v1897 = vadd.f32 0.0, %v1896
      %v1898 = vpop.f32.mrb[0].mxu0
      %v1899 = vpop.f32.mrb[0].mxu0
      %v1900 = vadd.f32 0.0, %v1899
      %v1901 = vpop.f32.mrb[0].mxu0
      %1902 = vdwg.mxu0
      %v1903 = vadd.f32 %v1742, %v1873
      %v1904 = vadd.f32 %v1743, %v1876
      %v1905 = vadd.f32 %v1744, %v1881
      %v1906 = vadd.f32 %v1745, %v1884
      %v1907 = vadd.f32 %v1746, %v1889
      %v1908 = vadd.f32 %v1747, %v1892
      %v1909 = vadd.f32 %v1748, %v1897
      %v1910 = vadd.f32 %v1749, %v1900
      %v1911 = vld [vmem:[%s1073] sm:$0xe]
      %v1912 = vld [vmem:[%s1073 + $0x8] sm:$0xe]
      %v1913 = vld [vmem:[%s1073 + $0x10] sm:$0xe]
      %v1914 = vld [vmem:[%s1073 + $0x18] sm:$0xe]
      %v1915 = vld [vmem:[%s1073 + $0x20] sm:$0xe]
      %v1916 = vld [vmem:[%s1073 + $0x28] sm:$0xe]
      %v1917 = vld [vmem:[%s1073 + $0x30] sm:$0xe]
      %v1918 = vld [vmem:[%s1073 + $0x38] sm:$0xe]
      %v1935 = vrot.slane %v1911, 5
      %v1936 = vrot.slane %v1935, 4
      %v1937 = vrot.slane %v1521, 5
      %v1938 = vsel %vm1776, %v1936, %v1937
      %v1939 = vrot.slane %v1912, 5
      %v1940 = vrot.slane %v1939, 4
      %v1941 = vrot.slane %v1523, 5
      %v1942 = vsel %vm1776, %v1940, %v1941
      %v1943 = vrot.slane %v1913, 5
      %v1944 = vrot.slane %v1943, 4
      %v1945 = vrot.slane %v1525, 5
      %v1946 = vsel %vm1776, %v1944, %v1945
      %v1947 = vrot.slane %v1914, 5
      %v1948 = vrot.slane %v1947, 4
      %v1949 = vrot.slane %v1527, 5
      %v1950 = vsel %vm1776, %v1948, %v1949
      %v1951 = vrot.slane %v1915, 5
      %v1952 = vrot.slane %v1951, 4
      %v1953 = vrot.slane %v1529, 5
      %v1954 = vsel %vm1776, %v1952, %v1953
      %v1955 = vrot.slane %v1916, 5
      %v1956 = vrot.slane %v1955, 4
      %v1957 = vrot.slane %v1531, 5
      %v1958 = vsel %vm1776, %v1956, %v1957
      %v1959 = vrot.slane %v1917, 5
      %v1960 = vrot.slane %v1959, 4
      %v1961 = vrot.slane %v1533, 5
      %v1962 = vsel %vm1776, %v1960, %v1961
      %v1963 = vrot.slane %v1918, 5
      %v1964 = vrot.slane %v1963, 4
      %v1965 = vrot.slane %v1535, 5
      %v1966 = vsel %vm1776, %v1964, %v1965
      %s1967 = scalar_lea.vmem %s4, 8
      %v1968 = vld [vmem:[%s1967] sm:$0x7]
      %v1969 = vunpack.c.l.b16 %v1938
      %v1970 = vunpack.c.l.b16 %v1942
      %v1971 = vunpack.c.l.b16 %v1946
      %v1972 = vunpack.c.l.b16 %v1950
      %v1973 = vunpack.c.l.b16 %v1954
      %v1974 = vunpack.c.l.b16 %v1958
      %v1975 = vunpack.c.l.b16 %v1962
      %v1976 = vunpack.c.l.b16 %v1966
      %v1977 = vpack.c.b16 %v1970, %v1969
      %v1978 = vpack.c.b16 %v1972, %v1971
      %v1979 = vpack.c.b16 %v1974, %v1973
      %v1980 = vpack.c.b16 %v1976, %v1975
      %v1982 = vsel %vm541, %v1977, 0
      %v1985 = vsel %vm541, %v1978, 0
      %v1988 = vsel %vm541, %v1979, 0
      %v1991 = vsel %vm541, %v1980, 0
      %v1994 = vsel %vm554, %v1968, 0
      %1996 = vmatprep.subr.bf16.mxu0 0
      %1997 = vmatpush1.bf16.msra.mxu0 %v1994
      %1998 = vmatprep.subr.bf16.mxu0 0
      %1999 = vmatpush1.bf16.msra.mxu0 0
      %2000 = vmatprep.subr.bf16.mxu0 0
      %2001 = vmatpush1.bf16.msra.mxu0 0
      %2002 = vmatprep.subr.bf16.mxu0 0
      %2003 = vmatpush1.bf16.msra.mxu0 0
      %2004 = vmatprep.subr.bf16.mxu0 0
      %2005 = vmatpush1.bf16.msra.mxu0 0
      %2006 = vmatprep.subr.bf16.mxu0 0
      %2007 = vmatpush1.bf16.msra.mxu0 0
      %2008 = vmatprep.subr.bf16.mxu0 0
      %2009 = vmatpush1.bf16.msra.mxu0 0
      %2010 = vmatprep.subr.bf16.mxu0 0
      %2011 = vmatpush1.bf16.msra.mxu0 0
      %2012 = vmatprep.subr.bf16.mxu0 0
      %2013 = vmatpush1.bf16.msra.mxu0 0
      %2014 = vmatprep.subr.bf16.mxu0 0
      %2015 = vmatpush1.bf16.msra.mxu0 0
      %2016 = vmatprep.subr.bf16.mxu0 0
      %2017 = vmatpush1.bf16.msra.mxu0 0
      %2018 = vmatprep.subr.bf16.mxu0 0
      %2019 = vmatpush1.bf16.msra.mxu0 0
      %2020 = vmatprep.subr.bf16.mxu0 0
      %2021 = vmatpush1.bf16.msra.mxu0 0
      %2022 = vmatprep.subr.bf16.mxu0 0
      %2023 = vmatpush1.bf16.msra.mxu0 0
      %2024 = vmatprep.subr.bf16.mxu0 0
      %2025 = vmatpush1.bf16.msra.mxu0 0
      %2026 = vmatprep.subr.bf16.mxu0 0
      %2027 = vmatpush1.bf16.msra.mxu0 0
      %2028 = vmatprep.mubr.bf16.mxu0 0
      %2029 = vmatmul.mubr.bf16.gmra.mrb[0].mxu0 %v1982
      %v2030 = vpop.f32.mrb[0].mxu0
      %v2031 = vadd.f32 0.0, %v2030
      %v2032 = vpop.f32.mrb[0].mxu0
      %v2033 = vpop.f32.mrb[0].mxu0
      %v2034 = vadd.f32 0.0, %v2033
      %v2035 = vpop.f32.mrb[0].mxu0
      %2036 = vmatprep.mubr.bf16.mxu0 0
      %2037 = vmatmul.mubr.bf16.gmra.mrb[0].mxu0 %v1985
      %v2038 = vpop.f32.mrb[0].mxu0
      %v2039 = vadd.f32 0.0, %v2038
      %v2040 = vpop.f32.mrb[0].mxu0
      %v2041 = vpop.f32.mrb[0].mxu0
      %v2042 = vadd.f32 0.0, %v2041
      %v2043 = vpop.f32.mrb[0].mxu0
      %2044 = vmatprep.mubr.bf16.mxu0 0
      %2045 = vmatmul.mubr.bf16.gmra.mrb[0].mxu0 %v1988
      %v2046 = vpop.f32.mrb[0].mxu0
      %v2047 = vadd.f32 0.0, %v2046
      %v2048 = vpop.f32.mrb[0].mxu0
      %v2049 = vpop.f32.mrb[0].mxu0
      %v2050 = vadd.f32 0.0, %v2049
      %v2051 = vpop.f32.mrb[0].mxu0
      %2052 = vmatprep.mubr.bf16.mxu0 0
      %2053 = vmatmul.mubr.bf16.gmra.mrb[0].mxu0 %v1991
      %v2054 = vpop.f32.mrb[0].mxu0
      %v2055 = vadd.f32 0.0, %v2054
      %v2056 = vpop.f32.mrb[0].mxu0
      %v2057 = vpop.f32.mrb[0].mxu0
      %v2058 = vadd.f32 0.0, %v2057
      %v2059 = vpop.f32.mrb[0].mxu0
      %2060 = vdwg.mxu0
      %v2061 = vadd.f32 %v1903, %v2031
      %v2062 = vadd.f32 %v1904, %v2034
      %v2063 = vadd.f32 %v1905, %v2039
      %v2064 = vadd.f32 %v1906, %v2042
      %v2065 = vadd.f32 %v1907, %v2047
      %v2066 = vadd.f32 %v1908, %v2050
      %v2067 = vadd.f32 %v1909, %v2055
      %v2068 = vadd.f32 %v1910, %v2058
      %s2069 = sadd.s32 2, %s1060
      %s2070 = smul.addr %s2069, 4
      %s2071 = scalar_lea.vmem [#allocation2], %s2070
      %v2072 = vld [vmem:[%s2071] sm:$0xf]
      %v2073 = vld [vmem:[%s2071 + $0x8] sm:$0xf]
      %v2074 = vld [vmem:[%s2071 + $0x10] sm:$0xf]
      %v2075 = vld [vmem:[%s2071 + $0x18] sm:$0xf]
      %v2076 = vld [vmem:[%s2071 + $0x20] sm:$0xf]
      %v2077 = vld [vmem:[%s2071 + $0x28] sm:$0xf]
      %v2078 = vld [vmem:[%s2071 + $0x30] sm:$0xf]
      %v2079 = vld [vmem:[%s2071 + $0x38] sm:$0xf]
      %s2080 = scalar_lea.vmem %s3, 6
      %v2081 = vld [vmem:[%s2080] sm:$0x3]
      %v2090 = vunpack.c.l.b16 %v2072
      %v2091 = vunpack.c.l.b16 %v2073
      %v2092 = vunpack.c.l.b16 %v2074
      %v2093 = vunpack.c.l.b16 %v2075
      %v2094 = vunpack.c.l.b16 %v2076
      %v2095 = vunpack.c.l.b16 %v2077
      %v2096 = vunpack.c.l.b16 %v2078
      %v2097 = vunpack.c.l.b16 %v2079
      %v2098 = vpack.c.b16 %v2091, %v2090
      %v2099 = vpack.c.b16 %v2093, %v2092
      %v2100 = vpack.c.b16 %v2095, %v2094
      %v2101 = vpack.c.b16 %v2097, %v2096
      %v2103 = vsel %vm1203, %v2098, 0
      %v2106 = vsel %vm1203, %v2099, 0
      %v2109 = vsel %vm1203, %v2100, 0
      %v2112 = vsel %vm1203, %v2101, 0
      %v2115 = vand.u32 %v2081, %v1218
      %2117 = vmatprep.subr.bf16.mxu0 0
      %2118 = vmatpush1.bf16.msra.mxu0 %v2115
      %2119 = vmatprep.subr.bf16.mxu0 0
      %2120 = vmatpush1.bf16.msra.mxu0 0
      %2121 = vmatprep.subr.bf16.mxu0 0
      %2122 = vmatpush1.bf16.msra.mxu0 0
      %2123 = vmatprep.subr.bf16.mxu0 0
      %2124 = vmatpush1.bf16.msra.mxu0 0
      %2125 = vmatprep.subr.bf16.mxu0 0
      %2126 = vmatpush1.bf16.msra.mxu0 0
      %2127 = vmatprep.subr.bf16.mxu0 0
      %2128 = vmatpush1.bf16.msra.mxu0 0
      %2129 = vmatprep.subr.bf16.mxu0 0
      %2130 = vmatpush1.bf16.msra.mxu0 0
      %2131 = vmatprep.subr.bf16.mxu0 0
      %2132 = vmatpush1.bf16.msra.mxu0 0
      %2133 = vmatprep.subr.bf16.mxu0 0
      %2134 = vmatpush1.bf16.msra.mxu0 0
      %2135 = vmatprep.subr.bf16.mxu0 0
      %2136 = vmatpush1.bf16.msra.mxu0 0
      %2137 = vmatprep.subr.bf16.mxu0 0
      %2138 = vmatpush1.bf16.msra.mxu0 0
      %2139 = vmatprep.subr.bf16.mxu0 0
      %2140 = vmatpush1.bf16.msra.mxu0 0
      %2141 = vmatprep.subr.bf16.mxu0 0
      %2142 = vmatpush1.bf16.msra.mxu0 0
      %2143 = vmatprep.subr.bf16.mxu0 0
      %2144 = vmatpush1.bf16.msra.mxu0 0
      %2145 = vmatprep.subr.bf16.mxu0 0
      %2146 = vmatpush1.bf16.msra.mxu0 0
      %2147 = vmatprep.subr.bf16.mxu0 0
      %2148 = vmatpush1.bf16.msra.mxu0 0
      %2149 = vmatprep.mubr.bf16.mxu0 0
      %2150 = vmatmul.mubr.bf16.gmra.mrb[0].mxu0 %v2103
      %v2151 = vpop.f32.mrb[0].mxu0
      %v2152 = vadd.f32 0.0, %v2151
      %v2153 = vpop.f32.mrb[0].mxu0
      %v2154 = vpop.f32.mrb[0].mxu0
      %v2155 = vadd.f32 0.0, %v2154
      %v2156 = vpop.f32.mrb[0].mxu0
      %2157 = vmatprep.mubr.bf16.mxu0 0
      %2158 = vmatmul.mubr.bf16.gmra.mrb[0].mxu0 %v2106
      %v2159 = vpop.f32.mrb[0].mxu0
      %v2160 = vadd.f32 0.0, %v2159
      %v2161 = vpop.f32.mrb[0].mxu0
      %v2162 = vpop.f32.mrb[0].mxu0
      %v2163 = vadd.f32 0.0, %v2162
      %v2164 = vpop.f32.mrb[0].mxu0
      %2165 = vmatprep.mubr.bf16.mxu0 0
      %2166 = vmatmul.mubr.bf16.gmra.mrb[0].mxu0 %v2109
      %v2167 = vpop.f32.mrb[0].mxu0
      %v2168 = vadd.f32 0.0, %v2167
      %v2169 = vpop.f32.mrb[0].mxu0
      %v2170 = vpop.f32.mrb[0].mxu0
      %v2171 = vadd.f32 0.0, %v2170
      %v2172 = vpop.f32.mrb[0].mxu0
      %2173 = vmatprep.mubr.bf16.mxu0 0
      %2174 = vmatmul.mubr.bf16.gmra.mrb[0].mxu0 %v2112
      %v2175 = vpop.f32.mrb[0].mxu0
      %v2176 = vadd.f32 0.0, %v2175
      %v2177 = vpop.f32.mrb[0].mxu0
      %v2178 = vpop.f32.mrb[0].mxu0
      %v2179 = vadd.f32 0.0, %v2178
      %v2180 = vpop.f32.mrb[0].mxu0
      %2181 = vdwg.mxu0
      %v2182 = vadd.f32 %v2061, %v2152
      %v2183 = vadd.f32 %v2062, %v2155
      %v2184 = vadd.f32 %v2063, %v2160
      %v2185 = vadd.f32 %v2064, %v2163
      %v2186 = vadd.f32 %v2065, %v2168
      %v2187 = vadd.f32 %v2066, %v2171
      %v2188 = vadd.f32 %v2067, %v2176
      %v2189 = vadd.f32 %v2068, %v2179
      %v2190 = vld [vmem:[%s1005] sm:$0xf]
      %v2191 = vld [vmem:[%s1005 + $0x8] sm:$0xf]
      %v2192 = vld [vmem:[%s1005 + $0x10] sm:$0xf]
      %v2193 = vld [vmem:[%s1005 + $0x18] sm:$0xf]
      %v2194 = vld [vmem:[%s1005 + $0x20] sm:$0xf]
      %v2195 = vld [vmem:[%s1005 + $0x28] sm:$0xf]
      %v2196 = vld [vmem:[%s1005 + $0x30] sm:$0xf]
      %v2197 = vld [vmem:[%s1005 + $0x38] sm:$0xf]
      %s2198 = scalar_lea.vmem %s4, 12
      %v2199 = vld [vmem:[%s2198] sm:$0x7]
      %v2208 = vunpack.c.l.b16 %v2190
      %v2209 = vunpack.c.l.b16 %v2191
      %v2210 = vunpack.c.l.b16 %v2192
      %v2211 = vunpack.c.l.b16 %v2193
      %v2212 = vunpack.c.l.b16 %v2194
      %v2213 = vunpack.c.l.b16 %v2195
      %v2214 = vunpack.c.l.b16 %v2196
      %v2215 = vunpack.c.l.b16 %v2197
      %v2216 = vpack.c.b16 %v2209, %v2208
      %v2217 = vpack.c.b16 %v2211, %v2210
      %v2218 = vpack.c.b16 %v2213, %v2212
      %v2219 = vpack.c.b16 %v2215, %v2214
      %v2221 = vsel %vm541, %v2216, 0
      %v2224 = vsel %vm541, %v2217, 0
      %v2227 = vsel %vm541, %v2218, 0
      %v2230 = vsel %vm541, %v2219, 0
      %v2233 = vsel %vm554, %v2199, 0
      %2235 = vmatprep.subr.bf16.mxu0 0
      %2236 = vmatpush1.bf16.msra.mxu0 %v2233
      %2237 = vmatprep.subr.bf16.mxu0 0
      %2238 = vmatpush1.bf16.msra.mxu0 0
      %2239 = vmatprep.subr.bf16.mxu0 0
      %2240 = vmatpush1.bf16.msra.mxu0 0
      %2241 = vmatprep.subr.bf16.mxu0 0
      %2242 = vmatpush1.bf16.msra.mxu0 0
      %2243 = vmatprep.subr.bf16.mxu0 0
      %2244 = vmatpush1.bf16.msra.mxu0 0
      %2245 = vmatprep.subr.bf16.mxu0 0
      %2246 = vmatpush1.bf16.msra.mxu0 0
      %2247 = vmatprep.subr.bf16.mxu0 0
      %2248 = vmatpush1.bf16.msra.mxu0 0
      %2249 = vmatprep.subr.bf16.mxu0 0
      %2250 = vmatpush1.bf16.msra.mxu0 0
      %2251 = vmatprep.subr.bf16.mxu0 0
      %2252 = vmatpush1.bf16.msra.mxu0 0
      %2253 = vmatprep.subr.bf16.mxu0 0
      %2254 = vmatpush1.bf16.msra.mxu0 0
      %2255 = vmatprep.subr.bf16.mxu0 0
      %2256 = vmatpush1.bf16.msra.mxu0 0
      %2257 = vmatprep.subr.bf16.mxu0 0
      %2258 = vmatpush1.bf16.msra.mxu0 0
      %2259 = vmatprep.subr.bf16.mxu0 0
      %2260 = vmatpush1.bf16.msra.mxu0 0
      %2261 = vmatprep.subr.bf16.mxu0 0
      %2262 = vmatpush1.bf16.msra.mxu0 0
      %2263 = vmatprep.subr.bf16.mxu0 0
      %2264 = vmatpush1.bf16.msra.mxu0 0
      %2265 = vmatprep.subr.bf16.mxu0 0
      %2266 = vmatpush1.bf16.msra.mxu0 0
      %2267 = vmatprep.mubr.bf16.mxu0 0
      %2268 = vmatmul.mubr.bf16.gmra.mrb[0].mxu0 %v2221
      %v2269 = vpop.f32.mrb[0].mxu0
      %v2270 = vadd.f32 0.0, %v2269
      %v2271 = vpop.f32.mrb[0].mxu0
      %v2272 = vpop.f32.mrb[0].mxu0
      %v2273 = vadd.f32 0.0, %v2272
      %v2274 = vpop.f32.mrb[0].mxu0
      %2275 = vmatprep.mubr.bf16.mxu0 0
      %2276 = vmatmul.mubr.bf16.gmra.mrb[0].mxu0 %v2224
      %v2277 = vpop.f32.mrb[0].mxu0
      %v2278 = vadd.f32 0.0, %v2277
      %v2279 = vpop.f32.mrb[0].mxu0
      %v2280 = vpop.f32.mrb[0].mxu0
      %v2281 = vadd.f32 0.0, %v2280
      %v2282 = vpop.f32.mrb[0].mxu0
      %2283 = vmatprep.mubr.bf16.mxu0 0
      %2284 = vmatmul.mubr.bf16.gmra.mrb[0].mxu0 %v2227
      %v2285 = vpop.f32.mrb[0].mxu0
      %v2286 = vadd.f32 0.0, %v2285
      %v2287 = vpop.f32.mrb[0].mxu0
      %v2288 = vpop.f32.mrb[0].mxu0
      %v2289 = vadd.f32 0.0, %v2288
      %v2290 = vpop.f32.mrb[0].mxu0
      %2291 = vmatprep.mubr.bf16.mxu0 0
      %2292 = vmatmul.mubr.bf16.gmra.mrb[0].mxu0 %v2230
      %v2293 = vpop.f32.mrb[0].mxu0
      %v2294 = vadd.f32 0.0, %v2293
      %v2295 = vpop.f32.mrb[0].mxu0
      %v2296 = vpop.f32.mrb[0].mxu0
      %v2297 = vadd.f32 0.0, %v2296
      %v2298 = vpop.f32.mrb[0].mxu0
      %2299 = vdwg.mxu0
      %v2300 = vadd.f32 %v2182, %v2270
      %v2301 = vadd.f32 %v2183, %v2273
      %v2302 = vadd.f32 %v2184, %v2278
      %v2303 = vadd.f32 %v2185, %v2281
      %v2304 = vadd.f32 %v2186, %v2286
      %v2305 = vadd.f32 %v2187, %v2289
      %v2306 = vadd.f32 %v2188, %v2294
      %v2307 = vadd.f32 %v2189, %v2297
      %v2308 = vld [vmem:[%s2071] sm:$0xf]
      %v2309 = vld [vmem:[%s2071 + $0x4] sm:$0x1]
      %v2310 = vld [vmem:[%s2071 + $0x8] sm:$0xf]
      %v2311 = vld [vmem:[%s2071 + $0xc] sm:$0x1]
      %v2312 = vld [vmem:[%s2071 + $0x10] sm:$0xf]
      %v2313 = vld [vmem:[%s2071 + $0x14] sm:$0x1]
      %v2314 = vld [vmem:[%s2071 + $0x18] sm:$0xf]
      %v2315 = vld [vmem:[%s2071 + $0x1c] sm:$0x1]
      %v2316 = vld [vmem:[%s2071 + $0x20] sm:$0xf]
      %v2317 = vld [vmem:[%s2071 + $0x24] sm:$0x1]
      %v2318 = vld [vmem:[%s2071 + $0x28] sm:$0xf]
      %v2319 = vld [vmem:[%s2071 + $0x2c] sm:$0x1]
      %v2320 = vld [vmem:[%s2071 + $0x30] sm:$0xf]
      %v2321 = vld [vmem:[%s2071 + $0x34] sm:$0x1]
      %v2322 = vld [vmem:[%s2071 + $0x38] sm:$0xf]
      %v2323 = vld [vmem:[%s2071 + $0x3c] sm:$0x1]
      %v2325 = vshrl.u32 %v2308, 16
      %v2327 = vrot.slane %v2325, 4
      %v2328 = vshll.u32 %v2308, 16
      %v2330 = vrot.slane %v2328, 5
      %v2331 = vor.u32 %v2327, %v2330
      %v2332 = vrot.slane %v2331, 4
      %v2334 = vshll.u32 %v2309, 16
      %v2336 = vrot.slane %v2334, 5
      %v2337 = vsel %vm1305, %v2332, %v2336
      %v2339 = vshrl.u32 %v2310, 16
      %v2341 = vrot.slane %v2339, 4
      %v2342 = vshll.u32 %v2310, 16
      %v2344 = vrot.slane %v2342, 5
      %v2345 = vor.u32 %v2341, %v2344
      %v2346 = vrot.slane %v2345, 4
      %v2348 = vshll.u32 %v2311, 16
      %v2350 = vrot.slane %v2348, 5
      %v2351 = vsel %vm1305, %v2346, %v2350
      %v2353 = vshrl.u32 %v2312, 16
      %v2355 = vrot.slane %v2353, 4
      %v2356 = vshll.u32 %v2312, 16
      %v2358 = vrot.slane %v2356, 5
      %v2359 = vor.u32 %v2355, %v2358
      %v2360 = vrot.slane %v2359, 4
      %v2362 = vshll.u32 %v2313, 16
      %v2364 = vrot.slane %v2362, 5
      %v2365 = vsel %vm1305, %v2360, %v2364
      %v2367 = vshrl.u32 %v2314, 16
      %v2369 = vrot.slane %v2367, 4
      %v2370 = vshll.u32 %v2314, 16
      %v2372 = vrot.slane %v2370, 5
      %v2373 = vor.u32 %v2369, %v2372
      %v2374 = vrot.slane %v2373, 4
      %v2376 = vshll.u32 %v2315, 16
      %v2378 = vrot.slane %v2376, 5
      %v2379 = vsel %vm1305, %v2374, %v2378
      %v2381 = vshrl.u32 %v2316, 16
      %v2383 = vrot.slane %v2381, 4
      %v2384 = vshll.u32 %v2316, 16
      %v2386 = vrot.slane %v2384, 5
      %v2387 = vor.u32 %v2383, %v2386
      %v2388 = vrot.slane %v2387, 4
      %v2390 = vshll.u32 %v2317, 16
      %v2392 = vrot.slane %v2390, 5
      %v2393 = vsel %vm1305, %v2388, %v2392
      %v2395 = vshrl.u32 %v2318, 16
      %v2397 = vrot.slane %v2395, 4
      %v2398 = vshll.u32 %v2318, 16
      %v2400 = vrot.slane %v2398, 5
      %v2401 = vor.u32 %v2397, %v2400
      %v2402 = vrot.slane %v2401, 4
      %v2404 = vshll.u32 %v2319, 16
      %v2406 = vrot.slane %v2404, 5
      %v2407 = vsel %vm1305, %v2402, %v2406
      %v2409 = vshrl.u32 %v2320, 16
      %v2411 = vrot.slane %v2409, 4
      %v2412 = vshll.u32 %v2320, 16
      %v2414 = vrot.slane %v2412, 5
      %v2415 = vor.u32 %v2411, %v2414
      %v2416 = vrot.slane %v2415, 4
      %v2418 = vshll.u32 %v2321, 16
      %v2420 = vrot.slane %v2418, 5
      %v2421 = vsel %vm1305, %v2416, %v2420
      %v2423 = vshrl.u32 %v2322, 16
      %v2425 = vrot.slane %v2423, 4
      %v2426 = vshll.u32 %v2322, 16
      %v2428 = vrot.slane %v2426, 5
      %v2429 = vor.u32 %v2425, %v2428
      %v2430 = vrot.slane %v2429, 4
      %v2432 = vshll.u32 %v2323, 16
      %v2434 = vrot.slane %v2432, 5
      %v2435 = vsel %vm1305, %v2430, %v2434
      %s2436 = scalar_lea.vmem %s3, 8
      %v2437 = vld [vmem:[%s2436] sm:$0x3]
      %v2438 = vunpack.c.l.b16 %v2337
      %v2439 = vunpack.c.l.b16 %v2351
      %v2440 = vunpack.c.l.b16 %v2365
      %v2441 = vunpack.c.l.b16 %v2379
      %v2442 = vunpack.c.l.b16 %v2393
      %v2443 = vunpack.c.l.b16 %v2407
      %v2444 = vunpack.c.l.b16 %v2421
      %v2445 = vunpack.c.l.b16 %v2435
      %v2446 = vpack.c.b16 %v2439, %v2438
      %v2447 = vpack.c.b16 %v2441, %v2440
      %v2448 = vpack.c.b16 %v2443, %v2442
      %v2449 = vpack.c.b16 %v2445, %v2444
      %v2451 = vsel %vm1203, %v2446, 0
      %v2454 = vsel %vm1203, %v2447, 0
      %v2457 = vsel %vm1203, %v2448, 0
      %v2460 = vsel %vm1203, %v2449, 0
      %v2463 = vand.u32 %v2437, %v1218
      %2465 = vmatprep.subr.bf16.mxu0 0
      %2466 = vmatpush1.bf16.msra.mxu0 %v2463
      %2467 = vmatprep.subr.bf16.mxu0 0
      %2468 = vmatpush1.bf16.msra.mxu0 0
      %2469 = vmatprep.subr.bf16.mxu0 0
      %2470 = vmatpush1.bf16.msra.mxu0 0
      %2471 = vmatprep.subr.bf16.mxu0 0
      %2472 = vmatpush1.bf16.msra.mxu0 0
      %2473 = vmatprep.subr.bf16.mxu0 0
      %2474 = vmatpush1.bf16.msra.mxu0 0
      %2475 = vmatprep.subr.bf16.mxu0 0
      %2476 = vmatpush1.bf16.msra.mxu0 0
      %2477 = vmatprep.subr.bf16.mxu0 0
      %2478 = vmatpush1.bf16.msra.mxu0 0
      %2479 = vmatprep.subr.bf16.mxu0 0
      %2480 = vmatpush1.bf16.msra.mxu0 0
      %2481 = vmatprep.subr.bf16.mxu0 0
      %2482 = vmatpush1.bf16.msra.mxu0 0
      %2483 = vmatprep.subr.bf16.mxu0 0
      %2484 = vmatpush1.bf16.msra.mxu0 0
      %2485 = vmatprep.subr.bf16.mxu0 0
      %2486 = vmatpush1.bf16.msra.mxu0 0
      %2487 = vmatprep.subr.bf16.mxu0 0
      %2488 = vmatpush1.bf16.msra.mxu0 0
      %2489 = vmatprep.subr.bf16.mxu0 0
      %2490 = vmatpush1.bf16.msra.mxu0 0
      %2491 = vmatprep.subr.bf16.mxu0 0
      %2492 = vmatpush1.bf16.msra.mxu0 0
      %2493 = vmatprep.subr.bf16.mxu0 0
      %2494 = vmatpush1.bf16.msra.mxu0 0
      %2495 = vmatprep.subr.bf16.mxu0 0
      %2496 = vmatpush1.bf16.msra.mxu0 0
      %2497 = vmatprep.mubr.bf16.mxu0 0
      %2498 = vmatmul.mubr.bf16.gmra.mrb[0].mxu0 %v2451
      %v2499 = vpop.f32.mrb[0].mxu0
      %v2500 = vadd.f32 0.0, %v2499
      %v2501 = vpop.f32.mrb[0].mxu0
      %v2502 = vpop.f32.mrb[0].mxu0
      %v2503 = vadd.f32 0.0, %v2502
      %v2504 = vpop.f32.mrb[0].mxu0
      %2505 = vmatprep.mubr.bf16.mxu0 0
      %2506 = vmatmul.mubr.bf16.gmra.mrb[0].mxu0 %v2454
      %v2507 = vpop.f32.mrb[0].mxu0
      %v2508 = vadd.f32 0.0, %v2507
      %v2509 = vpop.f32.mrb[0].mxu0
      %v2510 = vpop.f32.mrb[0].mxu0
      %v2511 = vadd.f32 0.0, %v2510
      %v2512 = vpop.f32.mrb[0].mxu0
      %2513 = vmatprep.mubr.bf16.mxu0 0
      %2514 = vmatmul.mubr.bf16.gmra.mrb[0].mxu0 %v2457
      %v2515 = vpop.f32.mrb[0].mxu0
      %v2516 = vadd.f32 0.0, %v2515
      %v2517 = vpop.f32.mrb[0].mxu0
      %v2518 = vpop.f32.mrb[0].mxu0
      %v2519 = vadd.f32 0.0, %v2518
      %v2520 = vpop.f32.mrb[0].mxu0
      %2521 = vmatprep.mubr.bf16.mxu0 0
      %2522 = vmatmul.mubr.bf16.gmra.mrb[0].mxu0 %v2460
      %v2523 = vpop.f32.mrb[0].mxu0
      %v2524 = vadd.f32 0.0, %v2523
      %v2525 = vpop.f32.mrb[0].mxu0
      %v2526 = vpop.f32.mrb[0].mxu0
      %v2527 = vadd.f32 0.0, %v2526
      %v2528 = vpop.f32.mrb[0].mxu0
      %2529 = vdwg.mxu0
      %v2530 = vadd.f32 %v2300, %v2500
      %v2531 = vadd.f32 %v2301, %v2503
      %v2532 = vadd.f32 %v2302, %v2508
      %v2533 = vadd.f32 %v2303, %v2511
      %v2534 = vadd.f32 %v2304, %v2516
      %v2535 = vadd.f32 %v2305, %v2519
      %v2536 = vadd.f32 %v2306, %v2524
      %v2537 = vadd.f32 %v2307, %v2527
      %v2538 = vld [vmem:[%s1005] sm:$0xf]
      %v2539 = vld [vmem:[%s1005 + $0x4] sm:$0x1]
      %v2540 = vld [vmem:[%s1005 + $0x8] sm:$0xf]
      %v2541 = vld [vmem:[%s1005 + $0xc] sm:$0x1]
      %v2542 = vld [vmem:[%s1005 + $0x10] sm:$0xf]
      %v2543 = vld [vmem:[%s1005 + $0x14] sm:$0x1]
      %v2544 = vld [vmem:[%s1005 + $0x18] sm:$0xf]
      %v2545 = vld [vmem:[%s1005 + $0x1c] sm:$0x1]
      %v2546 = vld [vmem:[%s1005 + $0x20] sm:$0xf]
      %v2547 = vld [vmem:[%s1005 + $0x24] sm:$0x1]
      %v2548 = vld [vmem:[%s1005 + $0x28] sm:$0xf]
      %v2549 = vld [vmem:[%s1005 + $0x2c] sm:$0x1]
      %v2550 = vld [vmem:[%s1005 + $0x30] sm:$0xf]
      %v2551 = vld [vmem:[%s1005 + $0x34] sm:$0x1]
      %v2552 = vld [vmem:[%s1005 + $0x38] sm:$0xf]
      %v2553 = vld [vmem:[%s1005 + $0x3c] sm:$0x1]
      %v2555 = vshrl.u32 %v2538, 16
      %v2557 = vrot.slane %v2555, 4
      %v2558 = vshll.u32 %v2538, 16
      %v2560 = vrot.slane %v2558, 5
      %v2561 = vor.u32 %v2557, %v2560
      %v2562 = vrot.slane %v2561, 4
      %v2564 = vshll.u32 %v2539, 16
      %v2566 = vrot.slane %v2564, 5
      %v2567 = vsel %vm1305, %v2562, %v2566
      %v2569 = vshrl.u32 %v2540, 16
      %v2571 = vrot.slane %v2569, 4
      %v2572 = vshll.u32 %v2540, 16
      %v2574 = vrot.slane %v2572, 5
      %v2575 = vor.u32 %v2571, %v2574
      %v2576 = vrot.slane %v2575, 4
      %v2578 = vshll.u32 %v2541, 16
      %v2580 = vrot.slane %v2578, 5
      %v2581 = vsel %vm1305, %v2576, %v2580
      %v2583 = vshrl.u32 %v2542, 16
      %v2585 = vrot.slane %v2583, 4
      %v2586 = vshll.u32 %v2542, 16
      %v2588 = vrot.slane %v2586, 5
      %v2589 = vor.u32 %v2585, %v2588
      %v2590 = vrot.slane %v2589, 4
      %v2592 = vshll.u32 %v2543, 16
      %v2594 = vrot.slane %v2592, 5
      %v2595 = vsel %vm1305, %v2590, %v2594
      %v2597 = vshrl.u32 %v2544, 16
      %v2599 = vrot.slane %v2597, 4
      %v2600 = vshll.u32 %v2544, 16
      %v2602 = vrot.slane %v2600, 5
      %v2603 = vor.u32 %v2599, %v2602
      %v2604 = vrot.slane %v2603, 4
      %v2606 = vshll.u32 %v2545, 16
      %v2608 = vrot.slane %v2606, 5
      %v2609 = vsel %vm1305, %v2604, %v2608
      %v2611 = vshrl.u32 %v2546, 16
      %v2613 = vrot.slane %v2611, 4
      %v2614 = vshll.u32 %v2546, 16
      %v2616 = vrot.slane %v2614, 5
      %v2617 = vor.u32 %v2613, %v2616
      %v2618 = vrot.slane %v2617, 4
      %v2620 = vshll.u32 %v2547, 16
      %v2622 = vrot.slane %v2620, 5
      %v2623 = vsel %vm1305, %v2618, %v2622
      %v2625 = vshrl.u32 %v2548, 16
      %v2627 = vrot.slane %v2625, 4
      %v2628 = vshll.u32 %v2548, 16
      %v2630 = vrot.slane %v2628, 5
      %v2631 = vor.u32 %v2627, %v2630
      %v2632 = vrot.slane %v2631, 4
      %v2634 = vshll.u32 %v2549, 16
      %v2636 = vrot.slane %v2634, 5
      %v2637 = vsel %vm1305, %v2632, %v2636
      %v2639 = vshrl.u32 %v2550, 16
      %v2641 = vrot.slane %v2639, 4
      %v2642 = vshll.u32 %v2550, 16
      %v2644 = vrot.slane %v2642, 5
      %v2645 = vor.u32 %v2641, %v2644
      %v2646 = vrot.slane %v2645, 4
      %v2648 = vshll.u32 %v2551, 16
      %v2650 = vrot.slane %v2648, 5
      %v2651 = vsel %vm1305, %v2646, %v2650
      %v2653 = vshrl.u32 %v2552, 16
      %v2655 = vrot.slane %v2653, 4
      %v2656 = vshll.u32 %v2552, 16
      %v2658 = vrot.slane %v2656, 5
      %v2659 = vor.u32 %v2655, %v2658
      %v2660 = vrot.slane %v2659, 4
      %v2662 = vshll.u32 %v2553, 16
      %v2664 = vrot.slane %v2662, 5
      %v2665 = vsel %vm1305, %v2660, %v2664
      %s2666 = scalar_lea.vmem %s4, 16
      %v2667 = vld [vmem:[%s2666] sm:$0x7]
      %v2668 = vunpack.c.l.b16 %v2567
      %v2669 = vunpack.c.l.b16 %v2581
      %v2670 = vunpack.c.l.b16 %v2595
      %v2671 = vunpack.c.l.b16 %v2609
      %v2672 = vunpack.c.l.b16 %v2623
      %v2673 = vunpack.c.l.b16 %v2637
      %v2674 = vunpack.c.l.b16 %v2651
      %v2675 = vunpack.c.l.b16 %v2665
      %v2676 = vpack.c.b16 %v2669, %v2668
      %v2677 = vpack.c.b16 %v2671, %v2670
      %v2678 = vpack.c.b16 %v2673, %v2672
      %v2679 = vpack.c.b16 %v2675, %v2674
      %v2681 = vsel %vm541, %v2676, 0
      %v2684 = vsel %vm541, %v2677, 0
      %v2687 = vsel %vm541, %v2678, 0
      %v2690 = vsel %vm541, %v2679, 0
      %v2693 = vsel %vm554, %v2667, 0
      %2695 = vmatprep.subr.bf16.mxu0 0
      %2696 = vmatpush1.bf16.msra.mxu0 %v2693
      %2697 = vmatprep.subr.bf16.mxu0 0
      %2698 = vmatpush1.bf16.msra.mxu0 0
      %2699 = vmatprep.subr.bf16.mxu0 0
      %2700 = vmatpush1.bf16.msra.mxu0 0
      %2701 = vmatprep.subr.bf16.mxu0 0
      %2702 = vmatpush1.bf16.msra.mxu0 0
      %2703 = vmatprep.subr.bf16.mxu0 0
      %2704 = vmatpush1.bf16.msra.mxu0 0
      %2705 = vmatprep.subr.bf16.mxu0 0
      %2706 = vmatpush1.bf16.msra.mxu0 0
      %2707 = vmatprep.subr.bf16.mxu0 0
      %2708 = vmatpush1.bf16.msra.mxu0 0
      %2709 = vmatprep.subr.bf16.mxu0 0
      %2710 = vmatpush1.bf16.msra.mxu0 0
      %2711 = vmatprep.subr.bf16.mxu0 0
      %2712 = vmatpush1.bf16.msra.mxu0 0
      %2713 = vmatprep.subr.bf16.mxu0 0
      %2714 = vmatpush1.bf16.msra.mxu0 0
      %2715 = vmatprep.subr.bf16.mxu0 0
      %2716 = vmatpush1.bf16.msra.mxu0 0
      %2717 = vmatprep.subr.bf16.mxu0 0
      %2718 = vmatpush1.bf16.msra.mxu0 0
      %2719 = vmatprep.subr.bf16.mxu0 0
      %2720 = vmatpush1.bf16.msra.mxu0 0
      %2721 = vmatprep.subr.bf16.mxu0 0
      %2722 = vmatpush1.bf16.msra.mxu0 0
      %2723 = vmatprep.subr.bf16.mxu0 0
      %2724 = vmatpush1.bf16.msra.mxu0 0
      %2725 = vmatprep.subr.bf16.mxu0 0
      %2726 = vmatpush1.bf16.msra.mxu0 0
      %2727 = vmatprep.mubr.bf16.mxu0 0
      %2728 = vmatmul.mubr.bf16.gmra.mrb[0].mxu0 %v2681
      %v2729 = vpop.f32.mrb[0].mxu0
      %v2730 = vadd.f32 0.0, %v2729
      %v2731 = vpop.f32.mrb[0].mxu0
      %v2732 = vpop.f32.mrb[0].mxu0
      %v2733 = vadd.f32 0.0, %v2732
      %v2734 = vpop.f32.mrb[0].mxu0
      %2735 = vmatprep.mubr.bf16.mxu0 0
      %2736 = vmatmul.mubr.bf16.gmra.mrb[0].mxu0 %v2684
      %v2737 = vpop.f32.mrb[0].mxu0
      %v2738 = vadd.f32 0.0, %v2737
      %v2739 = vpop.f32.mrb[0].mxu0
      %v2740 = vpop.f32.mrb[0].mxu0
      %v2741 = vadd.f32 0.0, %v2740
      %v2742 = vpop.f32.mrb[0].mxu0
      %2743 = vmatprep.mubr.bf16.mxu0 0
      %2744 = vmatmul.mubr.bf16.gmra.mrb[0].mxu0 %v2687
      %v2745 = vpop.f32.mrb[0].mxu0
      %v2746 = vadd.f32 0.0, %v2745
      %v2747 = vpop.f32.mrb[0].mxu0
      %v2748 = vpop.f32.mrb[0].mxu0
      %v2749 = vadd.f32 0.0, %v2748
      %v2750 = vpop.f32.mrb[0].mxu0
      %2751 = vmatprep.mubr.bf16.mxu0 0
      %2752 = vmatmul.mubr.bf16.gmra.mrb[0].mxu0 %v2690
      %v2753 = vpop.f32.mrb[0].mxu0
      %v2754 = vadd.f32 0.0, %v2753
      %v2755 = vpop.f32.mrb[0].mxu0
      %v2756 = vpop.f32.mrb[0].mxu0
      %v2757 = vadd.f32 0.0, %v2756
      %v2758 = vpop.f32.mrb[0].mxu0
      %2759 = vdwg.mxu0
      %v2760 = vadd.f32 %v2530, %v2730
      %v2761 = vadd.f32 %v2531, %v2733
      %v2762 = vadd.f32 %v2532, %v2738
      %v2763 = vadd.f32 %v2533, %v2741
      %v2764 = vadd.f32 %v2534, %v2746
      %v2765 = vadd.f32 %v2535, %v2749
      %v2766 = vadd.f32 %v2536, %v2754
      %v2767 = vadd.f32 %v2537, %v2757
      %v2768 = vld [vmem:[%s2071] sm:$0xe]
      %v2769 = vld [vmem:[%s2071 + $0x8] sm:$0xe]
      %v2770 = vld [vmem:[%s2071 + $0x10] sm:$0xe]
      %v2771 = vld [vmem:[%s2071 + $0x18] sm:$0xe]
      %v2772 = vld [vmem:[%s2071 + $0x20] sm:$0xe]
      %v2773 = vld [vmem:[%s2071 + $0x28] sm:$0xe]
      %v2774 = vld [vmem:[%s2071 + $0x30] sm:$0xe]
      %v2775 = vld [vmem:[%s2071 + $0x38] sm:$0xe]
      %v2792 = vrot.slane %v2768, 5
      %v2793 = vrot.slane %v2792, 4
      %v2794 = vrot.slane %v2309, 5
      %v2795 = vsel %vm1776, %v2793, %v2794
      %v2796 = vrot.slane %v2769, 5
      %v2797 = vrot.slane %v2796, 4
      %v2798 = vrot.slane %v2311, 5
      %v2799 = vsel %vm1776, %v2797, %v2798
      %v2800 = vrot.slane %v2770, 5
      %v2801 = vrot.slane %v2800, 4
      %v2802 = vrot.slane %v2313, 5
      %v2803 = vsel %vm1776, %v2801, %v2802
      %v2804 = vrot.slane %v2771, 5
      %v2805 = vrot.slane %v2804, 4
      %v2806 = vrot.slane %v2315, 5
      %v2807 = vsel %vm1776, %v2805, %v2806
      %v2808 = vrot.slane %v2772, 5
      %v2809 = vrot.slane %v2808, 4
      %v2810 = vrot.slane %v2317, 5
      %v2811 = vsel %vm1776, %v2809, %v2810
      %v2812 = vrot.slane %v2773, 5
      %v2813 = vrot.slane %v2812, 4
      %v2814 = vrot.slane %v2319, 5
      %v2815 = vsel %vm1776, %v2813, %v2814
      %v2816 = vrot.slane %v2774, 5
      %v2817 = vrot.slane %v2816, 4
      %v2818 = vrot.slane %v2321, 5
      %v2819 = vsel %vm1776, %v2817, %v2818
      %v2820 = vrot.slane %v2775, 5
      %v2821 = vrot.slane %v2820, 4
      %v2822 = vrot.slane %v2323, 5
      %v2823 = vsel %vm1776, %v2821, %v2822
      %s2824 = scalar_lea.vmem %s3, 10
      %v2825 = vld [vmem:[%s2824] sm:$0x3]
      %v2826 = vunpack.c.l.b16 %v2795
      %v2827 = vunpack.c.l.b16 %v2799
      %v2828 = vunpack.c.l.b16 %v2803
      %v2829 = vunpack.c.l.b16 %v2807
      %v2830 = vunpack.c.l.b16 %v2811
      %v2831 = vunpack.c.l.b16 %v2815
      %v2832 = vunpack.c.l.b16 %v2819
      %v2833 = vunpack.c.l.b16 %v2823
      %v2834 = vpack.c.b16 %v2827, %v2826
      %v2835 = vpack.c.b16 %v2829, %v2828
      %v2836 = vpack.c.b16 %v2831, %v2830
      %v2837 = vpack.c.b16 %v2833, %v2832
      %v2839 = vsel %vm1203, %v2834, 0
      %v2842 = vsel %vm1203, %v2835, 0
      %v2845 = vsel %vm1203, %v2836, 0
      %v2848 = vsel %vm1203, %v2837, 0
      %v2851 = vand.u32 %v2825, %v1218
      %2853 = vmatprep.subr.bf16.mxu0 0
      %2854 = vmatpush1.bf16.msra.mxu0 %v2851
      %2855 = vmatprep.subr.bf16.mxu0 0
      %2856 = vmatpush1.bf16.msra.mxu0 0
      %2857 = vmatprep.subr.bf16.mxu0 0
      %2858 = vmatpush1.bf16.msra.mxu0 0
      %2859 = vmatprep.subr.bf16.mxu0 0
      %2860 = vmatpush1.bf16.msra.mxu0 0
      %2861 = vmatprep.subr.bf16.mxu0 0
      %2862 = vmatpush1.bf16.msra.mxu0 0
      %2863 = vmatprep.subr.bf16.mxu0 0
      %2864 = vmatpush1.bf16.msra.mxu0 0
      %2865 = vmatprep.subr.bf16.mxu0 0
      %2866 = vmatpush1.bf16.msra.mxu0 0
      %2867 = vmatprep.subr.bf16.mxu0 0
      %2868 = vmatpush1.bf16.msra.mxu0 0
      %2869 = vmatprep.subr.bf16.mxu0 0
      %2870 = vmatpush1.bf16.msra.mxu0 0
      %2871 = vmatprep.subr.bf16.mxu0 0
      %2872 = vmatpush1.bf16.msra.mxu0 0
      %2873 = vmatprep.subr.bf16.mxu0 0
      %2874 = vmatpush1.bf16.msra.mxu0 0
      %2875 = vmatprep.subr.bf16.mxu0 0
      %2876 = vmatpush1.bf16.msra.mxu0 0
      %2877 = vmatprep.subr.bf16.mxu0 0
      %2878 = vmatpush1.bf16.msra.mxu0 0
      %2879 = vmatprep.subr.bf16.mxu0 0
      %2880 = vmatpush1.bf16.msra.mxu0 0
      %2881 = vmatprep.subr.bf16.mxu0 0
      %2882 = vmatpush1.bf16.msra.mxu0 0
      %2883 = vmatprep.subr.bf16.mxu0 0
      %2884 = vmatpush1.bf16.msra.mxu0 0
      %2885 = vmatprep.mubr.bf16.mxu0 0
      %2886 = vmatmul.mubr.bf16.gmra.mrb[0].mxu0 %v2839
      %v2887 = vpop.f32.mrb[0].mxu0
      %v2888 = vadd.f32 0.0, %v2887
      %v2889 = vpop.f32.mrb[0].mxu0
      %v2890 = vpop.f32.mrb[0].mxu0
      %v2891 = vadd.f32 0.0, %v2890
      %v2892 = vpop.f32.mrb[0].mxu0
      %2893 = vmatprep.mubr.bf16.mxu0 0
      %2894 = vmatmul.mubr.bf16.gmra.mrb[0].mxu0 %v2842
      %v2895 = vpop.f32.mrb[0].mxu0
      %v2896 = vadd.f32 0.0, %v2895
      %v2897 = vpop.f32.mrb[0].mxu0
      %v2898 = vpop.f32.mrb[0].mxu0
      %v2899 = vadd.f32 0.0, %v2898
      %v2900 = vpop.f32.mrb[0].mxu0
      %2901 = vmatprep.mubr.bf16.mxu0 0
      %2902 = vmatmul.mubr.bf16.gmra.mrb[0].mxu0 %v2845
      %v2903 = vpop.f32.mrb[0].mxu0
      %v2904 = vadd.f32 0.0, %v2903
      %v2905 = vpop.f32.mrb[0].mxu0
      %v2906 = vpop.f32.mrb[0].mxu0
      %v2907 = vadd.f32 0.0, %v2906
      %v2908 = vpop.f32.mrb[0].mxu0
      %2909 = vmatprep.mubr.bf16.mxu0 0
      %2910 = vmatmul.mubr.bf16.gmra.mrb[0].mxu0 %v2848
      %v2911 = vpop.f32.mrb[0].mxu0
      %v2912 = vadd.f32 0.0, %v2911
      %v2913 = vpop.f32.mrb[0].mxu0
      %v2914 = vpop.f32.mrb[0].mxu0
      %v2915 = vadd.f32 0.0, %v2914
      %v2916 = vpop.f32.mrb[0].mxu0
      %2917 = vdwg.mxu0
      %v2918 = vadd.f32 %v2760, %v2888
      %v2919 = vadd.f32 %v2761, %v2891
      %v2920 = vadd.f32 %v2762, %v2896
      %v2921 = vadd.f32 %v2763, %v2899
      %v2922 = vadd.f32 %v2764, %v2904
      %v2923 = vadd.f32 %v2765, %v2907
      %v2924 = vadd.f32 %v2766, %v2912
      %v2925 = vadd.f32 %v2767, %v2915
      %v2926 = vld [vmem:[%s1005] sm:$0xe]
      %v2927 = vld [vmem:[%s1005 + $0x8] sm:$0xe]
      %v2928 = vld [vmem:[%s1005 + $0x10] sm:$0xe]
      %v2929 = vld [vmem:[%s1005 + $0x18] sm:$0xe]
      %v2930 = vld [vmem:[%s1005 + $0x20] sm:$0xe]
      %v2931 = vld [vmem:[%s1005 + $0x28] sm:$0xe]
      %v2932 = vld [vmem:[%s1005 + $0x30] sm:$0xe]
      %v2933 = vld [vmem:[%s1005 + $0x38] sm:$0xe]
      %v2950 = vrot.slane %v2926, 5
      %v2951 = vrot.slane %v2950, 4
      %v2952 = vrot.slane %v2539, 5
      %v2953 = vsel %vm1776, %v2951, %v2952
      %v2954 = vrot.slane %v2927, 5
      %v2955 = vrot.slane %v2954, 4
      %v2956 = vrot.slane %v2541, 5
      %v2957 = vsel %vm1776, %v2955, %v2956
      %v2958 = vrot.slane %v2928, 5
      %v2959 = vrot.slane %v2958, 4
      %v2960 = vrot.slane %v2543, 5
      %v2961 = vsel %vm1776, %v2959, %v2960
      %v2962 = vrot.slane %v2929, 5
      %v2963 = vrot.slane %v2962, 4
      %v2964 = vrot.slane %v2545, 5
      %v2965 = vsel %vm1776, %v2963, %v2964
      %v2966 = vrot.slane %v2930, 5
      %v2967 = vrot.slane %v2966, 4
      %v2968 = vrot.slane %v2547, 5
      %v2969 = vsel %vm1776, %v2967, %v2968
      %v2970 = vrot.slane %v2931, 5
      %v2971 = vrot.slane %v2970, 4
      %v2972 = vrot.slane %v2549, 5
      %v2973 = vsel %vm1776, %v2971, %v2972
      %v2974 = vrot.slane %v2932, 5
      %v2975 = vrot.slane %v2974, 4
      %v2976 = vrot.slane %v2551, 5
      %v2977 = vsel %vm1776, %v2975, %v2976
      %v2978 = vrot.slane %v2933, 5
      %v2979 = vrot.slane %v2978, 4
      %v2980 = vrot.slane %v2553, 5
      %v2981 = vsel %vm1776, %v2979, %v2980
      %s2982 = scalar_lea.vmem %s4, 20
      %v2983 = vld [vmem:[%s2982] sm:$0x7]
      %v2984 = vunpack.c.l.b16 %v2953
      %v2985 = vunpack.c.l.b16 %v2957
      %v2986 = vunpack.c.l.b16 %v2961
      %v2987 = vunpack.c.l.b16 %v2965
      %v2988 = vunpack.c.l.b16 %v2969
      %v2989 = vunpack.c.l.b16 %v2973
      %v2990 = vunpack.c.l.b16 %v2977
      %v2991 = vunpack.c.l.b16 %v2981
      %v2992 = vpack.c.b16 %v2985, %v2984
      %v2993 = vpack.c.b16 %v2987, %v2986
      %v2994 = vpack.c.b16 %v2989, %v2988
      %v2995 = vpack.c.b16 %v2991, %v2990
      %v2997 = vsel %vm541, %v2992, 0
      %v3000 = vsel %vm541, %v2993, 0
      %v3003 = vsel %vm541, %v2994, 0
      %v3006 = vsel %vm541, %v2995, 0
      %v3009 = vsel %vm554, %v2983, 0
      %3011 = vmatprep.subr.bf16.mxu0 0
      %3012 = vmatpush1.bf16.msra.mxu0 %v3009
      %3013 = vmatprep.subr.bf16.mxu0 0
      %3014 = vmatpush1.bf16.msra.mxu0 0
      %3015 = vmatprep.subr.bf16.mxu0 0
      %3016 = vmatpush1.bf16.msra.mxu0 0
      %3017 = vmatprep.subr.bf16.mxu0 0
      %3018 = vmatpush1.bf16.msra.mxu0 0
      %3019 = vmatprep.subr.bf16.mxu0 0
      %3020 = vmatpush1.bf16.msra.mxu0 0
      %3021 = vmatprep.subr.bf16.mxu0 0
      %3022 = vmatpush1.bf16.msra.mxu0 0
      %3023 = vmatprep.subr.bf16.mxu0 0
      %3024 = vmatpush1.bf16.msra.mxu0 0
      %3025 = vmatprep.subr.bf16.mxu0 0
      %3026 = vmatpush1.bf16.msra.mxu0 0
      %3027 = vmatprep.subr.bf16.mxu0 0
      %3028 = vmatpush1.bf16.msra.mxu0 0
      %3029 = vmatprep.subr.bf16.mxu0 0
      %3030 = vmatpush1.bf16.msra.mxu0 0
      %3031 = vmatprep.subr.bf16.mxu0 0
      %3032 = vmatpush1.bf16.msra.mxu0 0
      %3033 = vmatprep.subr.bf16.mxu0 0
      %3034 = vmatpush1.bf16.msra.mxu0 0
      %3035 = vmatprep.subr.bf16.mxu0 0
      %3036 = vmatpush1.bf16.msra.mxu0 0
      %3037 = vmatprep.subr.bf16.mxu0 0
      %3038 = vmatpush1.bf16.msra.mxu0 0
      %3039 = vmatprep.subr.bf16.mxu0 0
      %3040 = vmatpush1.bf16.msra.mxu0 0
      %3041 = vmatprep.subr.bf16.mxu0 0
      %3042 = vmatpush1.bf16.msra.mxu0 0
      %3043 = vmatprep.mubr.bf16.mxu0 0
      %3044 = vmatmul.mubr.bf16.gmra.mrb[0].mxu0 %v2997
      %v3045 = vpop.f32.mrb[0].mxu0
      %v3046 = vadd.f32 0.0, %v3045
      %v3047 = vpop.f32.mrb[0].mxu0
      %v3048 = vpop.f32.mrb[0].mxu0
      %v3049 = vadd.f32 0.0, %v3048
      %v3050 = vpop.f32.mrb[0].mxu0
      %3051 = vmatprep.mubr.bf16.mxu0 0
      %3052 = vmatmul.mubr.bf16.gmra.mrb[0].mxu0 %v3000
      %v3053 = vpop.f32.mrb[0].mxu0
      %v3054 = vadd.f32 0.0, %v3053
      %v3055 = vpop.f32.mrb[0].mxu0
      %v3056 = vpop.f32.mrb[0].mxu0
      %v3057 = vadd.f32 0.0, %v3056
      %v3058 = vpop.f32.mrb[0].mxu0
      %3059 = vmatprep.mubr.bf16.mxu0 0
      %3060 = vmatmul.mubr.bf16.gmra.mrb[0].mxu0 %v3003
      %v3061 = vpop.f32.mrb[0].mxu0
      %v3062 = vadd.f32 0.0, %v3061
      %v3063 = vpop.f32.mrb[0].mxu0
      %v3064 = vpop.f32.mrb[0].mxu0
      %v3065 = vadd.f32 0.0, %v3064
      %v3066 = vpop.f32.mrb[0].mxu0
      %3067 = vmatprep.mubr.bf16.mxu0 0
      %3068 = vmatmul.mubr.bf16.gmra.mrb[0].mxu0 %v3006
      %v3069 = vpop.f32.mrb[0].mxu0
      %v3070 = vadd.f32 0.0, %v3069
      %v3071 = vpop.f32.mrb[0].mxu0
      %v3072 = vpop.f32.mrb[0].mxu0
      %v3073 = vadd.f32 0.0, %v3072
      %v3074 = vpop.f32.mrb[0].mxu0
      %3075 = vdwg.mxu0
      %v3076 = vadd.f32 %v2918, %v3046
      %v3077 = vadd.f32 %v2919, %v3049
      %v3078 = vadd.f32 %v2920, %v3054
      %v3079 = vadd.f32 %v2921, %v3057
      %v3080 = vadd.f32 %v2922, %v3062
      %v3081 = vadd.f32 %v2923, %v3065
      %v3082 = vadd.f32 %v2924, %v3070
      %v3083 = vadd.f32 %v2925, %v3073
      %s3084 = sadd.s32 4, %s1060
      %s3085 = smul.addr %s3084, 4
      %s3086 = scalar_lea.vmem [#allocation2], %s3085
      %v3087 = vld [vmem:[%s3086] sm:$0xf]
      %v3088 = vld [vmem:[%s3086 + $0x8] sm:$0xf]
      %v3089 = vld [vmem:[%s3086 + $0x10] sm:$0xf]
      %v3090 = vld [vmem:[%s3086 + $0x18] sm:$0xf]
      %v3091 = vld [vmem:[%s3086 + $0x20] sm:$0xf]
      %v3092 = vld [vmem:[%s3086 + $0x28] sm:$0xf]
      %v3093 = vld [vmem:[%s3086 + $0x30] sm:$0xf]
      %v3094 = vld [vmem:[%s3086 + $0x38] sm:$0xf]
      %s3095 = scalar_lea.vmem %s3, 12
      %v3096 = vld [vmem:[%s3095] sm:$0x3]
      %v3105 = vunpack.c.l.b16 %v3087
      %v3106 = vunpack.c.l.b16 %v3088
      %v3107 = vunpack.c.l.b16 %v3089
      %v3108 = vunpack.c.l.b16 %v3090
      %v3109 = vunpack.c.l.b16 %v3091
      %v3110 = vunpack.c.l.b16 %v3092
      %v3111 = vunpack.c.l.b16 %v3093
      %v3112 = vunpack.c.l.b16 %v3094
      %v3113 = vpack.c.b16 %v3106, %v3105
      %v3114 = vpack.c.b16 %v3108, %v3107
      %v3115 = vpack.c.b16 %v3110, %v3109
      %v3116 = vpack.c.b16 %v3112, %v3111
      %v3118 = vsel %vm1203, %v3113, 0
      %v3121 = vsel %vm1203, %v3114, 0
      %v3124 = vsel %vm1203, %v3115, 0
      %v3127 = vsel %vm1203, %v3116, 0
      %v3130 = vand.u32 %v3096, %v1218
      %3132 = vmatprep.subr.bf16.mxu0 0
      %3133 = vmatpush1.bf16.msra.mxu0 %v3130
      %3134 = vmatprep.subr.bf16.mxu0 0
      %3135 = vmatpush1.bf16.msra.mxu0 0
      %3136 = vmatprep.subr.bf16.mxu0 0
      %3137 = vmatpush1.bf16.msra.mxu0 0
      %3138 = vmatprep.subr.bf16.mxu0 0
      %3139 = vmatpush1.bf16.msra.mxu0 0
      %3140 = vmatprep.subr.bf16.mxu0 0
      %3141 = vmatpush1.bf16.msra.mxu0 0
      %3142 = vmatprep.subr.bf16.mxu0 0
      %3143 = vmatpush1.bf16.msra.mxu0 0
      %3144 = vmatprep.subr.bf16.mxu0 0
      %3145 = vmatpush1.bf16.msra.mxu0 0
      %3146 = vmatprep.subr.bf16.mxu0 0
      %3147 = vmatpush1.bf16.msra.mxu0 0
      %3148 = vmatprep.subr.bf16.mxu0 0
      %3149 = vmatpush1.bf16.msra.mxu0 0
      %3150 = vmatprep.subr.bf16.mxu0 0
      %3151 = vmatpush1.bf16.msra.mxu0 0
      %3152 = vmatprep.subr.bf16.mxu0 0
      %3153 = vmatpush1.bf16.msra.mxu0 0
      %3154 = vmatprep.subr.bf16.mxu0 0
      %3155 = vmatpush1.bf16.msra.mxu0 0
      %3156 = vmatprep.subr.bf16.mxu0 0
      %3157 = vmatpush1.bf16.msra.mxu0 0
      %3158 = vmatprep.subr.bf16.mxu0 0
      %3159 = vmatpush1.bf16.msra.mxu0 0
      %3160 = vmatprep.subr.bf16.mxu0 0
      %3161 = vmatpush1.bf16.msra.mxu0 0
      %3162 = vmatprep.subr.bf16.mxu0 0
      %3163 = vmatpush1.bf16.msra.mxu0 0
      %3164 = vmatprep.mubr.bf16.mxu0 0
      %3165 = vmatmul.mubr.bf16.gmra.mrb[0].mxu0 %v3118
      %v3166 = vpop.f32.mrb[0].mxu0
      %v3167 = vadd.f32 0.0, %v3166
      %v3168 = vpop.f32.mrb[0].mxu0
      %v3169 = vpop.f32.mrb[0].mxu0
      %v3170 = vadd.f32 0.0, %v3169
      %v3171 = vpop.f32.mrb[0].mxu0
      %3172 = vmatprep.mubr.bf16.mxu0 0
      %3173 = vmatmul.mubr.bf16.gmra.mrb[0].mxu0 %v3121
      %v3174 = vpop.f32.mrb[0].mxu0
      %v3175 = vadd.f32 0.0, %v3174
      %v3176 = vpop.f32.mrb[0].mxu0
      %v3177 = vpop.f32.mrb[0].mxu0
      %v3178 = vadd.f32 0.0, %v3177
      %v3179 = vpop.f32.mrb[0].mxu0
      %3180 = vmatprep.mubr.bf16.mxu0 0
      %3181 = vmatmul.mubr.bf16.gmra.mrb[0].mxu0 %v3124
      %v3182 = vpop.f32.mrb[0].mxu0
      %v3183 = vadd.f32 0.0, %v3182
      %v3184 = vpop.f32.mrb[0].mxu0
      %v3185 = vpop.f32.mrb[0].mxu0
      %v3186 = vadd.f32 0.0, %v3185
      %v3187 = vpop.f32.mrb[0].mxu0
      %3188 = vmatprep.mubr.bf16.mxu0 0
      %3189 = vmatmul.mubr.bf16.gmra.mrb[0].mxu0 %v3127
      %v3190 = vpop.f32.mrb[0].mxu0
      %v3191 = vadd.f32 0.0, %v3190
      %v3192 = vpop.f32.mrb[0].mxu0
      %v3193 = vpop.f32.mrb[0].mxu0
      %v3194 = vadd.f32 0.0, %v3193
      %v3195 = vpop.f32.mrb[0].mxu0
      %3196 = vdwg.mxu0
      %v3197 = vadd.f32 %v3076, %v3167
      %v3198 = vadd.f32 %v3077, %v3170
      %v3199 = vadd.f32 %v3078, %v3175
      %v3200 = vadd.f32 %v3079, %v3178
      %v3201 = vadd.f32 %v3080, %v3183
      %v3202 = vadd.f32 %v3081, %v3186
      %v3203 = vadd.f32 %v3082, %v3191
      %v3204 = vadd.f32 %v3083, %v3194
      %s3205 = sadd.s32 4, %s1002
      %s3206 = smul.addr %s3205, 4
      %s3207 = scalar_lea.vmem [#allocation2], %s3206
      %v3208 = vld [vmem:[%s3207] sm:$0xf]
      %v3209 = vld [vmem:[%s3207 + $0x8] sm:$0xf]
      %v3210 = vld [vmem:[%s3207 + $0x10] sm:$0xf]
      %v3211 = vld [vmem:[%s3207 + $0x18] sm:$0xf]
      %v3212 = vld [vmem:[%s3207 + $0x20] sm:$0xf]
      %v3213 = vld [vmem:[%s3207 + $0x28] sm:$0xf]
      %v3214 = vld [vmem:[%s3207 + $0x30] sm:$0xf]
      %v3215 = vld [vmem:[%s3207 + $0x38] sm:$0xf]
      %s3216 = scalar_lea.vmem %s4, 24
      %v3217 = vld [vmem:[%s3216] sm:$0x7]
      %v3226 = vunpack.c.l.b16 %v3208
      %v3227 = vunpack.c.l.b16 %v3209
      %v3228 = vunpack.c.l.b16 %v3210
      %v3229 = vunpack.c.l.b16 %v3211
      %v3230 = vunpack.c.l.b16 %v3212
      %v3231 = vunpack.c.l.b16 %v3213
      %v3232 = vunpack.c.l.b16 %v3214
      %v3233 = vunpack.c.l.b16 %v3215
      %v3234 = vpack.c.b16 %v3227, %v3226
      %v3235 = vpack.c.b16 %v3229, %v3228
      %v3236 = vpack.c.b16 %v3231, %v3230
      %v3237 = vpack.c.b16 %v3233, %v3232
      %v3239 = vsel %vm541, %v3234, 0
      %v3242 = vsel %vm541, %v3235, 0
      %v3245 = vsel %vm541, %v3236, 0
      %v3248 = vsel %vm541, %v3237, 0
      %v3251 = vsel %vm554, %v3217, 0
      %3253 = vmatprep.subr.bf16.mxu0 0
      %3254 = vmatpush1.bf16.msra.mxu0 %v3251
      %3255 = vmatprep.subr.bf16.mxu0 0
      %3256 = vmatpush1.bf16.msra.mxu0 0
      %3257 = vmatprep.subr.bf16.mxu0 0
      %3258 = vmatpush1.bf16.msra.mxu0 0
      %3259 = vmatprep.subr.bf16.mxu0 0
      %3260 = vmatpush1.bf16.msra.mxu0 0
      %3261 = vmatprep.subr.bf16.mxu0 0
      %3262 = vmatpush1.bf16.msra.mxu0 0
      %3263 = vmatprep.subr.bf16.mxu0 0
      %3264 = vmatpush1.bf16.msra.mxu0 0
      %3265 = vmatprep.subr.bf16.mxu0 0
      %3266 = vmatpush1.bf16.msra.mxu0 0
      %3267 = vmatprep.subr.bf16.mxu0 0
      %3268 = vmatpush1.bf16.msra.mxu0 0
      %3269 = vmatprep.subr.bf16.mxu0 0
      %3270 = vmatpush1.bf16.msra.mxu0 0
      %3271 = vmatprep.subr.bf16.mxu0 0
      %3272 = vmatpush1.bf16.msra.mxu0 0
      %3273 = vmatprep.subr.bf16.mxu0 0
      %3274 = vmatpush1.bf16.msra.mxu0 0
      %3275 = vmatprep.subr.bf16.mxu0 0
      %3276 = vmatpush1.bf16.msra.mxu0 0
      %3277 = vmatprep.subr.bf16.mxu0 0
      %3278 = vmatpush1.bf16.msra.mxu0 0
      %3279 = vmatprep.subr.bf16.mxu0 0
      %3280 = vmatpush1.bf16.msra.mxu0 0
      %3281 = vmatprep.subr.bf16.mxu0 0
      %3282 = vmatpush1.bf16.msra.mxu0 0
      %3283 = vmatprep.subr.bf16.mxu0 0
      %3284 = vmatpush1.bf16.msra.mxu0 0
      %3285 = vmatprep.mubr.bf16.mxu0 0
      %3286 = vmatmul.mubr.bf16.gmra.mrb[0].mxu0 %v3239
      %v3287 = vpop.f32.mrb[0].mxu0
      %v3288 = vadd.f32 0.0, %v3287
      %v3289 = vpop.f32.mrb[0].mxu0
      %v3290 = vpop.f32.mrb[0].mxu0
      %v3291 = vadd.f32 0.0, %v3290
      %v3292 = vpop.f32.mrb[0].mxu0
      %3293 = vmatprep.mubr.bf16.mxu0 0
      %3294 = vmatmul.mubr.bf16.gmra.mrb[0].mxu0 %v3242
      %v3295 = vpop.f32.mrb[0].mxu0
      %v3296 = vadd.f32 0.0, %v3295
      %v3297 = vpop.f32.mrb[0].mxu0
      %v3298 = vpop.f32.mrb[0].mxu0
      %v3299 = vadd.f32 0.0, %v3298
      %v3300 = vpop.f32.mrb[0].mxu0
      %3301 = vmatprep.mubr.bf16.mxu0 0
      %3302 = vmatmul.mubr.bf16.gmra.mrb[0].mxu0 %v3245
      %v3303 = vpop.f32.mrb[0].mxu0
      %v3304 = vadd.f32 0.0, %v3303
      %v3305 = vpop.f32.mrb[0].mxu0
      %v3306 = vpop.f32.mrb[0].mxu0
      %v3307 = vadd.f32 0.0, %v3306
      %v3308 = vpop.f32.mrb[0].mxu0
      %3309 = vmatprep.mubr.bf16.mxu0 0
      %3310 = vmatmul.mubr.bf16.gmra.mrb[0].mxu0 %v3248
      %v3311 = vpop.f32.mrb[0].mxu0
      %v3312 = vadd.f32 0.0, %v3311
      %v3313 = vpop.f32.mrb[0].mxu0
      %v3314 = vpop.f32.mrb[0].mxu0
      %v3315 = vadd.f32 0.0, %v3314
      %v3316 = vpop.f32.mrb[0].mxu0
      %3317 = vdwg.mxu0
      %v3318 = vadd.f32 %v3197, %v3288
      %v3319 = vadd.f32 %v3198, %v3291
      %v3320 = vadd.f32 %v3199, %v3296
      %v3321 = vadd.f32 %v3200, %v3299
      %v3322 = vadd.f32 %v3201, %v3304
      %v3323 = vadd.f32 %v3202, %v3307
      %v3324 = vadd.f32 %v3203, %v3312
      %v3325 = vadd.f32 %v3204, %v3315
      %v3326 = vld [vmem:[%s3086] sm:$0xf]
      %v3327 = vld [vmem:[%s3086 + $0x4] sm:$0x1]
      %v3328 = vld [vmem:[%s3086 + $0x8] sm:$0xf]
      %v3329 = vld [vmem:[%s3086 + $0xc] sm:$0x1]
      %v3330 = vld [vmem:[%s3086 + $0x10] sm:$0xf]
      %v3331 = vld [vmem:[%s3086 + $0x14] sm:$0x1]
      %v3332 = vld [vmem:[%s3086 + $0x18] sm:$0xf]
      %v3333 = vld [vmem:[%s3086 + $0x1c] sm:$0x1]
      %v3334 = vld [vmem:[%s3086 + $0x20] sm:$0xf]
      %v3335 = vld [vmem:[%s3086 + $0x24] sm:$0x1]
      %v3336 = vld [vmem:[%s3086 + $0x28] sm:$0xf]
      %v3337 = vld [vmem:[%s3086 + $0x2c] sm:$0x1]
      %v3338 = vld [vmem:[%s3086 + $0x30] sm:$0xf]
      %v3339 = vld [vmem:[%s3086 + $0x34] sm:$0x1]
      %v3340 = vld [vmem:[%s3086 + $0x38] sm:$0xf]
      %v3341 = vld [vmem:[%s3086 + $0x3c] sm:$0x1]
      %v3343 = vshrl.u32 %v3326, 16
      %v3345 = vrot.slane %v3343, 4
      %v3346 = vshll.u32 %v3326, 16
      %v3348 = vrot.slane %v3346, 5
      %v3349 = vor.u32 %v3345, %v3348
      %v3350 = vrot.slane %v3349, 4
      %v3352 = vshll.u32 %v3327, 16
      %v3354 = vrot.slane %v3352, 5
      %v3355 = vsel %vm1305, %v3350, %v3354
      %v3357 = vshrl.u32 %v3328, 16
      %v3359 = vrot.slane %v3357, 4
      %v3360 = vshll.u32 %v3328, 16
      %v3362 = vrot.slane %v3360, 5
      %v3363 = vor.u32 %v3359, %v3362
      %v3364 = vrot.slane %v3363, 4
      %v3366 = vshll.u32 %v3329, 16
      %v3368 = vrot.slane %v3366, 5
      %v3369 = vsel %vm1305, %v3364, %v3368
      %v3371 = vshrl.u32 %v3330, 16
      %v3373 = vrot.slane %v3371, 4
      %v3374 = vshll.u32 %v3330, 16
      %v3376 = vrot.slane %v3374, 5
      %v3377 = vor.u32 %v3373, %v3376
      %v3378 = vrot.slane %v3377, 4
      %v3380 = vshll.u32 %v3331, 16
      %v3382 = vrot.slane %v3380, 5
      %v3383 = vsel %vm1305, %v3378, %v3382
      %v3385 = vshrl.u32 %v3332, 16
      %v3387 = vrot.slane %v3385, 4
      %v3388 = vshll.u32 %v3332, 16
      %v3390 = vrot.slane %v3388, 5
      %v3391 = vor.u32 %v3387, %v3390
      %v3392 = vrot.slane %v3391, 4
      %v3394 = vshll.u32 %v3333, 16
      %v3396 = vrot.slane %v3394, 5
      %v3397 = vsel %vm1305, %v3392, %v3396
      %v3399 = vshrl.u32 %v3334, 16
      %v3401 = vrot.slane %v3399, 4
      %v3402 = vshll.u32 %v3334, 16
      %v3404 = vrot.slane %v3402, 5
      %v3405 = vor.u32 %v3401, %v3404
      %v3406 = vrot.slane %v3405, 4
      %v3408 = vshll.u32 %v3335, 16
      %v3410 = vrot.slane %v3408, 5
      %v3411 = vsel %vm1305, %v3406, %v3410
      %v3413 = vshrl.u32 %v3336, 16
      %v3415 = vrot.slane %v3413, 4
      %v3416 = vshll.u32 %v3336, 16
      %v3418 = vrot.slane %v3416, 5
      %v3419 = vor.u32 %v3415, %v3418
      %v3420 = vrot.slane %v3419, 4
      %v3422 = vshll.u32 %v3337, 16
      %v3424 = vrot.slane %v3422, 5
      %v3425 = vsel %vm1305, %v3420, %v3424
      %v3427 = vshrl.u32 %v3338, 16
      %v3429 = vrot.slane %v3427, 4
      %v3430 = vshll.u32 %v3338, 16
      %v3432 = vrot.slane %v3430, 5
      %v3433 = vor.u32 %v3429, %v3432
      %v3434 = vrot.slane %v3433, 4
      %v3436 = vshll.u32 %v3339, 16
      %v3438 = vrot.slane %v3436, 5
      %v3439 = vsel %vm1305, %v3434, %v3438
      %v3441 = vshrl.u32 %v3340, 16
      %v3443 = vrot.slane %v3441, 4
      %v3444 = vshll.u32 %v3340, 16
      %v3446 = vrot.slane %v3444, 5
      %v3447 = vor.u32 %v3443, %v3446
      %v3448 = vrot.slane %v3447, 4
      %v3450 = vshll.u32 %v3341, 16
      %v3452 = vrot.slane %v3450, 5
      %v3453 = vsel %vm1305, %v3448, %v3452
      %s3454 = scalar_lea.vmem %s3, 14
      %v3455 = vld [vmem:[%s3454] sm:$0x3]
      %v3456 = vunpack.c.l.b16 %v3355
      %v3457 = vunpack.c.l.b16 %v3369
      %v3458 = vunpack.c.l.b16 %v3383
      %v3459 = vunpack.c.l.b16 %v3397
      %v3460 = vunpack.c.l.b16 %v3411
      %v3461 = vunpack.c.l.b16 %v3425
      %v3462 = vunpack.c.l.b16 %v3439
      %v3463 = vunpack.c.l.b16 %v3453
      %v3464 = vpack.c.b16 %v3457, %v3456
      %v3465 = vpack.c.b16 %v3459, %v3458
      %v3466 = vpack.c.b16 %v3461, %v3460
      %v3467 = vpack.c.b16 %v3463, %v3462
      %v3469 = vsel %vm1203, %v3464, 0
      %v3472 = vsel %vm1203, %v3465, 0
      %v3475 = vsel %vm1203, %v3466, 0
      %v3478 = vsel %vm1203, %v3467, 0
      %v3481 = vand.u32 %v3455, %v1218
      %3483 = vmatprep.subr.bf16.mxu0 0
      %3484 = vmatpush1.bf16.msra.mxu0 %v3481
      %3485 = vmatprep.subr.bf16.mxu0 0
      %3486 = vmatpush1.bf16.msra.mxu0 0
      %3487 = vmatprep.subr.bf16.mxu0 0
      %3488 = vmatpush1.bf16.msra.mxu0 0
      %3489 = vmatprep.subr.bf16.mxu0 0
      %3490 = vmatpush1.bf16.msra.mxu0 0
      %3491 = vmatprep.subr.bf16.mxu0 0
      %3492 = vmatpush1.bf16.msra.mxu0 0
      %3493 = vmatprep.subr.bf16.mxu0 0
      %3494 = vmatpush1.bf16.msra.mxu0 0
      %3495 = vmatprep.subr.bf16.mxu0 0
      %3496 = vmatpush1.bf16.msra.mxu0 0
      %3497 = vmatprep.subr.bf16.mxu0 0
      %3498 = vmatpush1.bf16.msra.mxu0 0
      %3499 = vmatprep.subr.bf16.mxu0 0
      %3500 = vmatpush1.bf16.msra.mxu0 0
      %3501 = vmatprep.subr.bf16.mxu0 0
      %3502 = vmatpush1.bf16.msra.mxu0 0
      %3503 = vmatprep.subr.bf16.mxu0 0
      %3504 = vmatpush1.bf16.msra.mxu0 0
      %3505 = vmatprep.subr.bf16.mxu0 0
      %3506 = vmatpush1.bf16.msra.mxu0 0
      %3507 = vmatprep.subr.bf16.mxu0 0
      %3508 = vmatpush1.bf16.msra.mxu0 0
      %3509 = vmatprep.subr.bf16.mxu0 0
      %3510 = vmatpush1.bf16.msra.mxu0 0
      %3511 = vmatprep.subr.bf16.mxu0 0
      %3512 = vmatpush1.bf16.msra.mxu0 0
      %3513 = vmatprep.subr.bf16.mxu0 0
      %3514 = vmatpush1.bf16.msra.mxu0 0
      %3515 = vmatprep.mubr.bf16.mxu0 0
      %3516 = vmatmul.mubr.bf16.gmra.mrb[0].mxu0 %v3469
      %v3517 = vpop.f32.mrb[0].mxu0
      %v3518 = vadd.f32 0.0, %v3517
      %v3519 = vpop.f32.mrb[0].mxu0
      %v3520 = vpop.f32.mrb[0].mxu0
      %v3521 = vadd.f32 0.0, %v3520
      %v3522 = vpop.f32.mrb[0].mxu0
      %3523 = vmatprep.mubr.bf16.mxu0 0
      %3524 = vmatmul.mubr.bf16.gmra.mrb[0].mxu0 %v3472
      %v3525 = vpop.f32.mrb[0].mxu0
      %v3526 = vadd.f32 0.0, %v3525
      %v3527 = vpop.f32.mrb[0].mxu0
      %v3528 = vpop.f32.mrb[0].mxu0
      %v3529 = vadd.f32 0.0, %v3528
      %v3530 = vpop.f32.mrb[0].mxu0
      %3531 = vmatprep.mubr.bf16.mxu0 0
      %3532 = vmatmul.mubr.bf16.gmra.mrb[0].mxu0 %v3475
      %v3533 = vpop.f32.mrb[0].mxu0
      %v3534 = vadd.f32 0.0, %v3533
      %v3535 = vpop.f32.mrb[0].mxu0
      %v3536 = vpop.f32.mrb[0].mxu0
      %v3537 = vadd.f32 0.0, %v3536
      %v3538 = vpop.f32.mrb[0].mxu0
      %3539 = vmatprep.mubr.bf16.mxu0 0
      %3540 = vmatmul.mubr.bf16.gmra.mrb[0].mxu0 %v3478
      %v3541 = vpop.f32.mrb[0].mxu0
      %v3542 = vadd.f32 0.0, %v3541
      %v3543 = vpop.f32.mrb[0].mxu0
      %v3544 = vpop.f32.mrb[0].mxu0
      %v3545 = vadd.f32 0.0, %v3544
      %v3546 = vpop.f32.mrb[0].mxu0
      %3547 = vdwg.mxu0
      %v3548 = vadd.f32 %v3318, %v3518
      %v3549 = vadd.f32 %v3319, %v3521
      %v3550 = vadd.f32 %v3320, %v3526
      %v3551 = vadd.f32 %v3321, %v3529
      %v3552 = vadd.f32 %v3322, %v3534
      %v3553 = vadd.f32 %v3323, %v3537
      %v3554 = vadd.f32 %v3324, %v3542
      %v3555 = vadd.f32 %v3325, %v3545
      %v3556 = vld [vmem:[%s3207] sm:$0xf]
      %v3557 = vld [vmem:[%s3207 + $0x4] sm:$0x1]
      %v3558 = vld [vmem:[%s3207 + $0x8] sm:$0xf]
      %v3559 = vld [vmem:[%s3207 + $0xc] sm:$0x1]
      %v3560 = vld [vmem:[%s3207 + $0x10] sm:$0xf]
      %v3561 = vld [vmem:[%s3207 + $0x14] sm:$0x1]
      %v3562 = vld [vmem:[%s3207 + $0x18] sm:$0xf]
      %v3563 = vld [vmem:[%s3207 + $0x1c] sm:$0x1]
      %v3564 = vld [vmem:[%s3207 + $0x20] sm:$0xf]
      %v3565 = vld [vmem:[%s3207 + $0x24] sm:$0x1]
      %v3566 = vld [vmem:[%s3207 + $0x28] sm:$0xf]
      %v3567 = vld [vmem:[%s3207 + $0x2c] sm:$0x1]
      %v3568 = vld [vmem:[%s3207 + $0x30] sm:$0xf]
      %v3569 = vld [vmem:[%s3207 + $0x34] sm:$0x1]
      %v3570 = vld [vmem:[%s3207 + $0x38] sm:$0xf]
      %v3571 = vld [vmem:[%s3207 + $0x3c] sm:$0x1]
      %v3573 = vshrl.u32 %v3556, 16
      %v3575 = vrot.slane %v3573, 4
      %v3576 = vshll.u32 %v3556, 16
      %v3578 = vrot.slane %v3576, 5
      %v3579 = vor.u32 %v3575, %v3578
      %v3580 = vrot.slane %v3579, 4
      %v3582 = vshll.u32 %v3557, 16
      %v3584 = vrot.slane %v3582, 5
      %v3585 = vsel %vm1305, %v3580, %v3584
      %v3587 = vshrl.u32 %v3558, 16
      %v3589 = vrot.slane %v3587, 4
      %v3590 = vshll.u32 %v3558, 16
      %v3592 = vrot.slane %v3590, 5
      %v3593 = vor.u32 %v3589, %v3592
      %v3594 = vrot.slane %v3593, 4
      %v3596 = vshll.u32 %v3559, 16
      %v3598 = vrot.slane %v3596, 5
      %v3599 = vsel %vm1305, %v3594, %v3598
      %v3601 = vshrl.u32 %v3560, 16
      %v3603 = vrot.slane %v3601, 4
      %v3604 = vshll.u32 %v3560, 16
      %v3606 = vrot.slane %v3604, 5
      %v3607 = vor.u32 %v3603, %v3606
      %v3608 = vrot.slane %v3607, 4
      %v3610 = vshll.u32 %v3561, 16
      %v3612 = vrot.slane %v3610, 5
      %v3613 = vsel %vm1305, %v3608, %v3612
      %v3615 = vshrl.u32 %v3562, 16
      %v3617 = vrot.slane %v3615, 4
      %v3618 = vshll.u32 %v3562, 16
      %v3620 = vrot.slane %v3618, 5
      %v3621 = vor.u32 %v3617, %v3620
      %v3622 = vrot.slane %v3621, 4
      %v3624 = vshll.u32 %v3563, 16
      %v3626 = vrot.slane %v3624, 5
      %v3627 = vsel %vm1305, %v3622, %v3626
      %v3629 = vshrl.u32 %v3564, 16
      %v3631 = vrot.slane %v3629, 4
      %v3632 = vshll.u32 %v3564, 16
      %v3634 = vrot.slane %v3632, 5
      %v3635 = vor.u32 %v3631, %v3634
      %v3636 = vrot.slane %v3635, 4
      %v3638 = vshll.u32 %v3565, 16
      %v3640 = vrot.slane %v3638, 5
      %v3641 = vsel %vm1305, %v3636, %v3640
      %v3643 = vshrl.u32 %v3566, 16
      %v3645 = vrot.slane %v3643, 4
      %v3646 = vshll.u32 %v3566, 16
      %v3648 = vrot.slane %v3646, 5
      %v3649 = vor.u32 %v3645, %v3648
      %v3650 = vrot.slane %v3649, 4
      %v3652 = vshll.u32 %v3567, 16
      %v3654 = vrot.slane %v3652, 5
      %v3655 = vsel %vm1305, %v3650, %v3654
      %v3657 = vshrl.u32 %v3568, 16
      %v3659 = vrot.slane %v3657, 4
      %v3660 = vshll.u32 %v3568, 16
      %v3662 = vrot.slane %v3660, 5
      %v3663 = vor.u32 %v3659, %v3662
      %v3664 = vrot.slane %v3663, 4
      %v3666 = vshll.u32 %v3569, 16
      %v3668 = vrot.slane %v3666, 5
      %v3669 = vsel %vm1305, %v3664, %v3668
      %v3671 = vshrl.u32 %v3570, 16
      %v3673 = vrot.slane %v3671, 4
      %v3674 = vshll.u32 %v3570, 16
      %v3676 = vrot.slane %v3674, 5
      %v3677 = vor.u32 %v3673, %v3676
      %v3678 = vrot.slane %v3677, 4
      %v3680 = vshll.u32 %v3571, 16
      %v3682 = vrot.slane %v3680, 5
      %v3683 = vsel %vm1305, %v3678, %v3682
      %s3684 = scalar_lea.vmem %s4, 28
      %v3685 = vld [vmem:[%s3684] sm:$0x7]
      %v3686 = vunpack.c.l.b16 %v3585
      %v3687 = vunpack.c.l.b16 %v3599
      %v3688 = vunpack.c.l.b16 %v3613
      %v3689 = vunpack.c.l.b16 %v3627
      %v3690 = vunpack.c.l.b16 %v3641
      %v3691 = vunpack.c.l.b16 %v3655
      %v3692 = vunpack.c.l.b16 %v3669
      %v3693 = vunpack.c.l.b16 %v3683
      %v3694 = vpack.c.b16 %v3687, %v3686
      %v3695 = vpack.c.b16 %v3689, %v3688
      %v3696 = vpack.c.b16 %v3691, %v3690
      %v3697 = vpack.c.b16 %v3693, %v3692
      %v3699 = vsel %vm541, %v3694, 0
      %v3702 = vsel %vm541, %v3695, 0
      %v3705 = vsel %vm541, %v3696, 0
      %v3708 = vsel %vm541, %v3697, 0
      %v3711 = vsel %vm554, %v3685, 0
      %3713 = vmatprep.subr.bf16.mxu0 0
      %3714 = vmatpush1.bf16.msra.mxu0 %v3711
      %3715 = vmatprep.subr.bf16.mxu0 0
      %3716 = vmatpush1.bf16.msra.mxu0 0
      %3717 = vmatprep.subr.bf16.mxu0 0
      %3718 = vmatpush1.bf16.msra.mxu0 0
      %3719 = vmatprep.subr.bf16.mxu0 0
      %3720 = vmatpush1.bf16.msra.mxu0 0
      %3721 = vmatprep.subr.bf16.mxu0 0
      %3722 = vmatpush1.bf16.msra.mxu0 0
      %3723 = vmatprep.subr.bf16.mxu0 0
      %3724 = vmatpush1.bf16.msra.mxu0 0
      %3725 = vmatprep.subr.bf16.mxu0 0
      %3726 = vmatpush1.bf16.msra.mxu0 0
      %3727 = vmatprep.subr.bf16.mxu0 0
      %3728 = vmatpush1.bf16.msra.mxu0 0
      %3729 = vmatprep.subr.bf16.mxu0 0
      %3730 = vmatpush1.bf16.msra.mxu0 0
      %3731 = vmatprep.subr.bf16.mxu0 0
      %3732 = vmatpush1.bf16.msra.mxu0 0
      %3733 = vmatprep.subr.bf16.mxu0 0
      %3734 = vmatpush1.bf16.msra.mxu0 0
      %3735 = vmatprep.subr.bf16.mxu0 0
      %3736 = vmatpush1.bf16.msra.mxu0 0
      %3737 = vmatprep.subr.bf16.mxu0 0
      %3738 = vmatpush1.bf16.msra.mxu0 0
      %3739 = vmatprep.subr.bf16.mxu0 0
      %3740 = vmatpush1.bf16.msra.mxu0 0
      %3741 = vmatprep.subr.bf16.mxu0 0
      %3742 = vmatpush1.bf16.msra.mxu0 0
      %3743 = vmatprep.subr.bf16.mxu0 0
      %3744 = vmatpush1.bf16.msra.mxu0 0
      %3745 = vmatprep.mubr.bf16.mxu0 0
      %3746 = vmatmul.mubr.bf16.gmra.mrb[0].mxu0 %v3699
      %v3747 = vpop.f32.mrb[0].mxu0
      %v3748 = vadd.f32 0.0, %v3747
      %v3749 = vpop.f32.mrb[0].mxu0
      %v3750 = vpop.f32.mrb[0].mxu0
      %v3751 = vadd.f32 0.0, %v3750
      %v3752 = vpop.f32.mrb[0].mxu0
      %3753 = vmatprep.mubr.bf16.mxu0 0
      %3754 = vmatmul.mubr.bf16.gmra.mrb[0].mxu0 %v3702
      %v3755 = vpop.f32.mrb[0].mxu0
      %v3756 = vadd.f32 0.0, %v3755
      %v3757 = vpop.f32.mrb[0].mxu0
      %v3758 = vpop.f32.mrb[0].mxu0
      %v3759 = vadd.f32 0.0, %v3758
      %v3760 = vpop.f32.mrb[0].mxu0
      %3761 = vmatprep.mubr.bf16.mxu0 0
      %3762 = vmatmul.mubr.bf16.gmra.mrb[0].mxu0 %v3705
      %v3763 = vpop.f32.mrb[0].mxu0
      %v3764 = vadd.f32 0.0, %v3763
      %v3765 = vpop.f32.mrb[0].mxu0
      %v3766 = vpop.f32.mrb[0].mxu0
      %v3767 = vadd.f32 0.0, %v3766
      %v3768 = vpop.f32.mrb[0].mxu0
      %3769 = vmatprep.mubr.bf16.mxu0 0
      %3770 = vmatmul.mubr.bf16.gmra.mrb[0].mxu0 %v3708
      %v3771 = vpop.f32.mrb[0].mxu0
      %v3772 = vadd.f32 0.0, %v3771
      %v3773 = vpop.f32.mrb[0].mxu0
      %v3774 = vpop.f32.mrb[0].mxu0
      %v3775 = vadd.f32 0.0, %v3774
      %v3776 = vpop.f32.mrb[0].mxu0
      %3777 = vdwg.mxu0
      %v3778 = vadd.f32 %v3548, %v3748
      %v3779 = vadd.f32 %v3549, %v3751
      %v3780 = vadd.f32 %v3550, %v3756
      %v3781 = vadd.f32 %v3551, %v3759
      %v3782 = vadd.f32 %v3552, %v3764
      %v3783 = vadd.f32 %v3553, %v3767
      %v3784 = vadd.f32 %v3554, %v3772
      %v3785 = vadd.f32 %v3555, %v3775
      %v3786 = vld [vmem:[%s3086] sm:$0xe]
      %v3787 = vld [vmem:[%s3086 + $0x8] sm:$0xe]
      %v3788 = vld [vmem:[%s3086 + $0x10] sm:$0xe]
      %v3789 = vld [vmem:[%s3086 + $0x18] sm:$0xe]
      %v3790 = vld [vmem:[%s3086 + $0x20] sm:$0xe]
      %v3791 = vld [vmem:[%s3086 + $0x28] sm:$0xe]
      %v3792 = vld [vmem:[%s3086 + $0x30] sm:$0xe]
      %v3793 = vld [vmem:[%s3086 + $0x38] sm:$0xe]
      %v3810 = vrot.slane %v3786, 5
      %v3811 = vrot.slane %v3810, 4
      %v3812 = vrot.slane %v3327, 5
      %v3813 = vsel %vm1776, %v3811, %v3812
      %v3814 = vrot.slane %v3787, 5
      %v3815 = vrot.slane %v3814, 4
      %v3816 = vrot.slane %v3329, 5
      %v3817 = vsel %vm1776, %v3815, %v3816
      %v3818 = vrot.slane %v3788, 5
      %v3819 = vrot.slane %v3818, 4
      %v3820 = vrot.slane %v3331, 5
      %v3821 = vsel %vm1776, %v3819, %v3820
      %v3822 = vrot.slane %v3789, 5
      %v3823 = vrot.slane %v3822, 4
      %v3824 = vrot.slane %v3333, 5
      %v3825 = vsel %vm1776, %v3823, %v3824
      %v3826 = vrot.slane %v3790, 5
      %v3827 = vrot.slane %v3826, 4
      %v3828 = vrot.slane %v3335, 5
      %v3829 = vsel %vm1776, %v3827, %v3828
      %v3830 = vrot.slane %v3791, 5
      %v3831 = vrot.slane %v3830, 4
      %v3832 = vrot.slane %v3337, 5
      %v3833 = vsel %vm1776, %v3831, %v3832
      %v3834 = vrot.slane %v3792, 5
      %v3835 = vrot.slane %v3834, 4
      %v3836 = vrot.slane %v3339, 5
      %v3837 = vsel %vm1776, %v3835, %v3836
      %v3838 = vrot.slane %v3793, 5
      %v3839 = vrot.slane %v3838, 4
      %v3840 = vrot.slane %v3341, 5
      %v3841 = vsel %vm1776, %v3839, %v3840
      %s3842 = scalar_lea.vmem %s3, 16
      %v3843 = vld [vmem:[%s3842] sm:$0x3]
      %v3844 = vunpack.c.l.b16 %v3813
      %v3845 = vunpack.c.l.b16 %v3817
      %v3846 = vunpack.c.l.b16 %v3821
      %v3847 = vunpack.c.l.b16 %v3825
      %v3848 = vunpack.c.l.b16 %v3829
      %v3849 = vunpack.c.l.b16 %v3833
      %v3850 = vunpack.c.l.b16 %v3837
      %v3851 = vunpack.c.l.b16 %v3841
      %v3852 = vpack.c.b16 %v3845, %v3844
      %v3853 = vpack.c.b16 %v3847, %v3846
      %v3854 = vpack.c.b16 %v3849, %v3848
      %v3855 = vpack.c.b16 %v3851, %v3850
      %v3857 = vsel %vm1203, %v3852, 0
      %v3860 = vsel %vm1203, %v3853, 0
      %v3863 = vsel %vm1203, %v3854, 0
      %v3866 = vsel %vm1203, %v3855, 0
      %v3869 = vand.u32 %v3843, %v1218
      %3871 = vmatprep.subr.bf16.mxu0 0
      %3872 = vmatpush1.bf16.msra.mxu0 %v3869
      %3873 = vmatprep.subr.bf16.mxu0 0
      %3874 = vmatpush1.bf16.msra.mxu0 0
      %3875 = vmatprep.subr.bf16.mxu0 0
      %3876 = vmatpush1.bf16.msra.mxu0 0
      %3877 = vmatprep.subr.bf16.mxu0 0
      %3878 = vmatpush1.bf16.msra.mxu0 0
      %3879 = vmatprep.subr.bf16.mxu0 0
      %3880 = vmatpush1.bf16.msra.mxu0 0
      %3881 = vmatprep.subr.bf16.mxu0 0
      %3882 = vmatpush1.bf16.msra.mxu0 0
      %3883 = vmatprep.subr.bf16.mxu0 0
      %3884 = vmatpush1.bf16.msra.mxu0 0
      %3885 = vmatprep.subr.bf16.mxu0 0
      %3886 = vmatpush1.bf16.msra.mxu0 0
      %3887 = vmatprep.subr.bf16.mxu0 0
      %3888 = vmatpush1.bf16.msra.mxu0 0
      %3889 = vmatprep.subr.bf16.mxu0 0
      %3890 = vmatpush1.bf16.msra.mxu0 0
      %3891 = vmatprep.subr.bf16.mxu0 0
      %3892 = vmatpush1.bf16.msra.mxu0 0
      %3893 = vmatprep.subr.bf16.mxu0 0
      %3894 = vmatpush1.bf16.msra.mxu0 0
      %3895 = vmatprep.subr.bf16.mxu0 0
      %3896 = vmatpush1.bf16.msra.mxu0 0
      %3897 = vmatprep.subr.bf16.mxu0 0
      %3898 = vmatpush1.bf16.msra.mxu0 0
      %3899 = vmatprep.subr.bf16.mxu0 0
      %3900 = vmatpush1.bf16.msra.mxu0 0
      %3901 = vmatprep.subr.bf16.mxu0 0
      %3902 = vmatpush1.bf16.msra.mxu0 0
      %3903 = vmatprep.mubr.bf16.mxu0 0
      %3904 = vmatmul.mubr.bf16.gmra.mrb[0].mxu0 %v3857
      %v3905 = vpop.f32.mrb[0].mxu0
      %v3906 = vadd.f32 0.0, %v3905
      %v3907 = vpop.f32.mrb[0].mxu0
      %v3908 = vpop.f32.mrb[0].mxu0
      %v3909 = vadd.f32 0.0, %v3908
      %v3910 = vpop.f32.mrb[0].mxu0
      %3911 = vmatprep.mubr.bf16.mxu0 0
      %3912 = vmatmul.mubr.bf16.gmra.mrb[0].mxu0 %v3860
      %v3913 = vpop.f32.mrb[0].mxu0
      %v3914 = vadd.f32 0.0, %v3913
      %v3915 = vpop.f32.mrb[0].mxu0
      %v3916 = vpop.f32.mrb[0].mxu0
      %v3917 = vadd.f32 0.0, %v3916
      %v3918 = vpop.f32.mrb[0].mxu0
      %3919 = vmatprep.mubr.bf16.mxu0 0
      %3920 = vmatmul.mubr.bf16.gmra.mrb[0].mxu0 %v3863
      %v3921 = vpop.f32.mrb[0].mxu0
      %v3922 = vadd.f32 0.0, %v3921
      %v3923 = vpop.f32.mrb[0].mxu0
      %v3924 = vpop.f32.mrb[0].mxu0
      %v3925 = vadd.f32 0.0, %v3924
      %v3926 = vpop.f32.mrb[0].mxu0
      %3927 = vmatprep.mubr.bf16.mxu0 0
      %3928 = vmatmul.mubr.bf16.gmra.mrb[0].mxu0 %v3866
      %v3929 = vpop.f32.mrb[0].mxu0
      %v3930 = vadd.f32 0.0, %v3929
      %v3931 = vpop.f32.mrb[0].mxu0
      %v3932 = vpop.f32.mrb[0].mxu0
      %v3933 = vadd.f32 0.0, %v3932
      %v3934 = vpop.f32.mrb[0].mxu0
      %3935 = vdwg.mxu0
      %v3936 = vadd.f32 %v3778, %v3906
      %v3937 = vadd.f32 %v3779, %v3909
      %v3938 = vadd.f32 %v3780, %v3914
      %v3939 = vadd.f32 %v3781, %v3917
      %v3940 = vadd.f32 %v3782, %v3922
      %v3941 = vadd.f32 %v3783, %v3925
      %v3942 = vadd.f32 %v3784, %v3930
      %v3943 = vadd.f32 %v3785, %v3933
      %v3944 = vld [vmem:[%s3207] sm:$0xe]
      %v3945 = vld [vmem:[%s3207 + $0x8] sm:$0xe]
      %v3946 = vld [vmem:[%s3207 + $0x10] sm:$0xe]
      %v3947 = vld [vmem:[%s3207 + $0x18] sm:$0xe]
      %v3948 = vld [vmem:[%s3207 + $0x20] sm:$0xe]
      %v3949 = vld [vmem:[%s3207 + $0x28] sm:$0xe]
      %v3950 = vld [vmem:[%s3207 + $0x30] sm:$0xe]
      %v3951 = vld [vmem:[%s3207 + $0x38] sm:$0xe]
      %v3968 = vrot.slane %v3944, 5
      %v3969 = vrot.slane %v3968, 4
      %v3970 = vrot.slane %v3557, 5
      %v3971 = vsel %vm1776, %v3969, %v3970
      %v3972 = vrot.slane %v3945, 5
      %v3973 = vrot.slane %v3972, 4
      %v3974 = vrot.slane %v3559, 5
      %v3975 = vsel %vm1776, %v3973, %v3974
      %v3976 = vrot.slane %v3946, 5
      %v3977 = vrot.slane %v3976, 4
      %v3978 = vrot.slane %v3561, 5
      %v3979 = vsel %vm1776, %v3977, %v3978
      %v3980 = vrot.slane %v3947, 5
      %v3981 = vrot.slane %v3980, 4
      %v3982 = vrot.slane %v3563, 5
      %v3983 = vsel %vm1776, %v3981, %v3982
      %v3984 = vrot.slane %v3948, 5
      %v3985 = vrot.slane %v3984, 4
      %v3986 = vrot.slane %v3565, 5
      %v3987 = vsel %vm1776, %v3985, %v3986
      %v3988 = vrot.slane %v3949, 5
      %v3989 = vrot.slane %v3988, 4
      %v3990 = vrot.slane %v3567, 5
      %v3991 = vsel %vm1776, %v3989, %v3990
      %v3992 = vrot.slane %v3950, 5
      %v3993 = vrot.slane %v3992, 4
      %v3994 = vrot.slane %v3569, 5
      %v3995 = vsel %vm1776, %v3993, %v3994
      %v3996 = vrot.slane %v3951, 5
      %v3997 = vrot.slane %v3996, 4
      %v3998 = vrot.slane %v3571, 5
      %v3999 = vsel %vm1776, %v3997, %v3998
      %s4000 = scalar_lea.vmem %s4, 32
      %v4001 = vld [vmem:[%s4000] sm:$0x7]
      %v4002 = vunpack.c.l.b16 %v3971
      %v4003 = vunpack.c.l.b16 %v3975
      %v4004 = vunpack.c.l.b16 %v3979
      %v4005 = vunpack.c.l.b16 %v3983
      %v4006 = vunpack.c.l.b16 %v3987
      %v4007 = vunpack.c.l.b16 %v3991
      %v4008 = vunpack.c.l.b16 %v3995
      %v4009 = vunpack.c.l.b16 %v3999
      %v4010 = vpack.c.b16 %v4003, %v4002
      %v4011 = vpack.c.b16 %v4005, %v4004
      %v4012 = vpack.c.b16 %v4007, %v4006
      %v4013 = vpack.c.b16 %v4009, %v4008
      %v4015 = vsel %vm541, %v4010, 0
      %v4018 = vsel %vm541, %v4011, 0
      %v4021 = vsel %vm541, %v4012, 0
      %v4024 = vsel %vm541, %v4013, 0
      %v4027 = vsel %vm554, %v4001, 0
      %4029 = vmatprep.subr.bf16.mxu0 0
      %4030 = vmatpush1.bf16.msra.mxu0 %v4027
      %4031 = vmatprep.subr.bf16.mxu0 0
      %4032 = vmatpush1.bf16.msra.mxu0 0
      %4033 = vmatprep.subr.bf16.mxu0 0
      %4034 = vmatpush1.bf16.msra.mxu0 0
      %4035 = vmatprep.subr.bf16.mxu0 0
      %4036 = vmatpush1.bf16.msra.mxu0 0
      %4037 = vmatprep.subr.bf16.mxu0 0
      %4038 = vmatpush1.bf16.msra.mxu0 0
      %4039 = vmatprep.subr.bf16.mxu0 0
      %4040 = vmatpush1.bf16.msra.mxu0 0
      %4041 = vmatprep.subr.bf16.mxu0 0
      %4042 = vmatpush1.bf16.msra.mxu0 0
      %4043 = vmatprep.subr.bf16.mxu0 0
      %4044 = vmatpush1.bf16.msra.mxu0 0
      %4045 = vmatprep.subr.bf16.mxu0 0
      %4046 = vmatpush1.bf16.msra.mxu0 0
      %4047 = vmatprep.subr.bf16.mxu0 0
      %4048 = vmatpush1.bf16.msra.mxu0 0
      %4049 = vmatprep.subr.bf16.mxu0 0
      %4050 = vmatpush1.bf16.msra.mxu0 0
      %4051 = vmatprep.subr.bf16.mxu0 0
      %4052 = vmatpush1.bf16.msra.mxu0 0
      %4053 = vmatprep.subr.bf16.mxu0 0
      %4054 = vmatpush1.bf16.msra.mxu0 0
      %4055 = vmatprep.subr.bf16.mxu0 0
      %4056 = vmatpush1.bf16.msra.mxu0 0
      %4057 = vmatprep.subr.bf16.mxu0 0
      %4058 = vmatpush1.bf16.msra.mxu0 0
      %4059 = vmatprep.subr.bf16.mxu0 0
      %4060 = vmatpush1.bf16.msra.mxu0 0
      %4061 = vmatprep.mubr.bf16.mxu0 0
      %4062 = vmatmul.mubr.bf16.gmra.mrb[0].mxu0 %v4015
      %v4063 = vpop.f32.mrb[0].mxu0
      %v4064 = vadd.f32 0.0, %v4063
      %v4065 = vpop.f32.mrb[0].mxu0
      %v4066 = vpop.f32.mrb[0].mxu0
      %v4067 = vadd.f32 0.0, %v4066
      %v4068 = vpop.f32.mrb[0].mxu0
      %4069 = vmatprep.mubr.bf16.mxu0 0
      %4070 = vmatmul.mubr.bf16.gmra.mrb[0].mxu0 %v4018
      %v4071 = vpop.f32.mrb[0].mxu0
      %v4072 = vadd.f32 0.0, %v4071
      %v4073 = vpop.f32.mrb[0].mxu0
      %v4074 = vpop.f32.mrb[0].mxu0
      %v4075 = vadd.f32 0.0, %v4074
      %v4076 = vpop.f32.mrb[0].mxu0
      %4077 = vmatprep.mubr.bf16.mxu0 0
      %4078 = vmatmul.mubr.bf16.gmra.mrb[0].mxu0 %v4021
      %v4079 = vpop.f32.mrb[0].mxu0
      %v4080 = vadd.f32 0.0, %v4079
      %v4081 = vpop.f32.mrb[0].mxu0
      %v4082 = vpop.f32.mrb[0].mxu0
      %v4083 = vadd.f32 0.0, %v4082
      %v4084 = vpop.f32.mrb[0].mxu0
      %4085 = vmatprep.mubr.bf16.mxu0 0
      %4086 = vmatmul.mubr.bf16.gmra.mrb[0].mxu0 %v4024
      %v4087 = vpop.f32.mrb[0].mxu0
      %v4088 = vadd.f32 0.0, %v4087
      %v4089 = vpop.f32.mrb[0].mxu0
      %v4090 = vpop.f32.mrb[0].mxu0
      %v4091 = vadd.f32 0.0, %v4090
      %v4092 = vpop.f32.mrb[0].mxu0
      %4093 = vdwg.mxu0
      %v4094 = vadd.f32 %v3936, %v4064
      %v4095 = vadd.f32 %v3937, %v4067
      %v4096 = vadd.f32 %v3938, %v4072
      %v4097 = vadd.f32 %v3939, %v4075
      %v4098 = vadd.f32 %v3940, %v4080
      %v4099 = vadd.f32 %v3941, %v4083
      %v4100 = vadd.f32 %v3942, %v4088
      %v4101 = vadd.f32 %v3943, %v4091
      %v4102 = vld [vmem:[%s5] sm:$0x1]
      %v4104 = vlaneseq
      %v4105 = vshrl.u32 %v4104, 7
      %v4106 = vsub.s32 0, %v4105
      %v4107 = vrot.slane %v4102, %v4106
      %v4109 = vadd.f32 %v4094, %v4107
      %v4110 = vadd.f32 %v4095, %v4107
      %v4111 = vadd.f32 %v4096, %v4107
      %v4112 = vadd.f32 %v4097, %v4107
      %v4113 = vadd.f32 %v4098, %v4107
      %v4114 = vadd.f32 %v4099, %v4107
      %v4115 = vadd.f32 %v4100, %v4107
      %v4116 = vadd.f32 %v4101, %v4107
      %v4117 = vmax.f32 %v4109, 0.0
      %v4118 = vmax.f32 %v4110, 0.0
      %v4119 = vmax.f32 %v4111, 0.0
      %v4120 = vmax.f32 %v4112, 0.0
      %v4121 = vmax.f32 %v4113, 0.0
      %v4122 = vmax.f32 %v4114, 0.0
      %v4123 = vmax.f32 %v4115, 0.0
      %v4124 = vmax.f32 %v4116, 0.0
      %v4125 = vpack.c.bf16 %v4118, %v4117
      %v4126 = vpack.c.bf16 %v4120, %v4119
      %v4127 = vpack.c.bf16 %v4122, %v4121
      %v4128 = vpack.c.bf16 %v4124, %v4123
      %v4129 = vld [vmem:[%s6] sm:$0x7]
      %v4130 = vld [vmem:[%s7] sm:$0x3]
      %4131 = vrot.lane.b32.xlu0 %v898, 122
      %v4132 = vpop.permute.xlu0 %4131
      %4133 = vrot.lane.b32.xlu0 %v899, 122
      %v4134 = vpop.permute.xlu0 %4133
      %4135 = vrot.lane.b32.xlu0 %v900, 122
      %v4136 = vpop.permute.xlu0 %4135
      %4137 = vrot.lane.b32.xlu0 %v901, 122
      %v4138 = vpop.permute.xlu0 %4137
      %v4140 = vsel %vm1203, %v4132, 0
      %v4143 = vsel %vm1203, %v4134, 0
      %v4146 = vsel %vm1203, %v4136, 0
      %v4149 = vsel %vm1203, %v4138, 0
      %v4152 = vand.u32 %v4130, %v1218
      %4154 = vmatprep.subr.bf16.mxu0 0
      %4155 = vmatpush1.bf16.msra.mxu0 %v4152
      %4156 = vmatprep.subr.bf16.mxu0 0
      %4157 = vmatpush1.bf16.msra.mxu0 0
      %4158 = vmatprep.subr.bf16.mxu0 0
      %4159 = vmatpush1.bf16.msra.mxu0 0
      %4160 = vmatprep.subr.bf16.mxu0 0
      %4161 = vmatpush1.bf16.msra.mxu0 0
      %4162 = vmatprep.subr.bf16.mxu0 0
      %4163 = vmatpush1.bf16.msra.mxu0 0
      %4164 = vmatprep.subr.bf16.mxu0 0
      %4165 = vmatpush1.bf16.msra.mxu0 0
      %4166 = vmatprep.subr.bf16.mxu0 0
      %4167 = vmatpush1.bf16.msra.mxu0 0
      %4168 = vmatprep.subr.bf16.mxu0 0
      %4169 = vmatpush1.bf16.msra.mxu0 0
      %4170 = vmatprep.subr.bf16.mxu0 0
      %4171 = vmatpush1.bf16.msra.mxu0 0
      %4172 = vmatprep.subr.bf16.mxu0 0
      %4173 = vmatpush1.bf16.msra.mxu0 0
      %4174 = vmatprep.subr.bf16.mxu0 0
      %4175 = vmatpush1.bf16.msra.mxu0 0
      %4176 = vmatprep.subr.bf16.mxu0 0
      %4177 = vmatpush1.bf16.msra.mxu0 0
      %4178 = vmatprep.subr.bf16.mxu0 0
      %4179 = vmatpush1.bf16.msra.mxu0 0
      %4180 = vmatprep.subr.bf16.mxu0 0
      %4181 = vmatpush1.bf16.msra.mxu0 0
      %4182 = vmatprep.subr.bf16.mxu0 0
      %4183 = vmatpush1.bf16.msra.mxu0 0
      %4184 = vmatprep.subr.bf16.mxu0 0
      %4185 = vmatpush1.bf16.msra.mxu0 0
      %4186 = vmatprep.mubr.bf16.mxu0 0
      %4187 = vmatmul.mubr.bf16.gmra.mrb[0].mxu0 %v4140
      %v4188 = vpop.f32.mrb[0].mxu0
      %v4189 = vadd.f32 0.0, %v4188
      %v4190 = vpop.f32.mrb[0].mxu0
      %v4191 = vpop.f32.mrb[0].mxu0
      %v4192 = vadd.f32 0.0, %v4191
      %v4193 = vpop.f32.mrb[0].mxu0
      %4194 = vmatprep.mubr.bf16.mxu0 0
      %4195 = vmatmul.mubr.bf16.gmra.mrb[0].mxu0 %v4143
      %v4196 = vpop.f32.mrb[0].mxu0
      %v4197 = vadd.f32 0.0, %v4196
      %v4198 = vpop.f32.mrb[0].mxu0
      %v4199 = vpop.f32.mrb[0].mxu0
      %v4200 = vadd.f32 0.0, %v4199
      %v4201 = vpop.f32.mrb[0].mxu0
      %4202 = vmatprep.mubr.bf16.mxu0 0
      %4203 = vmatmul.mubr.bf16.gmra.mrb[0].mxu0 %v4146
      %v4204 = vpop.f32.mrb[0].mxu0
      %v4205 = vadd.f32 0.0, %v4204
      %v4206 = vpop.f32.mrb[0].mxu0
      %v4207 = vpop.f32.mrb[0].mxu0
      %v4208 = vadd.f32 0.0, %v4207
      %v4209 = vpop.f32.mrb[0].mxu0
      %4210 = vmatprep.mubr.bf16.mxu0 0
      %4211 = vmatmul.mubr.bf16.gmra.mrb[0].mxu0 %v4149
      %v4212 = vpop.f32.mrb[0].mxu0
      %v4213 = vadd.f32 0.0, %v4212
      %v4214 = vpop.f32.mrb[0].mxu0
      %v4215 = vpop.f32.mrb[0].mxu0
      %v4216 = vadd.f32 0.0, %v4215
      %v4217 = vpop.f32.mrb[0].mxu0
      %4218 = vdwg.mxu0
      %v4220 = vsel %vm541, %v4125, 0
      %v4223 = vsel %vm541, %v4126, 0
      %v4226 = vsel %vm541, %v4127, 0
      %v4229 = vsel %vm541, %v4128, 0
      %v4232 = vsel %vm554, %v4129, 0
      %4234 = vmatprep.subr.bf16.mxu0 0
      %4235 = vmatpush1.bf16.msra.mxu0 %v4232
      %4236 = vmatprep.subr.bf16.mxu0 0
      %4237 = vmatpush1.bf16.msra.mxu0 0
      %4238 = vmatprep.subr.bf16.mxu0 0
      %4239 = vmatpush1.bf16.msra.mxu0 0
      %4240 = vmatprep.subr.bf16.mxu0 0
      %4241 = vmatpush1.bf16.msra.mxu0 0
      %4242 = vmatprep.subr.bf16.mxu0 0
      %4243 = vmatpush1.bf16.msra.mxu0 0
      %4244 = vmatprep.subr.bf16.mxu0 0
      %4245 = vmatpush1.bf16.msra.mxu0 0
      %4246 = vmatprep.subr.bf16.mxu0 0
      %4247 = vmatpush1.bf16.msra.mxu0 0
      %4248 = vmatprep.subr.bf16.mxu0 0
      %4249 = vmatpush1.bf16.msra.mxu0 0
      %4250 = vmatprep.subr.bf16.mxu0 0
      %4251 = vmatpush1.bf16.msra.mxu0 0
      %4252 = vmatprep.subr.bf16.mxu0 0
      %4253 = vmatpush1.bf16.msra.mxu0 0
      %4254 = vmatprep.subr.bf16.mxu0 0
      %4255 = vmatpush1.bf16.msra.mxu0 0
      %4256 = vmatprep.subr.bf16.mxu0 0
      %4257 = vmatpush1.bf16.msra.mxu0 0
      %4258 = vmatprep.subr.bf16.mxu0 0
      %4259 = vmatpush1.bf16.msra.mxu0 0
      %4260 = vmatprep.subr.bf16.mxu0 0
      %4261 = vmatpush1.bf16.msra.mxu0 0
      %4262 = vmatprep.subr.bf16.mxu0 0
      %4263 = vmatpush1.bf16.msra.mxu0 0
      %4264 = vmatprep.subr.bf16.mxu0 0
      %4265 = vmatpush1.bf16.msra.mxu0 0
      %4266 = vmatprep.mubr.bf16.mxu0 0
      %4267 = vmatmul.mubr.bf16.gmra.mrb[0].mxu0 %v4220
      %v4268 = vpop.f32.mrb[0].mxu0
      %v4269 = vadd.f32 %v4189, %v4268
      %v4270 = vpop.f32.mrb[0].mxu0
      %v4271 = vpop.f32.mrb[0].mxu0
      %v4272 = vadd.f32 %v4192, %v4271
      %v4273 = vpop.f32.mrb[0].mxu0
      %4274 = vmatprep.mubr.bf16.mxu0 0
      %4275 = vmatmul.mubr.bf16.gmra.mrb[0].mxu0 %v4223
      %v4276 = vpop.f32.mrb[0].mxu0
      %v4277 = vadd.f32 %v4197, %v4276
      %v4278 = vpop.f32.mrb[0].mxu0
      %v4279 = vpop.f32.mrb[0].mxu0
      %v4280 = vadd.f32 %v4200, %v4279
      %v4281 = vpop.f32.mrb[0].mxu0
      %4282 = vmatprep.mubr.bf16.mxu0 0
      %4283 = vmatmul.mubr.bf16.gmra.mrb[0].mxu0 %v4226
      %v4284 = vpop.f32.mrb[0].mxu0
      %v4285 = vadd.f32 %v4205, %v4284
      %v4286 = vpop.f32.mrb[0].mxu0
      %v4287 = vpop.f32.mrb[0].mxu0
      %v4288 = vadd.f32 %v4208, %v4287
      %v4289 = vpop.f32.mrb[0].mxu0
      %4290 = vmatprep.mubr.bf16.mxu0 0
      %4291 = vmatmul.mubr.bf16.gmra.mrb[0].mxu0 %v4229
      %v4292 = vpop.f32.mrb[0].mxu0
      %v4293 = vadd.f32 %v4213, %v4292
      %v4294 = vpop.f32.mrb[0].mxu0
      %v4295 = vpop.f32.mrb[0].mxu0
      %v4296 = vadd.f32 %v4216, %v4295
      %v4297 = vpop.f32.mrb[0].mxu0
      %4298 = vdwg.mxu0
      %v4299 = vlaneseq
      %v4300 = vshrl.u32 %v4299, 7
      %v4301 = vsub.s32 0, %v4300
      %v4302 = vrot.slane %v838, %v4301
      %v4303 = vadd.f32 %v4269, %v4302
      %v4304 = vadd.f32 %v4272, %v4302
      %v4305 = vadd.f32 %v4277, %v4302
      %v4306 = vadd.f32 %v4280, %v4302
      %v4307 = vadd.f32 %v4285, %v4302
      %v4308 = vadd.f32 %v4288, %v4302
      %v4309 = vadd.f32 %v4293, %v4302
      %v4310 = vadd.f32 %v4296, %v4302
      %v4311 = vld [vmem:[%s8] sm:$0x1]
      %v4313 = vlaneseq
      %v4314 = vshrl.u32 %v4313, 7
      %v4315 = vsub.s32 0, %v4314
      %v4316 = vrot.slane %v4311, %v4315
      %v4318 = vadd.f32 %v4303, %v4316
      %v4319 = vadd.f32 %v4304, %v4316
      %v4320 = vadd.f32 %v4305, %v4316
      %v4321 = vadd.f32 %v4306, %v4316
      %v4322 = vadd.f32 %v4307, %v4316
      %v4323 = vadd.f32 %v4308, %v4316
      %v4324 = vadd.f32 %v4309, %v4316
      %v4325 = vadd.f32 %v4310, %v4316
      %v4326 = vmax.f32 %v4318, 0.0
      %v4327 = vmax.f32 %v4319, 0.0
      %v4328 = vmax.f32 %v4320, 0.0
      %v4329 = vmax.f32 %v4321, 0.0
      %v4330 = vmax.f32 %v4322, 0.0
      %v4331 = vmax.f32 %v4323, 0.0
      %v4332 = vmax.f32 %v4324, 0.0
      %v4333 = vmax.f32 %v4325, 0.0
      %v4334 = vld [vmem:[%s12] sm:$0x7]
      %v4335 = vld [vmem:[%s13] sm:$0x1]
      %v4337 = vlaneseq
      %v4338 = vshrl.u32 %v4337, 7
      %v4339 = vsub.s32 0, %v4338
      %v4340 = vrot.slane %v4335, %v4339
      %v4343 = vsel %vm554, %v4334, 0
      %4345 = vmatprep.subr.bf16.mxu0 0
      %4346 = vmatpush1.bf16.msra.mxu0 %v4343
      %4347 = vmatprep.subr.bf16.mxu0 0
      %4348 = vmatpush1.bf16.msra.mxu0 0
      %4349 = vmatprep.subr.bf16.mxu0 0
      %4350 = vmatpush1.bf16.msra.mxu0 0
      %4351 = vmatprep.subr.bf16.mxu0 0
      %4352 = vmatpush1.bf16.msra.mxu0 0
      %4353 = vmatprep.subr.bf16.mxu0 0
      %4354 = vmatpush1.bf16.msra.mxu0 0
      %4355 = vmatprep.subr.bf16.mxu0 0
      %4356 = vmatpush1.bf16.msra.mxu0 0
      %4357 = vmatprep.subr.bf16.mxu0 0
      %4358 = vmatpush1.bf16.msra.mxu0 0
      %4359 = vmatprep.subr.bf16.mxu0 0
      %4360 = vmatpush1.bf16.msra.mxu0 0
      %4361 = vmatprep.subr.bf16.mxu0 0
      %4362 = vmatpush1.bf16.msra.mxu0 0
      %4363 = vmatprep.subr.bf16.mxu0 0
      %4364 = vmatpush1.bf16.msra.mxu0 0
      %4365 = vmatprep.subr.bf16.mxu0 0
      %4366 = vmatpush1.bf16.msra.mxu0 0
      %4367 = vmatprep.subr.bf16.mxu0 0
      %4368 = vmatpush1.bf16.msra.mxu0 0
      %4369 = vmatprep.subr.bf16.mxu0 0
      %4370 = vmatpush1.bf16.msra.mxu0 0
      %4371 = vmatprep.subr.bf16.mxu0 0
      %4372 = vmatpush1.bf16.msra.mxu0 0
      %4373 = vmatprep.subr.bf16.mxu0 0
      %4374 = vmatpush1.bf16.msra.mxu0 0
      %4375 = vmatprep.subr.bf16.mxu0 0
      %4376 = vmatpush1.bf16.msra.mxu0 0
      %4377 = vmatprep.mubr.bf16.mxu0 0
      %4378 = vmatmul.mubr.bf16.gmra.mrb[0].mxu0 %v543
      %v4379 = vpop.f32.mrb[0].mxu0
      %v4380 = vadd.f32 %v4340, %v4379
      %v4381 = vpop.f32.mrb[0].mxu0
      %v4382 = vpop.f32.mrb[0].mxu0
      %v4383 = vadd.f32 %v4340, %v4382
      %v4384 = vpop.f32.mrb[0].mxu0
      %4385 = vmatprep.mubr.bf16.mxu0 0
      %4386 = vmatmul.mubr.bf16.gmra.mrb[0].mxu0 %v546
      %v4387 = vpop.f32.mrb[0].mxu0
      %v4388 = vadd.f32 %v4340, %v4387
      %v4389 = vpop.f32.mrb[0].mxu0
      %v4390 = vpop.f32.mrb[0].mxu0
      %v4391 = vadd.f32 %v4340, %v4390
      %v4392 = vpop.f32.mrb[0].mxu0
      %4393 = vmatprep.mubr.bf16.mxu0 0
      %4394 = vmatmul.mubr.bf16.gmra.mrb[0].mxu0 %v549
      %v4395 = vpop.f32.mrb[0].mxu0
      %v4396 = vadd.f32 %v4340, %v4395
      %v4397 = vpop.f32.mrb[0].mxu0
      %v4398 = vpop.f32.mrb[0].mxu0
      %v4399 = vadd.f32 %v4340, %v4398
      %v4400 = vpop.f32.mrb[0].mxu0
      %4401 = vmatprep.mubr.bf16.mxu0 0
      %4402 = vmatmul.mubr.bf16.gmra.mrb[0].mxu0 %v552
      %v4403 = vpop.f32.mrb[0].mxu0
      %v4404 = vadd.f32 %v4340, %v4403
      %v4405 = vpop.f32.mrb[0].mxu0
      %v4406 = vpop.f32.mrb[0].mxu0
      %v4407 = vadd.f32 %v4340, %v4406
      %v4408 = vpop.f32.mrb[0].mxu0
      %4409 = vdwg.mxu0
      %v4410 = vadd.f32 %v4326, %v4380
      %v4411 = vadd.f32 %v4327, %v4383
      %v4412 = vadd.f32 %v4328, %v4388
      %v4413 = vadd.f32 %v4329, %v4391
      %v4414 = vadd.f32 %v4330, %v4396
      %v4415 = vadd.f32 %v4331, %v4399
      %v4416 = vadd.f32 %v4332, %v4404
      %v4417 = vadd.f32 %v4333, %v4407
      %v4418 = vpack.c.bf16 %v4410, %v4410
      %v4419 = vpack.c.bf16 %v4411, %v4411
      %v4420 = vpack.c.bf16 %v4412, %v4412
      %v4421 = vpack.c.bf16 %v4413, %v4413
      %v4422 = vpack.c.bf16 %v4414, %v4414
      %v4423 = vpack.c.bf16 %v4415, %v4415
      %v4424 = vpack.c.bf16 %v4416, %v4416
      %v4425 = vpack.c.bf16 %v4417, %v4417
      %vm4426 = vcmask 60416
      %4427 = vst.msk [vmem:[%s503] sm:$0xf] %vm4426, %v4418
      %4428 = vst.msk [vmem:[%s503 + $0x4] sm:$0xf] %vm4426, %v4419
      %4429 = vst.msk [vmem:[%s503 + $0x8] sm:$0xf] %vm4426, %v4420
      %4430 = vst.msk [vmem:[%s503 + $0xc] sm:$0xf] %vm4426, %v4421
      %4431 = vst.msk [vmem:[%s503 + $0x10] sm:$0xf] %vm4426, %v4422
      %4432 = vst.msk [vmem:[%s503 + $0x14] sm:$0xf] %vm4426, %v4423
      %4433 = vst.msk [vmem:[%s503 + $0x18] sm:$0xf] %vm4426, %v4424
      %4434 = vst.msk [vmem:[%s503 + $0x1c] sm:$0xf] %vm4426, %v4425
      %p4435 = scmp.lt.s32.totalorder %s29, 1
      %s4436 = scalar_select %p4435, %s29, 1
      %p4437 = scmp.lt.s32.totalorder %s30, 4
      %s4438 = scalar_select %p4437, %s30, 4
      %s4439 = smul.addr %s4438, 8
      %s4440 = smul.addr %s4436, 40
      %s4441 = sadd.s32 %s4439, %s4440
      %s4442 = smul.addr %s4441, 4
      %s4443 = scalar_lea.vmem %s14, %s4442
      // Predicated region
      $region85: #{run.2} parent=75 // pred_check
        %p4444 = pneg %p358
      $region86: #{run.2} parent=75 // pred_check_branch
        %4446 = sbr.rel (%p4444) target = $region88
      $region87: #{run.2} parent=75 // pred_region
        _
      $region88: #{run.2} parent=75 // pred_fallthru
        _
    $region76: #{run.2} parent=5 // pred_fallthru
      _
    %p4447 = scmp.le.s32.totalorder 2, %s20
    // Predicated region
    $region89: #{run.2} parent=5 // pred_check
      %p4448 = pneg %p4447
    $region90: #{run.2} parent=5 // pred_check_branch
      %4450 = sbr.rel (%p4448) target = $region92
    $region91: #{run.2} parent=5 // pred_region
      %s4451 = ssub.s32 %s20, 2
      // Predicated region
      $region93: #{run.2} parent=91 // pred_check
        %p4452 = pneg %p364
      $region94: #{run.2} parent=91 // pred_check_branch
        %4454 = sbr.rel (%p4452) target = $region96
      $region95: #{run.2} parent=91 // pred_region
        %p4455 = scmp.lt.s32.totalorder %s31, 1
        %s4456 = scalar_select %p4455, %s31, 1
        %p4457 = scmp.lt.s32.totalorder %s32, 4
        %s4458 = scalar_select %p4457, %s32, 4
        %s4459 = smul.addr %s4458, 8
        %s4460 = smul.addr %s4456, 40
        %s4461 = sadd.s32 %s4459, %s4460
        %s4462 = smul.addr %s4461, 4
        %s4463 = scalar_lea.vmem %s14, %s4462
      $region96: #{run.2} parent=91 // pred_fallthru
        _
    $region92: #{run.2} parent=5 // pred_fallthru
      _
  $region6: #{run.2} parent=0 // loop_footer
    %s24 = sadd.s32 1, %s20
  $region7: #{run.2} parent=0 // loop_footer_branch
    %19 = sbr.rel target = $region3
  $region8: #{run.2} parent=0 // loop_exit
    _

// kernel: run.3
$region0: #{run.3}
  #allocation0 [shape = 'u32[]', space=smem, size = 0x4, offset = 0x4, fixed_abs, tag = 'smem constant byte address 0x4 - core index']
  #allocation1 [shape = 'u32[144,128]{1,0:T(1,128)}', space=vmem, size = 0x12000, scoped, tag = 'internal scratch']
  #allocation2 [shape = 'bf16[2,10,10,8]{3,2,1,0:T(8,128)(2,1)}', space=vmem, size = 0x14000, scoped, tag = 'scratch operand']
  #allocation3 [shape = 'f32[1,8]{1,0:T(1,128)}', space=vmem, size = 0x200, scoped, tag = 'scratch operand']
  %s0 = inlined_call_operand.vmem [shape: bf16[2,5,8,8,8], index: 0, kind: input, shape index: {}]
  %s1 = inlined_call_operand.vmem [shape: bf16[8,12], index: 1, kind: input, shape index: {}]
  %s2 = inlined_call_operand.vmem [shape: f32[1,12], index: 2, kind: input, shape index: {}]
  %s3 = inlined_call_operand.vmem [shape: bf16[9,4,8], index: 3, kind: input, shape index: {}]
  %s4 = inlined_call_operand.vmem [shape: bf16[9,8,8], index: 4, kind: input, shape index: {}]
  %s5 = inlined_call_operand.vmem [shape: f32[1,8], index: 5, kind: input, shape index: {}]
  %s6 = inlined_call_operand.vmem [shape: bf16[8,8], index: 6, kind: input, shape index: {}]
  %s7 = inlined_call_operand.vmem [shape: bf16[4,8], index: 7, kind: input, shape index: {}]
  %s8 = inlined_call_operand.vmem [shape: f32[1,8], index: 8, kind: input, shape index: {}]
  %s9 = inlined_call_operand.vmem [shape: f32[8,2], index: 9, kind: input, shape index: {}]
  %s10 = inlined_call_operand.vmem [shape: f32[1,2], index: 10, kind: input, shape index: {}]
  %s11 = inlined_call_operand.vmem [shape: f32[2,8], index: 11, kind: input, shape index: {}]
  %s12 = inlined_call_operand.vmem [shape: bf16[2,5,8,8,8], index: 12, kind: output, shape index: {}]
  %s13 = sld [smem:[#allocation0]]
  $region89: #{run.3} parent=0
    _
  %s15 = ssub.s32 1, %s13
  %s16 = scalar_select 0, %s15, %s13
  loop: start=0, step=1, limit=12
  $region2: #{run.3} parent=0 // loop_pre_header
    _
  $region3: #{run.3} parent=0 // loop_header
    %s18 = sphi 0, %s22
    %p19 = scmp.ge.s32.totalorder %s18, 12
    %s25 = sphi 0, %s37
    %s26 = sphi 0, %s33
    %s27 = sphi 0, %s25
    %s28 = sphi 0, %s26
    %s29 = sphi 0, %s27
    %s30 = sphi 0, %s28
    %s42 = sphi 0, %s44
    %s45 = sphi 0, %s42
    %s46 = sphi 0, %s45
    %s62 = sphi 0, %s46
    %s66 = sphi 0, %s66
    %s68 = sphi 0, %s66
    %s69 = sphi 0, %s68
    %s83 = sphi 0, %s69
    %s87 = sphi 0, %s87
    %s89 = sphi 0, %s87
    %s90 = sphi 0, %s89
    %s104 = sphi 0, %s90
    %s108 = sphi 0, %s108
    %s110 = sphi 0, %s108
    %s111 = sphi 0, %s110
    %s125 = sphi 0, %s111
    %s129 = sphi 0, %s129
    %s131 = sphi 0, %s129
    %s132 = sphi 0, %s131
    %s146 = sphi 0, %s132
    %s150 = sphi 0, %s150
    %s152 = sphi 0, %s150
    %s153 = sphi 0, %s152
    %s167 = sphi 0, %s153
    %s171 = sphi 0, %s171
    %s173 = sphi 0, %s171
    %s174 = sphi 0, %s173
    %s188 = sphi 0, %s174
    %s192 = sphi 0, %s192
    %s194 = sphi 0, %s192
    %s195 = sphi 0, %s194
    %s209 = sphi 0, %s195
    %s213 = sphi 0, %s213
    %s215 = sphi 0, %s213
    %s216 = sphi 0, %s215
    %s230 = sphi 0, %s216
    %s234 = sphi 0, %s234
    %s236 = sphi 0, %s234
    %s237 = sphi 0, %s236
    %s251 = sphi 0, %s237
    %s255 = sphi 0, %s255
    %s257 = sphi 0, %s255
    %s258 = sphi 0, %s257
    %s272 = sphi 0, %s258
    %s276 = sphi 0, %s276
    %s278 = sphi 0, %s276
    %s279 = sphi 0, %s278
    %s293 = sphi 0, %s279
    %s301 = sphi 0, %s303
    %s304 = sphi 0, %s301
    %s305 = sphi 0, %s304
    %s321 = sphi 0, %s305
  $region4: #{run.3} parent=0 // loop_header_branch
    %21 = sbr.rel (%p19) target = $region8
  $region5: #{run.3} parent=0 // loop_body
    %s23 = ssub.s32 %s18, 1
    %s24 = ssub.s32 %s18, 2
    %s31 = sadd.s32 1, %s26
    %p32 = scmp.ge.s32.totalorder %s31, 5
    %s33 = scalar_select %p32, 0, %s31
    %s34 = sadd.s32 1, %s25
    %s35 = scalar_select %p32, %s34, %s25
    %p36 = scmp.ge.s32.totalorder %s35, 2
    %s37 = scalar_select %p36, 0, %s35
    %s38 = ssub.s32 %s25, %s37
    %s39 = ssub.s32 %s26, %s33
    %s40 = sor.u32 %s38, %s39
    %p41 = scmp.eq.s32.totalorder %s40, 0
    %s43 = sadd.s32 %s42, 1
    %s44 = scalar_select %p41, %s42, %s43
    %p47 = pneg %p41
    %p48 = scmp.eq.s32.totalorder %s18, 9
    %p49 = por %p47, %p48
    %p50 = scmp.ne.s32.totalorder %s42, %s45
    %p51 = scmp.eq.s32.totalorder %s18, 0
    %p52 = por %p50, %p51
    %p53 = scmp.ne.s32.totalorder %s42, %s45
    %p54 = scmp.eq.s32.totalorder %s23, 9
    %p55 = por %p53, %p54
    %p56 = scmp.ne.s32.totalorder %s45, %s46
    %p57 = scmp.eq.s32.totalorder %s23, 0
    %p58 = por %p56, %p57
    %p59 = scmp.ne.s32.totalorder %s45, %s46
    %p60 = scmp.eq.s32.totalorder %s24, 9
    %p61 = por %p59, %p60
    %p63 = scmp.ne.s32.totalorder %s46, %s62
    %p64 = scmp.eq.s32.totalorder %s24, 0
    %p65 = por %p63, %p64
    %s67 = sadd.s32 %s66, 1
    %p70 = scmp.eq.s32.totalorder %s18, 9
    %p71 = scmp.ne.s32.totalorder %s66, %s68
    %p72 = scmp.eq.s32.totalorder %s18, 0
    %p73 = por %p71, %p72
    %p74 = scmp.ne.s32.totalorder %s66, %s68
    %p75 = scmp.eq.s32.totalorder %s23, 9
    %p76 = por %p74, %p75
    %p77 = scmp.ne.s32.totalorder %s68, %s69
    %p78 = scmp.eq.s32.totalorder %s23, 0
    %p79 = por %p77, %p78
    %p80 = scmp.ne.s32.totalorder %s68, %s69
    %p81 = scmp.eq.s32.totalorder %s24, 9
    %p82 = por %p80, %p81
    %p84 = scmp.ne.s32.totalorder %s69, %s83
    %p85 = scmp.eq.s32.totalorder %s24, 0
    %p86 = por %p84, %p85
    %s88 = sadd.s32 %s87, 1
    %p91 = scmp.eq.s32.totalorder %s18, 9
    %p92 = scmp.ne.s32.totalorder %s87, %s89
    %p93 = scmp.eq.s32.totalorder %s18, 0
    %p94 = por %p92, %p93
    %p95 = scmp.ne.s32.totalorder %s87, %s89
    %p96 = scmp.eq.s32.totalorder %s23, 9
    %p97 = por %p95, %p96
    %p98 = scmp.ne.s32.totalorder %s89, %s90
    %p99 = scmp.eq.s32.totalorder %s23, 0
    %p100 = por %p98, %p99
    %p101 = scmp.ne.s32.totalorder %s89, %s90
    %p102 = scmp.eq.s32.totalorder %s24, 9
    %p103 = por %p101, %p102
    %p105 = scmp.ne.s32.totalorder %s90, %s104
    %p106 = scmp.eq.s32.totalorder %s24, 0
    %p107 = por %p105, %p106
    %s109 = sadd.s32 %s108, 1
    %p112 = scmp.eq.s32.totalorder %s18, 9
    %p113 = scmp.ne.s32.totalorder %s108, %s110
    %p114 = scmp.eq.s32.totalorder %s18, 0
    %p115 = por %p113, %p114
    %p116 = scmp.ne.s32.totalorder %s108, %s110
    %p117 = scmp.eq.s32.totalorder %s23, 9
    %p118 = por %p116, %p117
    %p119 = scmp.ne.s32.totalorder %s110, %s111
    %p120 = scmp.eq.s32.totalorder %s23, 0
    %p121 = por %p119, %p120
    %p122 = scmp.ne.s32.totalorder %s110, %s111
    %p123 = scmp.eq.s32.totalorder %s24, 9
    %p124 = por %p122, %p123
    %p126 = scmp.ne.s32.totalorder %s111, %s125
    %p127 = scmp.eq.s32.totalorder %s24, 0
    %p128 = por %p126, %p127
    %s130 = sadd.s32 %s129, 1
    %p133 = scmp.eq.s32.totalorder %s18, 9
    %p134 = scmp.ne.s32.totalorder %s129, %s131
    %p135 = scmp.eq.s32.totalorder %s18, 0
    %p136 = por %p134, %p135
    %p137 = scmp.ne.s32.totalorder %s129, %s131
    %p138 = scmp.eq.s32.totalorder %s23, 9
    %p139 = por %p137, %p138
    %p140 = scmp.ne.s32.totalorder %s131, %s132
    %p141 = scmp.eq.s32.totalorder %s23, 0
    %p142 = por %p140, %p141
    %p143 = scmp.ne.s32.totalorder %s131, %s132
    %p144 = scmp.eq.s32.totalorder %s24, 9
    %p145 = por %p143, %p144
    %p147 = scmp.ne.s32.totalorder %s132, %s146
    %p148 = scmp.eq.s32.totalorder %s24, 0
    %p149 = por %p147, %p148
    %s151 = sadd.s32 %s150, 1
    %p154 = scmp.eq.s32.totalorder %s18, 9
    %p155 = scmp.ne.s32.totalorder %s150, %s152
    %p156 = scmp.eq.s32.totalorder %s18, 0
    %p157 = por %p155, %p156
    %p158 = scmp.ne.s32.totalorder %s150, %s152
    %p159 = scmp.eq.s32.totalorder %s23, 9
    %p160 = por %p158, %p159
    %p161 = scmp.ne.s32.totalorder %s152, %s153
    %p162 = scmp.eq.s32.totalorder %s23, 0
    %p163 = por %p161, %p162
    %p164 = scmp.ne.s32.totalorder %s152, %s153
    %p165 = scmp.eq.s32.totalorder %s24, 9
    %p166 = por %p164, %p165
    %p168 = scmp.ne.s32.totalorder %s153, %s167
    %p169 = scmp.eq.s32.totalorder %s24, 0
    %p170 = por %p168, %p169
    %s172 = sadd.s32 %s171, 1
    %p175 = scmp.eq.s32.totalorder %s18, 9
    %p176 = scmp.ne.s32.totalorder %s171, %s173
    %p177 = scmp.eq.s32.totalorder %s18, 0
    %p178 = por %p176, %p177
    %p179 = scmp.ne.s32.totalorder %s171, %s173
    %p180 = scmp.eq.s32.totalorder %s23, 9
    %p181 = por %p179, %p180
    %p182 = scmp.ne.s32.totalorder %s173, %s174
    %p183 = scmp.eq.s32.totalorder %s23, 0
    %p184 = por %p182, %p183
    %p185 = scmp.ne.s32.totalorder %s173, %s174
    %p186 = scmp.eq.s32.totalorder %s24, 9
    %p187 = por %p185, %p186
    %p189 = scmp.ne.s32.totalorder %s174, %s188
    %p190 = scmp.eq.s32.totalorder %s24, 0
    %p191 = por %p189, %p190
    %s193 = sadd.s32 %s192, 1
    %p196 = scmp.eq.s32.totalorder %s18, 9
    %p197 = scmp.ne.s32.totalorder %s192, %s194
    %p198 = scmp.eq.s32.totalorder %s18, 0
    %p199 = por %p197, %p198
    %p200 = scmp.ne.s32.totalorder %s192, %s194
    %p201 = scmp.eq.s32.totalorder %s23, 9
    %p202 = por %p200, %p201
    %p203 = scmp.ne.s32.totalorder %s194, %s195
    %p204 = scmp.eq.s32.totalorder %s23, 0
    %p205 = por %p203, %p204
    %p206 = scmp.ne.s32.totalorder %s194, %s195
    %p207 = scmp.eq.s32.totalorder %s24, 9
    %p208 = por %p206, %p207
    %p210 = scmp.ne.s32.totalorder %s195, %s209
    %p211 = scmp.eq.s32.totalorder %s24, 0
    %p212 = por %p210, %p211
    %s214 = sadd.s32 %s213, 1
    %p217 = scmp.eq.s32.totalorder %s18, 9
    %p218 = scmp.ne.s32.totalorder %s213, %s215
    %p219 = scmp.eq.s32.totalorder %s18, 0
    %p220 = por %p218, %p219
    %p221 = scmp.ne.s32.totalorder %s213, %s215
    %p222 = scmp.eq.s32.totalorder %s23, 9
    %p223 = por %p221, %p222
    %p224 = scmp.ne.s32.totalorder %s215, %s216
    %p225 = scmp.eq.s32.totalorder %s23, 0
    %p226 = por %p224, %p225
    %p227 = scmp.ne.s32.totalorder %s215, %s216
    %p228 = scmp.eq.s32.totalorder %s24, 9
    %p229 = por %p227, %p228
    %p231 = scmp.ne.s32.totalorder %s216, %s230
    %p232 = scmp.eq.s32.totalorder %s24, 0
    %p233 = por %p231, %p232
    %s235 = sadd.s32 %s234, 1
    %p238 = scmp.eq.s32.totalorder %s18, 9
    %p239 = scmp.ne.s32.totalorder %s234, %s236
    %p240 = scmp.eq.s32.totalorder %s18, 0
    %p241 = por %p239, %p240
    %p242 = scmp.ne.s32.totalorder %s234, %s236
    %p243 = scmp.eq.s32.totalorder %s23, 9
    %p244 = por %p242, %p243
    %p245 = scmp.ne.s32.totalorder %s236, %s237
    %p246 = scmp.eq.s32.totalorder %s23, 0
    %p247 = por %p245, %p246
    %p248 = scmp.ne.s32.totalorder %s236, %s237
    %p249 = scmp.eq.s32.totalorder %s24, 9
    %p250 = por %p248, %p249
    %p252 = scmp.ne.s32.totalorder %s237, %s251
    %p253 = scmp.eq.s32.totalorder %s24, 0
    %p254 = por %p252, %p253
    %s256 = sadd.s32 %s255, 1
    %p259 = scmp.eq.s32.totalorder %s18, 9
    %p260 = scmp.ne.s32.totalorder %s255, %s257
    %p261 = scmp.eq.s32.totalorder %s18, 0
    %p262 = por %p260, %p261
    %p263 = scmp.ne.s32.totalorder %s255, %s257
    %p264 = scmp.eq.s32.totalorder %s23, 9
    %p265 = por %p263, %p264
    %p266 = scmp.ne.s32.totalorder %s257, %s258
    %p267 = scmp.eq.s32.totalorder %s23, 0
    %p268 = por %p266, %p267
    %p269 = scmp.ne.s32.totalorder %s257, %s258
    %p270 = scmp.eq.s32.totalorder %s24, 9
    %p271 = por %p269, %p270
    %p273 = scmp.ne.s32.totalorder %s258, %s272
    %p274 = scmp.eq.s32.totalorder %s24, 0
    %p275 = por %p273, %p274
    %s277 = sadd.s32 %s276, 1
    %p280 = scmp.eq.s32.totalorder %s18, 9
    %p281 = scmp.ne.s32.totalorder %s276, %s278
    %p282 = scmp.eq.s32.totalorder %s18, 0
    %p283 = por %p281, %p282
    %p284 = scmp.ne.s32.totalorder %s276, %s278
    %p285 = scmp.eq.s32.totalorder %s23, 9
    %p286 = por %p284, %p285
    %p287 = scmp.ne.s32.totalorder %s278, %s279
    %p288 = scmp.eq.s32.totalorder %s23, 0
    %p289 = por %p287, %p288
    %p290 = scmp.ne.s32.totalorder %s278, %s279
    %p291 = scmp.eq.s32.totalorder %s24, 9
    %p292 = por %p290, %p291
    %p294 = scmp.ne.s32.totalorder %s279, %s293
    %p295 = scmp.eq.s32.totalorder %s24, 0
    %p296 = por %p294, %p295
    %s297 = ssub.s32 %s25, %s37
    %s298 = ssub.s32 %s26, %s33
    %s299 = sor.u32 %s297, %s298
    %p300 = scmp.eq.s32.totalorder %s299, 0
    %s302 = sadd.s32 %s301, 1
    %s303 = scalar_select %p300, %s301, %s302
    %p306 = pneg %p300
    %p307 = scmp.eq.s32.totalorder %s18, 9
    %p308 = por %p306, %p307
    %p309 = scmp.ne.s32.totalorder %s301, %s304
    %p310 = scmp.eq.s32.totalorder %s18, 0
    %p311 = por %p309, %p310
    %p312 = scmp.ne.s32.totalorder %s301, %s304
    %p313 = scmp.eq.s32.totalorder %s23, 9
    %p314 = por %p312, %p313
    %p315 = scmp.ne.s32.totalorder %s304, %s305
    %p316 = scmp.eq.s32.totalorder %s23, 0
    %p317 = por %p315, %p316
    %p318 = scmp.ne.s32.totalorder %s304, %s305
    %p319 = scmp.eq.s32.totalorder %s24, 9
    %p320 = por %p318, %p319
    %p322 = scmp.ne.s32.totalorder %s305, %s321
    %p323 = scmp.eq.s32.totalorder %s24, 0
    %p324 = por %p322, %p323
    %p325 = scmp.le.s32.totalorder 1, %s18
    %p326 = scmp.lt.s32.totalorder %s18, 11
    %p327 = pnand %p325, %p326
    %p328 = pneg %p327
    // Predicated region
    $region9: #{run.3} parent=5 // pred_check
      _
    $region10: #{run.3} parent=5 // pred_check_branch
      %330 = sbr.rel (%p327) target = $region12
    $region11: #{run.3} parent=5 // pred_region
      %s331 = ssub.s32 %s18, 1
      // Predicated region
      $region13: #{run.3} parent=11 // pred_check
        %p332 = pneg %p79
      $region14: #{run.3} parent=11 // pred_check_branch
        %334 = sbr.rel (%p332) target = $region16
      $region15: #{run.3} parent=11 // pred_region
        _
      $region16: #{run.3} parent=11 // pred_fallthru
        _
      // Predicated region
      $region17: #{run.3} parent=11 // pred_check
        %p335 = pneg %p100
      $region18: #{run.3} parent=11 // pred_check_branch
        %337 = sbr.rel (%p335) target = $region20
      $region19: #{run.3} parent=11 // pred_region
        _
      $region20: #{run.3} parent=11 // pred_fallthru
        _
      // Predicated region
      $region21: #{run.3} parent=11 // pred_check
        %p338 = pneg %p121
      $region22: #{run.3} parent=11 // pred_check_branch
        %340 = sbr.rel (%p338) target = $region24
      $region23: #{run.3} parent=11 // pred_region
        _
      $region24: #{run.3} parent=11 // pred_fallthru
        _
      // Predicated region
      $region25: #{run.3} parent=11 // pred_check
        %p341 = pneg %p142
      $region26: #{run.3} parent=11 // pred_check_branch
        %343 = sbr.rel (%p341) target = $region28
      $region27: #{run.3} parent=11 // pred_region
        _
      $region28: #{run.3} parent=11 // pred_fallthru
        _
      // Predicated region
      $region29: #{run.3} parent=11 // pred_check
        %p344 = pneg %p163
      $region30: #{run.3} parent=11 // pred_check_branch
        %346 = sbr.rel (%p344) target = $region32
      $region31: #{run.3} parent=11 // pred_region
        _
      $region32: #{run.3} parent=11 // pred_fallthru
        _
      // Predicated region
      $region33: #{run.3} parent=11 // pred_check
        %p347 = pneg %p184
      $region34: #{run.3} parent=11 // pred_check_branch
        %349 = sbr.rel (%p347) target = $region36
      $region35: #{run.3} parent=11 // pred_region
        _
      $region36: #{run.3} parent=11 // pred_fallthru
        _
      // Predicated region
      $region37: #{run.3} parent=11 // pred_check
        %p350 = pneg %p205
      $region38: #{run.3} parent=11 // pred_check_branch
        %352 = sbr.rel (%p350) target = $region40
      $region39: #{run.3} parent=11 // pred_region
        _
      $region40: #{run.3} parent=11 // pred_fallthru
        _
      // Predicated region
      $region41: #{run.3} parent=11 // pred_check
        %p353 = pneg %p226
      $region42: #{run.3} parent=11 // pred_check_branch
        %355 = sbr.rel (%p353) target = $region44
      $region43: #{run.3} parent=11 // pred_region
        _
      $region44: #{run.3} parent=11 // pred_fallthru
        _
      // Predicated region
      $region45: #{run.3} parent=11 // pred_check
        %p356 = pneg %p247
      $region46: #{run.3} parent=11 // pred_check_branch
        %358 = sbr.rel (%p356) target = $region48
      $region47: #{run.3} parent=11 // pred_region
        _
      $region48: #{run.3} parent=11 // pred_fallthru
        _
      // Predicated region
      $region49: #{run.3} parent=11 // pred_check
        %p359 = pneg %p268
      $region50: #{run.3} parent=11 // pred_check_branch
        %361 = sbr.rel (%p359) target = $region52
      $region51: #{run.3} parent=11 // pred_region
        _
      $region52: #{run.3} parent=11 // pred_fallthru
        _
      // Predicated region
      $region53: #{run.3} parent=11 // pred_check
        %p362 = pneg %p289
      $region54: #{run.3} parent=11 // pred_check_branch
        %364 = sbr.rel (%p362) target = $region56
      $region55: #{run.3} parent=11 // pred_region
        _
      $region56: #{run.3} parent=11 // pred_fallthru
        _
    $region12: #{run.3} parent=5 // pred_fallthru
      _
    %p365 = scmp.lt.s32.totalorder %s18, 10
    // Predicated region
    $region57: #{run.3} parent=5 // pred_check
      %p366 = pneg %p365
    $region58: #{run.3} parent=5 // pred_check_branch
      %368 = sbr.rel (%p366) target = $region60
    $region59: #{run.3} parent=5 // pred_region
      // Predicated region
      $region61: #{run.3} parent=59 // pred_check
        %p369 = pneg %p52
      $region62: #{run.3} parent=59 // pred_check_branch
        %371 = sbr.rel (%p369) target = $region64
      $region63: #{run.3} parent=59 // pred_region
        %p372 = scmp.lt.s32.totalorder %s25, 1
        %s373 = scalar_select %p372, %s25, 1
        %p374 = scmp.lt.s32.totalorder %s26, 4
        %s375 = scalar_select %p374, %s26, 4
        %s376 = smul.addr %s375, 8
        %s377 = smul.addr %s373, 40
        %s378 = sadd.s32 %s376, %s377
        %s379 = smul.addr %s378, 4
        %s380 = scalar_lea.vmem %s0, %s379
      $region64: #{run.3} parent=59 // pred_fallthru
        _
    $region60: #{run.3} parent=5 // pred_fallthru
      _
    %p381 = scmp.le.s32.totalorder 1, %s18
    %p382 = scmp.lt.s32.totalorder %s18, 11
    %p383 = pnand %p381, %p382
    %p384 = pneg %p383
    // Predicated region
    $region65: #{run.3} parent=5 // pred_check
      _
    $region66: #{run.3} parent=5 // pred_check_branch
      %386 = sbr.rel (%p383) target = $region68
    $region67: #{run.3} parent=5 // pred_region
      %s387 = ssub.s32 %s18, 1
      %p388 = scmp.lt.s32.totalorder %s27, 1
      %s389 = scalar_select %p388, %s27, 1
      %p390 = scmp.lt.s32.totalorder %s28, 4
      %s391 = scalar_select %p390, %s28, 4
      %s392 = smul.addr %s391, 8
      %s393 = smul.addr %s389, 40
      %s394 = sadd.s32 %s392, %s393
      %s395 = smul.addr %s394, 4
      %s396 = scalar_lea.vmem %s0, %s395
      %p397 = pneg %p58
      %p398 = pneg %p55
      %p399 = pneg %p79
      %p400 = pneg %p76
      %p401 = pneg %p100
      %p402 = pneg %p97
      %p403 = pneg %p121
      %p404 = pneg %p118
      %p405 = pneg %p142
      %p406 = pneg %p139
      %p407 = pneg %p163
      %p408 = pneg %p160
      %p409 = pneg %p184
      %p410 = pneg %p181
      %p411 = pneg %p205
      %p412 = pneg %p202
      %p413 = pneg %p226
      %p414 = pneg %p223
      %p415 = pneg %p247
      %p416 = pneg %p244
      %p417 = pneg %p268
      %p418 = pneg %p265
      %p419 = pneg %p289
      %p420 = pneg %p286
      %p421 = pneg %p317
      %p422 = pneg %p314
      %p423 = scmp.lt.s32.totalorder %s27, 1
      %s424 = scalar_select %p423, %s27, 1
      %p425 = scmp.lt.s32.totalorder %s28, 4
      %s426 = scalar_select %p425, %s28, 4
      %s427 = smul.addr %s426, 8
      %s428 = smul.addr %s424, 40
      %s429 = sadd.s32 %s427, %s428
      %s430 = smul.addr %s429, 4
      %s431 = scalar_lea.vmem %s12, %s430
      %p432 = scmp.lt.s32.totalorder %s27, 1
      %s433 = scalar_select %p432, %s27, 1
      %p434 = scmp.lt.s32.totalorder %s28, 4
      %s435 = scalar_select %p434, %s28, 4
      %s436 = smul.addr %s435, 8
      %s437 = smul.addr %s433, 40
      %s438 = sadd.s32 %s436, %s437
      %s439 = smul.addr %s438, 4
      %s440 = scalar_lea.vmem %s0, %s439
      %p441 = scmp.lt.s32.totalorder %s27, 1
      %s442 = scalar_select %p441, %s27, 1
      %p443 = scmp.lt.s32.totalorder %s28, 4
      %s444 = scalar_select %p443, %s28, 4
      %s445 = smul.addr %s444, 8
      %s446 = smul.addr %s442, 40
      %s447 = sadd.s32 %s445, %s446
      %s448 = smul.addr %s447, 4
      %s449 = scalar_lea.vmem %s12, %s448
      %v451 = vld [vmem:[%s440] sm:$0xf]
      %v452 = vld [vmem:[%s440 + $0x4] sm:$0xf]
      %v453 = vld [vmem:[%s440 + $0x8] sm:$0xf]
      %v454 = vld [vmem:[%s440 + $0xc] sm:$0xf]
      %v455 = vld [vmem:[%s440 + $0x10] sm:$0xf]
      %v456 = vld [vmem:[%s440 + $0x14] sm:$0xf]
      %v457 = vld [vmem:[%s440 + $0x18] sm:$0xf]
      %v458 = vld [vmem:[%s440 + $0x1c] sm:$0xf]
      %v459 = vld [vmem:[%s1] sm:$0xf]
      %v460 = vld [vmem:[%s2] sm:$0x1]
      %v462 = vlaneseq
      %v463 = vshrl.u32 %v462, 7
      %v464 = vsub.s32 0, %v463
      %v465 = vrot.slane %v460, %v464
      %v475 = vunpack.c.l.b16 %v451
      %v476 = vunpack.c.l.b16 %v452
      %v477 = vunpack.c.l.b16 %v453
      %v478 = vunpack.c.l.b16 %v454
      %v479 = vunpack.c.l.b16 %v455
      %v480 = vunpack.c.l.b16 %v456
      %v481 = vunpack.c.l.b16 %v457
      %v482 = vunpack.c.l.b16 %v458
      %v483 = vpack.c.b16 %v476, %v475
      %v484 = vpack.c.b16 %v478, %v477
      %v485 = vpack.c.b16 %v480, %v479
      %v486 = vpack.c.b16 %v482, %v481
      %vm487 = vcmask 64512
      %v489 = vsel %vm487, %v483, 0
      %v492 = vsel %vm487, %v484, 0
      %v495 = vsel %vm487, %v485, 0
      %v498 = vsel %vm487, %v486, 0
      %vm500 = vcmask 1043456
      %v502 = vsel %vm500, %v459, 0
      %504 = vmatprep.subr.bf16.mxu0 0
      %505 = vmatpush1.bf16.msra.mxu0 %v502
      %506 = vmatprep.subr.bf16.mxu0 0
      %507 = vmatpush1.bf16.msra.mxu0 0
      %508 = vmatprep.subr.bf16.mxu0 0
      %509 = vmatpush1.bf16.msra.mxu0 0
      %510 = vmatprep.subr.bf16.mxu0 0
      %511 = vmatpush1.bf16.msra.mxu0 0
      %512 = vmatprep.subr.bf16.mxu0 0
      %513 = vmatpush1.bf16.msra.mxu0 0
      %514 = vmatprep.subr.bf16.mxu0 0
      %515 = vmatpush1.bf16.msra.mxu0 0
      %516 = vmatprep.subr.bf16.mxu0 0
      %517 = vmatpush1.bf16.msra.mxu0 0
      %518 = vmatprep.subr.bf16.mxu0 0
      %519 = vmatpush1.bf16.msra.mxu0 0
      %520 = vmatprep.subr.bf16.mxu0 0
      %521 = vmatpush1.bf16.msra.mxu0 0
      %522 = vmatprep.subr.bf16.mxu0 0
      %523 = vmatpush1.bf16.msra.mxu0 0
      %524 = vmatprep.subr.bf16.mxu0 0
      %525 = vmatpush1.bf16.msra.mxu0 0
      %526 = vmatprep.subr.bf16.mxu0 0
      %527 = vmatpush1.bf16.msra.mxu0 0
      %528 = vmatprep.subr.bf16.mxu0 0
      %529 = vmatpush1.bf16.msra.mxu0 0
      %530 = vmatprep.subr.bf16.mxu0 0
      %531 = vmatpush1.bf16.msra.mxu0 0
      %532 = vmatprep.subr.bf16.mxu0 0
      %533 = vmatpush1.bf16.msra.mxu0 0
      %534 = vmatprep.subr.bf16.mxu0 0
      %535 = vmatpush1.bf16.msra.mxu0 0
      %536 = vmatprep.mubr.bf16.mxu0 0
      %537 = vmatmul.mubr.bf16.gmra.mrb[0].mxu0 %v489
      %v538 = vpop.f32.mrb[0].mxu0
      %v539 = vadd.f32 %v465, %v538
      %v540 = vpop.f32.mrb[0].mxu0
      %v541 = vpop.f32.mrb[0].mxu0
      %v542 = vadd.f32 %v465, %v541
      %v543 = vpop.f32.mrb[0].mxu0
      %544 = vmatprep.mubr.bf16.mxu0 0
      %545 = vmatmul.mubr.bf16.gmra.mrb[0].mxu0 %v492
      %v546 = vpop.f32.mrb[0].mxu0
      %v547 = vadd.f32 %v465, %v546
      %v548 = vpop.f32.mrb[0].mxu0
      %v549 = vpop.f32.mrb[0].mxu0
      %v550 = vadd.f32 %v465, %v549
      %v551 = vpop.f32.mrb[0].mxu0
      %552 = vmatprep.mubr.bf16.mxu0 0
      %553 = vmatmul.mubr.bf16.gmra.mrb[0].mxu0 %v495
      %v554 = vpop.f32.mrb[0].mxu0
      %v555 = vadd.f32 %v465, %v554
      %v556 = vpop.f32.mrb[0].mxu0
      %v557 = vpop.f32.mrb[0].mxu0
      %v558 = vadd.f32 %v465, %v557
      %v559 = vpop.f32.mrb[0].mxu0
      %560 = vmatprep.mubr.bf16.mxu0 0
      %561 = vmatmul.mubr.bf16.gmra.mrb[0].mxu0 %v498
      %v562 = vpop.f32.mrb[0].mxu0
      %v563 = vadd.f32 %v465, %v562
      %v564 = vpop.f32.mrb[0].mxu0
      %v565 = vpop.f32.mrb[0].mxu0
      %v566 = vadd.f32 %v465, %v565
      %v567 = vpop.f32.mrb[0].mxu0
      %568 = vdwg.mxu0
      %v569 = vmax.f32 %v539, 0.0
      %v570 = vmax.f32 %v542, 0.0
      %v571 = vmax.f32 %v547, 0.0
      %v572 = vmax.f32 %v550, 0.0
      %v573 = vmax.f32 %v555, 0.0
      %v574 = vmax.f32 %v558, 0.0
      %v575 = vmax.f32 %v563, 0.0
      %v576 = vmax.f32 %v566, 0.0
      %v577 = vunpack.c.l.bf16 %v451
      %v578 = vunpack.c.l.bf16 %v452
      %v579 = vunpack.c.l.bf16 %v453
      %v580 = vunpack.c.l.bf16 %v454
      %v581 = vunpack.c.l.bf16 %v455
      %v582 = vunpack.c.l.bf16 %v456
      %v583 = vunpack.c.l.bf16 %v457
      %v584 = vunpack.c.l.bf16 %v458
      %v585 = vsel %vm487, %v577, 0.0
      %v586 = vsel %vm487, %v578, 0.0
      %v587 = vadd.f32 %v585, %v586
      %v588 = vsel %vm487, %v579, 0.0
      %v589 = vadd.f32 %v587, %v588
      %v590 = vsel %vm487, %v580, 0.0
      %v591 = vadd.f32 %v589, %v590
      %v592 = vsel %vm487, %v581, 0.0
      %v593 = vadd.f32 %v591, %v592
      %v594 = vsel %vm487, %v582, 0.0
      %v595 = vadd.f32 %v593, %v594
      %v596 = vsel %vm487, %v583, 0.0
      %v597 = vadd.f32 %v595, %v596
      %v598 = vsel %vm487, %v584, 0.0
      %v599 = vadd.f32 %v597, %v598
      %v600 = vrot.slane %v599, 4
      %v601 = vadd.f32 %v599, %v600
      %v602 = vrot.slane %v601, 2
      %v603 = vadd.f32 %v601, %v602
      %v604 = vrot.slane %v603, 1
      %v605 = vadd.f32 %v603, %v604
      %v606 = vmul.f32 %v605, 0.015625
      %p607 = scmp.eq.s32.totalorder %s28, 0
      // Predicated region
      $region69: #{run.3} parent=67 // pred_check
        %p608 = pneg %p607
      $region70: #{run.3} parent=67 // pred_check_branch
        %610 = sbr.rel (%p608) target = $region72
      $region71: #{run.3} parent=67 // pred_region
        %vm611 = vcmask 57344
        %612 = vst.msk [vmem:[#allocation3] sm:$0x1] %vm611, %v606
      $region72: #{run.3} parent=67 // pred_fallthru
        _
      %v613 = vld [vmem:[#allocation3] sm:$0x1]
      %v614 = vadd.f32 %v613, %v606
      %v615 = vmul.f32 %v614, 0.5
      %vm616 = vcmask 57344
      %617 = vst.msk [vmem:[#allocation3] sm:$0x1] %vm616, %v606
      %v619 = vlaneseq
      %v620 = vshrl.u32 %v619, 7
      %v621 = vsub.s32 0, %v620
      %v622 = vrot.slane %v615, %v621
      %v623 = vld [vmem:[%s9] sm:$0xff]
      %v624 = vld [vmem:[%s10] sm:$0x1]
      %v626 = vlaneseq
      %v627 = vshrl.u32 %v626, 7
      %v628 = vsub.s32 0, %v627
      %v629 = vrot.slane %v624, %v628
      %v631 = vsel %vm487, %v622, 0
      %633 = vmatprep.subr.mxu0 0.0
      %634 = vmatpush1.msra.mxu0 %v623
      %635 = vmatprep.subr.mxu0 0.0
      %636 = vmatpush1.msra.mxu0 0.0
      %637 = vmatprep.subr.mxu0 0.0
      %638 = vmatpush1.msra.mxu0 0.0
      %639 = vmatprep.subr.mxu0 0.0
      %640 = vmatpush1.msra.mxu0 0.0
      %641 = vmatprep.subr.mxu0 0.0
      %642 = vmatpush1.msra.mxu0 0.0
      %643 = vmatprep.subr.mxu0 0.0
      %644 = vmatpush1.msra.mxu0 0.0
      %645 = vmatprep.subr.mxu0 0.0
      %646 = vmatpush1.msra.mxu0 0.0
      %647 = vmatprep.subr.mxu0 0.0
      %648 = vmatpush1.msra.mxu0 0.0
      %649 = vmatprep.subr.mxu0 0.0
      %650 = vmatpush1.msra.mxu0 0.0
      %651 = vmatprep.subr.mxu0 0.0
      %652 = vmatpush1.msra.mxu0 0.0
      %653 = vmatprep.subr.mxu0 0.0
      %654 = vmatpush1.msra.mxu0 0.0
      %655 = vmatprep.subr.mxu0 0.0
      %656 = vmatpush1.msra.mxu0 0.0
      %657 = vmatprep.subr.mxu0 0.0
      %658 = vmatpush1.msra.mxu0 0.0
      %659 = vmatprep.subr.mxu0 0.0
      %660 = vmatpush1.msra.mxu0 0.0
      %661 = vmatprep.subr.mxu0 0.0
      %662 = vmatpush1.msra.mxu0 0.0
      %663 = vmatprep.subr.mxu0 0.0
      %664 = vmatpush1.msra.mxu0 0.0
      %665 = vmatprep.subr.mxu0 0.0
      %666 = vmatpush1.msra.mxu0 0.0
      %667 = vmatprep.subr.mxu0 0.0
      %668 = vmatpush1.msra.mxu0 0.0
      %669 = vmatprep.subr.mxu0 0.0
      %670 = vmatpush1.msra.mxu0 0.0
      %671 = vmatprep.subr.mxu0 0.0
      %672 = vmatpush1.msra.mxu0 0.0
      %673 = vmatprep.subr.mxu0 0.0
      %674 = vmatpush1.msra.mxu0 0.0
      %675 = vmatprep.subr.mxu0 0.0
      %676 = vmatpush1.msra.mxu0 0.0
      %677 = vmatprep.subr.mxu0 0.0
      %678 = vmatpush1.msra.mxu0 0.0
      %679 = vmatprep.subr.mxu0 0.0
      %680 = vmatpush1.msra.mxu0 0.0
      %681 = vmatprep.subr.mxu0 0.0
      %682 = vmatpush1.msra.mxu0 0.0
      %683 = vmatprep.subr.mxu0 0.0
      %684 = vmatpush1.msra.mxu0 0.0
      %685 = vmatprep.subr.mxu0 0.0
      %686 = vmatpush1.msra.mxu0 0.0
      %687 = vmatprep.subr.mxu0 0.0
      %688 = vmatpush1.msra.mxu0 0.0
      %689 = vmatprep.subr.mxu0 0.0
      %690 = vmatpush1.msra.mxu0 0.0
      %691 = vmatprep.subr.mxu0 0.0
      %692 = vmatpush1.msra.mxu0 0.0
      %693 = vmatprep.subr.mxu0 0.0
      %694 = vmatpush1.msra.mxu0 0.0
      %695 = vmatprep.subr.mxu0 0.0
      %696 = vmatpush1.msra.mxu0 0.0
      %697 = vmatprep.mubr.f32.mxu0 0.0
      %698 = vmatmul.mubr.f32.gmra.mrb[0].mxu0 %v631
      %v699 = vpop.f32.mrb[0].mxu0
      %v700 = vadd.f32 %v629, %v699
      %v701 = vpop.f32.mrb[0].mxu0
      %702 = vdwg.mxu0
      %v703 = vmax.f32 %v700, 0.0
      %v704 = vld [vmem:[%s11] sm:$0x3]
      %vm705 = vcmask 15360
      %v707 = vsel %vm705, %v703, 0
      %vm709 = vcmask 1041408
      %v711 = vsel %vm709, %v704, 0
      %713 = vmatprep.subr.mxu0 0.0
      %714 = vmatpush1.msra.mxu0 %v711
      %715 = vmatprep.subr.mxu0 0.0
      %716 = vmatpush1.msra.mxu0 0.0
      %717 = vmatprep.subr.mxu0 0.0
      %718 = vmatpush1.msra.mxu0 0.0
      %719 = vmatprep.subr.mxu0 0.0
      %720 = vmatpush1.msra.mxu0 0.0
      %721 = vmatprep.subr.mxu0 0.0
      %722 = vmatpush1.msra.mxu0 0.0
      %723 = vmatprep.subr.mxu0 0.0
      %724 = vmatpush1.msra.mxu0 0.0
      %725 = vmatprep.subr.mxu0 0.0
      %726 = vmatpush1.msra.mxu0 0.0
      %727 = vmatprep.subr.mxu0 0.0
      %728 = vmatpush1.msra.mxu0 0.0
      %729 = vmatprep.subr.mxu0 0.0
      %730 = vmatpush1.msra.mxu0 0.0
      %731 = vmatprep.subr.mxu0 0.0
      %732 = vmatpush1.msra.mxu0 0.0
      %733 = vmatprep.subr.mxu0 0.0
      %734 = vmatpush1.msra.mxu0 0.0
      %735 = vmatprep.subr.mxu0 0.0
      %736 = vmatpush1.msra.mxu0 0.0
      %737 = vmatprep.subr.mxu0 0.0
      %738 = vmatpush1.msra.mxu0 0.0
      %739 = vmatprep.subr.mxu0 0.0
      %740 = vmatpush1.msra.mxu0 0.0
      %741 = vmatprep.subr.mxu0 0.0
      %742 = vmatpush1.msra.mxu0 0.0
      %743 = vmatprep.subr.mxu0 0.0
      %744 = vmatpush1.msra.mxu0 0.0
      %745 = vmatprep.subr.mxu0 0.0
      %746 = vmatpush1.msra.mxu0 0.0
      %747 = vmatprep.subr.mxu0 0.0
      %748 = vmatpush1.msra.mxu0 0.0
      %749 = vmatprep.subr.mxu0 0.0
      %750 = vmatpush1.msra.mxu0 0.0
      %751 = vmatprep.subr.mxu0 0.0
      %752 = vmatpush1.msra.mxu0 0.0
      %753 = vmatprep.subr.mxu0 0.0
      %754 = vmatpush1.msra.mxu0 0.0
      %755 = vmatprep.subr.mxu0 0.0
      %756 = vmatpush1.msra.mxu0 0.0
      %757 = vmatprep.subr.mxu0 0.0
      %758 = vmatpush1.msra.mxu0 0.0
      %759 = vmatprep.subr.mxu0 0.0
      %760 = vmatpush1.msra.mxu0 0.0
      %761 = vmatprep.subr.mxu0 0.0
      %762 = vmatpush1.msra.mxu0 0.0
      %763 = vmatprep.subr.mxu0 0.0
      %764 = vmatpush1.msra.mxu0 0.0
      %765 = vmatprep.subr.mxu0 0.0
      %766 = vmatpush1.msra.mxu0 0.0
      %767 = vmatprep.subr.mxu0 0.0
      %768 = vmatpush1.msra.mxu0 0.0
      %769 = vmatprep.subr.mxu0 0.0
      %770 = vmatpush1.msra.mxu0 0.0
      %771 = vmatprep.subr.mxu0 0.0
      %772 = vmatpush1.msra.mxu0 0.0
      %773 = vmatprep.subr.mxu0 0.0
      %774 = vmatpush1.msra.mxu0 0.0
      %775 = vmatprep.subr.mxu0 0.0
      %776 = vmatpush1.msra.mxu0 0.0
      %777 = vmatprep.mubr.f32.mxu0 0.0
      %778 = vmatmul.mubr.f32.gmra.mrb[0].mxu0 %v707
      %v779 = vpop.f32.mrb[0].mxu0
      %v780 = vadd.f32 0.0, %v779
      %v781 = vpop.f32.mrb[0].mxu0
      %782 = vdwg.mxu0
      // Predicated region
      $region73: #{run.3} parent=67 // pred_check
        %p783 = pneg %p607
      $region74: #{run.3} parent=67 // pred_check_branch
        %785 = sbr.rel (%p783) target = $region76
      $region75: #{run.3} parent=67 // pred_region
        %vm786 = vcmask 60416
        %787 = vst.msk [vmem:[#allocation2] sm:$0xf] %vm786, 0
        %788 = vst.msk [vmem:[#allocation2 + $0x4] sm:$0x1] %vm616, 0
        %789 = vst.msk [vmem:[#allocation2 + $0x8] sm:$0xf] %vm786, 0
        %790 = vst.msk [vmem:[#allocation2 + $0xc] sm:$0x1] %vm616, 0
        %791 = vst.msk [vmem:[#allocation2 + $0x10] sm:$0xf] %vm786, 0
        %792 = vst.msk [vmem:[#allocation2 + $0x14] sm:$0x1] %vm616, 0
        %793 = vst.msk [vmem:[#allocation2 + $0x18] sm:$0xf] %vm786, 0
        %794 = vst.msk [vmem:[#allocation2 + $0x1c] sm:$0x1] %vm616, 0
        %795 = vst.msk [vmem:[#allocation2 + $0x20] sm:$0xf] %vm786, 0
        %796 = vst.msk [vmem:[#allocation2 + $0x24] sm:$0x1] %vm616, 0
        %797 = vst.msk [vmem:[#allocation2 + $0x28] sm:$0xf] %vm786, 0
        %798 = vst.msk [vmem:[#allocation2 + $0x2c] sm:$0x1] %vm616, 0
        %799 = vst.msk [vmem:[#allocation2 + $0x30] sm:$0xf] %vm786, 0
        %800 = vst.msk [vmem:[#allocation2 + $0x34] sm:$0x1] %vm616, 0
        %801 = vst.msk [vmem:[#allocation2 + $0x38] sm:$0xf] %vm786, 0
        %802 = vst.msk [vmem:[#allocation2 + $0x3c] sm:$0x1] %vm616, 0
        %803 = vst.msk [vmem:[#allocation2 + $0x40] sm:$0xf] %vm786, 0
        %804 = vst.msk [vmem:[#allocation2 + $0x44] sm:$0x1] %vm616, 0
        %805 = vst.msk [vmem:[#allocation2 + $0x48] sm:$0xf] %vm786, 0
        %806 = vst.msk [vmem:[#allocation2 + $0x4c] sm:$0x1] %vm616, 0
        %807 = vst.msk [vmem:[#allocation2 + $0x50] sm:$0xf] %vm786, 0
        %808 = vst.msk [vmem:[#allocation2 + $0x54] sm:$0x1] %vm616, 0
        %809 = vst.msk [vmem:[#allocation2 + $0x58] sm:$0xf] %vm786, 0
        %810 = vst.msk [vmem:[#allocation2 + $0x5c] sm:$0x1] %vm616, 0
        %811 = vst.msk [vmem:[#allocation2 + $0x60] sm:$0xf] %vm786, 0
        %812 = vst.msk [vmem:[#allocation2 + $0x64] sm:$0x1] %vm616, 0
        %813 = vst.msk [vmem:[#allocation2 + $0x68] sm:$0xf] %vm786, 0
        %814 = vst.msk [vmem:[#allocation2 + $0x6c] sm:$0x1] %vm616, 0
        %815 = vst.msk [vmem:[#allocation2 + $0x70] sm:$0xf] %vm786, 0
        %816 = vst.msk [vmem:[#allocation2 + $0x74] sm:$0x1] %vm616, 0
        %817 = vst.msk [vmem:[#allocation2 + $0x78] sm:$0xf] %vm786, 0
        %818 = vst.msk [vmem:[#allocation2 + $0x7c] sm:$0x1] %vm616, 0
        %819 = vst.msk [vmem:[#allocation2 + $0x80] sm:$0xf] %vm786, 0
        %820 = vst.msk [vmem:[#allocation2 + $0x84] sm:$0x1] %vm616, 0
        %821 = vst.msk [vmem:[#allocation2 + $0x88] sm:$0xf] %vm786, 0
        %822 = vst.msk [vmem:[#allocation2 + $0x8c] sm:$0x1] %vm616, 0
        %823 = vst.msk [vmem:[#allocation2 + $0x90] sm:$0xf] %vm786, 0
        %824 = vst.msk [vmem:[#allocation2 + $0x94] sm:$0x1] %vm616, 0
        %825 = vst.msk [vmem:[#allocation2 + $0x98] sm:$0xf] %vm786, 0
        %826 = vst.msk [vmem:[#allocation2 + $0x9c] sm:$0x1] %vm616, 0
      $region76: #{run.3} parent=67 // pred_fallthru
        _
      %p827 = scmp.lt.s32.totalorder %s28, 0
      %s828 = ssub.s32 0, %s28
      %s829 = scalar_select %p827, %s828, %s28
      %s830 = sand.u32 %s829, 1
      %s831 = ssub.s32 0, %s830
      %s832 = scalar_select %p827, %s831, %s830
      %p833 = scmp.ne.s32.totalorder %s832, 0
      %p834 = scmp.lt.s32.totalorder %s832, 0
      %p835 = pnand %p834, %p833
      %p836 = pneg %p835
      %s837 = sadd.s32 %s832, 2
      %s838 = scalar_select %p836, %s837, %s832
      %s839 = ssub.s32 1, %s838
      %v840 = vpack.c.bf16 %v570, %v569
      %v841 = vpack.c.bf16 %v572, %v571
      %v842 = vpack.c.bf16 %v574, %v573
      %v843 = vpack.c.bf16 %v576, %v575
      %v848 = vunpack.c.l.b16 %v840
      %v849 = vunpack.c.h.b16 %v840
      %v850 = vunpack.c.l.b16 %v841
      %v851 = vunpack.c.h.b16 %v841
      %v852 = vunpack.c.l.b16 %v842
      %v853 = vunpack.c.h.b16 %v842
      %v854 = vunpack.c.l.b16 %v843
      %v855 = vunpack.c.h.b16 %v843
      %v856 = vpack.c.b16 %v848, %v848
      %v857 = vpack.c.b16 %v849, %v849
      %v858 = vpack.c.b16 %v850, %v850
      %v859 = vpack.c.b16 %v851, %v851
      %v860 = vpack.c.b16 %v852, %v852
      %v861 = vpack.c.b16 %v853, %v853
      %v862 = vpack.c.b16 %v854, %v854
      %v863 = vpack.c.b16 %v855, %v855
      %v865 = vshrl.u32 %v856, 16
      %v867 = vrot.slane %v865, 7
      %v868 = vshll.u32 %v856, 16
      %v870 = vor.u32 %v867, %v868
      %v871 = vrot.slane %v867, 4
      %v873 = vshrl.u32 %v857, 16
      %v875 = vrot.slane %v873, 7
      %v876 = vshll.u32 %v857, 16
      %v878 = vor.u32 %v875, %v876
      %v879 = vrot.slane %v875, 4
      %v881 = vshrl.u32 %v858, 16
      %v883 = vrot.slane %v881, 7
      %v884 = vshll.u32 %v858, 16
      %v886 = vor.u32 %v883, %v884
      %v887 = vrot.slane %v883, 4
      %v889 = vshrl.u32 %v859, 16
      %v891 = vrot.slane %v889, 7
      %v892 = vshll.u32 %v859, 16
      %v894 = vor.u32 %v891, %v892
      %v895 = vrot.slane %v891, 4
      %v897 = vshrl.u32 %v860, 16
      %v899 = vrot.slane %v897, 7
      %v900 = vshll.u32 %v860, 16
      %v902 = vor.u32 %v899, %v900
      %v903 = vrot.slane %v899, 4
      %v905 = vshrl.u32 %v861, 16
      %v907 = vrot.slane %v905, 7
      %v908 = vshll.u32 %v861, 16
      %v910 = vor.u32 %v907, %v908
      %v911 = vrot.slane %v907, 4
      %v913 = vshrl.u32 %v862, 16
      %v915 = vrot.slane %v913, 7
      %v916 = vshll.u32 %v862, 16
      %v918 = vor.u32 %v915, %v916
      %v919 = vrot.slane %v915, 4
      %v921 = vshrl.u32 %v863, 16
      %v923 = vrot.slane %v921, 7
      %v924 = vshll.u32 %v863, 16
      %v926 = vor.u32 %v923, %v924
      %v927 = vrot.slane %v923, 4
      %s944 = smul.u32 %s838, 20
      %s945 = sadd.s32 2, %s944
      %s946 = smul.addr %s945, 4
      %s947 = scalar_lea.vmem [#allocation2], %s946
      %vm948 = vcmask 60416
      %vm949 = vsmask.f32 7938
      %vm950 = vmand %vm948, %vm949
      %v951 = vld [vmem:[%s947] sm:$0xf]
      %v952 = vsel %vm950, %v870, %v951
      %953 = vst [vmem:[%s947] sm:$0xf] %v952
      %vm954 = vcmask 57344
      %vm955 = vsmask.f32 256
      %vm956 = vmand %vm954, %vm955
      %v957 = vld [vmem:[%s947 + $0x4] sm:$0x1]
      %v958 = vsel %vm956, %v871, %v957
      %959 = vst [vmem:[%s947 + $0x4] sm:$0x1] %v958
      %v960 = vld [vmem:[%s947 + $0x8] sm:$0xf]
      %v961 = vsel %vm950, %v878, %v960
      %962 = vst [vmem:[%s947 + $0x8] sm:$0xf] %v961
      %v963 = vld [vmem:[%s947 + $0xc] sm:$0x1]
      %v964 = vsel %vm956, %v879, %v963
      %965 = vst [vmem:[%s947 + $0xc] sm:$0x1] %v964
      %v966 = vld [vmem:[%s947 + $0x10] sm:$0xf]
      %v967 = vsel %vm950, %v886, %v966
      %968 = vst [vmem:[%s947 + $0x10] sm:$0xf] %v967
      %v969 = vld [vmem:[%s947 + $0x14] sm:$0x1]
      %v970 = vsel %vm956, %v887, %v969
      %971 = vst [vmem:[%s947 + $0x14] sm:$0x1] %v970
      %v972 = vld [vmem:[%s947 + $0x18] sm:$0xf]
      %v973 = vsel %vm950, %v894, %v972
      %974 = vst [vmem:[%s947 + $0x18] sm:$0xf] %v973
      %v975 = vld [vmem:[%s947 + $0x1c] sm:$0x1]
      %v976 = vsel %vm956, %v895, %v975
      %977 = vst [vmem:[%s947 + $0x1c] sm:$0x1] %v976
      %v978 = vld [vmem:[%s947 + $0x20] sm:$0xf]
      %v979 = vsel %vm950, %v902, %v978
      %980 = vst [vmem:[%s947 + $0x20] sm:$0xf] %v979
      %v981 = vld [vmem:[%s947 + $0x24] sm:$0x1]
      %v982 = vsel %vm956, %v903, %v981
      %983 = vst [vmem:[%s947 + $0x24] sm:$0x1] %v982
      %v984 = vld [vmem:[%s947 + $0x28] sm:$0xf]
      %v985 = vsel %vm950, %v910, %v984
      %986 = vst [vmem:[%s947 + $0x28] sm:$0xf] %v985
      %v987 = vld [vmem:[%s947 + $0x2c] sm:$0x1]
      %v988 = vsel %vm956, %v911, %v987
      %989 = vst [vmem:[%s947 + $0x2c] sm:$0x1] %v988
      %v990 = vld [vmem:[%s947 + $0x30] sm:$0xf]
      %v991 = vsel %vm950, %v918, %v990
      %992 = vst [vmem:[%s947 + $0x30] sm:$0xf] %v991
      %v993 = vld [vmem:[%s947 + $0x34] sm:$0x1]
      %v994 = vsel %vm956, %v919, %v993
      %995 = vst [vmem:[%s947 + $0x34] sm:$0x1] %v994
      %v996 = vld [vmem:[%s947 + $0x38] sm:$0xf]
      %v997 = vsel %vm950, %v926, %v996
      %998 = vst [vmem:[%s947 + $0x38] sm:$0xf] %v997
      %v999 = vld [vmem:[%s947 + $0x3c] sm:$0x1]
      %v1000 = vsel %vm956, %v927, %v999
      %1001 = vst [vmem:[%s947 + $0x3c] sm:$0x1] %v1000
      %s1002 = smul.u32 %s839, 20
      %s1003 = smul.addr %s1002, 4
      %s1004 = scalar_lea.vmem [#allocation2], %s1003
      %v1005 = vld [vmem:[%s1004] sm:$0xf]
      %v1006 = vld [vmem:[%s1004 + $0x8] sm:$0xf]
      %v1007 = vld [vmem:[%s1004 + $0x10] sm:$0xf]
      %v1008 = vld [vmem:[%s1004 + $0x18] sm:$0xf]
      %v1009 = vld [vmem:[%s1004 + $0x20] sm:$0xf]
      %v1010 = vld [vmem:[%s1004 + $0x28] sm:$0xf]
      %v1011 = vld [vmem:[%s1004 + $0x30] sm:$0xf]
      %v1012 = vld [vmem:[%s1004 + $0x38] sm:$0xf]
      %v1013 = vld [vmem:[%s3] sm:$0x3]
      %s1014 = smul.addr %s944, 4
      %s1015 = scalar_lea.vmem [#allocation2], %s1014
      %v1016 = vld [vmem:[%s1015] sm:$0xf]
      %v1017 = vld [vmem:[%s1015 + $0x8] sm:$0xf]
      %v1018 = vld [vmem:[%s1015 + $0x10] sm:$0xf]
      %v1019 = vld [vmem:[%s1015 + $0x18] sm:$0xf]
      %v1020 = vld [vmem:[%s1015 + $0x20] sm:$0xf]
      %v1021 = vld [vmem:[%s1015 + $0x28] sm:$0xf]
      %v1022 = vld [vmem:[%s1015 + $0x30] sm:$0xf]
      %v1023 = vld [vmem:[%s1015 + $0x38] sm:$0xf]
      %v1024 = vld [vmem:[%s4] sm:$0xf]
      %v1033 = vunpack.c.l.b16 %v1016
      %v1034 = vunpack.c.l.b16 %v1017
      %v1035 = vunpack.c.l.b16 %v1018
      %v1036 = vunpack.c.l.b16 %v1019
      %v1037 = vunpack.c.l.b16 %v1020
      %v1038 = vunpack.c.l.b16 %v1021
      %v1039 = vunpack.c.l.b16 %v1022
      %v1040 = vunpack.c.l.b16 %v1023
      %v1041 = vpack.c.b16 %v1034, %v1033
      %v1042 = vpack.c.b16 %v1036, %v1035
      %v1043 = vpack.c.b16 %v1038, %v1037
      %v1044 = vpack.c.b16 %v1040, %v1039
      %v1046 = vsel %vm487, %v1041, 0
      %v1049 = vsel %vm487, %v1042, 0
      %v1052 = vsel %vm487, %v1043, 0
      %v1055 = vsel %vm487, %v1044, 0
      %v1058 = vsel %vm500, %v1024, 0
      %1060 = vmatprep.subr.bf16.mxu0 0
      %1061 = vmatpush1.bf16.msra.mxu0 %v1058
      %1062 = vmatprep.subr.bf16.mxu0 0
      %1063 = vmatpush1.bf16.msra.mxu0 0
      %1064 = vmatprep.subr.bf16.mxu0 0
      %1065 = vmatpush1.bf16.msra.mxu0 0
      %1066 = vmatprep.subr.bf16.mxu0 0
      %1067 = vmatpush1.bf16.msra.mxu0 0
      %1068 = vmatprep.subr.bf16.mxu0 0
      %1069 = vmatpush1.bf16.msra.mxu0 0
      %1070 = vmatprep.subr.bf16.mxu0 0
      %1071 = vmatpush1.bf16.msra.mxu0 0
      %1072 = vmatprep.subr.bf16.mxu0 0
      %1073 = vmatpush1.bf16.msra.mxu0 0
      %1074 = vmatprep.subr.bf16.mxu0 0
      %1075 = vmatpush1.bf16.msra.mxu0 0
      %1076 = vmatprep.subr.bf16.mxu0 0
      %1077 = vmatpush1.bf16.msra.mxu0 0
      %1078 = vmatprep.subr.bf16.mxu0 0
      %1079 = vmatpush1.bf16.msra.mxu0 0
      %1080 = vmatprep.subr.bf16.mxu0 0
      %1081 = vmatpush1.bf16.msra.mxu0 0
      %1082 = vmatprep.subr.bf16.mxu0 0
      %1083 = vmatpush1.bf16.msra.mxu0 0
      %1084 = vmatprep.subr.bf16.mxu0 0
      %1085 = vmatpush1.bf16.msra.mxu0 0
      %1086 = vmatprep.subr.bf16.mxu0 0
      %1087 = vmatpush1.bf16.msra.mxu0 0
      %1088 = vmatprep.subr.bf16.mxu0 0
      %1089 = vmatpush1.bf16.msra.mxu0 0
      %1090 = vmatprep.subr.bf16.mxu0 0
      %1091 = vmatpush1.bf16.msra.mxu0 0
      %1092 = vmatprep.mubr.bf16.mxu0 0
      %1093 = vmatmul.mubr.bf16.gmra.mrb[0].mxu0 %v1046
      %v1094 = vpop.f32.mrb[0].mxu0
      %v1095 = vadd.f32 0.0, %v1094
      %v1096 = vpop.f32.mrb[0].mxu0
      %v1097 = vpop.f32.mrb[0].mxu0
      %v1098 = vadd.f32 0.0, %v1097
      %v1099 = vpop.f32.mrb[0].mxu0
      %1100 = vmatprep.mubr.bf16.mxu0 0
      %1101 = vmatmul.mubr.bf16.gmra.mrb[0].mxu0 %v1049
      %v1102 = vpop.f32.mrb[0].mxu0
      %v1103 = vadd.f32 0.0, %v1102
      %v1104 = vpop.f32.mrb[0].mxu0
      %v1105 = vpop.f32.mrb[0].mxu0
      %v1106 = vadd.f32 0.0, %v1105
      %v1107 = vpop.f32.mrb[0].mxu0
      %1108 = vmatprep.mubr.bf16.mxu0 0
      %1109 = vmatmul.mubr.bf16.gmra.mrb[0].mxu0 %v1052
      %v1110 = vpop.f32.mrb[0].mxu0
      %v1111 = vadd.f32 0.0, %v1110
      %v1112 = vpop.f32.mrb[0].mxu0
      %v1113 = vpop.f32.mrb[0].mxu0
      %v1114 = vadd.f32 0.0, %v1113
      %v1115 = vpop.f32.mrb[0].mxu0
      %1116 = vmatprep.mubr.bf16.mxu0 0
      %1117 = vmatmul.mubr.bf16.gmra.mrb[0].mxu0 %v1055
      %v1118 = vpop.f32.mrb[0].mxu0
      %v1119 = vadd.f32 0.0, %v1118
      %v1120 = vpop.f32.mrb[0].mxu0
      %v1121 = vpop.f32.mrb[0].mxu0
      %v1122 = vadd.f32 0.0, %v1121
      %v1123 = vpop.f32.mrb[0].mxu0
      %1124 = vdwg.mxu0
      %v1133 = vunpack.c.l.b16 %v1005
      %v1134 = vunpack.c.l.b16 %v1006
      %v1135 = vunpack.c.l.b16 %v1007
      %v1136 = vunpack.c.l.b16 %v1008
      %v1137 = vunpack.c.l.b16 %v1009
      %v1138 = vunpack.c.l.b16 %v1010
      %v1139 = vunpack.c.l.b16 %v1011
      %v1140 = vunpack.c.l.b16 %v1012
      %v1141 = vpack.c.b16 %v1134, %v1133
      %v1142 = vpack.c.b16 %v1136, %v1135
      %v1143 = vpack.c.b16 %v1138, %v1137
      %v1144 = vpack.c.b16 %v1140, %v1139
      %vm1145 = vcmask 31744
      %v1147 = vsel %vm1145, %v1141, 0
      %v1150 = vsel %vm1145, %v1142, 0
      %v1153 = vsel %vm1145, %v1143, 0
      %v1156 = vsel %vm1145, %v1144, 0
      %v1159 = vsel %vm709, %v1013, 0
      %1161 = vmatprep.subr.bf16.mxu0 0
      %1162 = vmatpush1.bf16.msra.mxu0 %v1159
      %1163 = vmatprep.subr.bf16.mxu0 0
      %1164 = vmatpush1.bf16.msra.mxu0 0
      %1165 = vmatprep.subr.bf16.mxu0 0
      %1166 = vmatpush1.bf16.msra.mxu0 0
      %1167 = vmatprep.subr.bf16.mxu0 0
      %1168 = vmatpush1.bf16.msra.mxu0 0
      %1169 = vmatprep.subr.bf16.mxu0 0
      %1170 = vmatpush1.bf16.msra.mxu0 0
      %1171 = vmatprep.subr.bf16.mxu0 0
      %1172 = vmatpush1.bf16.msra.mxu0 0
      %1173 = vmatprep.subr.bf16.mxu0 0
      %1174 = vmatpush1.bf16.msra.mxu0 0
      %1175 = vmatprep.subr.bf16.mxu0 0
      %1176 = vmatpush1.bf16.msra.mxu0 0
      %1177 = vmatprep.subr.bf16.mxu0 0
      %1178 = vmatpush1.bf16.msra.mxu0 0
      %1179 = vmatprep.subr.bf16.mxu0 0
      %1180 = vmatpush1.bf16.msra.mxu0 0
      %1181 = vmatprep.subr.bf16.mxu0 0
      %1182 = vmatpush1.bf16.msra.mxu0 0
      %1183 = vmatprep.subr.bf16.mxu0 0
      %1184 = vmatpush1.bf16.msra.mxu0 0
      %1185 = vmatprep.subr.bf16.mxu0 0
      %1186 = vmatpush1.bf16.msra.mxu0 0
      %1187 = vmatprep.subr.bf16.mxu0 0
      %1188 = vmatpush1.bf16.msra.mxu0 0
      %1189 = vmatprep.subr.bf16.mxu0 0
      %1190 = vmatpush1.bf16.msra.mxu0 0
      %1191 = vmatprep.subr.bf16.mxu0 0
      %1192 = vmatpush1.bf16.msra.mxu0 0
      %1193 = vmatprep.mubr.bf16.mxu0 0
      %1194 = vmatmul.mubr.bf16.gmra.mrb[0].mxu0 %v1147
      %v1195 = vpop.f32.mrb[0].mxu0
      %v1196 = vadd.f32 %v1095, %v1195
      %v1197 = vpop.f32.mrb[0].mxu0
      %v1198 = vpop.f32.mrb[0].mxu0
      %v1199 = vadd.f32 %v1098, %v1198
      %v1200 = vpop.f32.mrb[0].mxu0
      %1201 = vmatprep.mubr.bf16.mxu0 0
      %1202 = vmatmul.mubr.bf16.gmra.mrb[0].mxu0 %v1150
      %v1203 = vpop.f32.mrb[0].mxu0
      %v1204 = vadd.f32 %v1103, %v1203
      %v1205 = vpop.f32.mrb[0].mxu0
      %v1206 = vpop.f32.mrb[0].mxu0
      %v1207 = vadd.f32 %v1106, %v1206
      %v1208 = vpop.f32.mrb[0].mxu0
      %1209 = vmatprep.mubr.bf16.mxu0 0
      %1210 = vmatmul.mubr.bf16.gmra.mrb[0].mxu0 %v1153
      %v1211 = vpop.f32.mrb[0].mxu0
      %v1212 = vadd.f32 %v1111, %v1211
      %v1213 = vpop.f32.mrb[0].mxu0
      %v1214 = vpop.f32.mrb[0].mxu0
      %v1215 = vadd.f32 %v1114, %v1214
      %v1216 = vpop.f32.mrb[0].mxu0
      %1217 = vmatprep.mubr.bf16.mxu0 0
      %1218 = vmatmul.mubr.bf16.gmra.mrb[0].mxu0 %v1156
      %v1219 = vpop.f32.mrb[0].mxu0
      %v1220 = vadd.f32 %v1119, %v1219
      %v1221 = vpop.f32.mrb[0].mxu0
      %v1222 = vpop.f32.mrb[0].mxu0
      %v1223 = vadd.f32 %v1122, %v1222
      %v1224 = vpop.f32.mrb[0].mxu0
      %1225 = vdwg.mxu0
      %v1226 = vld [vmem:[%s1004] sm:$0xf]
      %v1227 = vld [vmem:[%s1004 + $0x4] sm:$0x1]
      %v1228 = vld [vmem:[%s1004 + $0x8] sm:$0xf]
      %v1229 = vld [vmem:[%s1004 + $0xc] sm:$0x1]
      %v1230 = vld [vmem:[%s1004 + $0x10] sm:$0xf]
      %v1231 = vld [vmem:[%s1004 + $0x14] sm:$0x1]
      %v1232 = vld [vmem:[%s1004 + $0x18] sm:$0xf]
      %v1233 = vld [vmem:[%s1004 + $0x1c] sm:$0x1]
      %v1234 = vld [vmem:[%s1004 + $0x20] sm:$0xf]
      %v1235 = vld [vmem:[%s1004 + $0x24] sm:$0x1]
      %v1236 = vld [vmem:[%s1004 + $0x28] sm:$0xf]
      %v1237 = vld [vmem:[%s1004 + $0x2c] sm:$0x1]
      %v1238 = vld [vmem:[%s1004 + $0x30] sm:$0xf]
      %v1239 = vld [vmem:[%s1004 + $0x34] sm:$0x1]
      %v1240 = vld [vmem:[%s1004 + $0x38] sm:$0xf]
      %v1241 = vld [vmem:[%s1004 + $0x3c] sm:$0x1]
      %vm1242 = vsmask.f32 3328
      %vm1243 = vsmask.f32 7440
      %vm1244 = vmor %vm1242, %vm1243
      %v1246 = vshrl.u32 %v1226, 16
      %v1248 = vrot.slane %v1246, 4
      %v1249 = vshll.u32 %v1226, 16
      %v1251 = vrot.slane %v1249, 5
      %v1252 = vor.u32 %v1248, %v1251
      %v1253 = vrot.slane %v1252, 4
      %v1255 = vshll.u32 %v1227, 16
      %v1257 = vrot.slane %v1255, 5
      %v1258 = vsel %vm1244, %v1253, %v1257
      %v1260 = vshrl.u32 %v1228, 16
      %v1262 = vrot.slane %v1260, 4
      %v1263 = vshll.u32 %v1228, 16
      %v1265 = vrot.slane %v1263, 5
      %v1266 = vor.u32 %v1262, %v1265
      %v1267 = vrot.slane %v1266, 4
      %v1269 = vshll.u32 %v1229, 16
      %v1271 = vrot.slane %v1269, 5
      %v1272 = vsel %vm1244, %v1267, %v1271
      %v1274 = vshrl.u32 %v1230, 16
      %v1276 = vrot.slane %v1274, 4
      %v1277 = vshll.u32 %v1230, 16
      %v1279 = vrot.slane %v1277, 5
      %v1280 = vor.u32 %v1276, %v1279
      %v1281 = vrot.slane %v1280, 4
      %v1283 = vshll.u32 %v1231, 16
      %v1285 = vrot.slane %v1283, 5
      %v1286 = vsel %vm1244, %v1281, %v1285
      %v1288 = vshrl.u32 %v1232, 16
      %v1290 = vrot.slane %v1288, 4
      %v1291 = vshll.u32 %v1232, 16
      %v1293 = vrot.slane %v1291, 5
      %v1294 = vor.u32 %v1290, %v1293
      %v1295 = vrot.slane %v1294, 4
      %v1297 = vshll.u32 %v1233, 16
      %v1299 = vrot.slane %v1297, 5
      %v1300 = vsel %vm1244, %v1295, %v1299
      %v1302 = vshrl.u32 %v1234, 16
      %v1304 = vrot.slane %v1302, 4
      %v1305 = vshll.u32 %v1234, 16
      %v1307 = vrot.slane %v1305, 5
      %v1308 = vor.u32 %v1304, %v1307
      %v1309 = vrot.slane %v1308, 4
      %v1311 = vshll.u32 %v1235, 16
      %v1313 = vrot.slane %v1311, 5
      %v1314 = vsel %vm1244, %v1309, %v1313
      %v1316 = vshrl.u32 %v1236, 16
      %v1318 = vrot.slane %v1316, 4
      %v1319 = vshll.u32 %v1236, 16
      %v1321 = vrot.slane %v1319, 5
      %v1322 = vor.u32 %v1318, %v1321
      %v1323 = vrot.slane %v1322, 4
      %v1325 = vshll.u32 %v1237, 16
      %v1327 = vrot.slane %v1325, 5
      %v1328 = vsel %vm1244, %v1323, %v1327
      %v1330 = vshrl.u32 %v1238, 16
      %v1332 = vrot.slane %v1330, 4
      %v1333 = vshll.u32 %v1238, 16
      %v1335 = vrot.slane %v1333, 5
      %v1336 = vor.u32 %v1332, %v1335
      %v1337 = vrot.slane %v1336, 4
      %v1339 = vshll.u32 %v1239, 16
      %v1341 = vrot.slane %v1339, 5
      %v1342 = vsel %vm1244, %v1337, %v1341
      %v1344 = vshrl.u32 %v1240, 16
      %v1346 = vrot.slane %v1344, 4
      %v1347 = vshll.u32 %v1240, 16
      %v1349 = vrot.slane %v1347, 5
      %v1350 = vor.u32 %v1346, %v1349
      %v1351 = vrot.slane %v1350, 4
      %v1353 = vshll.u32 %v1241, 16
      %v1355 = vrot.slane %v1353, 5
      %v1356 = vsel %vm1244, %v1351, %v1355
      %s1357 = scalar_lea.vmem %s3, 2
      %v1358 = vld [vmem:[%s1357] sm:$0x3]
      %v1359 = vunpack.c.l.b16 %v1258
      %v1360 = vunpack.c.l.b16 %v1272
      %v1361 = vunpack.c.l.b16 %v1286
      %v1362 = vunpack.c.l.b16 %v1300
      %v1363 = vunpack.c.l.b16 %v1314
      %v1364 = vunpack.c.l.b16 %v1328
      %v1365 = vunpack.c.l.b16 %v1342
      %v1366 = vunpack.c.l.b16 %v1356
      %v1367 = vpack.c.b16 %v1360, %v1359
      %v1368 = vpack.c.b16 %v1362, %v1361
      %v1369 = vpack.c.b16 %v1364, %v1363
      %v1370 = vpack.c.b16 %v1366, %v1365
      %v1372 = vsel %vm1145, %v1367, 0
      %v1375 = vsel %vm1145, %v1368, 0
      %v1378 = vsel %vm1145, %v1369, 0
      %v1381 = vsel %vm1145, %v1370, 0
      %v1384 = vsel %vm709, %v1358, 0
      %1386 = vmatprep.subr.bf16.mxu0 0
      %1387 = vmatpush1.bf16.msra.mxu0 %v1384
      %1388 = vmatprep.subr.bf16.mxu0 0
      %1389 = vmatpush1.bf16.msra.mxu0 0
      %1390 = vmatprep.subr.bf16.mxu0 0
      %1391 = vmatpush1.bf16.msra.mxu0 0
      %1392 = vmatprep.subr.bf16.mxu0 0
      %1393 = vmatpush1.bf16.msra.mxu0 0
      %1394 = vmatprep.subr.bf16.mxu0 0
      %1395 = vmatpush1.bf16.msra.mxu0 0
      %1396 = vmatprep.subr.bf16.mxu0 0
      %1397 = vmatpush1.bf16.msra.mxu0 0
      %1398 = vmatprep.subr.bf16.mxu0 0
      %1399 = vmatpush1.bf16.msra.mxu0 0
      %1400 = vmatprep.subr.bf16.mxu0 0
      %1401 = vmatpush1.bf16.msra.mxu0 0
      %1402 = vmatprep.subr.bf16.mxu0 0
      %1403 = vmatpush1.bf16.msra.mxu0 0
      %1404 = vmatprep.subr.bf16.mxu0 0
      %1405 = vmatpush1.bf16.msra.mxu0 0
      %1406 = vmatprep.subr.bf16.mxu0 0
      %1407 = vmatpush1.bf16.msra.mxu0 0
      %1408 = vmatprep.subr.bf16.mxu0 0
      %1409 = vmatpush1.bf16.msra.mxu0 0
      %1410 = vmatprep.subr.bf16.mxu0 0
      %1411 = vmatpush1.bf16.msra.mxu0 0
      %1412 = vmatprep.subr.bf16.mxu0 0
      %1413 = vmatpush1.bf16.msra.mxu0 0
      %1414 = vmatprep.subr.bf16.mxu0 0
      %1415 = vmatpush1.bf16.msra.mxu0 0
      %1416 = vmatprep.subr.bf16.mxu0 0
      %1417 = vmatpush1.bf16.msra.mxu0 0
      %1418 = vmatprep.mubr.bf16.mxu0 0
      %1419 = vmatmul.mubr.bf16.gmra.mrb[0].mxu0 %v1372
      %v1420 = vpop.f32.mrb[0].mxu0
      %v1421 = vadd.f32 0.0, %v1420
      %v1422 = vpop.f32.mrb[0].mxu0
      %v1423 = vpop.f32.mrb[0].mxu0
      %v1424 = vadd.f32 0.0, %v1423
      %v1425 = vpop.f32.mrb[0].mxu0
      %1426 = vmatprep.mubr.bf16.mxu0 0
      %1427 = vmatmul.mubr.bf16.gmra.mrb[0].mxu0 %v1375
      %v1428 = vpop.f32.mrb[0].mxu0
      %v1429 = vadd.f32 0.0, %v1428
      %v1430 = vpop.f32.mrb[0].mxu0
      %v1431 = vpop.f32.mrb[0].mxu0
      %v1432 = vadd.f32 0.0, %v1431
      %v1433 = vpop.f32.mrb[0].mxu0
      %1434 = vmatprep.mubr.bf16.mxu0 0
      %1435 = vmatmul.mubr.bf16.gmra.mrb[0].mxu0 %v1378
      %v1436 = vpop.f32.mrb[0].mxu0
      %v1437 = vadd.f32 0.0, %v1436
      %v1438 = vpop.f32.mrb[0].mxu0
      %v1439 = vpop.f32.mrb[0].mxu0
      %v1440 = vadd.f32 0.0, %v1439
      %v1441 = vpop.f32.mrb[0].mxu0
      %1442 = vmatprep.mubr.bf16.mxu0 0
      %1443 = vmatmul.mubr.bf16.gmra.mrb[0].mxu0 %v1381
      %v1444 = vpop.f32.mrb[0].mxu0
      %v1445 = vadd.f32 0.0, %v1444
      %v1446 = vpop.f32.mrb[0].mxu0
      %v1447 = vpop.f32.mrb[0].mxu0
      %v1448 = vadd.f32 0.0, %v1447
      %v1449 = vpop.f32.mrb[0].mxu0
      %1450 = vdwg.mxu0
      %v1451 = vadd.f32 %v1196, %v1421
      %v1452 = vadd.f32 %v1199, %v1424
      %v1453 = vadd.f32 %v1204, %v1429
      %v1454 = vadd.f32 %v1207, %v1432
      %v1455 = vadd.f32 %v1212, %v1437
      %v1456 = vadd.f32 %v1215, %v1440
      %v1457 = vadd.f32 %v1220, %v1445
      %v1458 = vadd.f32 %v1223, %v1448
      %v1459 = vld [vmem:[%s1015] sm:$0xf]
      %v1460 = vld [vmem:[%s1015 + $0x4] sm:$0x1]
      %v1461 = vld [vmem:[%s1015 + $0x8] sm:$0xf]
      %v1462 = vld [vmem:[%s1015 + $0xc] sm:$0x1]
      %v1463 = vld [vmem:[%s1015 + $0x10] sm:$0xf]
      %v1464 = vld [vmem:[%s1015 + $0x14] sm:$0x1]
      %v1465 = vld [vmem:[%s1015 + $0x18] sm:$0xf]
      %v1466 = vld [vmem:[%s1015 + $0x1c] sm:$0x1]
      %v1467 = vld [vmem:[%s1015 + $0x20] sm:$0xf]
      %v1468 = vld [vmem:[%s1015 + $0x24] sm:$0x1]
      %v1469 = vld [vmem:[%s1015 + $0x28] sm:$0xf]
      %v1470 = vld [vmem:[%s1015 + $0x2c] sm:$0x1]
      %v1471 = vld [vmem:[%s1015 + $0x30] sm:$0xf]
      %v1472 = vld [vmem:[%s1015 + $0x34] sm:$0x1]
      %v1473 = vld [vmem:[%s1015 + $0x38] sm:$0xf]
      %v1474 = vld [vmem:[%s1015 + $0x3c] sm:$0x1]
      %v1476 = vshrl.u32 %v1459, 16
      %v1478 = vrot.slane %v1476, 4
      %v1479 = vshll.u32 %v1459, 16
      %v1481 = vrot.slane %v1479, 5
      %v1482 = vor.u32 %v1478, %v1481
      %v1483 = vrot.slane %v1482, 4
      %v1485 = vshll.u32 %v1460, 16
      %v1487 = vrot.slane %v1485, 5
      %v1488 = vsel %vm1244, %v1483, %v1487
      %v1490 = vshrl.u32 %v1461, 16
      %v1492 = vrot.slane %v1490, 4
      %v1493 = vshll.u32 %v1461, 16
      %v1495 = vrot.slane %v1493, 5
      %v1496 = vor.u32 %v1492, %v1495
      %v1497 = vrot.slane %v1496, 4
      %v1499 = vshll.u32 %v1462, 16
      %v1501 = vrot.slane %v1499, 5
      %v1502 = vsel %vm1244, %v1497, %v1501
      %v1504 = vshrl.u32 %v1463, 16
      %v1506 = vrot.slane %v1504, 4
      %v1507 = vshll.u32 %v1463, 16
      %v1509 = vrot.slane %v1507, 5
      %v1510 = vor.u32 %v1506, %v1509
      %v1511 = vrot.slane %v1510, 4
      %v1513 = vshll.u32 %v1464, 16
      %v1515 = vrot.slane %v1513, 5
      %v1516 = vsel %vm1244, %v1511, %v1515
      %v1518 = vshrl.u32 %v1465, 16
      %v1520 = vrot.slane %v1518, 4
      %v1521 = vshll.u32 %v1465, 16
      %v1523 = vrot.slane %v1521, 5
      %v1524 = vor.u32 %v1520, %v1523
      %v1525 = vrot.slane %v1524, 4
      %v1527 = vshll.u32 %v1466, 16
      %v1529 = vrot.slane %v1527, 5
      %v1530 = vsel %vm1244, %v1525, %v1529
      %v1532 = vshrl.u32 %v1467, 16
      %v1534 = vrot.slane %v1532, 4
      %v1535 = vshll.u32 %v1467, 16
      %v1537 = vrot.slane %v1535, 5
      %v1538 = vor.u32 %v1534, %v1537
      %v1539 = vrot.slane %v1538, 4
      %v1541 = vshll.u32 %v1468, 16
      %v1543 = vrot.slane %v1541, 5
      %v1544 = vsel %vm1244, %v1539, %v1543
      %v1546 = vshrl.u32 %v1469, 16
      %v1548 = vrot.slane %v1546, 4
      %v1549 = vshll.u32 %v1469, 16
      %v1551 = vrot.slane %v1549, 5
      %v1552 = vor.u32 %v1548, %v1551
      %v1553 = vrot.slane %v1552, 4
      %v1555 = vshll.u32 %v1470, 16
      %v1557 = vrot.slane %v1555, 5
      %v1558 = vsel %vm1244, %v1553, %v1557
      %v1560 = vshrl.u32 %v1471, 16
      %v1562 = vrot.slane %v1560, 4
      %v1563 = vshll.u32 %v1471, 16
      %v1565 = vrot.slane %v1563, 5
      %v1566 = vor.u32 %v1562, %v1565
      %v1567 = vrot.slane %v1566, 4
      %v1569 = vshll.u32 %v1472, 16
      %v1571 = vrot.slane %v1569, 5
      %v1572 = vsel %vm1244, %v1567, %v1571
      %v1574 = vshrl.u32 %v1473, 16
      %v1576 = vrot.slane %v1574, 4
      %v1577 = vshll.u32 %v1473, 16
      %v1579 = vrot.slane %v1577, 5
      %v1580 = vor.u32 %v1576, %v1579
      %v1581 = vrot.slane %v1580, 4
      %v1583 = vshll.u32 %v1474, 16
      %v1585 = vrot.slane %v1583, 5
      %v1586 = vsel %vm1244, %v1581, %v1585
      %s1587 = scalar_lea.vmem %s4, 4
      %v1588 = vld [vmem:[%s1587] sm:$0xf]
      %v1589 = vunpack.c.l.b16 %v1488
      %v1590 = vunpack.c.l.b16 %v1502
      %v1591 = vunpack.c.l.b16 %v1516
      %v1592 = vunpack.c.l.b16 %v1530
      %v1593 = vunpack.c.l.b16 %v1544
      %v1594 = vunpack.c.l.b16 %v1558
      %v1595 = vunpack.c.l.b16 %v1572
      %v1596 = vunpack.c.l.b16 %v1586
      %v1597 = vpack.c.b16 %v1590, %v1589
      %v1598 = vpack.c.b16 %v1592, %v1591
      %v1599 = vpack.c.b16 %v1594, %v1593
      %v1600 = vpack.c.b16 %v1596, %v1595
      %v1602 = vsel %vm487, %v1597, 0
      %v1605 = vsel %vm487, %v1598, 0
      %v1608 = vsel %vm487, %v1599, 0
      %v1611 = vsel %vm487, %v1600, 0
      %v1614 = vsel %vm500, %v1588, 0
      %1616 = vmatprep.subr.bf16.mxu0 0
      %1617 = vmatpush1.bf16.msra.mxu0 %v1614
      %1618 = vmatprep.subr.bf16.mxu0 0
      %1619 = vmatpush1.bf16.msra.mxu0 0
      %1620 = vmatprep.subr.bf16.mxu0 0
      %1621 = vmatpush1.bf16.msra.mxu0 0
      %1622 = vmatprep.subr.bf16.mxu0 0
      %1623 = vmatpush1.bf16.msra.mxu0 0
      %1624 = vmatprep.subr.bf16.mxu0 0
      %1625 = vmatpush1.bf16.msra.mxu0 0
      %1626 = vmatprep.subr.bf16.mxu0 0
      %1627 = vmatpush1.bf16.msra.mxu0 0
      %1628 = vmatprep.subr.bf16.mxu0 0
      %1629 = vmatpush1.bf16.msra.mxu0 0
      %1630 = vmatprep.subr.bf16.mxu0 0
      %1631 = vmatpush1.bf16.msra.mxu0 0
      %1632 = vmatprep.subr.bf16.mxu0 0
      %1633 = vmatpush1.bf16.msra.mxu0 0
      %1634 = vmatprep.subr.bf16.mxu0 0
      %1635 = vmatpush1.bf16.msra.mxu0 0
      %1636 = vmatprep.subr.bf16.mxu0 0
      %1637 = vmatpush1.bf16.msra.mxu0 0
      %1638 = vmatprep.subr.bf16.mxu0 0
      %1639 = vmatpush1.bf16.msra.mxu0 0
      %1640 = vmatprep.subr.bf16.mxu0 0
      %1641 = vmatpush1.bf16.msra.mxu0 0
      %1642 = vmatprep.subr.bf16.mxu0 0
      %1643 = vmatpush1.bf16.msra.mxu0 0
      %1644 = vmatprep.subr.bf16.mxu0 0
      %1645 = vmatpush1.bf16.msra.mxu0 0
      %1646 = vmatprep.subr.bf16.mxu0 0
      %1647 = vmatpush1.bf16.msra.mxu0 0
      %1648 = vmatprep.mubr.bf16.mxu0 0
      %1649 = vmatmul.mubr.bf16.gmra.mrb[0].mxu0 %v1602
      %v1650 = vpop.f32.mrb[0].mxu0
      %v1651 = vadd.f32 0.0, %v1650
      %v1652 = vpop.f32.mrb[0].mxu0
      %v1653 = vpop.f32.mrb[0].mxu0
      %v1654 = vadd.f32 0.0, %v1653
      %v1655 = vpop.f32.mrb[0].mxu0
      %1656 = vmatprep.mubr.bf16.mxu0 0
      %1657 = vmatmul.mubr.bf16.gmra.mrb[0].mxu0 %v1605
      %v1658 = vpop.f32.mrb[0].mxu0
      %v1659 = vadd.f32 0.0, %v1658
      %v1660 = vpop.f32.mrb[0].mxu0
      %v1661 = vpop.f32.mrb[0].mxu0
      %v1662 = vadd.f32 0.0, %v1661
      %v1663 = vpop.f32.mrb[0].mxu0
      %1664 = vmatprep.mubr.bf16.mxu0 0
      %1665 = vmatmul.mubr.bf16.gmra.mrb[0].mxu0 %v1608
      %v1666 = vpop.f32.mrb[0].mxu0
      %v1667 = vadd.f32 0.0, %v1666
      %v1668 = vpop.f32.mrb[0].mxu0
      %v1669 = vpop.f32.mrb[0].mxu0
      %v1670 = vadd.f32 0.0, %v1669
      %v1671 = vpop.f32.mrb[0].mxu0
      %1672 = vmatprep.mubr.bf16.mxu0 0
      %1673 = vmatmul.mubr.bf16.gmra.mrb[0].mxu0 %v1611
      %v1674 = vpop.f32.mrb[0].mxu0
      %v1675 = vadd.f32 0.0, %v1674
      %v1676 = vpop.f32.mrb[0].mxu0
      %v1677 = vpop.f32.mrb[0].mxu0
      %v1678 = vadd.f32 0.0, %v1677
      %v1679 = vpop.f32.mrb[0].mxu0
      %1680 = vdwg.mxu0
      %v1681 = vadd.f32 %v1451, %v1651
      %v1682 = vadd.f32 %v1452, %v1654
      %v1683 = vadd.f32 %v1453, %v1659
      %v1684 = vadd.f32 %v1454, %v1662
      %v1685 = vadd.f32 %v1455, %v1667
      %v1686 = vadd.f32 %v1456, %v1670
      %v1687 = vadd.f32 %v1457, %v1675
      %v1688 = vadd.f32 %v1458, %v1678
      %v1689 = vld [vmem:[%s1004] sm:$0xe]
      %v1690 = vld [vmem:[%s1004 + $0x8] sm:$0xe]
      %v1691 = vld [vmem:[%s1004 + $0x10] sm:$0xe]
      %v1692 = vld [vmem:[%s1004 + $0x18] sm:$0xe]
      %v1693 = vld [vmem:[%s1004 + $0x20] sm:$0xe]
      %v1694 = vld [vmem:[%s1004 + $0x28] sm:$0xe]
      %v1695 = vld [vmem:[%s1004 + $0x30] sm:$0xe]
      %v1696 = vld [vmem:[%s1004 + $0x38] sm:$0xe]
      %vm1713 = vcmask 1042432
      %vm1714 = vcmask 1046532
      %vm1715 = vmor %vm1713, %vm1714
      %v1716 = vrot.slane %v1689, 5
      %v1717 = vrot.slane %v1716, 4
      %v1718 = vrot.slane %v1227, 5
      %v1719 = vsel %vm1715, %v1717, %v1718
      %v1720 = vrot.slane %v1690, 5
      %v1721 = vrot.slane %v1720, 4
      %v1722 = vrot.slane %v1229, 5
      %v1723 = vsel %vm1715, %v1721, %v1722
      %v1724 = vrot.slane %v1691, 5
      %v1725 = vrot.slane %v1724, 4
      %v1726 = vrot.slane %v1231, 5
      %v1727 = vsel %vm1715, %v1725, %v1726
      %v1728 = vrot.slane %v1692, 5
      %v1729 = vrot.slane %v1728, 4
      %v1730 = vrot.slane %v1233, 5
      %v1731 = vsel %vm1715, %v1729, %v1730
      %v1732 = vrot.slane %v1693, 5
      %v1733 = vrot.slane %v1732, 4
      %v1734 = vrot.slane %v1235, 5
      %v1735 = vsel %vm1715, %v1733, %v1734
      %v1736 = vrot.slane %v1694, 5
      %v1737 = vrot.slane %v1736, 4
      %v1738 = vrot.slane %v1237, 5
      %v1739 = vsel %vm1715, %v1737, %v1738
      %v1740 = vrot.slane %v1695, 5
      %v1741 = vrot.slane %v1740, 4
      %v1742 = vrot.slane %v1239, 5
      %v1743 = vsel %vm1715, %v1741, %v1742
      %v1744 = vrot.slane %v1696, 5
      %v1745 = vrot.slane %v1744, 4
      %v1746 = vrot.slane %v1241, 5
      %v1747 = vsel %vm1715, %v1745, %v1746
      %s1748 = scalar_lea.vmem %s3, 4
      %v1749 = vld [vmem:[%s1748] sm:$0x3]
      %v1750 = vunpack.c.l.b16 %v1719
      %v1751 = vunpack.c.l.b16 %v1723
      %v1752 = vunpack.c.l.b16 %v1727
      %v1753 = vunpack.c.l.b16 %v1731
      %v1754 = vunpack.c.l.b16 %v1735
      %v1755 = vunpack.c.l.b16 %v1739
      %v1756 = vunpack.c.l.b16 %v1743
      %v1757 = vunpack.c.l.b16 %v1747
      %v1758 = vpack.c.b16 %v1751, %v1750
      %v1759 = vpack.c.b16 %v1753, %v1752
      %v1760 = vpack.c.b16 %v1755, %v1754
      %v1761 = vpack.c.b16 %v1757, %v1756
      %v1763 = vsel %vm1145, %v1758, 0
      %v1766 = vsel %vm1145, %v1759, 0
      %v1769 = vsel %vm1145, %v1760, 0
      %v1772 = vsel %vm1145, %v1761, 0
      %v1775 = vsel %vm709, %v1749, 0
      %1777 = vmatprep.subr.bf16.mxu0 0
      %1778 = vmatpush1.bf16.msra.mxu0 %v1775
      %1779 = vmatprep.subr.bf16.mxu0 0
      %1780 = vmatpush1.bf16.msra.mxu0 0
      %1781 = vmatprep.subr.bf16.mxu0 0
      %1782 = vmatpush1.bf16.msra.mxu0 0
      %1783 = vmatprep.subr.bf16.mxu0 0
      %1784 = vmatpush1.bf16.msra.mxu0 0
      %1785 = vmatprep.subr.bf16.mxu0 0
      %1786 = vmatpush1.bf16.msra.mxu0 0
      %1787 = vmatprep.subr.bf16.mxu0 0
      %1788 = vmatpush1.bf16.msra.mxu0 0
      %1789 = vmatprep.subr.bf16.mxu0 0
      %1790 = vmatpush1.bf16.msra.mxu0 0
      %1791 = vmatprep.subr.bf16.mxu0 0
      %1792 = vmatpush1.bf16.msra.mxu0 0
      %1793 = vmatprep.subr.bf16.mxu0 0
      %1794 = vmatpush1.bf16.msra.mxu0 0
      %1795 = vmatprep.subr.bf16.mxu0 0
      %1796 = vmatpush1.bf16.msra.mxu0 0
      %1797 = vmatprep.subr.bf16.mxu0 0
      %1798 = vmatpush1.bf16.msra.mxu0 0
      %1799 = vmatprep.subr.bf16.mxu0 0
      %1800 = vmatpush1.bf16.msra.mxu0 0
      %1801 = vmatprep.subr.bf16.mxu0 0
      %1802 = vmatpush1.bf16.msra.mxu0 0
      %1803 = vmatprep.subr.bf16.mxu0 0
      %1804 = vmatpush1.bf16.msra.mxu0 0
      %1805 = vmatprep.subr.bf16.mxu0 0
      %1806 = vmatpush1.bf16.msra.mxu0 0
      %1807 = vmatprep.subr.bf16.mxu0 0
      %1808 = vmatpush1.bf16.msra.mxu0 0
      %1809 = vmatprep.mubr.bf16.mxu0 0
      %1810 = vmatmul.mubr.bf16.gmra.mrb[0].mxu0 %v1763
      %v1811 = vpop.f32.mrb[0].mxu0
      %v1812 = vadd.f32 0.0, %v1811
      %v1813 = vpop.f32.mrb[0].mxu0
      %v1814 = vpop.f32.mrb[0].mxu0
      %v1815 = vadd.f32 0.0, %v1814
      %v1816 = vpop.f32.mrb[0].mxu0
      %1817 = vmatprep.mubr.bf16.mxu0 0
      %1818 = vmatmul.mubr.bf16.gmra.mrb[0].mxu0 %v1766
      %v1819 = vpop.f32.mrb[0].mxu0
      %v1820 = vadd.f32 0.0, %v1819
      %v1821 = vpop.f32.mrb[0].mxu0
      %v1822 = vpop.f32.mrb[0].mxu0
      %v1823 = vadd.f32 0.0, %v1822
      %v1824 = vpop.f32.mrb[0].mxu0
      %1825 = vmatprep.mubr.bf16.mxu0 0
      %1826 = vmatmul.mubr.bf16.gmra.mrb[0].mxu0 %v1769
      %v1827 = vpop.f32.mrb[0].mxu0
      %v1828 = vadd.f32 0.0, %v1827
      %v1829 = vpop.f32.mrb[0].mxu0
      %v1830 = vpop.f32.mrb[0].mxu0
      %v1831 = vadd.f32 0.0, %v1830
      %v1832 = vpop.f32.mrb[0].mxu0
      %1833 = vmatprep.mubr.bf16.mxu0 0
      %1834 = vmatmul.mubr.bf16.gmra.mrb[0].mxu0 %v1772
      %v1835 = vpop.f32.mrb[0].mxu0
      %v1836 = vadd.f32 0.0, %v1835
      %v1837 = vpop.f32.mrb[0].mxu0
      %v1838 = vpop.f32.mrb[0].mxu0
      %v1839 = vadd.f32 0.0, %v1838
      %v1840 = vpop.f32.mrb[0].mxu0
      %1841 = vdwg.mxu0
      %v1842 = vadd.f32 %v1681, %v1812
      %v1843 = vadd.f32 %v1682, %v1815
      %v1844 = vadd.f32 %v1683, %v1820
      %v1845 = vadd.f32 %v1684, %v1823
      %v1846 = vadd.f32 %v1685, %v1828
      %v1847 = vadd.f32 %v1686, %v1831
      %v1848 = vadd.f32 %v1687, %v1836
      %v1849 = vadd.f32 %v1688, %v1839
      %v1850 = vld [vmem:[%s1015] sm:$0xe]
      %v1851 = vld [vmem:[%s1015 + $0x8] sm:$0xe]
      %v1852 = vld [vmem:[%s1015 + $0x10] sm:$0xe]
      %v1853 = vld [vmem:[%s1015 + $0x18] sm:$0xe]
      %v1854 = vld [vmem:[%s1015 + $0x20] sm:$0xe]
      %v1855 = vld [vmem:[%s1015 + $0x28] sm:$0xe]
      %v1856 = vld [vmem:[%s1015 + $0x30] sm:$0xe]
      %v1857 = vld [vmem:[%s1015 + $0x38] sm:$0xe]
      %v1874 = vrot.slane %v1850, 5
      %v1875 = vrot.slane %v1874, 4
      %v1876 = vrot.slane %v1460, 5
      %v1877 = vsel %vm1715, %v1875, %v1876
      %v1878 = vrot.slane %v1851, 5
      %v1879 = vrot.slane %v1878, 4
      %v1880 = vrot.slane %v1462, 5
      %v1881 = vsel %vm1715, %v1879, %v1880
      %v1882 = vrot.slane %v1852, 5
      %v1883 = vrot.slane %v1882, 4
      %v1884 = vrot.slane %v1464, 5
      %v1885 = vsel %vm1715, %v1883, %v1884
      %v1886 = vrot.slane %v1853, 5
      %v1887 = vrot.slane %v1886, 4
      %v1888 = vrot.slane %v1466, 5
      %v1889 = vsel %vm1715, %v1887, %v1888
      %v1890 = vrot.slane %v1854, 5
      %v1891 = vrot.slane %v1890, 4
      %v1892 = vrot.slane %v1468, 5
      %v1893 = vsel %vm1715, %v1891, %v1892
      %v1894 = vrot.slane %v1855, 5
      %v1895 = vrot.slane %v1894, 4
      %v1896 = vrot.slane %v1470, 5
      %v1897 = vsel %vm1715, %v1895, %v1896
      %v1898 = vrot.slane %v1856, 5
      %v1899 = vrot.slane %v1898, 4
      %v1900 = vrot.slane %v1472, 5
      %v1901 = vsel %vm1715, %v1899, %v1900
      %v1902 = vrot.slane %v1857, 5
      %v1903 = vrot.slane %v1902, 4
      %v1904 = vrot.slane %v1474, 5
      %v1905 = vsel %vm1715, %v1903, %v1904
      %s1906 = scalar_lea.vmem %s4, 8
      %v1907 = vld [vmem:[%s1906] sm:$0xf]
      %v1908 = vunpack.c.l.b16 %v1877
      %v1909 = vunpack.c.l.b16 %v1881
      %v1910 = vunpack.c.l.b16 %v1885
      %v1911 = vunpack.c.l.b16 %v1889
      %v1912 = vunpack.c.l.b16 %v1893
      %v1913 = vunpack.c.l.b16 %v1897
      %v1914 = vunpack.c.l.b16 %v1901
      %v1915 = vunpack.c.l.b16 %v1905
      %v1916 = vpack.c.b16 %v1909, %v1908
      %v1917 = vpack.c.b16 %v1911, %v1910
      %v1918 = vpack.c.b16 %v1913, %v1912
      %v1919 = vpack.c.b16 %v1915, %v1914
      %v1921 = vsel %vm487, %v1916, 0
      %v1924 = vsel %vm487, %v1917, 0
      %v1927 = vsel %vm487, %v1918, 0
      %v1930 = vsel %vm487, %v1919, 0
      %v1933 = vsel %vm500, %v1907, 0
      %1935 = vmatprep.subr.bf16.mxu0 0
      %1936 = vmatpush1.bf16.msra.mxu0 %v1933
      %1937 = vmatprep.subr.bf16.mxu0 0
      %1938 = vmatpush1.bf16.msra.mxu0 0
      %1939 = vmatprep.subr.bf16.mxu0 0
      %1940 = vmatpush1.bf16.msra.mxu0 0
      %1941 = vmatprep.subr.bf16.mxu0 0
      %1942 = vmatpush1.bf16.msra.mxu0 0
      %1943 = vmatprep.subr.bf16.mxu0 0
      %1944 = vmatpush1.bf16.msra.mxu0 0
      %1945 = vmatprep.subr.bf16.mxu0 0
      %1946 = vmatpush1.bf16.msra.mxu0 0
      %1947 = vmatprep.subr.bf16.mxu0 0
      %1948 = vmatpush1.bf16.msra.mxu0 0
      %1949 = vmatprep.subr.bf16.mxu0 0
      %1950 = vmatpush1.bf16.msra.mxu0 0
      %1951 = vmatprep.subr.bf16.mxu0 0
      %1952 = vmatpush1.bf16.msra.mxu0 0
      %1953 = vmatprep.subr.bf16.mxu0 0
      %1954 = vmatpush1.bf16.msra.mxu0 0
      %1955 = vmatprep.subr.bf16.mxu0 0
      %1956 = vmatpush1.bf16.msra.mxu0 0
      %1957 = vmatprep.subr.bf16.mxu0 0
      %1958 = vmatpush1.bf16.msra.mxu0 0
      %1959 = vmatprep.subr.bf16.mxu0 0
      %1960 = vmatpush1.bf16.msra.mxu0 0
      %1961 = vmatprep.subr.bf16.mxu0 0
      %1962 = vmatpush1.bf16.msra.mxu0 0
      %1963 = vmatprep.subr.bf16.mxu0 0
      %1964 = vmatpush1.bf16.msra.mxu0 0
      %1965 = vmatprep.subr.bf16.mxu0 0
      %1966 = vmatpush1.bf16.msra.mxu0 0
      %1967 = vmatprep.mubr.bf16.mxu0 0
      %1968 = vmatmul.mubr.bf16.gmra.mrb[0].mxu0 %v1921
      %v1969 = vpop.f32.mrb[0].mxu0
      %v1970 = vadd.f32 0.0, %v1969
      %v1971 = vpop.f32.mrb[0].mxu0
      %v1972 = vpop.f32.mrb[0].mxu0
      %v1973 = vadd.f32 0.0, %v1972
      %v1974 = vpop.f32.mrb[0].mxu0
      %1975 = vmatprep.mubr.bf16.mxu0 0
      %1976 = vmatmul.mubr.bf16.gmra.mrb[0].mxu0 %v1924
      %v1977 = vpop.f32.mrb[0].mxu0
      %v1978 = vadd.f32 0.0, %v1977
      %v1979 = vpop.f32.mrb[0].mxu0
      %v1980 = vpop.f32.mrb[0].mxu0
      %v1981 = vadd.f32 0.0, %v1980
      %v1982 = vpop.f32.mrb[0].mxu0
      %1983 = vmatprep.mubr.bf16.mxu0 0
      %1984 = vmatmul.mubr.bf16.gmra.mrb[0].mxu0 %v1927
      %v1985 = vpop.f32.mrb[0].mxu0
      %v1986 = vadd.f32 0.0, %v1985
      %v1987 = vpop.f32.mrb[0].mxu0
      %v1988 = vpop.f32.mrb[0].mxu0
      %v1989 = vadd.f32 0.0, %v1988
      %v1990 = vpop.f32.mrb[0].mxu0
      %1991 = vmatprep.mubr.bf16.mxu0 0
      %1992 = vmatmul.mubr.bf16.gmra.mrb[0].mxu0 %v1930
      %v1993 = vpop.f32.mrb[0].mxu0
      %v1994 = vadd.f32 0.0, %v1993
      %v1995 = vpop.f32.mrb[0].mxu0
      %v1996 = vpop.f32.mrb[0].mxu0
      %v1997 = vadd.f32 0.0, %v1996
      %v1998 = vpop.f32.mrb[0].mxu0
      %1999 = vdwg.mxu0
      %v2000 = vadd.f32 %v1842, %v1970
      %v2001 = vadd.f32 %v1843, %v1973
      %v2002 = vadd.f32 %v1844, %v1978
      %v2003 = vadd.f32 %v1845, %v1981
      %v2004 = vadd.f32 %v1846, %v1986
      %v2005 = vadd.f32 %v1847, %v1989
      %v2006 = vadd.f32 %v1848, %v1994
      %v2007 = vadd.f32 %v1849, %v1997
      %s2008 = sadd.s32 2, %s1002
      %s2009 = smul.addr %s2008, 4
      %s2010 = scalar_lea.vmem [#allocation2], %s2009
      %v2011 = vld [vmem:[%s2010] sm:$0xf]
      %v2012 = vld [vmem:[%s2010 + $0x8] sm:$0xf]
      %v2013 = vld [vmem:[%s2010 + $0x10] sm:$0xf]
      %v2014 = vld [vmem:[%s2010 + $0x18] sm:$0xf]
      %v2015 = vld [vmem:[%s2010 + $0x20] sm:$0xf]
      %v2016 = vld [vmem:[%s2010 + $0x28] sm:$0xf]
      %v2017 = vld [vmem:[%s2010 + $0x30] sm:$0xf]
      %v2018 = vld [vmem:[%s2010 + $0x38] sm:$0xf]
      %s2019 = scalar_lea.vmem %s3, 6
      %v2020 = vld [vmem:[%s2019] sm:$0x3]
      %v2029 = vunpack.c.l.b16 %v2011
      %v2030 = vunpack.c.l.b16 %v2012
      %v2031 = vunpack.c.l.b16 %v2013
      %v2032 = vunpack.c.l.b16 %v2014
      %v2033 = vunpack.c.l.b16 %v2015
      %v2034 = vunpack.c.l.b16 %v2016
      %v2035 = vunpack.c.l.b16 %v2017
      %v2036 = vunpack.c.l.b16 %v2018
      %v2037 = vpack.c.b16 %v2030, %v2029
      %v2038 = vpack.c.b16 %v2032, %v2031
      %v2039 = vpack.c.b16 %v2034, %v2033
      %v2040 = vpack.c.b16 %v2036, %v2035
      %v2042 = vsel %vm1145, %v2037, 0
      %v2045 = vsel %vm1145, %v2038, 0
      %v2048 = vsel %vm1145, %v2039, 0
      %v2051 = vsel %vm1145, %v2040, 0
      %v2054 = vsel %vm709, %v2020, 0
      %2056 = vmatprep.subr.bf16.mxu0 0
      %2057 = vmatpush1.bf16.msra.mxu0 %v2054
      %2058 = vmatprep.subr.bf16.mxu0 0
      %2059 = vmatpush1.bf16.msra.mxu0 0
      %2060 = vmatprep.subr.bf16.mxu0 0
      %2061 = vmatpush1.bf16.msra.mxu0 0
      %2062 = vmatprep.subr.bf16.mxu0 0
      %2063 = vmatpush1.bf16.msra.mxu0 0
      %2064 = vmatprep.subr.bf16.mxu0 0
      %2065 = vmatpush1.bf16.msra.mxu0 0
      %2066 = vmatprep.subr.bf16.mxu0 0
      %2067 = vmatpush1.bf16.msra.mxu0 0
      %2068 = vmatprep.subr.bf16.mxu0 0
      %2069 = vmatpush1.bf16.msra.mxu0 0
      %2070 = vmatprep.subr.bf16.mxu0 0
      %2071 = vmatpush1.bf16.msra.mxu0 0
      %2072 = vmatprep.subr.bf16.mxu0 0
      %2073 = vmatpush1.bf16.msra.mxu0 0
      %2074 = vmatprep.subr.bf16.mxu0 0
      %2075 = vmatpush1.bf16.msra.mxu0 0
      %2076 = vmatprep.subr.bf16.mxu0 0
      %2077 = vmatpush1.bf16.msra.mxu0 0
      %2078 = vmatprep.subr.bf16.mxu0 0
      %2079 = vmatpush1.bf16.msra.mxu0 0
      %2080 = vmatprep.subr.bf16.mxu0 0
      %2081 = vmatpush1.bf16.msra.mxu0 0
      %2082 = vmatprep.subr.bf16.mxu0 0
      %2083 = vmatpush1.bf16.msra.mxu0 0
      %2084 = vmatprep.subr.bf16.mxu0 0
      %2085 = vmatpush1.bf16.msra.mxu0 0
      %2086 = vmatprep.subr.bf16.mxu0 0
      %2087 = vmatpush1.bf16.msra.mxu0 0
      %2088 = vmatprep.mubr.bf16.mxu0 0
      %2089 = vmatmul.mubr.bf16.gmra.mrb[0].mxu0 %v2042
      %v2090 = vpop.f32.mrb[0].mxu0
      %v2091 = vadd.f32 0.0, %v2090
      %v2092 = vpop.f32.mrb[0].mxu0
      %v2093 = vpop.f32.mrb[0].mxu0
      %v2094 = vadd.f32 0.0, %v2093
      %v2095 = vpop.f32.mrb[0].mxu0
      %2096 = vmatprep.mubr.bf16.mxu0 0
      %2097 = vmatmul.mubr.bf16.gmra.mrb[0].mxu0 %v2045
      %v2098 = vpop.f32.mrb[0].mxu0
      %v2099 = vadd.f32 0.0, %v2098
      %v2100 = vpop.f32.mrb[0].mxu0
      %v2101 = vpop.f32.mrb[0].mxu0
      %v2102 = vadd.f32 0.0, %v2101
      %v2103 = vpop.f32.mrb[0].mxu0
      %2104 = vmatprep.mubr.bf16.mxu0 0
      %2105 = vmatmul.mubr.bf16.gmra.mrb[0].mxu0 %v2048
      %v2106 = vpop.f32.mrb[0].mxu0
      %v2107 = vadd.f32 0.0, %v2106
      %v2108 = vpop.f32.mrb[0].mxu0
      %v2109 = vpop.f32.mrb[0].mxu0
      %v2110 = vadd.f32 0.0, %v2109
      %v2111 = vpop.f32.mrb[0].mxu0
      %2112 = vmatprep.mubr.bf16.mxu0 0
      %2113 = vmatmul.mubr.bf16.gmra.mrb[0].mxu0 %v2051
      %v2114 = vpop.f32.mrb[0].mxu0
      %v2115 = vadd.f32 0.0, %v2114
      %v2116 = vpop.f32.mrb[0].mxu0
      %v2117 = vpop.f32.mrb[0].mxu0
      %v2118 = vadd.f32 0.0, %v2117
      %v2119 = vpop.f32.mrb[0].mxu0
      %2120 = vdwg.mxu0
      %v2121 = vadd.f32 %v2000, %v2091
      %v2122 = vadd.f32 %v2001, %v2094
      %v2123 = vadd.f32 %v2002, %v2099
      %v2124 = vadd.f32 %v2003, %v2102
      %v2125 = vadd.f32 %v2004, %v2107
      %v2126 = vadd.f32 %v2005, %v2110
      %v2127 = vadd.f32 %v2006, %v2115
      %v2128 = vadd.f32 %v2007, %v2118
      %v2129 = vld [vmem:[%s947] sm:$0xf]
      %v2130 = vld [vmem:[%s947 + $0x8] sm:$0xf]
      %v2131 = vld [vmem:[%s947 + $0x10] sm:$0xf]
      %v2132 = vld [vmem:[%s947 + $0x18] sm:$0xf]
      %v2133 = vld [vmem:[%s947 + $0x20] sm:$0xf]
      %v2134 = vld [vmem:[%s947 + $0x28] sm:$0xf]
      %v2135 = vld [vmem:[%s947 + $0x30] sm:$0xf]
      %v2136 = vld [vmem:[%s947 + $0x38] sm:$0xf]
      %s2137 = scalar_lea.vmem %s4, 12
      %v2138 = vld [vmem:[%s2137] sm:$0xf]
      %v2147 = vunpack.c.l.b16 %v2129
      %v2148 = vunpack.c.l.b16 %v2130
      %v2149 = vunpack.c.l.b16 %v2131
      %v2150 = vunpack.c.l.b16 %v2132
      %v2151 = vunpack.c.l.b16 %v2133
      %v2152 = vunpack.c.l.b16 %v2134
      %v2153 = vunpack.c.l.b16 %v2135
      %v2154 = vunpack.c.l.b16 %v2136
      %v2155 = vpack.c.b16 %v2148, %v2147
      %v2156 = vpack.c.b16 %v2150, %v2149
      %v2157 = vpack.c.b16 %v2152, %v2151
      %v2158 = vpack.c.b16 %v2154, %v2153
      %v2160 = vsel %vm487, %v2155, 0
      %v2163 = vsel %vm487, %v2156, 0
      %v2166 = vsel %vm487, %v2157, 0
      %v2169 = vsel %vm487, %v2158, 0
      %v2172 = vsel %vm500, %v2138, 0
      %2174 = vmatprep.subr.bf16.mxu0 0
      %2175 = vmatpush1.bf16.msra.mxu0 %v2172
      %2176 = vmatprep.subr.bf16.mxu0 0
      %2177 = vmatpush1.bf16.msra.mxu0 0
      %2178 = vmatprep.subr.bf16.mxu0 0
      %2179 = vmatpush1.bf16.msra.mxu0 0
      %2180 = vmatprep.subr.bf16.mxu0 0
      %2181 = vmatpush1.bf16.msra.mxu0 0
      %2182 = vmatprep.subr.bf16.mxu0 0
      %2183 = vmatpush1.bf16.msra.mxu0 0
      %2184 = vmatprep.subr.bf16.mxu0 0
      %2185 = vmatpush1.bf16.msra.mxu0 0
      %2186 = vmatprep.subr.bf16.mxu0 0
      %2187 = vmatpush1.bf16.msra.mxu0 0
      %2188 = vmatprep.subr.bf16.mxu0 0
      %2189 = vmatpush1.bf16.msra.mxu0 0
      %2190 = vmatprep.subr.bf16.mxu0 0
      %2191 = vmatpush1.bf16.msra.mxu0 0
      %2192 = vmatprep.subr.bf16.mxu0 0
      %2193 = vmatpush1.bf16.msra.mxu0 0
      %2194 = vmatprep.subr.bf16.mxu0 0
      %2195 = vmatpush1.bf16.msra.mxu0 0
      %2196 = vmatprep.subr.bf16.mxu0 0
      %2197 = vmatpush1.bf16.msra.mxu0 0
      %2198 = vmatprep.subr.bf16.mxu0 0
      %2199 = vmatpush1.bf16.msra.mxu0 0
      %2200 = vmatprep.subr.bf16.mxu0 0
      %2201 = vmatpush1.bf16.msra.mxu0 0
      %2202 = vmatprep.subr.bf16.mxu0 0
      %2203 = vmatpush1.bf16.msra.mxu0 0
      %2204 = vmatprep.subr.bf16.mxu0 0
      %2205 = vmatpush1.bf16.msra.mxu0 0
      %2206 = vmatprep.mubr.bf16.mxu0 0
      %2207 = vmatmul.mubr.bf16.gmra.mrb[0].mxu0 %v2160
      %v2208 = vpop.f32.mrb[0].mxu0
      %v2209 = vadd.f32 0.0, %v2208
      %v2210 = vpop.f32.mrb[0].mxu0
      %v2211 = vpop.f32.mrb[0].mxu0
      %v2212 = vadd.f32 0.0, %v2211
      %v2213 = vpop.f32.mrb[0].mxu0
      %2214 = vmatprep.mubr.bf16.mxu0 0
      %2215 = vmatmul.mubr.bf16.gmra.mrb[0].mxu0 %v2163
      %v2216 = vpop.f32.mrb[0].mxu0
      %v2217 = vadd.f32 0.0, %v2216
      %v2218 = vpop.f32.mrb[0].mxu0
      %v2219 = vpop.f32.mrb[0].mxu0
      %v2220 = vadd.f32 0.0, %v2219
      %v2221 = vpop.f32.mrb[0].mxu0
      %2222 = vmatprep.mubr.bf16.mxu0 0
      %2223 = vmatmul.mubr.bf16.gmra.mrb[0].mxu0 %v2166
      %v2224 = vpop.f32.mrb[0].mxu0
      %v2225 = vadd.f32 0.0, %v2224
      %v2226 = vpop.f32.mrb[0].mxu0
      %v2227 = vpop.f32.mrb[0].mxu0
      %v2228 = vadd.f32 0.0, %v2227
      %v2229 = vpop.f32.mrb[0].mxu0
      %2230 = vmatprep.mubr.bf16.mxu0 0
      %2231 = vmatmul.mubr.bf16.gmra.mrb[0].mxu0 %v2169
      %v2232 = vpop.f32.mrb[0].mxu0
      %v2233 = vadd.f32 0.0, %v2232
      %v2234 = vpop.f32.mrb[0].mxu0
      %v2235 = vpop.f32.mrb[0].mxu0
      %v2236 = vadd.f32 0.0, %v2235
      %v2237 = vpop.f32.mrb[0].mxu0
      %2238 = vdwg.mxu0
      %v2239 = vadd.f32 %v2121, %v2209
      %v2240 = vadd.f32 %v2122, %v2212
      %v2241 = vadd.f32 %v2123, %v2217
      %v2242 = vadd.f32 %v2124, %v2220
      %v2243 = vadd.f32 %v2125, %v2225
      %v2244 = vadd.f32 %v2126, %v2228
      %v2245 = vadd.f32 %v2127, %v2233
      %v2246 = vadd.f32 %v2128, %v2236
      %v2247 = vld [vmem:[%s2010] sm:$0xf]
      %v2248 = vld [vmem:[%s2010 + $0x4] sm:$0x1]
      %v2249 = vld [vmem:[%s2010 + $0x8] sm:$0xf]
      %v2250 = vld [vmem:[%s2010 + $0xc] sm:$0x1]
      %v2251 = vld [vmem:[%s2010 + $0x10] sm:$0xf]
      %v2252 = vld [vmem:[%s2010 + $0x14] sm:$0x1]
      %v2253 = vld [vmem:[%s2010 + $0x18] sm:$0xf]
      %v2254 = vld [vmem:[%s2010 + $0x1c] sm:$0x1]
      %v2255 = vld [vmem:[%s2010 + $0x20] sm:$0xf]
      %v2256 = vld [vmem:[%s2010 + $0x24] sm:$0x1]
      %v2257 = vld [vmem:[%s2010 + $0x28] sm:$0xf]
      %v2258 = vld [vmem:[%s2010 + $0x2c] sm:$0x1]
      %v2259 = vld [vmem:[%s2010 + $0x30] sm:$0xf]
      %v2260 = vld [vmem:[%s2010 + $0x34] sm:$0x1]
      %v2261 = vld [vmem:[%s2010 + $0x38] sm:$0xf]
      %v2262 = vld [vmem:[%s2010 + $0x3c] sm:$0x1]
      %v2264 = vshrl.u32 %v2247, 16
      %v2266 = vrot.slane %v2264, 4
      %v2267 = vshll.u32 %v2247, 16
      %v2269 = vrot.slane %v2267, 5
      %v2270 = vor.u32 %v2266, %v2269
      %v2271 = vrot.slane %v2270, 4
      %v2273 = vshll.u32 %v2248, 16
      %v2275 = vrot.slane %v2273, 5
      %v2276 = vsel %vm1244, %v2271, %v2275
      %v2278 = vshrl.u32 %v2249, 16
      %v2280 = vrot.slane %v2278, 4
      %v2281 = vshll.u32 %v2249, 16
      %v2283 = vrot.slane %v2281, 5
      %v2284 = vor.u32 %v2280, %v2283
      %v2285 = vrot.slane %v2284, 4
      %v2287 = vshll.u32 %v2250, 16
      %v2289 = vrot.slane %v2287, 5
      %v2290 = vsel %vm1244, %v2285, %v2289
      %v2292 = vshrl.u32 %v2251, 16
      %v2294 = vrot.slane %v2292, 4
      %v2295 = vshll.u32 %v2251, 16
      %v2297 = vrot.slane %v2295, 5
      %v2298 = vor.u32 %v2294, %v2297
      %v2299 = vrot.slane %v2298, 4
      %v2301 = vshll.u32 %v2252, 16
      %v2303 = vrot.slane %v2301, 5
      %v2304 = vsel %vm1244, %v2299, %v2303
      %v2306 = vshrl.u32 %v2253, 16
      %v2308 = vrot.slane %v2306, 4
      %v2309 = vshll.u32 %v2253, 16
      %v2311 = vrot.slane %v2309, 5
      %v2312 = vor.u32 %v2308, %v2311
      %v2313 = vrot.slane %v2312, 4
      %v2315 = vshll.u32 %v2254, 16
      %v2317 = vrot.slane %v2315, 5
      %v2318 = vsel %vm1244, %v2313, %v2317
      %v2320 = vshrl.u32 %v2255, 16
      %v2322 = vrot.slane %v2320, 4
      %v2323 = vshll.u32 %v2255, 16
      %v2325 = vrot.slane %v2323, 5
      %v2326 = vor.u32 %v2322, %v2325
      %v2327 = vrot.slane %v2326, 4
      %v2329 = vshll.u32 %v2256, 16
      %v2331 = vrot.slane %v2329, 5
      %v2332 = vsel %vm1244, %v2327, %v2331
      %v2334 = vshrl.u32 %v2257, 16
      %v2336 = vrot.slane %v2334, 4
      %v2337 = vshll.u32 %v2257, 16
      %v2339 = vrot.slane %v2337, 5
      %v2340 = vor.u32 %v2336, %v2339
      %v2341 = vrot.slane %v2340, 4
      %v2343 = vshll.u32 %v2258, 16
      %v2345 = vrot.slane %v2343, 5
      %v2346 = vsel %vm1244, %v2341, %v2345
      %v2348 = vshrl.u32 %v2259, 16
      %v2350 = vrot.slane %v2348, 4
      %v2351 = vshll.u32 %v2259, 16
      %v2353 = vrot.slane %v2351, 5
      %v2354 = vor.u32 %v2350, %v2353
      %v2355 = vrot.slane %v2354, 4
      %v2357 = vshll.u32 %v2260, 16
      %v2359 = vrot.slane %v2357, 5
      %v2360 = vsel %vm1244, %v2355, %v2359
      %v2362 = vshrl.u32 %v2261, 16
      %v2364 = vrot.slane %v2362, 4
      %v2365 = vshll.u32 %v2261, 16
      %v2367 = vrot.slane %v2365, 5
      %v2368 = vor.u32 %v2364, %v2367
      %v2369 = vrot.slane %v2368, 4
      %v2371 = vshll.u32 %v2262, 16
      %v2373 = vrot.slane %v2371, 5
      %v2374 = vsel %vm1244, %v2369, %v2373
      %s2375 = scalar_lea.vmem %s3, 8
      %v2376 = vld [vmem:[%s2375] sm:$0x3]
      %v2377 = vunpack.c.l.b16 %v2276
      %v2378 = vunpack.c.l.b16 %v2290
      %v2379 = vunpack.c.l.b16 %v2304
      %v2380 = vunpack.c.l.b16 %v2318
      %v2381 = vunpack.c.l.b16 %v2332
      %v2382 = vunpack.c.l.b16 %v2346
      %v2383 = vunpack.c.l.b16 %v2360
      %v2384 = vunpack.c.l.b16 %v2374
      %v2385 = vpack.c.b16 %v2378, %v2377
      %v2386 = vpack.c.b16 %v2380, %v2379
      %v2387 = vpack.c.b16 %v2382, %v2381
      %v2388 = vpack.c.b16 %v2384, %v2383
      %v2390 = vsel %vm1145, %v2385, 0
      %v2393 = vsel %vm1145, %v2386, 0
      %v2396 = vsel %vm1145, %v2387, 0
      %v2399 = vsel %vm1145, %v2388, 0
      %v2402 = vsel %vm709, %v2376, 0
      %2404 = vmatprep.subr.bf16.mxu0 0
      %2405 = vmatpush1.bf16.msra.mxu0 %v2402
      %2406 = vmatprep.subr.bf16.mxu0 0
      %2407 = vmatpush1.bf16.msra.mxu0 0
      %2408 = vmatprep.subr.bf16.mxu0 0
      %2409 = vmatpush1.bf16.msra.mxu0 0
      %2410 = vmatprep.subr.bf16.mxu0 0
      %2411 = vmatpush1.bf16.msra.mxu0 0
      %2412 = vmatprep.subr.bf16.mxu0 0
      %2413 = vmatpush1.bf16.msra.mxu0 0
      %2414 = vmatprep.subr.bf16.mxu0 0
      %2415 = vmatpush1.bf16.msra.mxu0 0
      %2416 = vmatprep.subr.bf16.mxu0 0
      %2417 = vmatpush1.bf16.msra.mxu0 0
      %2418 = vmatprep.subr.bf16.mxu0 0
      %2419 = vmatpush1.bf16.msra.mxu0 0
      %2420 = vmatprep.subr.bf16.mxu0 0
      %2421 = vmatpush1.bf16.msra.mxu0 0
      %2422 = vmatprep.subr.bf16.mxu0 0
      %2423 = vmatpush1.bf16.msra.mxu0 0
      %2424 = vmatprep.subr.bf16.mxu0 0
      %2425 = vmatpush1.bf16.msra.mxu0 0
      %2426 = vmatprep.subr.bf16.mxu0 0
      %2427 = vmatpush1.bf16.msra.mxu0 0
      %2428 = vmatprep.subr.bf16.mxu0 0
      %2429 = vmatpush1.bf16.msra.mxu0 0
      %2430 = vmatprep.subr.bf16.mxu0 0
      %2431 = vmatpush1.bf16.msra.mxu0 0
      %2432 = vmatprep.subr.bf16.mxu0 0
      %2433 = vmatpush1.bf16.msra.mxu0 0
      %2434 = vmatprep.subr.bf16.mxu0 0
      %2435 = vmatpush1.bf16.msra.mxu0 0
      %2436 = vmatprep.mubr.bf16.mxu0 0
      %2437 = vmatmul.mubr.bf16.gmra.mrb[0].mxu0 %v2390
      %v2438 = vpop.f32.mrb[0].mxu0
      %v2439 = vadd.f32 0.0, %v2438
      %v2440 = vpop.f32.mrb[0].mxu0
      %v2441 = vpop.f32.mrb[0].mxu0
      %v2442 = vadd.f32 0.0, %v2441
      %v2443 = vpop.f32.mrb[0].mxu0
      %2444 = vmatprep.mubr.bf16.mxu0 0
      %2445 = vmatmul.mubr.bf16.gmra.mrb[0].mxu0 %v2393
      %v2446 = vpop.f32.mrb[0].mxu0
      %v2447 = vadd.f32 0.0, %v2446
      %v2448 = vpop.f32.mrb[0].mxu0
      %v2449 = vpop.f32.mrb[0].mxu0
      %v2450 = vadd.f32 0.0, %v2449
      %v2451 = vpop.f32.mrb[0].mxu0
      %2452 = vmatprep.mubr.bf16.mxu0 0
      %2453 = vmatmul.mubr.bf16.gmra.mrb[0].mxu0 %v2396
      %v2454 = vpop.f32.mrb[0].mxu0
      %v2455 = vadd.f32 0.0, %v2454
      %v2456 = vpop.f32.mrb[0].mxu0
      %v2457 = vpop.f32.mrb[0].mxu0
      %v2458 = vadd.f32 0.0, %v2457
      %v2459 = vpop.f32.mrb[0].mxu0
      %2460 = vmatprep.mubr.bf16.mxu0 0
      %2461 = vmatmul.mubr.bf16.gmra.mrb[0].mxu0 %v2399
      %v2462 = vpop.f32.mrb[0].mxu0
      %v2463 = vadd.f32 0.0, %v2462
      %v2464 = vpop.f32.mrb[0].mxu0
      %v2465 = vpop.f32.mrb[0].mxu0
      %v2466 = vadd.f32 0.0, %v2465
      %v2467 = vpop.f32.mrb[0].mxu0
      %2468 = vdwg.mxu0
      %v2469 = vadd.f32 %v2239, %v2439
      %v2470 = vadd.f32 %v2240, %v2442
      %v2471 = vadd.f32 %v2241, %v2447
      %v2472 = vadd.f32 %v2242, %v2450
      %v2473 = vadd.f32 %v2243, %v2455
      %v2474 = vadd.f32 %v2244, %v2458
      %v2475 = vadd.f32 %v2245, %v2463
      %v2476 = vadd.f32 %v2246, %v2466
      %v2477 = vld [vmem:[%s947] sm:$0xf]
      %v2478 = vld [vmem:[%s947 + $0x4] sm:$0x1]
      %v2479 = vld [vmem:[%s947 + $0x8] sm:$0xf]
      %v2480 = vld [vmem:[%s947 + $0xc] sm:$0x1]
      %v2481 = vld [vmem:[%s947 + $0x10] sm:$0xf]
      %v2482 = vld [vmem:[%s947 + $0x14] sm:$0x1]
      %v2483 = vld [vmem:[%s947 + $0x18] sm:$0xf]
      %v2484 = vld [vmem:[%s947 + $0x1c] sm:$0x1]
      %v2485 = vld [vmem:[%s947 + $0x20] sm:$0xf]
      %v2486 = vld [vmem:[%s947 + $0x24] sm:$0x1]
      %v2487 = vld [vmem:[%s947 + $0x28] sm:$0xf]
      %v2488 = vld [vmem:[%s947 + $0x2c] sm:$0x1]
      %v2489 = vld [vmem:[%s947 + $0x30] sm:$0xf]
      %v2490 = vld [vmem:[%s947 + $0x34] sm:$0x1]
      %v2491 = vld [vmem:[%s947 + $0x38] sm:$0xf]
      %v2492 = vld [vmem:[%s947 + $0x3c] sm:$0x1]
      %v2494 = vshrl.u32 %v2477, 16
      %v2496 = vrot.slane %v2494, 4
      %v2497 = vshll.u32 %v2477, 16
      %v2499 = vrot.slane %v2497, 5
      %v2500 = vor.u32 %v2496, %v2499
      %v2501 = vrot.slane %v2500, 4
      %v2503 = vshll.u32 %v2478, 16
      %v2505 = vrot.slane %v2503, 5
      %v2506 = vsel %vm1244, %v2501, %v2505
      %v2508 = vshrl.u32 %v2479, 16
      %v2510 = vrot.slane %v2508, 4
      %v2511 = vshll.u32 %v2479, 16
      %v2513 = vrot.slane %v2511, 5
      %v2514 = vor.u32 %v2510, %v2513
      %v2515 = vrot.slane %v2514, 4
      %v2517 = vshll.u32 %v2480, 16
      %v2519 = vrot.slane %v2517, 5
      %v2520 = vsel %vm1244, %v2515, %v2519
      %v2522 = vshrl.u32 %v2481, 16
      %v2524 = vrot.slane %v2522, 4
      %v2525 = vshll.u32 %v2481, 16
      %v2527 = vrot.slane %v2525, 5
      %v2528 = vor.u32 %v2524, %v2527
      %v2529 = vrot.slane %v2528, 4
      %v2531 = vshll.u32 %v2482, 16
      %v2533 = vrot.slane %v2531, 5
      %v2534 = vsel %vm1244, %v2529, %v2533
      %v2536 = vshrl.u32 %v2483, 16
      %v2538 = vrot.slane %v2536, 4
      %v2539 = vshll.u32 %v2483, 16
      %v2541 = vrot.slane %v2539, 5
      %v2542 = vor.u32 %v2538, %v2541
      %v2543 = vrot.slane %v2542, 4
      %v2545 = vshll.u32 %v2484, 16
      %v2547 = vrot.slane %v2545, 5
      %v2548 = vsel %vm1244, %v2543, %v2547
      %v2550 = vshrl.u32 %v2485, 16
      %v2552 = vrot.slane %v2550, 4
      %v2553 = vshll.u32 %v2485, 16
      %v2555 = vrot.slane %v2553, 5
      %v2556 = vor.u32 %v2552, %v2555
      %v2557 = vrot.slane %v2556, 4
      %v2559 = vshll.u32 %v2486, 16
      %v2561 = vrot.slane %v2559, 5
      %v2562 = vsel %vm1244, %v2557, %v2561
      %v2564 = vshrl.u32 %v2487, 16
      %v2566 = vrot.slane %v2564, 4
      %v2567 = vshll.u32 %v2487, 16
      %v2569 = vrot.slane %v2567, 5
      %v2570 = vor.u32 %v2566, %v2569
      %v2571 = vrot.slane %v2570, 4
      %v2573 = vshll.u32 %v2488, 16
      %v2575 = vrot.slane %v2573, 5
      %v2576 = vsel %vm1244, %v2571, %v2575
      %v2578 = vshrl.u32 %v2489, 16
      %v2580 = vrot.slane %v2578, 4
      %v2581 = vshll.u32 %v2489, 16
      %v2583 = vrot.slane %v2581, 5
      %v2584 = vor.u32 %v2580, %v2583
      %v2585 = vrot.slane %v2584, 4
      %v2587 = vshll.u32 %v2490, 16
      %v2589 = vrot.slane %v2587, 5
      %v2590 = vsel %vm1244, %v2585, %v2589
      %v2592 = vshrl.u32 %v2491, 16
      %v2594 = vrot.slane %v2592, 4
      %v2595 = vshll.u32 %v2491, 16
      %v2597 = vrot.slane %v2595, 5
      %v2598 = vor.u32 %v2594, %v2597
      %v2599 = vrot.slane %v2598, 4
      %v2601 = vshll.u32 %v2492, 16
      %v2603 = vrot.slane %v2601, 5
      %v2604 = vsel %vm1244, %v2599, %v2603
      %s2605 = scalar_lea.vmem %s4, 16
      %v2606 = vld [vmem:[%s2605] sm:$0xf]
      %v2607 = vunpack.c.l.b16 %v2506
      %v2608 = vunpack.c.l.b16 %v2520
      %v2609 = vunpack.c.l.b16 %v2534
      %v2610 = vunpack.c.l.b16 %v2548
      %v2611 = vunpack.c.l.b16 %v2562
      %v2612 = vunpack.c.l.b16 %v2576
      %v2613 = vunpack.c.l.b16 %v2590
      %v2614 = vunpack.c.l.b16 %v2604
      %v2615 = vpack.c.b16 %v2608, %v2607
      %v2616 = vpack.c.b16 %v2610, %v2609
      %v2617 = vpack.c.b16 %v2612, %v2611
      %v2618 = vpack.c.b16 %v2614, %v2613
      %v2620 = vsel %vm487, %v2615, 0
      %v2623 = vsel %vm487, %v2616, 0
      %v2626 = vsel %vm487, %v2617, 0
      %v2629 = vsel %vm487, %v2618, 0
      %v2632 = vsel %vm500, %v2606, 0
      %2634 = vmatprep.subr.bf16.mxu0 0
      %2635 = vmatpush1.bf16.msra.mxu0 %v2632
      %2636 = vmatprep.subr.bf16.mxu0 0
      %2637 = vmatpush1.bf16.msra.mxu0 0
      %2638 = vmatprep.subr.bf16.mxu0 0
      %2639 = vmatpush1.bf16.msra.mxu0 0
      %2640 = vmatprep.subr.bf16.mxu0 0
      %2641 = vmatpush1.bf16.msra.mxu0 0
      %2642 = vmatprep.subr.bf16.mxu0 0
      %2643 = vmatpush1.bf16.msra.mxu0 0
      %2644 = vmatprep.subr.bf16.mxu0 0
      %2645 = vmatpush1.bf16.msra.mxu0 0
      %2646 = vmatprep.subr.bf16.mxu0 0
      %2647 = vmatpush1.bf16.msra.mxu0 0
      %2648 = vmatprep.subr.bf16.mxu0 0
      %2649 = vmatpush1.bf16.msra.mxu0 0
      %2650 = vmatprep.subr.bf16.mxu0 0
      %2651 = vmatpush1.bf16.msra.mxu0 0
      %2652 = vmatprep.subr.bf16.mxu0 0
      %2653 = vmatpush1.bf16.msra.mxu0 0
      %2654 = vmatprep.subr.bf16.mxu0 0
      %2655 = vmatpush1.bf16.msra.mxu0 0
      %2656 = vmatprep.subr.bf16.mxu0 0
      %2657 = vmatpush1.bf16.msra.mxu0 0
      %2658 = vmatprep.subr.bf16.mxu0 0
      %2659 = vmatpush1.bf16.msra.mxu0 0
      %2660 = vmatprep.subr.bf16.mxu0 0
      %2661 = vmatpush1.bf16.msra.mxu0 0
      %2662 = vmatprep.subr.bf16.mxu0 0
      %2663 = vmatpush1.bf16.msra.mxu0 0
      %2664 = vmatprep.subr.bf16.mxu0 0
      %2665 = vmatpush1.bf16.msra.mxu0 0
      %2666 = vmatprep.mubr.bf16.mxu0 0
      %2667 = vmatmul.mubr.bf16.gmra.mrb[0].mxu0 %v2620
      %v2668 = vpop.f32.mrb[0].mxu0
      %v2669 = vadd.f32 0.0, %v2668
      %v2670 = vpop.f32.mrb[0].mxu0
      %v2671 = vpop.f32.mrb[0].mxu0
      %v2672 = vadd.f32 0.0, %v2671
      %v2673 = vpop.f32.mrb[0].mxu0
      %2674 = vmatprep.mubr.bf16.mxu0 0
      %2675 = vmatmul.mubr.bf16.gmra.mrb[0].mxu0 %v2623
      %v2676 = vpop.f32.mrb[0].mxu0
      %v2677 = vadd.f32 0.0, %v2676
      %v2678 = vpop.f32.mrb[0].mxu0
      %v2679 = vpop.f32.mrb[0].mxu0
      %v2680 = vadd.f32 0.0, %v2679
      %v2681 = vpop.f32.mrb[0].mxu0
      %2682 = vmatprep.mubr.bf16.mxu0 0
      %2683 = vmatmul.mubr.bf16.gmra.mrb[0].mxu0 %v2626
      %v2684 = vpop.f32.mrb[0].mxu0
      %v2685 = vadd.f32 0.0, %v2684
      %v2686 = vpop.f32.mrb[0].mxu0
      %v2687 = vpop.f32.mrb[0].mxu0
      %v2688 = vadd.f32 0.0, %v2687
      %v2689 = vpop.f32.mrb[0].mxu0
      %2690 = vmatprep.mubr.bf16.mxu0 0
      %2691 = vmatmul.mubr.bf16.gmra.mrb[0].mxu0 %v2629
      %v2692 = vpop.f32.mrb[0].mxu0
      %v2693 = vadd.f32 0.0, %v2692
      %v2694 = vpop.f32.mrb[0].mxu0
      %v2695 = vpop.f32.mrb[0].mxu0
      %v2696 = vadd.f32 0.0, %v2695
      %v2697 = vpop.f32.mrb[0].mxu0
      %2698 = vdwg.mxu0
      %v2699 = vadd.f32 %v2469, %v2669
      %v2700 = vadd.f32 %v2470, %v2672
      %v2701 = vadd.f32 %v2471, %v2677
      %v2702 = vadd.f32 %v2472, %v2680
      %v2703 = vadd.f32 %v2473, %v2685
      %v2704 = vadd.f32 %v2474, %v2688
      %v2705 = vadd.f32 %v2475, %v2693
      %v2706 = vadd.f32 %v2476, %v2696
      %v2707 = vld [vmem:[%s2010] sm:$0xe]
      %v2708 = vld [vmem:[%s2010 + $0x8] sm:$0xe]
      %v2709 = vld [vmem:[%s2010 + $0x10] sm:$0xe]
      %v2710 = vld [vmem:[%s2010 + $0x18] sm:$0xe]
      %v2711 = vld [vmem:[%s2010 + $0x20] sm:$0xe]
      %v2712 = vld [vmem:[%s2010 + $0x28] sm:$0xe]
      %v2713 = vld [vmem:[%s2010 + $0x30] sm:$0xe]
      %v2714 = vld [vmem:[%s2010 + $0x38] sm:$0xe]
      %v2731 = vrot.slane %v2707, 5
      %v2732 = vrot.slane %v2731, 4
      %v2733 = vrot.slane %v2248, 5
      %v2734 = vsel %vm1715, %v2732, %v2733
      %v2735 = vrot.slane %v2708, 5
      %v2736 = vrot.slane %v2735, 4
      %v2737 = vrot.slane %v2250, 5
      %v2738 = vsel %vm1715, %v2736, %v2737
      %v2739 = vrot.slane %v2709, 5
      %v2740 = vrot.slane %v2739, 4
      %v2741 = vrot.slane %v2252, 5
      %v2742 = vsel %vm1715, %v2740, %v2741
      %v2743 = vrot.slane %v2710, 5
      %v2744 = vrot.slane %v2743, 4
      %v2745 = vrot.slane %v2254, 5
      %v2746 = vsel %vm1715, %v2744, %v2745
      %v2747 = vrot.slane %v2711, 5
      %v2748 = vrot.slane %v2747, 4
      %v2749 = vrot.slane %v2256, 5
      %v2750 = vsel %vm1715, %v2748, %v2749
      %v2751 = vrot.slane %v2712, 5
      %v2752 = vrot.slane %v2751, 4
      %v2753 = vrot.slane %v2258, 5
      %v2754 = vsel %vm1715, %v2752, %v2753
      %v2755 = vrot.slane %v2713, 5
      %v2756 = vrot.slane %v2755, 4
      %v2757 = vrot.slane %v2260, 5
      %v2758 = vsel %vm1715, %v2756, %v2757
      %v2759 = vrot.slane %v2714, 5
      %v2760 = vrot.slane %v2759, 4
      %v2761 = vrot.slane %v2262, 5
      %v2762 = vsel %vm1715, %v2760, %v2761
      %s2763 = scalar_lea.vmem %s3, 10
      %v2764 = vld [vmem:[%s2763] sm:$0x3]
      %v2765 = vunpack.c.l.b16 %v2734
      %v2766 = vunpack.c.l.b16 %v2738
      %v2767 = vunpack.c.l.b16 %v2742
      %v2768 = vunpack.c.l.b16 %v2746
      %v2769 = vunpack.c.l.b16 %v2750
      %v2770 = vunpack.c.l.b16 %v2754
      %v2771 = vunpack.c.l.b16 %v2758
      %v2772 = vunpack.c.l.b16 %v2762
      %v2773 = vpack.c.b16 %v2766, %v2765
      %v2774 = vpack.c.b16 %v2768, %v2767
      %v2775 = vpack.c.b16 %v2770, %v2769
      %v2776 = vpack.c.b16 %v2772, %v2771
      %v2778 = vsel %vm1145, %v2773, 0
      %v2781 = vsel %vm1145, %v2774, 0
      %v2784 = vsel %vm1145, %v2775, 0
      %v2787 = vsel %vm1145, %v2776, 0
      %v2790 = vsel %vm709, %v2764, 0
      %2792 = vmatprep.subr.bf16.mxu0 0
      %2793 = vmatpush1.bf16.msra.mxu0 %v2790
      %2794 = vmatprep.subr.bf16.mxu0 0
      %2795 = vmatpush1.bf16.msra.mxu0 0
      %2796 = vmatprep.subr.bf16.mxu0 0
      %2797 = vmatpush1.bf16.msra.mxu0 0
      %2798 = vmatprep.subr.bf16.mxu0 0
      %2799 = vmatpush1.bf16.msra.mxu0 0
      %2800 = vmatprep.subr.bf16.mxu0 0
      %2801 = vmatpush1.bf16.msra.mxu0 0
      %2802 = vmatprep.subr.bf16.mxu0 0
      %2803 = vmatpush1.bf16.msra.mxu0 0
      %2804 = vmatprep.subr.bf16.mxu0 0
      %2805 = vmatpush1.bf16.msra.mxu0 0
      %2806 = vmatprep.subr.bf16.mxu0 0
      %2807 = vmatpush1.bf16.msra.mxu0 0
      %2808 = vmatprep.subr.bf16.mxu0 0
      %2809 = vmatpush1.bf16.msra.mxu0 0
      %2810 = vmatprep.subr.bf16.mxu0 0
      %2811 = vmatpush1.bf16.msra.mxu0 0
      %2812 = vmatprep.subr.bf16.mxu0 0
      %2813 = vmatpush1.bf16.msra.mxu0 0
      %2814 = vmatprep.subr.bf16.mxu0 0
      %2815 = vmatpush1.bf16.msra.mxu0 0
      %2816 = vmatprep.subr.bf16.mxu0 0
      %2817 = vmatpush1.bf16.msra.mxu0 0
      %2818 = vmatprep.subr.bf16.mxu0 0
      %2819 = vmatpush1.bf16.msra.mxu0 0
      %2820 = vmatprep.subr.bf16.mxu0 0
      %2821 = vmatpush1.bf16.msra.mxu0 0
      %2822 = vmatprep.subr.bf16.mxu0 0
      %2823 = vmatpush1.bf16.msra.mxu0 0
      %2824 = vmatprep.mubr.bf16.mxu0 0
      %2825 = vmatmul.mubr.bf16.gmra.mrb[0].mxu0 %v2778
      %v2826 = vpop.f32.mrb[0].mxu0
      %v2827 = vadd.f32 0.0, %v2826
      %v2828 = vpop.f32.mrb[0].mxu0
      %v2829 = vpop.f32.mrb[0].mxu0
      %v2830 = vadd.f32 0.0, %v2829
      %v2831 = vpop.f32.mrb[0].mxu0
      %2832 = vmatprep.mubr.bf16.mxu0 0
      %2833 = vmatmul.mubr.bf16.gmra.mrb[0].mxu0 %v2781
      %v2834 = vpop.f32.mrb[0].mxu0
      %v2835 = vadd.f32 0.0, %v2834
      %v2836 = vpop.f32.mrb[0].mxu0
      %v2837 = vpop.f32.mrb[0].mxu0
      %v2838 = vadd.f32 0.0, %v2837
      %v2839 = vpop.f32.mrb[0].mxu0
      %2840 = vmatprep.mubr.bf16.mxu0 0
      %2841 = vmatmul.mubr.bf16.gmra.mrb[0].mxu0 %v2784
      %v2842 = vpop.f32.mrb[0].mxu0
      %v2843 = vadd.f32 0.0, %v2842
      %v2844 = vpop.f32.mrb[0].mxu0
      %v2845 = vpop.f32.mrb[0].mxu0
      %v2846 = vadd.f32 0.0, %v2845
      %v2847 = vpop.f32.mrb[0].mxu0
      %2848 = vmatprep.mubr.bf16.mxu0 0
      %2849 = vmatmul.mubr.bf16.gmra.mrb[0].mxu0 %v2787
      %v2850 = vpop.f32.mrb[0].mxu0
      %v2851 = vadd.f32 0.0, %v2850
      %v2852 = vpop.f32.mrb[0].mxu0
      %v2853 = vpop.f32.mrb[0].mxu0
      %v2854 = vadd.f32 0.0, %v2853
      %v2855 = vpop.f32.mrb[0].mxu0
      %2856 = vdwg.mxu0
      %v2857 = vadd.f32 %v2699, %v2827
      %v2858 = vadd.f32 %v2700, %v2830
      %v2859 = vadd.f32 %v2701, %v2835
      %v2860 = vadd.f32 %v2702, %v2838
      %v2861 = vadd.f32 %v2703, %v2843
      %v2862 = vadd.f32 %v2704, %v2846
      %v2863 = vadd.f32 %v2705, %v2851
      %v2864 = vadd.f32 %v2706, %v2854
      %v2865 = vld [vmem:[%s947] sm:$0xe]
      %v2866 = vld [vmem:[%s947 + $0x8] sm:$0xe]
      %v2867 = vld [vmem:[%s947 + $0x10] sm:$0xe]
      %v2868 = vld [vmem:[%s947 + $0x18] sm:$0xe]
      %v2869 = vld [vmem:[%s947 + $0x20] sm:$0xe]
      %v2870 = vld [vmem:[%s947 + $0x28] sm:$0xe]
      %v2871 = vld [vmem:[%s947 + $0x30] sm:$0xe]
      %v2872 = vld [vmem:[%s947 + $0x38] sm:$0xe]
      %v2889 = vrot.slane %v2865, 5
      %v2890 = vrot.slane %v2889, 4
      %v2891 = vrot.slane %v2478, 5
      %v2892 = vsel %vm1715, %v2890, %v2891
      %v2893 = vrot.slane %v2866, 5
      %v2894 = vrot.slane %v2893, 4
      %v2895 = vrot.slane %v2480, 5
      %v2896 = vsel %vm1715, %v2894, %v2895
      %v2897 = vrot.slane %v2867, 5
      %v2898 = vrot.slane %v2897, 4
      %v2899 = vrot.slane %v2482, 5
      %v2900 = vsel %vm1715, %v2898, %v2899
      %v2901 = vrot.slane %v2868, 5
      %v2902 = vrot.slane %v2901, 4
      %v2903 = vrot.slane %v2484, 5
      %v2904 = vsel %vm1715, %v2902, %v2903
      %v2905 = vrot.slane %v2869, 5
      %v2906 = vrot.slane %v2905, 4
      %v2907 = vrot.slane %v2486, 5
      %v2908 = vsel %vm1715, %v2906, %v2907
      %v2909 = vrot.slane %v2870, 5
      %v2910 = vrot.slane %v2909, 4
      %v2911 = vrot.slane %v2488, 5
      %v2912 = vsel %vm1715, %v2910, %v2911
      %v2913 = vrot.slane %v2871, 5
      %v2914 = vrot.slane %v2913, 4
      %v2915 = vrot.slane %v2490, 5
      %v2916 = vsel %vm1715, %v2914, %v2915
      %v2917 = vrot.slane %v2872, 5
      %v2918 = vrot.slane %v2917, 4
      %v2919 = vrot.slane %v2492, 5
      %v2920 = vsel %vm1715, %v2918, %v2919
      %s2921 = scalar_lea.vmem %s4, 20
      %v2922 = vld [vmem:[%s2921] sm:$0xf]
      %v2923 = vunpack.c.l.b16 %v2892
      %v2924 = vunpack.c.l.b16 %v2896
      %v2925 = vunpack.c.l.b16 %v2900
      %v2926 = vunpack.c.l.b16 %v2904
      %v2927 = vunpack.c.l.b16 %v2908
      %v2928 = vunpack.c.l.b16 %v2912
      %v2929 = vunpack.c.l.b16 %v2916
      %v2930 = vunpack.c.l.b16 %v2920
      %v2931 = vpack.c.b16 %v2924, %v2923
      %v2932 = vpack.c.b16 %v2926, %v2925
      %v2933 = vpack.c.b16 %v2928, %v2927
      %v2934 = vpack.c.b16 %v2930, %v2929
      %v2936 = vsel %vm487, %v2931, 0
      %v2939 = vsel %vm487, %v2932, 0
      %v2942 = vsel %vm487, %v2933, 0
      %v2945 = vsel %vm487, %v2934, 0
      %v2948 = vsel %vm500, %v2922, 0
      %2950 = vmatprep.subr.bf16.mxu0 0
      %2951 = vmatpush1.bf16.msra.mxu0 %v2948
      %2952 = vmatprep.subr.bf16.mxu0 0
      %2953 = vmatpush1.bf16.msra.mxu0 0
      %2954 = vmatprep.subr.bf16.mxu0 0
      %2955 = vmatpush1.bf16.msra.mxu0 0
      %2956 = vmatprep.subr.bf16.mxu0 0
      %2957 = vmatpush1.bf16.msra.mxu0 0
      %2958 = vmatprep.subr.bf16.mxu0 0
      %2959 = vmatpush1.bf16.msra.mxu0 0
      %2960 = vmatprep.subr.bf16.mxu0 0
      %2961 = vmatpush1.bf16.msra.mxu0 0
      %2962 = vmatprep.subr.bf16.mxu0 0
      %2963 = vmatpush1.bf16.msra.mxu0 0
      %2964 = vmatprep.subr.bf16.mxu0 0
      %2965 = vmatpush1.bf16.msra.mxu0 0
      %2966 = vmatprep.subr.bf16.mxu0 0
      %2967 = vmatpush1.bf16.msra.mxu0 0
      %2968 = vmatprep.subr.bf16.mxu0 0
      %2969 = vmatpush1.bf16.msra.mxu0 0
      %2970 = vmatprep.subr.bf16.mxu0 0
      %2971 = vmatpush1.bf16.msra.mxu0 0
      %2972 = vmatprep.subr.bf16.mxu0 0
      %2973 = vmatpush1.bf16.msra.mxu0 0
      %2974 = vmatprep.subr.bf16.mxu0 0
      %2975 = vmatpush1.bf16.msra.mxu0 0
      %2976 = vmatprep.subr.bf16.mxu0 0
      %2977 = vmatpush1.bf16.msra.mxu0 0
      %2978 = vmatprep.subr.bf16.mxu0 0
      %2979 = vmatpush1.bf16.msra.mxu0 0
      %2980 = vmatprep.subr.bf16.mxu0 0
      %2981 = vmatpush1.bf16.msra.mxu0 0
      %2982 = vmatprep.mubr.bf16.mxu0 0
      %2983 = vmatmul.mubr.bf16.gmra.mrb[0].mxu0 %v2936
      %v2984 = vpop.f32.mrb[0].mxu0
      %v2985 = vadd.f32 0.0, %v2984
      %v2986 = vpop.f32.mrb[0].mxu0
      %v2987 = vpop.f32.mrb[0].mxu0
      %v2988 = vadd.f32 0.0, %v2987
      %v2989 = vpop.f32.mrb[0].mxu0
      %2990 = vmatprep.mubr.bf16.mxu0 0
      %2991 = vmatmul.mubr.bf16.gmra.mrb[0].mxu0 %v2939
      %v2992 = vpop.f32.mrb[0].mxu0
      %v2993 = vadd.f32 0.0, %v2992
      %v2994 = vpop.f32.mrb[0].mxu0
      %v2995 = vpop.f32.mrb[0].mxu0
      %v2996 = vadd.f32 0.0, %v2995
      %v2997 = vpop.f32.mrb[0].mxu0
      %2998 = vmatprep.mubr.bf16.mxu0 0
      %2999 = vmatmul.mubr.bf16.gmra.mrb[0].mxu0 %v2942
      %v3000 = vpop.f32.mrb[0].mxu0
      %v3001 = vadd.f32 0.0, %v3000
      %v3002 = vpop.f32.mrb[0].mxu0
      %v3003 = vpop.f32.mrb[0].mxu0
      %v3004 = vadd.f32 0.0, %v3003
      %v3005 = vpop.f32.mrb[0].mxu0
      %3006 = vmatprep.mubr.bf16.mxu0 0
      %3007 = vmatmul.mubr.bf16.gmra.mrb[0].mxu0 %v2945
      %v3008 = vpop.f32.mrb[0].mxu0
      %v3009 = vadd.f32 0.0, %v3008
      %v3010 = vpop.f32.mrb[0].mxu0
      %v3011 = vpop.f32.mrb[0].mxu0
      %v3012 = vadd.f32 0.0, %v3011
      %v3013 = vpop.f32.mrb[0].mxu0
      %3014 = vdwg.mxu0
      %v3015 = vadd.f32 %v2857, %v2985
      %v3016 = vadd.f32 %v2858, %v2988
      %v3017 = vadd.f32 %v2859, %v2993
      %v3018 = vadd.f32 %v2860, %v2996
      %v3019 = vadd.f32 %v2861, %v3001
      %v3020 = vadd.f32 %v2862, %v3004
      %v3021 = vadd.f32 %v2863, %v3009
      %v3022 = vadd.f32 %v2864, %v3012
      %s3023 = sadd.s32 4, %s1002
      %s3024 = smul.addr %s3023, 4
      %s3025 = scalar_lea.vmem [#allocation2], %s3024
      %v3026 = vld [vmem:[%s3025] sm:$0xf]
      %v3027 = vld [vmem:[%s3025 + $0x8] sm:$0xf]
      %v3028 = vld [vmem:[%s3025 + $0x10] sm:$0xf]
      %v3029 = vld [vmem:[%s3025 + $0x18] sm:$0xf]
      %v3030 = vld [vmem:[%s3025 + $0x20] sm:$0xf]
      %v3031 = vld [vmem:[%s3025 + $0x28] sm:$0xf]
      %v3032 = vld [vmem:[%s3025 + $0x30] sm:$0xf]
      %v3033 = vld [vmem:[%s3025 + $0x38] sm:$0xf]
      %s3034 = scalar_lea.vmem %s3, 12
      %v3035 = vld [vmem:[%s3034] sm:$0x3]
      %v3044 = vunpack.c.l.b16 %v3026
      %v3045 = vunpack.c.l.b16 %v3027
      %v3046 = vunpack.c.l.b16 %v3028
      %v3047 = vunpack.c.l.b16 %v3029
      %v3048 = vunpack.c.l.b16 %v3030
      %v3049 = vunpack.c.l.b16 %v3031
      %v3050 = vunpack.c.l.b16 %v3032
      %v3051 = vunpack.c.l.b16 %v3033
      %v3052 = vpack.c.b16 %v3045, %v3044
      %v3053 = vpack.c.b16 %v3047, %v3046
      %v3054 = vpack.c.b16 %v3049, %v3048
      %v3055 = vpack.c.b16 %v3051, %v3050
      %v3057 = vsel %vm1145, %v3052, 0
      %v3060 = vsel %vm1145, %v3053, 0
      %v3063 = vsel %vm1145, %v3054, 0
      %v3066 = vsel %vm1145, %v3055, 0
      %v3069 = vsel %vm709, %v3035, 0
      %3071 = vmatprep.subr.bf16.mxu0 0
      %3072 = vmatpush1.bf16.msra.mxu0 %v3069
      %3073 = vmatprep.subr.bf16.mxu0 0
      %3074 = vmatpush1.bf16.msra.mxu0 0
      %3075 = vmatprep.subr.bf16.mxu0 0
      %3076 = vmatpush1.bf16.msra.mxu0 0
      %3077 = vmatprep.subr.bf16.mxu0 0
      %3078 = vmatpush1.bf16.msra.mxu0 0
      %3079 = vmatprep.subr.bf16.mxu0 0
      %3080 = vmatpush1.bf16.msra.mxu0 0
      %3081 = vmatprep.subr.bf16.mxu0 0
      %3082 = vmatpush1.bf16.msra.mxu0 0
      %3083 = vmatprep.subr.bf16.mxu0 0
      %3084 = vmatpush1.bf16.msra.mxu0 0
      %3085 = vmatprep.subr.bf16.mxu0 0
      %3086 = vmatpush1.bf16.msra.mxu0 0
      %3087 = vmatprep.subr.bf16.mxu0 0
      %3088 = vmatpush1.bf16.msra.mxu0 0
      %3089 = vmatprep.subr.bf16.mxu0 0
      %3090 = vmatpush1.bf16.msra.mxu0 0
      %3091 = vmatprep.subr.bf16.mxu0 0
      %3092 = vmatpush1.bf16.msra.mxu0 0
      %3093 = vmatprep.subr.bf16.mxu0 0
      %3094 = vmatpush1.bf16.msra.mxu0 0
      %3095 = vmatprep.subr.bf16.mxu0 0
      %3096 = vmatpush1.bf16.msra.mxu0 0
      %3097 = vmatprep.subr.bf16.mxu0 0
      %3098 = vmatpush1.bf16.msra.mxu0 0
      %3099 = vmatprep.subr.bf16.mxu0 0
      %3100 = vmatpush1.bf16.msra.mxu0 0
      %3101 = vmatprep.subr.bf16.mxu0 0
      %3102 = vmatpush1.bf16.msra.mxu0 0
      %3103 = vmatprep.mubr.bf16.mxu0 0
      %3104 = vmatmul.mubr.bf16.gmra.mrb[0].mxu0 %v3057
      %v3105 = vpop.f32.mrb[0].mxu0
      %v3106 = vadd.f32 0.0, %v3105
      %v3107 = vpop.f32.mrb[0].mxu0
      %v3108 = vpop.f32.mrb[0].mxu0
      %v3109 = vadd.f32 0.0, %v3108
      %v3110 = vpop.f32.mrb[0].mxu0
      %3111 = vmatprep.mubr.bf16.mxu0 0
      %3112 = vmatmul.mubr.bf16.gmra.mrb[0].mxu0 %v3060
      %v3113 = vpop.f32.mrb[0].mxu0
      %v3114 = vadd.f32 0.0, %v3113
      %v3115 = vpop.f32.mrb[0].mxu0
      %v3116 = vpop.f32.mrb[0].mxu0
      %v3117 = vadd.f32 0.0, %v3116
      %v3118 = vpop.f32.mrb[0].mxu0
      %3119 = vmatprep.mubr.bf16.mxu0 0
      %3120 = vmatmul.mubr.bf16.gmra.mrb[0].mxu0 %v3063
      %v3121 = vpop.f32.mrb[0].mxu0
      %v3122 = vadd.f32 0.0, %v3121
      %v3123 = vpop.f32.mrb[0].mxu0
      %v3124 = vpop.f32.mrb[0].mxu0
      %v3125 = vadd.f32 0.0, %v3124
      %v3126 = vpop.f32.mrb[0].mxu0
      %3127 = vmatprep.mubr.bf16.mxu0 0
      %3128 = vmatmul.mubr.bf16.gmra.mrb[0].mxu0 %v3066
      %v3129 = vpop.f32.mrb[0].mxu0
      %v3130 = vadd.f32 0.0, %v3129
      %v3131 = vpop.f32.mrb[0].mxu0
      %v3132 = vpop.f32.mrb[0].mxu0
      %v3133 = vadd.f32 0.0, %v3132
      %v3134 = vpop.f32.mrb[0].mxu0
      %3135 = vdwg.mxu0
      %v3136 = vadd.f32 %v3015, %v3106
      %v3137 = vadd.f32 %v3016, %v3109
      %v3138 = vadd.f32 %v3017, %v3114
      %v3139 = vadd.f32 %v3018, %v3117
      %v3140 = vadd.f32 %v3019, %v3122
      %v3141 = vadd.f32 %v3020, %v3125
      %v3142 = vadd.f32 %v3021, %v3130
      %v3143 = vadd.f32 %v3022, %v3133
      %s3144 = sadd.s32 4, %s944
      %s3145 = smul.addr %s3144, 4
      %s3146 = scalar_lea.vmem [#allocation2], %s3145
      %v3147 = vld [vmem:[%s3146] sm:$0xf]
      %v3148 = vld [vmem:[%s3146 + $0x8] sm:$0xf]
      %v3149 = vld [vmem:[%s3146 + $0x10] sm:$0xf]
      %v3150 = vld [vmem:[%s3146 + $0x18] sm:$0xf]
      %v3151 = vld [vmem:[%s3146 + $0x20] sm:$0xf]
      %v3152 = vld [vmem:[%s3146 + $0x28] sm:$0xf]
      %v3153 = vld [vmem:[%s3146 + $0x30] sm:$0xf]
      %v3154 = vld [vmem:[%s3146 + $0x38] sm:$0xf]
      %s3155 = scalar_lea.vmem %s4, 24
      %v3156 = vld [vmem:[%s3155] sm:$0xf]
      %v3165 = vunpack.c.l.b16 %v3147
      %v3166 = vunpack.c.l.b16 %v3148
      %v3167 = vunpack.c.l.b16 %v3149
      %v3168 = vunpack.c.l.b16 %v3150
      %v3169 = vunpack.c.l.b16 %v3151
      %v3170 = vunpack.c.l.b16 %v3152
      %v3171 = vunpack.c.l.b16 %v3153
      %v3172 = vunpack.c.l.b16 %v3154
      %v3173 = vpack.c.b16 %v3166, %v3165
      %v3174 = vpack.c.b16 %v3168, %v3167
      %v3175 = vpack.c.b16 %v3170, %v3169
      %v3176 = vpack.c.b16 %v3172, %v3171
      %v3178 = vsel %vm487, %v3173, 0
      %v3181 = vsel %vm487, %v3174, 0
      %v3184 = vsel %vm487, %v3175, 0
      %v3187 = vsel %vm487, %v3176, 0
      %v3190 = vsel %vm500, %v3156, 0
      %3192 = vmatprep.subr.bf16.mxu0 0
      %3193 = vmatpush1.bf16.msra.mxu0 %v3190
      %3194 = vmatprep.subr.bf16.mxu0 0
      %3195 = vmatpush1.bf16.msra.mxu0 0
      %3196 = vmatprep.subr.bf16.mxu0 0
      %3197 = vmatpush1.bf16.msra.mxu0 0
      %3198 = vmatprep.subr.bf16.mxu0 0
      %3199 = vmatpush1.bf16.msra.mxu0 0
      %3200 = vmatprep.subr.bf16.mxu0 0
      %3201 = vmatpush1.bf16.msra.mxu0 0
      %3202 = vmatprep.subr.bf16.mxu0 0
      %3203 = vmatpush1.bf16.msra.mxu0 0
      %3204 = vmatprep.subr.bf16.mxu0 0
      %3205 = vmatpush1.bf16.msra.mxu0 0
      %3206 = vmatprep.subr.bf16.mxu0 0
      %3207 = vmatpush1.bf16.msra.mxu0 0
      %3208 = vmatprep.subr.bf16.mxu0 0
      %3209 = vmatpush1.bf16.msra.mxu0 0
      %3210 = vmatprep.subr.bf16.mxu0 0
      %3211 = vmatpush1.bf16.msra.mxu0 0
      %3212 = vmatprep.subr.bf16.mxu0 0
      %3213 = vmatpush1.bf16.msra.mxu0 0
      %3214 = vmatprep.subr.bf16.mxu0 0
      %3215 = vmatpush1.bf16.msra.mxu0 0
      %3216 = vmatprep.subr.bf16.mxu0 0
      %3217 = vmatpush1.bf16.msra.mxu0 0
      %3218 = vmatprep.subr.bf16.mxu0 0
      %3219 = vmatpush1.bf16.msra.mxu0 0
      %3220 = vmatprep.subr.bf16.mxu0 0
      %3221 = vmatpush1.bf16.msra.mxu0 0
      %3222 = vmatprep.subr.bf16.mxu0 0
      %3223 = vmatpush1.bf16.msra.mxu0 0
      %3224 = vmatprep.mubr.bf16.mxu0 0
      %3225 = vmatmul.mubr.bf16.gmra.mrb[0].mxu0 %v3178
      %v3226 = vpop.f32.mrb[0].mxu0
      %v3227 = vadd.f32 0.0, %v3226
      %v3228 = vpop.f32.mrb[0].mxu0
      %v3229 = vpop.f32.mrb[0].mxu0
      %v3230 = vadd.f32 0.0, %v3229
      %v3231 = vpop.f32.mrb[0].mxu0
      %3232 = vmatprep.mubr.bf16.mxu0 0
      %3233 = vmatmul.mubr.bf16.gmra.mrb[0].mxu0 %v3181
      %v3234 = vpop.f32.mrb[0].mxu0
      %v3235 = vadd.f32 0.0, %v3234
      %v3236 = vpop.f32.mrb[0].mxu0
      %v3237 = vpop.f32.mrb[0].mxu0
      %v3238 = vadd.f32 0.0, %v3237
      %v3239 = vpop.f32.mrb[0].mxu0
      %3240 = vmatprep.mubr.bf16.mxu0 0
      %3241 = vmatmul.mubr.bf16.gmra.mrb[0].mxu0 %v3184
      %v3242 = vpop.f32.mrb[0].mxu0
      %v3243 = vadd.f32 0.0, %v3242
      %v3244 = vpop.f32.mrb[0].mxu0
      %v3245 = vpop.f32.mrb[0].mxu0
      %v3246 = vadd.f32 0.0, %v3245
      %v3247 = vpop.f32.mrb[0].mxu0
      %3248 = vmatprep.mubr.bf16.mxu0 0
      %3249 = vmatmul.mubr.bf16.gmra.mrb[0].mxu0 %v3187
      %v3250 = vpop.f32.mrb[0].mxu0
      %v3251 = vadd.f32 0.0, %v3250
      %v3252 = vpop.f32.mrb[0].mxu0
      %v3253 = vpop.f32.mrb[0].mxu0
      %v3254 = vadd.f32 0.0, %v3253
      %v3255 = vpop.f32.mrb[0].mxu0
      %3256 = vdwg.mxu0
      %v3257 = vadd.f32 %v3136, %v3227
      %v3258 = vadd.f32 %v3137, %v3230
      %v3259 = vadd.f32 %v3138, %v3235
      %v3260 = vadd.f32 %v3139, %v3238
      %v3261 = vadd.f32 %v3140, %v3243
      %v3262 = vadd.f32 %v3141, %v3246
      %v3263 = vadd.f32 %v3142, %v3251
      %v3264 = vadd.f32 %v3143, %v3254
      %v3265 = vld [vmem:[%s3025] sm:$0xf]
      %v3266 = vld [vmem:[%s3025 + $0x4] sm:$0x1]
      %v3267 = vld [vmem:[%s3025 + $0x8] sm:$0xf]
      %v3268 = vld [vmem:[%s3025 + $0xc] sm:$0x1]
      %v3269 = vld [vmem:[%s3025 + $0x10] sm:$0xf]
      %v3270 = vld [vmem:[%s3025 + $0x14] sm:$0x1]
      %v3271 = vld [vmem:[%s3025 + $0x18] sm:$0xf]
      %v3272 = vld [vmem:[%s3025 + $0x1c] sm:$0x1]
      %v3273 = vld [vmem:[%s3025 + $0x20] sm:$0xf]
      %v3274 = vld [vmem:[%s3025 + $0x24] sm:$0x1]
      %v3275 = vld [vmem:[%s3025 + $0x28] sm:$0xf]
      %v3276 = vld [vmem:[%s3025 + $0x2c] sm:$0x1]
      %v3277 = vld [vmem:[%s3025 + $0x30] sm:$0xf]
      %v3278 = vld [vmem:[%s3025 + $0x34] sm:$0x1]
      %v3279 = vld [vmem:[%s3025 + $0x38] sm:$0xf]
      %v3280 = vld [vmem:[%s3025 + $0x3c] sm:$0x1]
      %v3282 = vshrl.u32 %v3265, 16
      %v3284 = vrot.slane %v3282, 4
      %v3285 = vshll.u32 %v3265, 16
      %v3287 = vrot.slane %v3285, 5
      %v3288 = vor.u32 %v3284, %v3287
      %v3289 = vrot.slane %v3288, 4
      %v3291 = vshll.u32 %v3266, 16
      %v3293 = vrot.slane %v3291, 5
      %v3294 = vsel %vm1244, %v3289, %v3293
      %v3296 = vshrl.u32 %v3267, 16
      %v3298 = vrot.slane %v3296, 4
      %v3299 = vshll.u32 %v3267, 16
      %v3301 = vrot.slane %v3299, 5
      %v3302 = vor.u32 %v3298, %v3301
      %v3303 = vrot.slane %v3302, 4
      %v3305 = vshll.u32 %v3268, 16
      %v3307 = vrot.slane %v3305, 5
      %v3308 = vsel %vm1244, %v3303, %v3307
      %v3310 = vshrl.u32 %v3269, 16
      %v3312 = vrot.slane %v3310, 4
      %v3313 = vshll.u32 %v3269, 16
      %v3315 = vrot.slane %v3313, 5
      %v3316 = vor.u32 %v3312, %v3315
      %v3317 = vrot.slane %v3316, 4
      %v3319 = vshll.u32 %v3270, 16
      %v3321 = vrot.slane %v3319, 5
      %v3322 = vsel %vm1244, %v3317, %v3321
      %v3324 = vshrl.u32 %v3271, 16
      %v3326 = vrot.slane %v3324, 4
      %v3327 = vshll.u32 %v3271, 16
      %v3329 = vrot.slane %v3327, 5
      %v3330 = vor.u32 %v3326, %v3329
      %v3331 = vrot.slane %v3330, 4
      %v3333 = vshll.u32 %v3272, 16
      %v3335 = vrot.slane %v3333, 5
      %v3336 = vsel %vm1244, %v3331, %v3335
      %v3338 = vshrl.u32 %v3273, 16
      %v3340 = vrot.slane %v3338, 4
      %v3341 = vshll.u32 %v3273, 16
      %v3343 = vrot.slane %v3341, 5
      %v3344 = vor.u32 %v3340, %v3343
      %v3345 = vrot.slane %v3344, 4
      %v3347 = vshll.u32 %v3274, 16
      %v3349 = vrot.slane %v3347, 5
      %v3350 = vsel %vm1244, %v3345, %v3349
      %v3352 = vshrl.u32 %v3275, 16
      %v3354 = vrot.slane %v3352, 4
      %v3355 = vshll.u32 %v3275, 16
      %v3357 = vrot.slane %v3355, 5
      %v3358 = vor.u32 %v3354, %v3357
      %v3359 = vrot.slane %v3358, 4
      %v3361 = vshll.u32 %v3276, 16
      %v3363 = vrot.slane %v3361, 5
      %v3364 = vsel %vm1244, %v3359, %v3363
      %v3366 = vshrl.u32 %v3277, 16
      %v3368 = vrot.slane %v3366, 4
      %v3369 = vshll.u32 %v3277, 16
      %v3371 = vrot.slane %v3369, 5
      %v3372 = vor.u32 %v3368, %v3371
      %v3373 = vrot.slane %v3372, 4
      %v3375 = vshll.u32 %v3278, 16
      %v3377 = vrot.slane %v3375, 5
      %v3378 = vsel %vm1244, %v3373, %v3377
      %v3380 = vshrl.u32 %v3279, 16
      %v3382 = vrot.slane %v3380, 4
      %v3383 = vshll.u32 %v3279, 16
      %v3385 = vrot.slane %v3383, 5
      %v3386 = vor.u32 %v3382, %v3385
      %v3387 = vrot.slane %v3386, 4
      %v3389 = vshll.u32 %v3280, 16
      %v3391 = vrot.slane %v3389, 5
      %v3392 = vsel %vm1244, %v3387, %v3391
      %s3393 = scalar_lea.vmem %s3, 14
      %v3394 = vld [vmem:[%s3393] sm:$0x3]
      %v3395 = vunpack.c.l.b16 %v3294
      %v3396 = vunpack.c.l.b16 %v3308
      %v3397 = vunpack.c.l.b16 %v3322
      %v3398 = vunpack.c.l.b16 %v3336
      %v3399 = vunpack.c.l.b16 %v3350
      %v3400 = vunpack.c.l.b16 %v3364
      %v3401 = vunpack.c.l.b16 %v3378
      %v3402 = vunpack.c.l.b16 %v3392
      %v3403 = vpack.c.b16 %v3396, %v3395
      %v3404 = vpack.c.b16 %v3398, %v3397
      %v3405 = vpack.c.b16 %v3400, %v3399
      %v3406 = vpack.c.b16 %v3402, %v3401
      %v3408 = vsel %vm1145, %v3403, 0
      %v3411 = vsel %vm1145, %v3404, 0
      %v3414 = vsel %vm1145, %v3405, 0
      %v3417 = vsel %vm1145, %v3406, 0
      %v3420 = vsel %vm709, %v3394, 0
      %3422 = vmatprep.subr.bf16.mxu0 0
      %3423 = vmatpush1.bf16.msra.mxu0 %v3420
      %3424 = vmatprep.subr.bf16.mxu0 0
      %3425 = vmatpush1.bf16.msra.mxu0 0
      %3426 = vmatprep.subr.bf16.mxu0 0
      %3427 = vmatpush1.bf16.msra.mxu0 0
      %3428 = vmatprep.subr.bf16.mxu0 0
      %3429 = vmatpush1.bf16.msra.mxu0 0
      %3430 = vmatprep.subr.bf16.mxu0 0
      %3431 = vmatpush1.bf16.msra.mxu0 0
      %3432 = vmatprep.subr.bf16.mxu0 0
      %3433 = vmatpush1.bf16.msra.mxu0 0
      %3434 = vmatprep.subr.bf16.mxu0 0
      %3435 = vmatpush1.bf16.msra.mxu0 0
      %3436 = vmatprep.subr.bf16.mxu0 0
      %3437 = vmatpush1.bf16.msra.mxu0 0
      %3438 = vmatprep.subr.bf16.mxu0 0
      %3439 = vmatpush1.bf16.msra.mxu0 0
      %3440 = vmatprep.subr.bf16.mxu0 0
      %3441 = vmatpush1.bf16.msra.mxu0 0
      %3442 = vmatprep.subr.bf16.mxu0 0
      %3443 = vmatpush1.bf16.msra.mxu0 0
      %3444 = vmatprep.subr.bf16.mxu0 0
      %3445 = vmatpush1.bf16.msra.mxu0 0
      %3446 = vmatprep.subr.bf16.mxu0 0
      %3447 = vmatpush1.bf16.msra.mxu0 0
      %3448 = vmatprep.subr.bf16.mxu0 0
      %3449 = vmatpush1.bf16.msra.mxu0 0
      %3450 = vmatprep.subr.bf16.mxu0 0
      %3451 = vmatpush1.bf16.msra.mxu0 0
      %3452 = vmatprep.subr.bf16.mxu0 0
      %3453 = vmatpush1.bf16.msra.mxu0 0
      %3454 = vmatprep.mubr.bf16.mxu0 0
      %3455 = vmatmul.mubr.bf16.gmra.mrb[0].mxu0 %v3408
      %v3456 = vpop.f32.mrb[0].mxu0
      %v3457 = vadd.f32 0.0, %v3456
      %v3458 = vpop.f32.mrb[0].mxu0
      %v3459 = vpop.f32.mrb[0].mxu0
      %v3460 = vadd.f32 0.0, %v3459
      %v3461 = vpop.f32.mrb[0].mxu0
      %3462 = vmatprep.mubr.bf16.mxu0 0
      %3463 = vmatmul.mubr.bf16.gmra.mrb[0].mxu0 %v3411
      %v3464 = vpop.f32.mrb[0].mxu0
      %v3465 = vadd.f32 0.0, %v3464
      %v3466 = vpop.f32.mrb[0].mxu0
      %v3467 = vpop.f32.mrb[0].mxu0
      %v3468 = vadd.f32 0.0, %v3467
      %v3469 = vpop.f32.mrb[0].mxu0
      %3470 = vmatprep.mubr.bf16.mxu0 0
      %3471 = vmatmul.mubr.bf16.gmra.mrb[0].mxu0 %v3414
      %v3472 = vpop.f32.mrb[0].mxu0
      %v3473 = vadd.f32 0.0, %v3472
      %v3474 = vpop.f32.mrb[0].mxu0
      %v3475 = vpop.f32.mrb[0].mxu0
      %v3476 = vadd.f32 0.0, %v3475
      %v3477 = vpop.f32.mrb[0].mxu0
      %3478 = vmatprep.mubr.bf16.mxu0 0
      %3479 = vmatmul.mubr.bf16.gmra.mrb[0].mxu0 %v3417
      %v3480 = vpop.f32.mrb[0].mxu0
      %v3481 = vadd.f32 0.0, %v3480
      %v3482 = vpop.f32.mrb[0].mxu0
      %v3483 = vpop.f32.mrb[0].mxu0
      %v3484 = vadd.f32 0.0, %v3483
      %v3485 = vpop.f32.mrb[0].mxu0
      %3486 = vdwg.mxu0
      %v3487 = vadd.f32 %v3257, %v3457
      %v3488 = vadd.f32 %v3258, %v3460
      %v3489 = vadd.f32 %v3259, %v3465
      %v3490 = vadd.f32 %v3260, %v3468
      %v3491 = vadd.f32 %v3261, %v3473
      %v3492 = vadd.f32 %v3262, %v3476
      %v3493 = vadd.f32 %v3263, %v3481
      %v3494 = vadd.f32 %v3264, %v3484
      %v3495 = vld [vmem:[%s3146] sm:$0xf]
      %v3496 = vld [vmem:[%s3146 + $0x4] sm:$0x1]
      %v3497 = vld [vmem:[%s3146 + $0x8] sm:$0xf]
      %v3498 = vld [vmem:[%s3146 + $0xc] sm:$0x1]
      %v3499 = vld [vmem:[%s3146 + $0x10] sm:$0xf]
      %v3500 = vld [vmem:[%s3146 + $0x14] sm:$0x1]
      %v3501 = vld [vmem:[%s3146 + $0x18] sm:$0xf]
      %v3502 = vld [vmem:[%s3146 + $0x1c] sm:$0x1]
      %v3503 = vld [vmem:[%s3146 + $0x20] sm:$0xf]
      %v3504 = vld [vmem:[%s3146 + $0x24] sm:$0x1]
      %v3505 = vld [vmem:[%s3146 + $0x28] sm:$0xf]
      %v3506 = vld [vmem:[%s3146 + $0x2c] sm:$0x1]
      %v3507 = vld [vmem:[%s3146 + $0x30] sm:$0xf]
      %v3508 = vld [vmem:[%s3146 + $0x34] sm:$0x1]
      %v3509 = vld [vmem:[%s3146 + $0x38] sm:$0xf]
      %v3510 = vld [vmem:[%s3146 + $0x3c] sm:$0x1]
      %v3512 = vshrl.u32 %v3495, 16
      %v3514 = vrot.slane %v3512, 4
      %v3515 = vshll.u32 %v3495, 16
      %v3517 = vrot.slane %v3515, 5
      %v3518 = vor.u32 %v3514, %v3517
      %v3519 = vrot.slane %v3518, 4
      %v3521 = vshll.u32 %v3496, 16
      %v3523 = vrot.slane %v3521, 5
      %v3524 = vsel %vm1244, %v3519, %v3523
      %v3526 = vshrl.u32 %v3497, 16
      %v3528 = vrot.slane %v3526, 4
      %v3529 = vshll.u32 %v3497, 16
      %v3531 = vrot.slane %v3529, 5
      %v3532 = vor.u32 %v3528, %v3531
      %v3533 = vrot.slane %v3532, 4
      %v3535 = vshll.u32 %v3498, 16
      %v3537 = vrot.slane %v3535, 5
      %v3538 = vsel %vm1244, %v3533, %v3537
      %v3540 = vshrl.u32 %v3499, 16
      %v3542 = vrot.slane %v3540, 4
      %v3543 = vshll.u32 %v3499, 16
      %v3545 = vrot.slane %v3543, 5
      %v3546 = vor.u32 %v3542, %v3545
      %v3547 = vrot.slane %v3546, 4
      %v3549 = vshll.u32 %v3500, 16
      %v3551 = vrot.slane %v3549, 5
      %v3552 = vsel %vm1244, %v3547, %v3551
      %v3554 = vshrl.u32 %v3501, 16
      %v3556 = vrot.slane %v3554, 4
      %v3557 = vshll.u32 %v3501, 16
      %v3559 = vrot.slane %v3557, 5
      %v3560 = vor.u32 %v3556, %v3559
      %v3561 = vrot.slane %v3560, 4
      %v3563 = vshll.u32 %v3502, 16
      %v3565 = vrot.slane %v3563, 5
      %v3566 = vsel %vm1244, %v3561, %v3565
      %v3568 = vshrl.u32 %v3503, 16
      %v3570 = vrot.slane %v3568, 4
      %v3571 = vshll.u32 %v3503, 16
      %v3573 = vrot.slane %v3571, 5
      %v3574 = vor.u32 %v3570, %v3573
      %v3575 = vrot.slane %v3574, 4
      %v3577 = vshll.u32 %v3504, 16
      %v3579 = vrot.slane %v3577, 5
      %v3580 = vsel %vm1244, %v3575, %v3579
      %v3582 = vshrl.u32 %v3505, 16
      %v3584 = vrot.slane %v3582, 4
      %v3585 = vshll.u32 %v3505, 16
      %v3587 = vrot.slane %v3585, 5
      %v3588 = vor.u32 %v3584, %v3587
      %v3589 = vrot.slane %v3588, 4
      %v3591 = vshll.u32 %v3506, 16
      %v3593 = vrot.slane %v3591, 5
      %v3594 = vsel %vm1244, %v3589, %v3593
      %v3596 = vshrl.u32 %v3507, 16
      %v3598 = vrot.slane %v3596, 4
      %v3599 = vshll.u32 %v3507, 16
      %v3601 = vrot.slane %v3599, 5
      %v3602 = vor.u32 %v3598, %v3601
      %v3603 = vrot.slane %v3602, 4
      %v3605 = vshll.u32 %v3508, 16
      %v3607 = vrot.slane %v3605, 5
      %v3608 = vsel %vm1244, %v3603, %v3607
      %v3610 = vshrl.u32 %v3509, 16
      %v3612 = vrot.slane %v3610, 4
      %v3613 = vshll.u32 %v3509, 16
      %v3615 = vrot.slane %v3613, 5
      %v3616 = vor.u32 %v3612, %v3615
      %v3617 = vrot.slane %v3616, 4
      %v3619 = vshll.u32 %v3510, 16
      %v3621 = vrot.slane %v3619, 5
      %v3622 = vsel %vm1244, %v3617, %v3621
      %s3623 = scalar_lea.vmem %s4, 28
      %v3624 = vld [vmem:[%s3623] sm:$0xf]
      %v3625 = vunpack.c.l.b16 %v3524
      %v3626 = vunpack.c.l.b16 %v3538
      %v3627 = vunpack.c.l.b16 %v3552
      %v3628 = vunpack.c.l.b16 %v3566
      %v3629 = vunpack.c.l.b16 %v3580
      %v3630 = vunpack.c.l.b16 %v3594
      %v3631 = vunpack.c.l.b16 %v3608
      %v3632 = vunpack.c.l.b16 %v3622
      %v3633 = vpack.c.b16 %v3626, %v3625
      %v3634 = vpack.c.b16 %v3628, %v3627
      %v3635 = vpack.c.b16 %v3630, %v3629
      %v3636 = vpack.c.b16 %v3632, %v3631
      %v3638 = vsel %vm487, %v3633, 0
      %v3641 = vsel %vm487, %v3634, 0
      %v3644 = vsel %vm487, %v3635, 0
      %v3647 = vsel %vm487, %v3636, 0
      %v3650 = vsel %vm500, %v3624, 0
      %3652 = vmatprep.subr.bf16.mxu0 0
      %3653 = vmatpush1.bf16.msra.mxu0 %v3650
      %3654 = vmatprep.subr.bf16.mxu0 0
      %3655 = vmatpush1.bf16.msra.mxu0 0
      %3656 = vmatprep.subr.bf16.mxu0 0
      %3657 = vmatpush1.bf16.msra.mxu0 0
      %3658 = vmatprep.subr.bf16.mxu0 0
      %3659 = vmatpush1.bf16.msra.mxu0 0
      %3660 = vmatprep.subr.bf16.mxu0 0
      %3661 = vmatpush1.bf16.msra.mxu0 0
      %3662 = vmatprep.subr.bf16.mxu0 0
      %3663 = vmatpush1.bf16.msra.mxu0 0
      %3664 = vmatprep.subr.bf16.mxu0 0
      %3665 = vmatpush1.bf16.msra.mxu0 0
      %3666 = vmatprep.subr.bf16.mxu0 0
      %3667 = vmatpush1.bf16.msra.mxu0 0
      %3668 = vmatprep.subr.bf16.mxu0 0
      %3669 = vmatpush1.bf16.msra.mxu0 0
      %3670 = vmatprep.subr.bf16.mxu0 0
      %3671 = vmatpush1.bf16.msra.mxu0 0
      %3672 = vmatprep.subr.bf16.mxu0 0
      %3673 = vmatpush1.bf16.msra.mxu0 0
      %3674 = vmatprep.subr.bf16.mxu0 0
      %3675 = vmatpush1.bf16.msra.mxu0 0
      %3676 = vmatprep.subr.bf16.mxu0 0
      %3677 = vmatpush1.bf16.msra.mxu0 0
      %3678 = vmatprep.subr.bf16.mxu0 0
      %3679 = vmatpush1.bf16.msra.mxu0 0
      %3680 = vmatprep.subr.bf16.mxu0 0
      %3681 = vmatpush1.bf16.msra.mxu0 0
      %3682 = vmatprep.subr.bf16.mxu0 0
      %3683 = vmatpush1.bf16.msra.mxu0 0
      %3684 = vmatprep.mubr.bf16.mxu0 0
      %3685 = vmatmul.mubr.bf16.gmra.mrb[0].mxu0 %v3638
      %v3686 = vpop.f32.mrb[0].mxu0
      %v3687 = vadd.f32 0.0, %v3686
      %v3688 = vpop.f32.mrb[0].mxu0
      %v3689 = vpop.f32.mrb[0].mxu0
      %v3690 = vadd.f32 0.0, %v3689
      %v3691 = vpop.f32.mrb[0].mxu0
      %3692 = vmatprep.mubr.bf16.mxu0 0
      %3693 = vmatmul.mubr.bf16.gmra.mrb[0].mxu0 %v3641
      %v3694 = vpop.f32.mrb[0].mxu0
      %v3695 = vadd.f32 0.0, %v3694
      %v3696 = vpop.f32.mrb[0].mxu0
      %v3697 = vpop.f32.mrb[0].mxu0
      %v3698 = vadd.f32 0.0, %v3697
      %v3699 = vpop.f32.mrb[0].mxu0
      %3700 = vmatprep.mubr.bf16.mxu0 0
      %3701 = vmatmul.mubr.bf16.gmra.mrb[0].mxu0 %v3644
      %v3702 = vpop.f32.mrb[0].mxu0
      %v3703 = vadd.f32 0.0, %v3702
      %v3704 = vpop.f32.mrb[0].mxu0
      %v3705 = vpop.f32.mrb[0].mxu0
      %v3706 = vadd.f32 0.0, %v3705
      %v3707 = vpop.f32.mrb[0].mxu0
      %3708 = vmatprep.mubr.bf16.mxu0 0
      %3709 = vmatmul.mubr.bf16.gmra.mrb[0].mxu0 %v3647
      %v3710 = vpop.f32.mrb[0].mxu0
      %v3711 = vadd.f32 0.0, %v3710
      %v3712 = vpop.f32.mrb[0].mxu0
      %v3713 = vpop.f32.mrb[0].mxu0
      %v3714 = vadd.f32 0.0, %v3713
      %v3715 = vpop.f32.mrb[0].mxu0
      %3716 = vdwg.mxu0
      %v3717 = vadd.f32 %v3487, %v3687
      %v3718 = vadd.f32 %v3488, %v3690
      %v3719 = vadd.f32 %v3489, %v3695
      %v3720 = vadd.f32 %v3490, %v3698
      %v3721 = vadd.f32 %v3491, %v3703
      %v3722 = vadd.f32 %v3492, %v3706
      %v3723 = vadd.f32 %v3493, %v3711
      %v3724 = vadd.f32 %v3494, %v3714
      %v3725 = vld [vmem:[%s3025] sm:$0xe]
      %v3726 = vld [vmem:[%s3025 + $0x8] sm:$0xe]
      %v3727 = vld [vmem:[%s3025 + $0x10] sm:$0xe]
      %v3728 = vld [vmem:[%s3025 + $0x18] sm:$0xe]
      %v3729 = vld [vmem:[%s3025 + $0x20] sm:$0xe]
      %v3730 = vld [vmem:[%s3025 + $0x28] sm:$0xe]
      %v3731 = vld [vmem:[%s3025 + $0x30] sm:$0xe]
      %v3732 = vld [vmem:[%s3025 + $0x38] sm:$0xe]
      %v3749 = vrot.slane %v3725, 5
      %v3750 = vrot.slane %v3749, 4
      %v3751 = vrot.slane %v3266, 5
      %v3752 = vsel %vm1715, %v3750, %v3751
      %v3753 = vrot.slane %v3726, 5
      %v3754 = vrot.slane %v3753, 4
      %v3755 = vrot.slane %v3268, 5
      %v3756 = vsel %vm1715, %v3754, %v3755
      %v3757 = vrot.slane %v3727, 5
      %v3758 = vrot.slane %v3757, 4
      %v3759 = vrot.slane %v3270, 5
      %v3760 = vsel %vm1715, %v3758, %v3759
      %v3761 = vrot.slane %v3728, 5
      %v3762 = vrot.slane %v3761, 4
      %v3763 = vrot.slane %v3272, 5
      %v3764 = vsel %vm1715, %v3762, %v3763
      %v3765 = vrot.slane %v3729, 5
      %v3766 = vrot.slane %v3765, 4
      %v3767 = vrot.slane %v3274, 5
      %v3768 = vsel %vm1715, %v3766, %v3767
      %v3769 = vrot.slane %v3730, 5
      %v3770 = vrot.slane %v3769, 4
      %v3771 = vrot.slane %v3276, 5
      %v3772 = vsel %vm1715, %v3770, %v3771
      %v3773 = vrot.slane %v3731, 5
      %v3774 = vrot.slane %v3773, 4
      %v3775 = vrot.slane %v3278, 5
      %v3776 = vsel %vm1715, %v3774, %v3775
      %v3777 = vrot.slane %v3732, 5
      %v3778 = vrot.slane %v3777, 4
      %v3779 = vrot.slane %v3280, 5
      %v3780 = vsel %vm1715, %v3778, %v3779
      %s3781 = scalar_lea.vmem %s3, 16
      %v3782 = vld [vmem:[%s3781] sm:$0x3]
      %v3783 = vunpack.c.l.b16 %v3752
      %v3784 = vunpack.c.l.b16 %v3756
      %v3785 = vunpack.c.l.b16 %v3760
      %v3786 = vunpack.c.l.b16 %v3764
      %v3787 = vunpack.c.l.b16 %v3768
      %v3788 = vunpack.c.l.b16 %v3772
      %v3789 = vunpack.c.l.b16 %v3776
      %v3790 = vunpack.c.l.b16 %v3780
      %v3791 = vpack.c.b16 %v3784, %v3783
      %v3792 = vpack.c.b16 %v3786, %v3785
      %v3793 = vpack.c.b16 %v3788, %v3787
      %v3794 = vpack.c.b16 %v3790, %v3789
      %v3796 = vsel %vm1145, %v3791, 0
      %v3799 = vsel %vm1145, %v3792, 0
      %v3802 = vsel %vm1145, %v3793, 0
      %v3805 = vsel %vm1145, %v3794, 0
      %v3808 = vsel %vm709, %v3782, 0
      %3810 = vmatprep.subr.bf16.mxu0 0
      %3811 = vmatpush1.bf16.msra.mxu0 %v3808
      %3812 = vmatprep.subr.bf16.mxu0 0
      %3813 = vmatpush1.bf16.msra.mxu0 0
      %3814 = vmatprep.subr.bf16.mxu0 0
      %3815 = vmatpush1.bf16.msra.mxu0 0
      %3816 = vmatprep.subr.bf16.mxu0 0
      %3817 = vmatpush1.bf16.msra.mxu0 0
      %3818 = vmatprep.subr.bf16.mxu0 0
      %3819 = vmatpush1.bf16.msra.mxu0 0
      %3820 = vmatprep.subr.bf16.mxu0 0
      %3821 = vmatpush1.bf16.msra.mxu0 0
      %3822 = vmatprep.subr.bf16.mxu0 0
      %3823 = vmatpush1.bf16.msra.mxu0 0
      %3824 = vmatprep.subr.bf16.mxu0 0
      %3825 = vmatpush1.bf16.msra.mxu0 0
      %3826 = vmatprep.subr.bf16.mxu0 0
      %3827 = vmatpush1.bf16.msra.mxu0 0
      %3828 = vmatprep.subr.bf16.mxu0 0
      %3829 = vmatpush1.bf16.msra.mxu0 0
      %3830 = vmatprep.subr.bf16.mxu0 0
      %3831 = vmatpush1.bf16.msra.mxu0 0
      %3832 = vmatprep.subr.bf16.mxu0 0
      %3833 = vmatpush1.bf16.msra.mxu0 0
      %3834 = vmatprep.subr.bf16.mxu0 0
      %3835 = vmatpush1.bf16.msra.mxu0 0
      %3836 = vmatprep.subr.bf16.mxu0 0
      %3837 = vmatpush1.bf16.msra.mxu0 0
      %3838 = vmatprep.subr.bf16.mxu0 0
      %3839 = vmatpush1.bf16.msra.mxu0 0
      %3840 = vmatprep.subr.bf16.mxu0 0
      %3841 = vmatpush1.bf16.msra.mxu0 0
      %3842 = vmatprep.mubr.bf16.mxu0 0
      %3843 = vmatmul.mubr.bf16.gmra.mrb[0].mxu0 %v3796
      %v3844 = vpop.f32.mrb[0].mxu0
      %v3845 = vadd.f32 0.0, %v3844
      %v3846 = vpop.f32.mrb[0].mxu0
      %v3847 = vpop.f32.mrb[0].mxu0
      %v3848 = vadd.f32 0.0, %v3847
      %v3849 = vpop.f32.mrb[0].mxu0
      %3850 = vmatprep.mubr.bf16.mxu0 0
      %3851 = vmatmul.mubr.bf16.gmra.mrb[0].mxu0 %v3799
      %v3852 = vpop.f32.mrb[0].mxu0
      %v3853 = vadd.f32 0.0, %v3852
      %v3854 = vpop.f32.mrb[0].mxu0
      %v3855 = vpop.f32.mrb[0].mxu0
      %v3856 = vadd.f32 0.0, %v3855
      %v3857 = vpop.f32.mrb[0].mxu0
      %3858 = vmatprep.mubr.bf16.mxu0 0
      %3859 = vmatmul.mubr.bf16.gmra.mrb[0].mxu0 %v3802
      %v3860 = vpop.f32.mrb[0].mxu0
      %v3861 = vadd.f32 0.0, %v3860
      %v3862 = vpop.f32.mrb[0].mxu0
      %v3863 = vpop.f32.mrb[0].mxu0
      %v3864 = vadd.f32 0.0, %v3863
      %v3865 = vpop.f32.mrb[0].mxu0
      %3866 = vmatprep.mubr.bf16.mxu0 0
      %3867 = vmatmul.mubr.bf16.gmra.mrb[0].mxu0 %v3805
      %v3868 = vpop.f32.mrb[0].mxu0
      %v3869 = vadd.f32 0.0, %v3868
      %v3870 = vpop.f32.mrb[0].mxu0
      %v3871 = vpop.f32.mrb[0].mxu0
      %v3872 = vadd.f32 0.0, %v3871
      %v3873 = vpop.f32.mrb[0].mxu0
      %3874 = vdwg.mxu0
      %v3875 = vadd.f32 %v3717, %v3845
      %v3876 = vadd.f32 %v3718, %v3848
      %v3877 = vadd.f32 %v3719, %v3853
      %v3878 = vadd.f32 %v3720, %v3856
      %v3879 = vadd.f32 %v3721, %v3861
      %v3880 = vadd.f32 %v3722, %v3864
      %v3881 = vadd.f32 %v3723, %v3869
      %v3882 = vadd.f32 %v3724, %v3872
      %v3883 = vld [vmem:[%s3146] sm:$0xe]
      %v3884 = vld [vmem:[%s3146 + $0x8] sm:$0xe]
      %v3885 = vld [vmem:[%s3146 + $0x10] sm:$0xe]
      %v3886 = vld [vmem:[%s3146 + $0x18] sm:$0xe]
      %v3887 = vld [vmem:[%s3146 + $0x20] sm:$0xe]
      %v3888 = vld [vmem:[%s3146 + $0x28] sm:$0xe]
      %v3889 = vld [vmem:[%s3146 + $0x30] sm:$0xe]
      %v3890 = vld [vmem:[%s3146 + $0x38] sm:$0xe]
      %v3907 = vrot.slane %v3883, 5
      %v3908 = vrot.slane %v3907, 4
      %v3909 = vrot.slane %v3496, 5
      %v3910 = vsel %vm1715, %v3908, %v3909
      %v3911 = vrot.slane %v3884, 5
      %v3912 = vrot.slane %v3911, 4
      %v3913 = vrot.slane %v3498, 5
      %v3914 = vsel %vm1715, %v3912, %v3913
      %v3915 = vrot.slane %v3885, 5
      %v3916 = vrot.slane %v3915, 4
      %v3917 = vrot.slane %v3500, 5
      %v3918 = vsel %vm1715, %v3916, %v3917
      %v3919 = vrot.slane %v3886, 5
      %v3920 = vrot.slane %v3919, 4
      %v3921 = vrot.slane %v3502, 5
      %v3922 = vsel %vm1715, %v3920, %v3921
      %v3923 = vrot.slane %v3887, 5
      %v3924 = vrot.slane %v3923, 4
      %v3925 = vrot.slane %v3504, 5
      %v3926 = vsel %vm1715, %v3924, %v3925
      %v3927 = vrot.slane %v3888, 5
      %v3928 = vrot.slane %v3927, 4
      %v3929 = vrot.slane %v3506, 5
      %v3930 = vsel %vm1715, %v3928, %v3929
      %v3931 = vrot.slane %v3889, 5
      %v3932 = vrot.slane %v3931, 4
      %v3933 = vrot.slane %v3508, 5
      %v3934 = vsel %vm1715, %v3932, %v3933
      %v3935 = vrot.slane %v3890, 5
      %v3936 = vrot.slane %v3935, 4
      %v3937 = vrot.slane %v3510, 5
      %v3938 = vsel %vm1715, %v3936, %v3937
      %s3939 = scalar_lea.vmem %s4, 32
      %v3940 = vld [vmem:[%s3939] sm:$0xf]
      %v3941 = vunpack.c.l.b16 %v3910
      %v3942 = vunpack.c.l.b16 %v3914
      %v3943 = vunpack.c.l.b16 %v3918
      %v3944 = vunpack.c.l.b16 %v3922
      %v3945 = vunpack.c.l.b16 %v3926
      %v3946 = vunpack.c.l.b16 %v3930
      %v3947 = vunpack.c.l.b16 %v3934
      %v3948 = vunpack.c.l.b16 %v3938
      %v3949 = vpack.c.b16 %v3942, %v3941
      %v3950 = vpack.c.b16 %v3944, %v3943
      %v3951 = vpack.c.b16 %v3946, %v3945
      %v3952 = vpack.c.b16 %v3948, %v3947
      %v3954 = vsel %vm487, %v3949, 0
      %v3957 = vsel %vm487, %v3950, 0
      %v3960 = vsel %vm487, %v3951, 0
      %v3963 = vsel %vm487, %v3952, 0
      %v3966 = vsel %vm500, %v3940, 0
      %3968 = vmatprep.subr.bf16.mxu0 0
      %3969 = vmatpush1.bf16.msra.mxu0 %v3966
      %3970 = vmatprep.subr.bf16.mxu0 0
      %3971 = vmatpush1.bf16.msra.mxu0 0
      %3972 = vmatprep.subr.bf16.mxu0 0
      %3973 = vmatpush1.bf16.msra.mxu0 0
      %3974 = vmatprep.subr.bf16.mxu0 0
      %3975 = vmatpush1.bf16.msra.mxu0 0
      %3976 = vmatprep.subr.bf16.mxu0 0
      %3977 = vmatpush1.bf16.msra.mxu0 0
      %3978 = vmatprep.subr.bf16.mxu0 0
      %3979 = vmatpush1.bf16.msra.mxu0 0
      %3980 = vmatprep.subr.bf16.mxu0 0
      %3981 = vmatpush1.bf16.msra.mxu0 0
      %3982 = vmatprep.subr.bf16.mxu0 0
      %3983 = vmatpush1.bf16.msra.mxu0 0
      %3984 = vmatprep.subr.bf16.mxu0 0
      %3985 = vmatpush1.bf16.msra.mxu0 0
      %3986 = vmatprep.subr.bf16.mxu0 0
      %3987 = vmatpush1.bf16.msra.mxu0 0
      %3988 = vmatprep.subr.bf16.mxu0 0
      %3989 = vmatpush1.bf16.msra.mxu0 0
      %3990 = vmatprep.subr.bf16.mxu0 0
      %3991 = vmatpush1.bf16.msra.mxu0 0
      %3992 = vmatprep.subr.bf16.mxu0 0
      %3993 = vmatpush1.bf16.msra.mxu0 0
      %3994 = vmatprep.subr.bf16.mxu0 0
      %3995 = vmatpush1.bf16.msra.mxu0 0
      %3996 = vmatprep.subr.bf16.mxu0 0
      %3997 = vmatpush1.bf16.msra.mxu0 0
      %3998 = vmatprep.subr.bf16.mxu0 0
      %3999 = vmatpush1.bf16.msra.mxu0 0
      %4000 = vmatprep.mubr.bf16.mxu0 0
      %4001 = vmatmul.mubr.bf16.gmra.mrb[0].mxu0 %v3954
      %v4002 = vpop.f32.mrb[0].mxu0
      %v4003 = vadd.f32 0.0, %v4002
      %v4004 = vpop.f32.mrb[0].mxu0
      %v4005 = vpop.f32.mrb[0].mxu0
      %v4006 = vadd.f32 0.0, %v4005
      %v4007 = vpop.f32.mrb[0].mxu0
      %4008 = vmatprep.mubr.bf16.mxu0 0
      %4009 = vmatmul.mubr.bf16.gmra.mrb[0].mxu0 %v3957
      %v4010 = vpop.f32.mrb[0].mxu0
      %v4011 = vadd.f32 0.0, %v4010
      %v4012 = vpop.f32.mrb[0].mxu0
      %v4013 = vpop.f32.mrb[0].mxu0
      %v4014 = vadd.f32 0.0, %v4013
      %v4015 = vpop.f32.mrb[0].mxu0
      %4016 = vmatprep.mubr.bf16.mxu0 0
      %4017 = vmatmul.mubr.bf16.gmra.mrb[0].mxu0 %v3960
      %v4018 = vpop.f32.mrb[0].mxu0
      %v4019 = vadd.f32 0.0, %v4018
      %v4020 = vpop.f32.mrb[0].mxu0
      %v4021 = vpop.f32.mrb[0].mxu0
      %v4022 = vadd.f32 0.0, %v4021
      %v4023 = vpop.f32.mrb[0].mxu0
      %4024 = vmatprep.mubr.bf16.mxu0 0
      %4025 = vmatmul.mubr.bf16.gmra.mrb[0].mxu0 %v3963
      %v4026 = vpop.f32.mrb[0].mxu0
      %v4027 = vadd.f32 0.0, %v4026
      %v4028 = vpop.f32.mrb[0].mxu0
      %v4029 = vpop.f32.mrb[0].mxu0
      %v4030 = vadd.f32 0.0, %v4029
      %v4031 = vpop.f32.mrb[0].mxu0
      %4032 = vdwg.mxu0
      %v4033 = vadd.f32 %v3875, %v4003
      %v4034 = vadd.f32 %v3876, %v4006
      %v4035 = vadd.f32 %v3877, %v4011
      %v4036 = vadd.f32 %v3878, %v4014
      %v4037 = vadd.f32 %v3879, %v4019
      %v4038 = vadd.f32 %v3880, %v4022
      %v4039 = vadd.f32 %v3881, %v4027
      %v4040 = vadd.f32 %v3882, %v4030
      %v4041 = vld [vmem:[%s5] sm:$0x1]
      %v4043 = vlaneseq
      %v4044 = vshrl.u32 %v4043, 7
      %v4045 = vsub.s32 0, %v4044
      %v4046 = vrot.slane %v4041, %v4045
      %v4048 = vadd.f32 %v4033, %v4046
      %v4049 = vadd.f32 %v4034, %v4046
      %v4050 = vadd.f32 %v4035, %v4046
      %v4051 = vadd.f32 %v4036, %v4046
      %v4052 = vadd.f32 %v4037, %v4046
      %v4053 = vadd.f32 %v4038, %v4046
      %v4054 = vadd.f32 %v4039, %v4046
      %v4055 = vadd.f32 %v4040, %v4046
      %v4056 = vmax.f32 %v4048, 0.0
      %v4057 = vmax.f32 %v4049, 0.0
      %v4058 = vmax.f32 %v4050, 0.0
      %v4059 = vmax.f32 %v4051, 0.0
      %v4060 = vmax.f32 %v4052, 0.0
      %v4061 = vmax.f32 %v4053, 0.0
      %v4062 = vmax.f32 %v4054, 0.0
      %v4063 = vmax.f32 %v4055, 0.0
      %v4064 = vpack.c.bf16 %v4057, %v4056
      %v4065 = vpack.c.bf16 %v4059, %v4058
      %v4066 = vpack.c.bf16 %v4061, %v4060
      %v4067 = vpack.c.bf16 %v4063, %v4062
      %v4068 = vld [vmem:[%s6] sm:$0xf]
      %v4069 = vld [vmem:[%s7] sm:$0x3]
      %4070 = vrot.lane.b32.xlu0 %v840, 120
      %v4071 = vpop.permute.xlu0 %4070
      %4072 = vrot.lane.b32.xlu0 %v841, 120
      %v4073 = vpop.permute.xlu0 %4072
      %4074 = vrot.lane.b32.xlu0 %v842, 120
      %v4075 = vpop.permute.xlu0 %4074
      %4076 = vrot.lane.b32.xlu0 %v843, 120
      %v4077 = vpop.permute.xlu0 %4076
      %v4079 = vsel %vm1145, %v4071, 0
      %v4082 = vsel %vm1145, %v4073, 0
      %v4085 = vsel %vm1145, %v4075, 0
      %v4088 = vsel %vm1145, %v4077, 0
      %v4091 = vsel %vm709, %v4069, 0
      %4093 = vmatprep.subr.bf16.mxu0 0
      %4094 = vmatpush1.bf16.msra.mxu0 %v4091
      %4095 = vmatprep.subr.bf16.mxu0 0
      %4096 = vmatpush1.bf16.msra.mxu0 0
      %4097 = vmatprep.subr.bf16.mxu0 0
      %4098 = vmatpush1.bf16.msra.mxu0 0
      %4099 = vmatprep.subr.bf16.mxu0 0
      %4100 = vmatpush1.bf16.msra.mxu0 0
      %4101 = vmatprep.subr.bf16.mxu0 0
      %4102 = vmatpush1.bf16.msra.mxu0 0
      %4103 = vmatprep.subr.bf16.mxu0 0
      %4104 = vmatpush1.bf16.msra.mxu0 0
      %4105 = vmatprep.subr.bf16.mxu0 0
      %4106 = vmatpush1.bf16.msra.mxu0 0
      %4107 = vmatprep.subr.bf16.mxu0 0
      %4108 = vmatpush1.bf16.msra.mxu0 0
      %4109 = vmatprep.subr.bf16.mxu0 0
      %4110 = vmatpush1.bf16.msra.mxu0 0
      %4111 = vmatprep.subr.bf16.mxu0 0
      %4112 = vmatpush1.bf16.msra.mxu0 0
      %4113 = vmatprep.subr.bf16.mxu0 0
      %4114 = vmatpush1.bf16.msra.mxu0 0
      %4115 = vmatprep.subr.bf16.mxu0 0
      %4116 = vmatpush1.bf16.msra.mxu0 0
      %4117 = vmatprep.subr.bf16.mxu0 0
      %4118 = vmatpush1.bf16.msra.mxu0 0
      %4119 = vmatprep.subr.bf16.mxu0 0
      %4120 = vmatpush1.bf16.msra.mxu0 0
      %4121 = vmatprep.subr.bf16.mxu0 0
      %4122 = vmatpush1.bf16.msra.mxu0 0
      %4123 = vmatprep.subr.bf16.mxu0 0
      %4124 = vmatpush1.bf16.msra.mxu0 0
      %4125 = vmatprep.mubr.bf16.mxu0 0
      %4126 = vmatmul.mubr.bf16.gmra.mrb[0].mxu0 %v4079
      %v4127 = vpop.f32.mrb[0].mxu0
      %v4128 = vadd.f32 0.0, %v4127
      %v4129 = vpop.f32.mrb[0].mxu0
      %v4130 = vpop.f32.mrb[0].mxu0
      %v4131 = vadd.f32 0.0, %v4130
      %v4132 = vpop.f32.mrb[0].mxu0
      %4133 = vmatprep.mubr.bf16.mxu0 0
      %4134 = vmatmul.mubr.bf16.gmra.mrb[0].mxu0 %v4082
      %v4135 = vpop.f32.mrb[0].mxu0
      %v4136 = vadd.f32 0.0, %v4135
      %v4137 = vpop.f32.mrb[0].mxu0
      %v4138 = vpop.f32.mrb[0].mxu0
      %v4139 = vadd.f32 0.0, %v4138
      %v4140 = vpop.f32.mrb[0].mxu0
      %4141 = vmatprep.mubr.bf16.mxu0 0
      %4142 = vmatmul.mubr.bf16.gmra.mrb[0].mxu0 %v4085
      %v4143 = vpop.f32.mrb[0].mxu0
      %v4144 = vadd.f32 0.0, %v4143
      %v4145 = vpop.f32.mrb[0].mxu0
      %v4146 = vpop.f32.mrb[0].mxu0
      %v4147 = vadd.f32 0.0, %v4146
      %v4148 = vpop.f32.mrb[0].mxu0
      %4149 = vmatprep.mubr.bf16.mxu0 0
      %4150 = vmatmul.mubr.bf16.gmra.mrb[0].mxu0 %v4088
      %v4151 = vpop.f32.mrb[0].mxu0
      %v4152 = vadd.f32 0.0, %v4151
      %v4153 = vpop.f32.mrb[0].mxu0
      %v4154 = vpop.f32.mrb[0].mxu0
      %v4155 = vadd.f32 0.0, %v4154
      %v4156 = vpop.f32.mrb[0].mxu0
      %4157 = vdwg.mxu0
      %v4159 = vsel %vm487, %v4064, 0
      %v4162 = vsel %vm487, %v4065, 0
      %v4165 = vsel %vm487, %v4066, 0
      %v4168 = vsel %vm487, %v4067, 0
      %v4171 = vsel %vm500, %v4068, 0
      %4173 = vmatprep.subr.bf16.mxu0 0
      %4174 = vmatpush1.bf16.msra.mxu0 %v4171
      %4175 = vmatprep.subr.bf16.mxu0 0
      %4176 = vmatpush1.bf16.msra.mxu0 0
      %4177 = vmatprep.subr.bf16.mxu0 0
      %4178 = vmatpush1.bf16.msra.mxu0 0
      %4179 = vmatprep.subr.bf16.mxu0 0
      %4180 = vmatpush1.bf16.msra.mxu0 0
      %4181 = vmatprep.subr.bf16.mxu0 0
      %4182 = vmatpush1.bf16.msra.mxu0 0
      %4183 = vmatprep.subr.bf16.mxu0 0
      %4184 = vmatpush1.bf16.msra.mxu0 0
      %4185 = vmatprep.subr.bf16.mxu0 0
      %4186 = vmatpush1.bf16.msra.mxu0 0
      %4187 = vmatprep.subr.bf16.mxu0 0
      %4188 = vmatpush1.bf16.msra.mxu0 0
      %4189 = vmatprep.subr.bf16.mxu0 0
      %4190 = vmatpush1.bf16.msra.mxu0 0
      %4191 = vmatprep.subr.bf16.mxu0 0
      %4192 = vmatpush1.bf16.msra.mxu0 0
      %4193 = vmatprep.subr.bf16.mxu0 0
      %4194 = vmatpush1.bf16.msra.mxu0 0
      %4195 = vmatprep.subr.bf16.mxu0 0
      %4196 = vmatpush1.bf16.msra.mxu0 0
      %4197 = vmatprep.subr.bf16.mxu0 0
      %4198 = vmatpush1.bf16.msra.mxu0 0
      %4199 = vmatprep.subr.bf16.mxu0 0
      %4200 = vmatpush1.bf16.msra.mxu0 0
      %4201 = vmatprep.subr.bf16.mxu0 0
      %4202 = vmatpush1.bf16.msra.mxu0 0
      %4203 = vmatprep.subr.bf16.mxu0 0
      %4204 = vmatpush1.bf16.msra.mxu0 0
      %4205 = vmatprep.mubr.bf16.mxu0 0
      %4206 = vmatmul.mubr.bf16.gmra.mrb[0].mxu0 %v4159
      %v4207 = vpop.f32.mrb[0].mxu0
      %v4208 = vadd.f32 %v4128, %v4207
      %v4209 = vpop.f32.mrb[0].mxu0
      %v4210 = vpop.f32.mrb[0].mxu0
      %v4211 = vadd.f32 %v4131, %v4210
      %v4212 = vpop.f32.mrb[0].mxu0
      %4213 = vmatprep.mubr.bf16.mxu0 0
      %4214 = vmatmul.mubr.bf16.gmra.mrb[0].mxu0 %v4162
      %v4215 = vpop.f32.mrb[0].mxu0
      %v4216 = vadd.f32 %v4136, %v4215
      %v4217 = vpop.f32.mrb[0].mxu0
      %v4218 = vpop.f32.mrb[0].mxu0
      %v4219 = vadd.f32 %v4139, %v4218
      %v4220 = vpop.f32.mrb[0].mxu0
      %4221 = vmatprep.mubr.bf16.mxu0 0
      %4222 = vmatmul.mubr.bf16.gmra.mrb[0].mxu0 %v4165
      %v4223 = vpop.f32.mrb[0].mxu0
      %v4224 = vadd.f32 %v4144, %v4223
      %v4225 = vpop.f32.mrb[0].mxu0
      %v4226 = vpop.f32.mrb[0].mxu0
      %v4227 = vadd.f32 %v4147, %v4226
      %v4228 = vpop.f32.mrb[0].mxu0
      %4229 = vmatprep.mubr.bf16.mxu0 0
      %4230 = vmatmul.mubr.bf16.gmra.mrb[0].mxu0 %v4168
      %v4231 = vpop.f32.mrb[0].mxu0
      %v4232 = vadd.f32 %v4152, %v4231
      %v4233 = vpop.f32.mrb[0].mxu0
      %v4234 = vpop.f32.mrb[0].mxu0
      %v4235 = vadd.f32 %v4155, %v4234
      %v4236 = vpop.f32.mrb[0].mxu0
      %4237 = vdwg.mxu0
      %v4238 = vlaneseq
      %v4239 = vshrl.u32 %v4238, 7
      %v4240 = vsub.s32 0, %v4239
      %v4241 = vrot.slane %v780, %v4240
      %v4242 = vadd.f32 %v4208, %v4241
      %v4243 = vadd.f32 %v4211, %v4241
      %v4244 = vadd.f32 %v4216, %v4241
      %v4245 = vadd.f32 %v4219, %v4241
      %v4246 = vadd.f32 %v4224, %v4241
      %v4247 = vadd.f32 %v4227, %v4241
      %v4248 = vadd.f32 %v4232, %v4241
      %v4249 = vadd.f32 %v4235, %v4241
      %v4250 = vld [vmem:[%s8] sm:$0x1]
      %v4252 = vlaneseq
      %v4253 = vshrl.u32 %v4252, 7
      %v4254 = vsub.s32 0, %v4253
      %v4255 = vrot.slane %v4250, %v4254
      %v4257 = vadd.f32 %v4242, %v4255
      %v4258 = vadd.f32 %v4243, %v4255
      %v4259 = vadd.f32 %v4244, %v4255
      %v4260 = vadd.f32 %v4245, %v4255
      %v4261 = vadd.f32 %v4246, %v4255
      %v4262 = vadd.f32 %v4247, %v4255
      %v4263 = vadd.f32 %v4248, %v4255
      %v4264 = vadd.f32 %v4249, %v4255
      %v4265 = vmax.f32 %v4257, 0.0
      %v4266 = vmax.f32 %v4258, 0.0
      %v4267 = vmax.f32 %v4259, 0.0
      %v4268 = vmax.f32 %v4260, 0.0
      %v4269 = vmax.f32 %v4261, 0.0
      %v4270 = vmax.f32 %v4262, 0.0
      %v4271 = vmax.f32 %v4263, 0.0
      %v4272 = vmax.f32 %v4264, 0.0
      %v4273 = vadd.f32 %v4265, %v577
      %v4274 = vadd.f32 %v4266, %v578
      %v4275 = vadd.f32 %v4267, %v579
      %v4276 = vadd.f32 %v4268, %v580
      %v4277 = vadd.f32 %v4269, %v581
      %v4278 = vadd.f32 %v4270, %v582
      %v4279 = vadd.f32 %v4271, %v583
      %v4280 = vadd.f32 %v4272, %v584
      %v4281 = vpack.c.bf16 %v4273, %v4273
      %v4282 = vpack.c.bf16 %v4274, %v4274
      %v4283 = vpack.c.bf16 %v4275, %v4275
      %v4284 = vpack.c.bf16 %v4276, %v4276
      %v4285 = vpack.c.bf16 %v4277, %v4277
      %v4286 = vpack.c.bf16 %v4278, %v4278
      %v4287 = vpack.c.bf16 %v4279, %v4279
      %v4288 = vpack.c.bf16 %v4280, %v4280
      %vm4289 = vcmask 60416
      %4290 = vst.msk [vmem:[%s449] sm:$0xf] %vm4289, %v4281
      %4291 = vst.msk [vmem:[%s449 + $0x4] sm:$0xf] %vm4289, %v4282
      %4292 = vst.msk [vmem:[%s449 + $0x8] sm:$0xf] %vm4289, %v4283
      %4293 = vst.msk [vmem:[%s449 + $0xc] sm:$0xf] %vm4289, %v4284
      %4294 = vst.msk [vmem:[%s449 + $0x10] sm:$0xf] %vm4289, %v4285
      %4295 = vst.msk [vmem:[%s449 + $0x14] sm:$0xf] %vm4289, %v4286
      %4296 = vst.msk [vmem:[%s449 + $0x18] sm:$0xf] %vm4289, %v4287
      %4297 = vst.msk [vmem:[%s449 + $0x1c] sm:$0xf] %vm4289, %v4288
      %p4298 = scmp.lt.s32.totalorder %s27, 1
      %s4299 = scalar_select %p4298, %s27, 1
      %p4300 = scmp.lt.s32.totalorder %s28, 4
      %s4301 = scalar_select %p4300, %s28, 4
      %s4302 = smul.addr %s4301, 8
      %s4303 = smul.addr %s4299, 40
      %s4304 = sadd.s32 %s4302, %s4303
      %s4305 = smul.addr %s4304, 4
      %s4306 = scalar_lea.vmem %s12, %s4305
      // Predicated region
      $region77: #{run.3} parent=67 // pred_check
        %p4307 = pneg %p314
      $region78: #{run.3} parent=67 // pred_check_branch
        %4309 = sbr.rel (%p4307) target = $region80
      $region79: #{run.3} parent=67 // pred_region
        _
      $region80: #{run.3} parent=67 // pred_fallthru
        _
    $region68: #{run.3} parent=5 // pred_fallthru
      _
    %p4310 = scmp.le.s32.totalorder 2, %s18
    // Predicated region
    $region81: #{run.3} parent=5 // pred_check
      %p4311 = pneg %p4310
    $region82: #{run.3} parent=5 // pred_check_branch
      %4313 = sbr.rel (%p4311) target = $region84
    $region83: #{run.3} parent=5 // pred_region
      %s4314 = ssub.s32 %s18, 2
      // Predicated region
      $region85: #{run.3} parent=83 // pred_check
        %p4315 = pneg %p320
      $region86: #{run.3} parent=83 // pred_check_branch
        %4317 = sbr.rel (%p4315) target = $region88
      $region87: #{run.3} parent=83 // pred_region
        %p4318 = scmp.lt.s32.totalorder %s29, 1
        %s4319 = scalar_select %p4318, %s29, 1
        %p4320 = scmp.lt.s32.totalorder %s30, 4
        %s4321 = scalar_select %p4320, %s30, 4
        %s4322 = smul.addr %s4321, 8
        %s4323 = smul.addr %s4319, 40
        %s4324 = sadd.s32 %s4322, %s4323
        %s4325 = smul.addr %s4324, 4
        %s4326 = scalar_lea.vmem %s12, %s4325
      $region88: #{run.3} parent=83 // pred_fallthru
        _
    $region84: #{run.3} parent=5 // pred_fallthru
      _
  $region6: #{run.3} parent=0 // loop_footer
    %s22 = sadd.s32 1, %s18
  $region7: #{run.3} parent=0 // loop_footer_branch
    %17 = sbr.rel target = $region3
  $region8: #{run.3} parent=0 // loop_exit
    _

</llo_original>
